<compile_context>
chip_gen: v6e
topology: v6e:2x2x1
jax: 0.10.0
libtpu: 0.0.40
codegen_flags: <defaults>
</compile_context>

<pallas_src>
import math
import functools

import jax
import jax.numpy as jnp
from jax import lax
from jax.experimental import pallas as pl
from jax.experimental.pallas import tpu as pltpu


WS = 512  # power-of-two row stride: holds W(226)+conv pad(2)+max harmonic shift(76)


def harmonic_shifts(octave_bins, undertones, overtones):
    harmonics = [1.0 / (x + 2) for x in range(undertones)] + list(range(1, overtones + 1))
    return [int(round(octave_bins * math.log2(h))) for h in harmonics]


def _shift_lanes(x, s):
    """result[:, i] = x[:, (i + s) % L]  (lane rotation; wrap only reaches don't-care lanes)."""
    L = x.shape[1]
    k = s % L
    if k == 0:
        return x
    return jnp.concatenate([x[:, k:], x[:, :k]], axis=1)


def _make_kernel(cfg):
    N, H, W = cfg["N"], cfg["H"], cfg["W"]
    cap = cfg["capacity"]
    onlyinput = cfg["hcnn_onlyinput"]
    sh48 = cfg["shifts48"]
    sh24 = cfg["shifts24"]

    RPI = H + 2                 # rows per image (1 zero pad row above/below for conv1)
    L = N * RPI * WS            # flattened lane extent, shared by every stage
    RB = RPI * WS               # per-image row-block stride (multiple of 128)
    W1v = W                     # conv1 output width (padding (1,1))
    W2v = W - 2                 # conv2 output width
    Wp1 = W2v // 2              # width after 1st max-pool (values live at even lanes)
    W3v = Wp1 - 2               # conv3 output width (dilation 2 in lanes)
    Wp2 = W3v // 2              # final per-channel feature count (values at lanes 4*w)
    C3 = 2 * cap
    FB = 64                     # per-channel block in the flattened head input
    KC = 256                    # row-0 lanes fed to the gather-by-matmul (4*(Wp2-1) < 256)

    def hstack(x, shifts, lane_mult, keep=None):
        # Harmonic stacking folded as static lane shifts on the flattened rows.
        parts = []
        for s in shifts:
            r = _shift_lanes(x, s * lane_mult)
            if keep is not None:
                r = r * keep
            parts.append(r)
        return jnp.concatenate(parts, axis=0)

    def conv3x3(stacked, wcat, bias, kw_step):
        # One MXU dot with K = 9*Cin: 3 lane-rotated copies (kw) x 3 aligned
        # row offsets (kh*WS) stacked along the contraction dim.
        cin = stacked.shape[0]
        tail = jnp.zeros((cin, 2 * WS), stacked.dtype)
        ext = []
        for kw in range(3):
            r = _shift_lanes(stacked, kw * kw_step)
            ext.append(jnp.concatenate([r, tail], axis=1).astype(jnp.bfloat16))
        parts = [ext[kw][:, kh * WS: kh * WS + L] for kh in range(3) for kw in range(3)]
        xcat = jnp.concatenate(parts, axis=0)                        # (9*cin, L) bf16
        out = jnp.dot(wcat, xcat, preferred_element_type=jnp.float32)
        return jnp.maximum(out + bias, 0.0)                          # fused BN bias + ReLU

    def kernel(x_ref, w1_ref, b1_ref, w2_ref, b2_ref, w3_ref, b3_ref,
               wl1_ref, bl1_ref, wl2_ref, bl2_ref, o_ref):
        lane = lax.broadcasted_iota(jnp.int32, (1, L), 1)
        col = jnp.bitwise_and(lane, WS - 1)          # lane index within a row (WS = 2^k)
        in_keep = jnp.where(jnp.logical_and(col >= 1, col < 1 + W), 1.0, 0.0)  # conv1 W-pad cols
        keep1 = jnp.where(col < W1v, 1.0, 0.0)
        keep2 = jnp.where(col < W2v, 1.0, 0.0)

        x0 = x_ref[...]                               # (1, L) padded, flattened input
        # --- stage 1: harmonic stacking (octave 48) + conv1(pad 1,1) + BN + ReLU ---
        s1 = hstack(x0, sh48, 1, keep=in_keep)        # (mult, L)
        a1 = conv3x3(s1, w1_ref[...], b1_ref[...], 1) * keep1          # (cap, L)

        # --- stage 2: harmonic stacking + conv2(pad 0) + BN + ReLU + 1x2 max-pool ---
        s2 = a1 if onlyinput else hstack(a1, sh48, 1)
        a2 = conv3x3(s2, w2_ref[...], b2_ref[...], 1) * keep2          # (cap, L)
        p2 = jnp.maximum(a2, _shift_lanes(a2, 1))      # pooled value w lives at lane 2*w
        # Dropout2d(0.25): identity in eval mode.

        # --- stage 3 (lane-dilated by 2): stacking + conv3 + BN + ReLU + 1x2 max-pool ---
        s3 = p2 if onlyinput else hstack(p2, sh24, 2)
        a3 = conv3x3(s3, w3_ref[...], b3_ref[...], 2)                  # (2*cap, L)
        p3 = jnp.maximum(a3, _shift_lanes(a3, 2))      # feature w lives at lane 4*w
        # Dropout2d(0.25): identity in eval mode.

        # --- head: flatten via gather-by-matmul, Linear+BN1d+ReLU, Linear ---
        jr = lax.broadcasted_iota(jnp.int32, (KC, FB), 0)
        jc = lax.broadcasted_iota(jnp.int32, (KC, FB), 1)
        sel = jnp.where(jnp.logical_and(jr == 4 * jc, jc < Wp2),
                        1.0, 0.0).astype(jnp.bfloat16)                 # (KC, FB) 0/1
        feat_parts = []
        for c in range(C3):
            rows = jnp.concatenate(
                [p3[c:c + 1, n * RB: n * RB + KC] for n in range(N)], axis=0)   # (N, KC)
            feat_parts.append(jnp.dot(rows.astype(jnp.bfloat16), sel,
                                      preferred_element_type=jnp.float32))      # (N, FB)
        feat = jnp.concatenate(feat_parts, axis=1).astype(jnp.bfloat16)         # (N, C3*FB)
        h = jnp.dot(feat, wl1_ref[...], preferred_element_type=jnp.float32)
        h = jnp.maximum(h + bl1_ref[...], 0.0)
        # Dropout(0.5): identity in eval mode.
        o_ref[...] = jnp.dot(h.astype(jnp.bfloat16), wl2_ref[...],
                             preferred_element_type=jnp.float32) + bl2_ref[...]

    return kernel


# ----------------------------------------------------------------------------
# Parameters (deterministic; BN folded, weights pre-arranged and cast to bf16)
# ----------------------------------------------------------------------------
def xavier_uniform(key, shape, fan_in, fan_out, gain):
    bound = gain * math.sqrt(6.0 / (fan_in + fan_out))
    return jax.random.uniform(key, shape, jnp.float32, minval=-bound, maxval=bound)


def init_params(key, capacity, undertones, overtones, hcnn_onlyinput):
    cap = capacity
    mult = undertones + overtones
    hcnn_in = cap if hcnn_onlyinput else cap * mult
    relu_gain = math.sqrt(2.0)
    sig_gain = 1.0
    eps = 1e-4
    keys = jax.random.split(key, 5)

    def bn_fold(n):
        gamma = jnp.ones((n,), jnp.float32)
        beta = jnp.zeros((n,), jnp.float32)
        rmean = jnp.zeros((n,), jnp.float32)
        rvar = jnp.ones((n,), jnp.float32)
        s = gamma / jnp.sqrt(rvar + eps)
        return s, beta - rmean * s

    def conv_folded(k, cout, cin):
        w = xavier_uniform(k, (cout, cin, 3, 3), cin * 9, cout * 9, relu_gain)
        s, b = bn_fold(cout)
        w = w * s[:, None, None, None]
        # column layout (kh*3 + kw)*cin + ci matches the kernel's tap-major stacking
        wcat = jnp.transpose(w, (0, 2, 3, 1)).reshape(cout, 9 * cin)
        return wcat.astype(jnp.bfloat16), b.reshape(cout, 1)

    c1w, c1b = conv_folded(keys[0], cap, 1 * mult)
    c2w, c2b = conv_folded(keys[1], cap, hcnn_in)
    c3w, c3b = conv_folded(keys[2], cap * 2, hcnn_in)

    # Linear head: fold BN1d scale into lin1 and re-index its rows from the
    # PyTorch flatten order (c*55 + w) to the kernel's (c*64 + w) layout.
    n_flat = cap * 2 * 1 * 55
    C3, FB, Wp2 = cap * 2, 64, 55
    s4, b4 = bn_fold(512)
    lin1 = xavier_uniform(keys[3], (512, n_flat), n_flat, 512, relu_gain)
    w1eff = lin1.T * s4[None, :]                               # (n_flat, 512)
    w1pp = jnp.zeros((C3, FB, 512), jnp.float32)
    w1pp = w1pp.at[:, :Wp2, :].set(w1eff.reshape(C3, Wp2, 512)).reshape(C3 * FB, 512)
    lin2 = xavier_uniform(keys[4], (88, 512), 512, 88, sig_gain).T   # (512, 88)
    # NOTE: the PyTorch init loop zeroes every Linear bias, so lin2 bias is zero.
    return {
        "conv1_w": c1w, "conv1_b": c1b,
        "conv2_w": c2w, "conv2_b": c2b,
        "conv3_w": c3w, "conv3_b": c3b,
        "lin1_w": w1pp.astype(jnp.bfloat16), "lin1_b": b4.reshape(1, 512),
        "lin2_w": lin2.astype(jnp.bfloat16), "lin2_b": jnp.zeros((1, 88), jnp.float32),
    }


# ----------------------------------------------------------------------------
# Forward: a single pallas_call, no grid (whole problem fits easily in VMEM)
# ----------------------------------------------------------------------------
def vggnet2016_forward(params, x, *, capacity, undertones, overtones, hcnn_onlyinput):
    N, C0, H, W = x.shape
    shifts48 = harmonic_shifts(48, undertones, overtones)
    shifts24 = harmonic_shifts(24, undertones, overtones)
    assert C0 == 1 and H == 5, "spec implies a 1-channel input with 5 rows"
    assert W + 2 + max(abs(s) for s in shifts48) <= WS
    Wp2 = ((W - 2) // 2 - 2) // 2
    assert Wp2 == 55, "spec's n_flat implies a final width of 55"

    cfg = dict(N=N, H=H, W=W, capacity=capacity,
               hcnn_onlyinput=hcnn_onlyinput, shifts48=shifts48, shifts24=shifts24)
    kernel = _make_kernel(cfg)

    # Flattened padded layout: per image RPI=H+2 rows of stride WS; data occupies
    # rows 1..H and lanes 1..W (conv1's (1,1) padding is baked into the layout).
    xp = jnp.pad(x, ((0, 0), (0, 0), (1, 1), (1, WS - W - 1)))
    xflat = xp.reshape(1, N * (H + 2) * WS)

    vmem = pl.BlockSpec(memory_space=pltpu.MemorySpace.VMEM)
    # TODO(synk): training-mode dropout / batch-statistics BatchNorm not implemented.
    # TODO(synk): if batch size grows on v7x, add a "parallel" grid axis over N so
    # both TensorCores get work; at batch=2 a single block is faster.
    return pl.pallas_call(
        kernel,
        out_shape=jax.ShapeDtypeStruct((N, 88), jnp.float32),
        in_specs=[vmem] * 11,
        out_specs=vmem,
        compiler_params=pltpu.CompilerParams(vmem_limit_bytes=32 * 1024 * 1024),
    )(xflat,
      params["conv1_w"], params["conv1_b"],
      params["conv2_w"], params["conv2_b"],
      params["conv3_w"], params["conv3_b"],
      params["lin1_w"], params["lin1_b"],
      params["lin2_w"], params["lin2_b"])


if __name__ == "__main__":
    # args: capacity=4, hcnn_undertones=1, hcnn_overtones=3, hcnn_onlyinput=False
    capacity, undertones, overtones, hcnn_onlyinput = 4, 1, 3, False

    key = jax.random.PRNGKey(0)
    kx, kp = jax.random.split(key)
    # Forward implies H=5 (-> final height 1) and W=226 (-> final width 55).
    x = jax.random.normal(kx, (2, 1, 5, 226), jnp.float32)
    params = init_params(kp, capacity, undertones, overtones, hcnn_onlyinput)

    fwd = jax.jit(functools.partial(
        vggnet2016_forward, capacity=capacity, undertones=undertones,
        overtones=overtones, hcnn_onlyinput=hcnn_onlyinput))
    out = fwd(params, x)
    jax.block_until_ready(out)
    assert out.shape == (2, 88), out.shape
    assert bool(jnp.all(jnp.isfinite(out)))
    print("KERNEL_OK")
</pallas_src>

<mosaic_0001>
module attributes {stable_mosaic.version = 11 : i64} {
  func.func @kernel(%arg0: memref<1x7168xf32, #tpu.memory_space<vmem>>, %arg1: memref<4x36xbf16, #tpu.memory_space<vmem>>, %arg2: memref<4x1xf32, #tpu.memory_space<vmem>>, %arg3: memref<4x144xbf16, #tpu.memory_space<vmem>>, %arg4: memref<4x1xf32, #tpu.memory_space<vmem>>, %arg5: memref<8x144xbf16, #tpu.memory_space<vmem>>, %arg6: memref<8x1xf32, #tpu.memory_space<vmem>>, %arg7: memref<512x512xbf16, #tpu.memory_space<vmem>>, %arg8: memref<1x512xf32, #tpu.memory_space<vmem>>, %arg9: memref<512x88xbf16, #tpu.memory_space<vmem>>, %arg10: memref<1x88xf32, #tpu.memory_space<vmem>>, %arg11: memref<2x88xf32, #tpu.memory_space<vmem>>) attributes {dimension_semantics = [], scalar_prefetch = 0 : i64, scratch_operands = 0 : i64, tpu.core_type = #tpu.core_type<tc>} {
    %0 = tpu.iota {dimensions = array<i32: 1>} : vector<1x7168xi32>
    %c511_i32 = arith.constant 511 : i32
    %1 = vector.broadcast %c511_i32 : i32 to vector<1x7168xi32>
    %2 = arith.andi %0, %1 : vector<1x7168xi32>
    %c1_i32 = arith.constant 1 : i32
    %3 = vector.broadcast %c1_i32 : i32 to vector<1x7168xi32>
    %4 = arith.cmpi sge, %2, %3 : vector<1x7168xi32>
    %c227_i32 = arith.constant 227 : i32
    %5 = vector.broadcast %c227_i32 : i32 to vector<1x7168xi32>
    %6 = arith.cmpi slt, %2, %5 : vector<1x7168xi32>
    %7 = arith.andi %4, %6 : vector<1x7168xi1>
    %cst = arith.constant 1.000000e+00 : f32
    %cst_0 = arith.constant 0.000000e+00 : f32
    %8 = vector.broadcast %cst : f32 to vector<1x7168xf32>
    %9 = vector.broadcast %cst_0 : f32 to vector<1x7168xf32>
    %10 = arith.select %7, %8, %9 : vector<1x7168xi1>, vector<1x7168xf32>
    %c226_i32 = arith.constant 226 : i32
    %11 = vector.broadcast %c226_i32 : i32 to vector<1x7168xi32>
    %12 = arith.cmpi slt, %2, %11 : vector<1x7168xi32>
    %cst_1 = arith.constant 1.000000e+00 : f32
    %cst_2 = arith.constant 0.000000e+00 : f32
    %13 = vector.broadcast %cst_1 : f32 to vector<1x7168xf32>
    %14 = vector.broadcast %cst_2 : f32 to vector<1x7168xf32>
    %15 = arith.select %12, %13, %14 : vector<1x7168xi1>, vector<1x7168xf32>
    %c224_i32 = arith.constant 224 : i32
    %16 = vector.broadcast %c224_i32 : i32 to vector<1x7168xi32>
    %17 = arith.cmpi slt, %2, %16 : vector<1x7168xi32>
    %cst_3 = arith.constant 1.000000e+00 : f32
    %cst_4 = arith.constant 0.000000e+00 : f32
    %18 = vector.broadcast %cst_3 : f32 to vector<1x7168xf32>
    %19 = vector.broadcast %cst_4 : f32 to vector<1x7168xf32>
    %20 = arith.select %17, %18, %19 : vector<1x7168xi1>, vector<1x7168xf32>
    %c0 = arith.constant 0 : index
    %c0_5 = arith.constant 0 : index
    %21 = vector.load %arg0[%c0, %c0_5] : memref<1x7168xf32, #tpu.memory_space<vmem>>, vector<1x7168xf32>
    %22 = vector.extract_strided_slice %21 {offsets = [0, 7120], sizes = [1, 48], strides = [1, 1]} : vector<1x7168xf32> to vector<1x48xf32>
    %23 = vector.extract_strided_slice %21 {offsets = [0, 0], sizes = [1, 7120], strides = [1, 1]} : vector<1x7168xf32> to vector<1x7120xf32>
    %24 = tpu.concatenate %22, %23 in 1 : vector<1x48xf32>, vector<1x7120xf32> -> vector<1x7168xf32>
    %25 = arith.mulf %24, %10 : vector<1x7168xf32>
    %26 = arith.mulf %21, %10 : vector<1x7168xf32>
    %27 = vector.extract_strided_slice %21 {offsets = [0, 48], sizes = [1, 7120], strides = [1, 1]} : vector<1x7168xf32> to vector<1x7120xf32>
    %28 = vector.extract_strided_slice %21 {offsets = [0, 0], sizes = [1, 48], strides = [1, 1]} : vector<1x7168xf32> to vector<1x48xf32>
    %29 = tpu.concatenate %27, %28 in 1 : vector<1x7120xf32>, vector<1x48xf32> -> vector<1x7168xf32>
    %30 = arith.mulf %29, %10 : vector<1x7168xf32>
    %31 = vector.extract_strided_slice %21 {offsets = [0, 76], sizes = [1, 7092], strides = [1, 1]} : vector<1x7168xf32> to vector<1x7092xf32>
    %32 = vector.extract_strided_slice %21 {offsets = [0, 0], sizes = [1, 76], strides = [1, 1]} : vector<1x7168xf32> to vector<1x76xf32>
    %33 = tpu.concatenate %31, %32 in 1 : vector<1x7092xf32>, vector<1x76xf32> -> vector<1x7168xf32>
    %34 = arith.mulf %33, %10 : vector<1x7168xf32>
    %35 = tpu.concatenate %25, %26, %30, %34 in 0 : vector<1x7168xf32>, vector<1x7168xf32>, vector<1x7168xf32>, vector<1x7168xf32> -> vector<4x7168xf32>
    %c0_6 = arith.constant 0 : index
    %c0_7 = arith.constant 0 : index
    %36 = vector.load %arg1[%c0_6, %c0_7] : memref<4x36xbf16, #tpu.memory_space<vmem>>, vector<4x36xbf16>
    %c0_8 = arith.constant 0 : index
    %c0_9 = arith.constant 0 : index
    %37 = vector.load %arg2[%c0_8, %c0_9] : memref<4x1xf32, #tpu.memory_space<vmem>>, vector<4x1xf32>
    %cst_10 = arith.constant 0.000000e+00 : f32
    %38 = vector.broadcast %cst_10 : f32 to vector<4x1024xf32>
    %39 = tpu.concatenate %35, %38 in 1 : vector<4x7168xf32>, vector<4x1024xf32> -> vector<4x8192xf32>
    %40 = arith.truncf %39 : vector<4x8192xf32> to vector<4x8192xbf16>
    %41 = vector.extract_strided_slice %35 {offsets = [0, 1], sizes = [4, 7167], strides = [1, 1]} : vector<4x7168xf32> to vector<4x7167xf32>
    %42 = vector.extract_strided_slice %35 {offsets = [0, 0], sizes = [4, 1], strides = [1, 1]} : vector<4x7168xf32> to vector<4x1xf32>
    %43 = tpu.concatenate %41, %42 in 1 : vector<4x7167xf32>, vector<4x1xf32> -> vector<4x7168xf32>
    %44 = tpu.concatenate %43, %38 in 1 : vector<4x7168xf32>, vector<4x1024xf32> -> vector<4x8192xf32>
    %45 = arith.truncf %44 : vector<4x8192xf32> to vector<4x8192xbf16>
    %46 = vector.extract_strided_slice %35 {offsets = [0, 2], sizes = [4, 7166], strides = [1, 1]} : vector<4x7168xf32> to vector<4x7166xf32>
    %47 = vector.extract_strided_slice %35 {offsets = [0, 0], sizes = [4, 2], strides = [1, 1]} : vector<4x7168xf32> to vector<4x2xf32>
    %48 = tpu.concatenate %46, %47 in 1 : vector<4x7166xf32>, vector<4x2xf32> -> vector<4x7168xf32>
    %49 = tpu.concatenate %48, %38 in 1 : vector<4x7168xf32>, vector<4x1024xf32> -> vector<4x8192xf32>
    %50 = arith.truncf %49 : vector<4x8192xf32> to vector<4x8192xbf16>
    %51 = vector.extract_strided_slice %40 {offsets = [0, 0], sizes = [4, 7168], strides = [1, 1]} : vector<4x8192xbf16> to vector<4x7168xbf16>
    %52 = vector.extract_strided_slice %45 {offsets = [0, 0], sizes = [4, 7168], strides = [1, 1]} : vector<4x8192xbf16> to vector<4x7168xbf16>
    %53 = vector.extract_strided_slice %50 {offsets = [0, 0], sizes = [4, 7168], strides = [1, 1]} : vector<4x8192xbf16> to vector<4x7168xbf16>
    %54 = vector.extract_strided_slice %40 {offsets = [0, 512], sizes = [4, 7168], strides = [1, 1]} : vector<4x8192xbf16> to vector<4x7168xbf16>
    %55 = vector.extract_strided_slice %45 {offsets = [0, 512], sizes = [4, 7168], strides = [1, 1]} : vector<4x8192xbf16> to vector<4x7168xbf16>
    %56 = vector.extract_strided_slice %50 {offsets = [0, 512], sizes = [4, 7168], strides = [1, 1]} : vector<4x8192xbf16> to vector<4x7168xbf16>
    %57 = vector.extract_strided_slice %40 {offsets = [0, 1024], sizes = [4, 7168], strides = [1, 1]} : vector<4x8192xbf16> to vector<4x7168xbf16>
    %58 = vector.extract_strided_slice %45 {offsets = [0, 1024], sizes = [4, 7168], strides = [1, 1]} : vector<4x8192xbf16> to vector<4x7168xbf16>
    %59 = vector.extract_strided_slice %50 {offsets = [0, 1024], sizes = [4, 7168], strides = [1, 1]} : vector<4x8192xbf16> to vector<4x7168xbf16>
    %60 = tpu.concatenate %51, %52, %53, %54, %55, %56, %57, %58, %59 in 0 : vector<4x7168xbf16>, vector<4x7168xbf16>, vector<4x7168xbf16>, vector<4x7168xbf16>, vector<4x7168xbf16>, vector<4x7168xbf16>, vector<4x7168xbf16>, vector<4x7168xbf16>, vector<4x7168xbf16> -> vector<36x7168xbf16>
    %cst_11 = arith.constant dense<0.000000e+00> : vector<4x7168xf32>
    %61 = tpu.matmul %36, %60, %cst_11 {dimension_numbers = #tpu.dot_dimension_numbers<[1], [0], [0], [1], [0, 0, 1, 1], [], []>} : vector<4x36xbf16>, vector<36x7168xbf16>, vector<4x7168xf32> -> vector<4x7168xf32>
    %62 = vector.broadcast %37 : vector<4x1xf32> to vector<4x7168xf32>
    %63 = arith.addf %61, %62 : vector<4x7168xf32>
    %cst_12 = arith.constant 0.000000e+00 : f32
    %64 = vector.broadcast %cst_12 : f32 to vector<4x7168xf32>
    %65 = arith.maximumf %63, %64 : vector<4x7168xf32>
    %66 = vector.broadcast %15 : vector<1x7168xf32> to vector<4x7168xf32>
    %67 = arith.mulf %65, %66 : vector<4x7168xf32>
    %68 = vector.extract_strided_slice %67 {offsets = [0, 7120], sizes = [4, 48], strides = [1, 1]} : vector<4x7168xf32> to vector<4x48xf32>
    %69 = vector.extract_strided_slice %67 {offsets = [0, 0], sizes = [4, 7120], strides = [1, 1]} : vector<4x7168xf32> to vector<4x7120xf32>
    %70 = tpu.concatenate %68, %69 in 1 : vector<4x48xf32>, vector<4x7120xf32> -> vector<4x7168xf32>
    %71 = vector.extract_strided_slice %67 {offsets = [0, 48], sizes = [4, 7120], strides = [1, 1]} : vector<4x7168xf32> to vector<4x7120xf32>
    %72 = vector.extract_strided_slice %67 {offsets = [0, 0], sizes = [4, 48], strides = [1, 1]} : vector<4x7168xf32> to vector<4x48xf32>
    %73 = tpu.concatenate %71, %72 in 1 : vector<4x7120xf32>, vector<4x48xf32> -> vector<4x7168xf32>
    %74 = vector.extract_strided_slice %67 {offsets = [0, 76], sizes = [4, 7092], strides = [1, 1]} : vector<4x7168xf32> to vector<4x7092xf32>
    %75 = vector.extract_strided_slice %67 {offsets = [0, 0], sizes = [4, 76], strides = [1, 1]} : vector<4x7168xf32> to vector<4x76xf32>
    %76 = tpu.concatenate %74, %75 in 1 : vector<4x7092xf32>, vector<4x76xf32> -> vector<4x7168xf32>
    %77 = tpu.concatenate %70, %67, %73, %76 in 0 : vector<4x7168xf32>, vector<4x7168xf32>, vector<4x7168xf32>, vector<4x7168xf32> -> vector<16x7168xf32>
    %c0_13 = arith.constant 0 : index
    %c0_14 = arith.constant 0 : index
    %78 = vector.load %arg3[%c0_13, %c0_14] : memref<4x144xbf16, #tpu.memory_space<vmem>>, vector<4x144xbf16>
    %c0_15 = arith.constant 0 : index
    %c0_16 = arith.constant 0 : index
    %79 = vector.load %arg4[%c0_15, %c0_16] : memref<4x1xf32, #tpu.memory_space<vmem>>, vector<4x1xf32>
    %cst_17 = arith.constant 0.000000e+00 : f32
    %80 = vector.broadcast %cst_17 : f32 to vector<16x1024xf32>
    %81 = tpu.concatenate %77, %80 in 1 : vector<16x7168xf32>, vector<16x1024xf32> -> vector<16x8192xf32>
    %82 = arith.truncf %81 : vector<16x8192xf32> to vector<16x8192xbf16>
    %83 = vector.extract_strided_slice %77 {offsets = [0, 1], sizes = [16, 7167], strides = [1, 1]} : vector<16x7168xf32> to vector<16x7167xf32>
    %84 = vector.extract_strided_slice %77 {offsets = [0, 0], sizes = [16, 1], strides = [1, 1]} : vector<16x7168xf32> to vector<16x1xf32>
    %85 = tpu.concatenate %83, %84 in 1 : vector<16x7167xf32>, vector<16x1xf32> -> vector<16x7168xf32>
    %86 = tpu.concatenate %85, %80 in 1 : vector<16x7168xf32>, vector<16x1024xf32> -> vector<16x8192xf32>
    %87 = arith.truncf %86 : vector<16x8192xf32> to vector<16x8192xbf16>
    %88 = vector.extract_strided_slice %77 {offsets = [0, 2], sizes = [16, 7166], strides = [1, 1]} : vector<16x7168xf32> to vector<16x7166xf32>
    %89 = vector.extract_strided_slice %77 {offsets = [0, 0], sizes = [16, 2], strides = [1, 1]} : vector<16x7168xf32> to vector<16x2xf32>
    %90 = tpu.concatenate %88, %89 in 1 : vector<16x7166xf32>, vector<16x2xf32> -> vector<16x7168xf32>
    %91 = tpu.concatenate %90, %80 in 1 : vector<16x7168xf32>, vector<16x1024xf32> -> vector<16x8192xf32>
    %92 = arith.truncf %91 : vector<16x8192xf32> to vector<16x8192xbf16>
    %93 = vector.extract_strided_slice %82 {offsets = [0, 0], sizes = [16, 7168], strides = [1, 1]} : vector<16x8192xbf16> to vector<16x7168xbf16>
    %94 = vector.extract_strided_slice %87 {offsets = [0, 0], sizes = [16, 7168], strides = [1, 1]} : vector<16x8192xbf16> to vector<16x7168xbf16>
    %95 = vector.extract_strided_slice %92 {offsets = [0, 0], sizes = [16, 7168], strides = [1, 1]} : vector<16x8192xbf16> to vector<16x7168xbf16>
    %96 = vector.extract_strided_slice %82 {offsets = [0, 512], sizes = [16, 7168], strides = [1, 1]} : vector<16x8192xbf16> to vector<16x7168xbf16>
    %97 = vector.extract_strided_slice %87 {offsets = [0, 512], sizes = [16, 7168], strides = [1, 1]} : vector<16x8192xbf16> to vector<16x7168xbf16>
    %98 = vector.extract_strided_slice %92 {offsets = [0, 512], sizes = [16, 7168], strides = [1, 1]} : vector<16x8192xbf16> to vector<16x7168xbf16>
    %99 = vector.extract_strided_slice %82 {offsets = [0, 1024], sizes = [16, 7168], strides = [1, 1]} : vector<16x8192xbf16> to vector<16x7168xbf16>
    %100 = vector.extract_strided_slice %87 {offsets = [0, 1024], sizes = [16, 7168], strides = [1, 1]} : vector<16x8192xbf16> to vector<16x7168xbf16>
    %101 = vector.extract_strided_slice %92 {offsets = [0, 1024], sizes = [16, 7168], strides = [1, 1]} : vector<16x8192xbf16> to vector<16x7168xbf16>
    %102 = tpu.concatenate %93, %94, %95, %96, %97, %98, %99, %100, %101 in 0 : vector<16x7168xbf16>, vector<16x7168xbf16>, vector<16x7168xbf16>, vector<16x7168xbf16>, vector<16x7168xbf16>, vector<16x7168xbf16>, vector<16x7168xbf16>, vector<16x7168xbf16>, vector<16x7168xbf16> -> vector<144x7168xbf16>
    %cst_18 = arith.constant dense<0.000000e+00> : vector<4x7168xf32>
    %103 = tpu.matmul %78, %102, %cst_18 {dimension_numbers = #tpu.dot_dimension_numbers<[1], [0], [0], [1], [0, 0, 1, 1], [], []>} : vector<4x144xbf16>, vector<144x7168xbf16>, vector<4x7168xf32> -> vector<4x7168xf32>
    %104 = vector.broadcast %79 : vector<4x1xf32> to vector<4x7168xf32>
    %105 = arith.addf %103, %104 : vector<4x7168xf32>
    %cst_19 = arith.constant 0.000000e+00 : f32
    %106 = vector.broadcast %cst_19 : f32 to vector<4x7168xf32>
    %107 = arith.maximumf %105, %106 : vector<4x7168xf32>
    %108 = vector.broadcast %20 : vector<1x7168xf32> to vector<4x7168xf32>
    %109 = arith.mulf %107, %108 : vector<4x7168xf32>
    %110 = vector.extract_strided_slice %109 {offsets = [0, 1], sizes = [4, 7167], strides = [1, 1]} : vector<4x7168xf32> to vector<4x7167xf32>
    %111 = vector.extract_strided_slice %109 {offsets = [0, 0], sizes = [4, 1], strides = [1, 1]} : vector<4x7168xf32> to vector<4x1xf32>
    %112 = tpu.concatenate %110, %111 in 1 : vector<4x7167xf32>, vector<4x1xf32> -> vector<4x7168xf32>
    %113 = arith.maximumf %109, %112 : vector<4x7168xf32>
    %114 = vector.extract_strided_slice %113 {offsets = [0, 7120], sizes = [4, 48], strides = [1, 1]} : vector<4x7168xf32> to vector<4x48xf32>
    %115 = vector.extract_strided_slice %113 {offsets = [0, 0], sizes = [4, 7120], strides = [1, 1]} : vector<4x7168xf32> to vector<4x7120xf32>
    %116 = tpu.concatenate %114, %115 in 1 : vector<4x48xf32>, vector<4x7120xf32> -> vector<4x7168xf32>
    %117 = vector.extract_strided_slice %113 {offsets = [0, 48], sizes = [4, 7120], strides = [1, 1]} : vector<4x7168xf32> to vector<4x7120xf32>
    %118 = vector.extract_strided_slice %113 {offsets = [0, 0], sizes = [4, 48], strides = [1, 1]} : vector<4x7168xf32> to vector<4x48xf32>
    %119 = tpu.concatenate %117, %118 in 1 : vector<4x7120xf32>, vector<4x48xf32> -> vector<4x7168xf32>
    %120 = vector.extract_strided_slice %113 {offsets = [0, 76], sizes = [4, 7092], strides = [1, 1]} : vector<4x7168xf32> to vector<4x7092xf32>
    %121 = vector.extract_strided_slice %113 {offsets = [0, 0], sizes = [4, 76], strides = [1, 1]} : vector<4x7168xf32> to vector<4x76xf32>
    %122 = tpu.concatenate %120, %121 in 1 : vector<4x7092xf32>, vector<4x76xf32> -> vector<4x7168xf32>
    %123 = tpu.concatenate %116, %113, %119, %122 in 0 : vector<4x7168xf32>, vector<4x7168xf32>, vector<4x7168xf32>, vector<4x7168xf32> -> vector<16x7168xf32>
    %c0_20 = arith.constant 0 : index
    %c0_21 = arith.constant 0 : index
    %124 = vector.load %arg5[%c0_20, %c0_21] : memref<8x144xbf16, #tpu.memory_space<vmem>>, vector<8x144xbf16>
    %c0_22 = arith.constant 0 : index
    %c0_23 = arith.constant 0 : index
    %125 = vector.load %arg6[%c0_22, %c0_23] : memref<8x1xf32, #tpu.memory_space<vmem>>, vector<8x1xf32>
    %cst_24 = arith.constant 0.000000e+00 : f32
    %126 = vector.broadcast %cst_24 : f32 to vector<16x1024xf32>
    %127 = tpu.concatenate %123, %126 in 1 : vector<16x7168xf32>, vector<16x1024xf32> -> vector<16x8192xf32>
    %128 = arith.truncf %127 : vector<16x8192xf32> to vector<16x8192xbf16>
    %129 = vector.extract_strided_slice %123 {offsets = [0, 2], sizes = [16, 7166], strides = [1, 1]} : vector<16x7168xf32> to vector<16x7166xf32>
    %130 = vector.extract_strided_slice %123 {offsets = [0, 0], sizes = [16, 2], strides = [1, 1]} : vector<16x7168xf32> to vector<16x2xf32>
    %131 = tpu.concatenate %129, %130 in 1 : vector<16x7166xf32>, vector<16x2xf32> -> vector<16x7168xf32>
    %132 = tpu.concatenate %131, %126 in 1 : vector<16x7168xf32>, vector<16x1024xf32> -> vector<16x8192xf32>
    %133 = arith.truncf %132 : vector<16x8192xf32> to vector<16x8192xbf16>
    %134 = vector.extract_strided_slice %123 {offsets = [0, 4], sizes = [16, 7164], strides = [1, 1]} : vector<16x7168xf32> to vector<16x7164xf32>
    %135 = vector.extract_strided_slice %123 {offsets = [0, 0], sizes = [16, 4], strides = [1, 1]} : vector<16x7168xf32> to vector<16x4xf32>
    %136 = tpu.concatenate %134, %135 in 1 : vector<16x7164xf32>, vector<16x4xf32> -> vector<16x7168xf32>
    %137 = tpu.concatenate %136, %126 in 1 : vector<16x7168xf32>, vector<16x1024xf32> -> vector<16x8192xf32>
    %138 = arith.truncf %137 : vector<16x8192xf32> to vector<16x8192xbf16>
    %139 = vector.extract_strided_slice %128 {offsets = [0, 0], sizes = [16, 7168], strides = [1, 1]} : vector<16x8192xbf16> to vector<16x7168xbf16>
    %140 = vector.extract_strided_slice %133 {offsets = [0, 0], sizes = [16, 7168], strides = [1, 1]} : vector<16x8192xbf16> to vector<16x7168xbf16>
    %141 = vector.extract_strided_slice %138 {offsets = [0, 0], sizes = [16, 7168], strides = [1, 1]} : vector<16x8192xbf16> to vector<16x7168xbf16>
    %142 = vector.extract_strided_slice %128 {offsets = [0, 512], sizes = [16, 7168], strides = [1, 1]} : vector<16x8192xbf16> to vector<16x7168xbf16>
    %143 = vector.extract_strided_slice %133 {offsets = [0, 512], sizes = [16, 7168], strides = [1, 1]} : vector<16x8192xbf16> to vector<16x7168xbf16>
    %144 = vector.extract_strided_slice %138 {offsets = [0, 512], sizes = [16, 7168], strides = [1, 1]} : vector<16x8192xbf16> to vector<16x7168xbf16>
    %145 = vector.extract_strided_slice %128 {offsets = [0, 1024], sizes = [16, 7168], strides = [1, 1]} : vector<16x8192xbf16> to vector<16x7168xbf16>
    %146 = vector.extract_strided_slice %133 {offsets = [0, 1024], sizes = [16, 7168], strides = [1, 1]} : vector<16x8192xbf16> to vector<16x7168xbf16>
    %147 = vector.extract_strided_slice %138 {offsets = [0, 1024], sizes = [16, 7168], strides = [1, 1]} : vector<16x8192xbf16> to vector<16x7168xbf16>
    %148 = tpu.concatenate %139, %140, %141, %142, %143, %144, %145, %146, %147 in 0 : vector<16x7168xbf16>, vector<16x7168xbf16>, vector<16x7168xbf16>, vector<16x7168xbf16>, vector<16x7168xbf16>, vector<16x7168xbf16>, vector<16x7168xbf16>, vector<16x7168xbf16>, vector<16x7168xbf16> -> vector<144x7168xbf16>
    %cst_25 = arith.constant dense<0.000000e+00> : vector<8x7168xf32>
    %149 = tpu.matmul %124, %148, %cst_25 {dimension_numbers = #tpu.dot_dimension_numbers<[1], [0], [0], [1], [0, 0, 1, 1], [], []>} : vector<8x144xbf16>, vector<144x7168xbf16>, vector<8x7168xf32> -> vector<8x7168xf32>
    %150 = vector.broadcast %125 : vector<8x1xf32> to vector<8x7168xf32>
    %151 = arith.addf %149, %150 : vector<8x7168xf32>
    %cst_26 = arith.constant 0.000000e+00 : f32
    %152 = vector.broadcast %cst_26 : f32 to vector<8x7168xf32>
    %153 = arith.maximumf %151, %152 : vector<8x7168xf32>
    %154 = vector.extract_strided_slice %153 {offsets = [0, 2], sizes = [8, 7166], strides = [1, 1]} : vector<8x7168xf32> to vector<8x7166xf32>
    %155 = vector.extract_strided_slice %153 {offsets = [0, 0], sizes = [8, 2], strides = [1, 1]} : vector<8x7168xf32> to vector<8x2xf32>
    %156 = tpu.concatenate %154, %155 in 1 : vector<8x7166xf32>, vector<8x2xf32> -> vector<8x7168xf32>
    %157 = arith.maximumf %153, %156 : vector<8x7168xf32>
    %158 = tpu.iota {dimensions = array<i32: 0>} : vector<256x64xi32>
    %159 = tpu.iota {dimensions = array<i32: 1>} : vector<256x64xi32>
    %c4_i32 = arith.constant 4 : i32
    %160 = vector.broadcast %c4_i32 : i32 to vector<256x64xi32>
    %161 = arith.muli %160, %159 : vector<256x64xi32>
    %162 = arith.cmpi eq, %158, %161 : vector<256x64xi32>
    %c55_i32 = arith.constant 55 : i32
    %163 = vector.broadcast %c55_i32 : i32 to vector<256x64xi32>
    %164 = arith.cmpi slt, %159, %163 : vector<256x64xi32>
    %165 = arith.andi %162, %164 : vector<256x64xi1>
    %cst_27 = arith.constant 1.000000e+00 : f32
    %cst_28 = arith.constant 0.000000e+00 : f32
    %166 = vector.broadcast %cst_27 : f32 to vector<256x64xf32>
    %167 = vector.broadcast %cst_28 : f32 to vector<256x64xf32>
    %168 = arith.select %165, %166, %167 : vector<256x64xi1>, vector<256x64xf32>
    %169 = arith.truncf %168 : vector<256x64xf32> to vector<256x64xbf16>
    %170 = vector.extract_strided_slice %157 {offsets = [0, 0], sizes = [1, 256], strides = [1, 1]} : vector<8x7168xf32> to vector<1x256xf32>
    %171 = vector.extract_strided_slice %157 {offsets = [0, 3584], sizes = [1, 256], strides = [1, 1]} : vector<8x7168xf32> to vector<1x256xf32>
    %172 = tpu.concatenate %170, %171 in 0 : vector<1x256xf32>, vector<1x256xf32> -> vector<2x256xf32>
    %173 = arith.truncf %172 : vector<2x256xf32> to vector<2x256xbf16>
    %cst_29 = arith.constant dense<0.000000e+00> : vector<2x64xf32>
    %174 = tpu.matmul %173, %169, %cst_29 {dimension_numbers = #tpu.dot_dimension_numbers<[1], [0], [0], [1], [0, 0, 1, 1], [], []>} : vector<2x256xbf16>, vector<256x64xbf16>, vector<2x64xf32> -> vector<2x64xf32>
    %175 = vector.extract_strided_slice %157 {offsets = [1, 0], sizes = [1, 256], strides = [1, 1]} : vector<8x7168xf32> to vector<1x256xf32>
    %176 = vector.extract_strided_slice %157 {offsets = [1, 3584], sizes = [1, 256], strides = [1, 1]} : vector<8x7168xf32> to vector<1x256xf32>
    %177 = tpu.concatenate %175, %176 in 0 : vector<1x256xf32>, vector<1x256xf32> -> vector<2x256xf32>
    %178 = arith.truncf %177 : vector<2x256xf32> to vector<2x256xbf16>
    %cst_30 = arith.constant dense<0.000000e+00> : vector<2x64xf32>
    %179 = tpu.matmul %178, %169, %cst_30 {dimension_numbers = #tpu.dot_dimension_numbers<[1], [0], [0], [1], [0, 0, 1, 1], [], []>} : vector<2x256xbf16>, vector<256x64xbf16>, vector<2x64xf32> -> vector<2x64xf32>
    %180 = vector.extract_strided_slice %157 {offsets = [2, 0], sizes = [1, 256], strides = [1, 1]} : vector<8x7168xf32> to vector<1x256xf32>
    %181 = vector.extract_strided_slice %157 {offsets = [2, 3584], sizes = [1, 256], strides = [1, 1]} : vector<8x7168xf32> to vector<1x256xf32>
    %182 = tpu.concatenate %180, %181 in 0 : vector<1x256xf32>, vector<1x256xf32> -> vector<2x256xf32>
    %183 = arith.truncf %182 : vector<2x256xf32> to vector<2x256xbf16>
    %cst_31 = arith.constant dense<0.000000e+00> : vector<2x64xf32>
    %184 = tpu.matmul %183, %169, %cst_31 {dimension_numbers = #tpu.dot_dimension_numbers<[1], [0], [0], [1], [0, 0, 1, 1], [], []>} : vector<2x256xbf16>, vector<256x64xbf16>, vector<2x64xf32> -> vector<2x64xf32>
    %185 = vector.extract_strided_slice %157 {offsets = [3, 0], sizes = [1, 256], strides = [1, 1]} : vector<8x7168xf32> to vector<1x256xf32>
    %186 = vector.extract_strided_slice %157 {offsets = [3, 3584], sizes = [1, 256], strides = [1, 1]} : vector<8x7168xf32> to vector<1x256xf32>
    %187 = tpu.concatenate %185, %186 in 0 : vector<1x256xf32>, vector<1x256xf32> -> vector<2x256xf32>
    %188 = arith.truncf %187 : vector<2x256xf32> to vector<2x256xbf16>
    %cst_32 = arith.constant dense<0.000000e+00> : vector<2x64xf32>
    %189 = tpu.matmul %188, %169, %cst_32 {dimension_numbers = #tpu.dot_dimension_numbers<[1], [0], [0], [1], [0, 0, 1, 1], [], []>} : vector<2x256xbf16>, vector<256x64xbf16>, vector<2x64xf32> -> vector<2x64xf32>
    %190 = vector.extract_strided_slice %157 {offsets = [4, 0], sizes = [1, 256], strides = [1, 1]} : vector<8x7168xf32> to vector<1x256xf32>
    %191 = vector.extract_strided_slice %157 {offsets = [4, 3584], sizes = [1, 256], strides = [1, 1]} : vector<8x7168xf32> to vector<1x256xf32>
    %192 = tpu.concatenate %190, %191 in 0 : vector<1x256xf32>, vector<1x256xf32> -> vector<2x256xf32>
    %193 = arith.truncf %192 : vector<2x256xf32> to vector<2x256xbf16>
    %cst_33 = arith.constant dense<0.000000e+00> : vector<2x64xf32>
    %194 = tpu.matmul %193, %169, %cst_33 {dimension_numbers = #tpu.dot_dimension_numbers<[1], [0], [0], [1], [0, 0, 1, 1], [], []>} : vector<2x256xbf16>, vector<256x64xbf16>, vector<2x64xf32> -> vector<2x64xf32>
    %195 = vector.extract_strided_slice %157 {offsets = [5, 0], sizes = [1, 256], strides = [1, 1]} : vector<8x7168xf32> to vector<1x256xf32>
    %196 = vector.extract_strided_slice %157 {offsets = [5, 3584], sizes = [1, 256], strides = [1, 1]} : vector<8x7168xf32> to vector<1x256xf32>
    %197 = tpu.concatenate %195, %196 in 0 : vector<1x256xf32>, vector<1x256xf32> -> vector<2x256xf32>
    %198 = arith.truncf %197 : vector<2x256xf32> to vector<2x256xbf16>
    %cst_34 = arith.constant dense<0.000000e+00> : vector<2x64xf32>
    %199 = tpu.matmul %198, %169, %cst_34 {dimension_numbers = #tpu.dot_dimension_numbers<[1], [0], [0], [1], [0, 0, 1, 1], [], []>} : vector<2x256xbf16>, vector<256x64xbf16>, vector<2x64xf32> -> vector<2x64xf32>
    %200 = vector.extract_strided_slice %157 {offsets = [6, 0], sizes = [1, 256], strides = [1, 1]} : vector<8x7168xf32> to vector<1x256xf32>
    %201 = vector.extract_strided_slice %157 {offsets = [6, 3584], sizes = [1, 256], strides = [1, 1]} : vector<8x7168xf32> to vector<1x256xf32>
    %202 = tpu.concatenate %200, %201 in 0 : vector<1x256xf32>, vector<1x256xf32> -> vector<2x256xf32>
    %203 = arith.truncf %202 : vector<2x256xf32> to vector<2x256xbf16>
    %cst_35 = arith.constant dense<0.000000e+00> : vector<2x64xf32>
    %204 = tpu.matmul %203, %169, %cst_35 {dimension_numbers = #tpu.dot_dimension_numbers<[1], [0], [0], [1], [0, 0, 1, 1], [], []>} : vector<2x256xbf16>, vector<256x64xbf16>, vector<2x64xf32> -> vector<2x64xf32>
    %205 = vector.extract_strided_slice %157 {offsets = [7, 0], sizes = [1, 256], strides = [1, 1]} : vector<8x7168xf32> to vector<1x256xf32>
    %206 = vector.extract_strided_slice %157 {offsets = [7, 3584], sizes = [1, 256], strides = [1, 1]} : vector<8x7168xf32> to vector<1x256xf32>
    %207 = tpu.concatenate %205, %206 in 0 : vector<1x256xf32>, vector<1x256xf32> -> vector<2x256xf32>
    %208 = arith.truncf %207 : vector<2x256xf32> to vector<2x256xbf16>
    %cst_36 = arith.constant dense<0.000000e+00> : vector<2x64xf32>
    %209 = tpu.matmul %208, %169, %cst_36 {dimension_numbers = #tpu.dot_dimension_numbers<[1], [0], [0], [1], [0, 0, 1, 1], [], []>} : vector<2x256xbf16>, vector<256x64xbf16>, vector<2x64xf32> -> vector<2x64xf32>
    %210 = tpu.concatenate %174, %179, %184, %189, %194, %199, %204, %209 in 1 : vector<2x64xf32>, vector<2x64xf32>, vector<2x64xf32>, vector<2x64xf32>, vector<2x64xf32>, vector<2x64xf32>, vector<2x64xf32>, vector<2x64xf32> -> vector<2x512xf32>
    %211 = arith.truncf %210 : vector<2x512xf32> to vector<2x512xbf16>
    %c0_37 = arith.constant 0 : index
    %c0_38 = arith.constant 0 : index
    %212 = vector.load %arg7[%c0_37, %c0_38] : memref<512x512xbf16, #tpu.memory_space<vmem>>, vector<512x512xbf16>
    %cst_39 = arith.constant dense<0.000000e+00> : vector<2x512xf32>
    %213 = tpu.matmul %211, %212, %cst_39 {dimension_numbers = #tpu.dot_dimension_numbers<[1], [0], [0], [1], [0, 0, 1, 1], [], []>} : vector<2x512xbf16>, vector<512x512xbf16>, vector<2x512xf32> -> vector<2x512xf32>
    %c0_40 = arith.constant 0 : index
    %c0_41 = arith.constant 0 : index
    %214 = vector.load %arg8[%c0_40, %c0_41] : memref<1x512xf32, #tpu.memory_space<vmem>>, vector<1x512xf32>
    %215 = vector.broadcast %214 : vector<1x512xf32> to vector<2x512xf32>
    %216 = arith.addf %213, %215 : vector<2x512xf32>
    %cst_42 = arith.constant 0.000000e+00 : f32
    %217 = vector.broadcast %cst_42 : f32 to vector<2x512xf32>
    %218 = arith.maximumf %216, %217 : vector<2x512xf32>
    %219 = arith.truncf %218 : vector<2x512xf32> to vector<2x512xbf16>
    %c0_43 = arith.constant 0 : index
    %c0_44 = arith.constant 0 : index
    %220 = vector.load %arg9[%c0_43, %c0_44] : memref<512x88xbf16, #tpu.memory_space<vmem>>, vector<512x88xbf16>
    %cst_45 = arith.constant dense<0.000000e+00> : vector<2x88xf32>
    %221 = tpu.matmul %219, %220, %cst_45 {dimension_numbers = #tpu.dot_dimension_numbers<[1], [0], [0], [1], [0, 0, 1, 1], [], []>} : vector<2x512xbf16>, vector<512x88xbf16>, vector<2x88xf32> -> vector<2x88xf32>
    %c0_46 = arith.constant 0 : index
    %c0_47 = arith.constant 0 : index
    %222 = vector.load %arg10[%c0_46, %c0_47] : memref<1x88xf32, #tpu.memory_space<vmem>>, vector<1x88xf32>
    %223 = vector.broadcast %222 : vector<1x88xf32> to vector<2x88xf32>
    %224 = arith.addf %221, %223 : vector<2x88xf32>
    %c0_48 = arith.constant 0 : index
    %c0_49 = arith.constant 0 : index
    %225 = vector.load %arg11[%c0_48, %c0_49] : memref<2x88xf32, #tpu.memory_space<vmem>>, vector<2x88xf32>
    tpu.vector_store %arg11[%c0_48, %c0_49], %224 {strides = array<i32>} : memref<2x88xf32, #tpu.memory_space<vmem>>, vector<2x88xf32>,
    return
  }
}

</mosaic_0001>

<llo_original>
// kernel: vggnet2016_forward.1
$region0: #{vggnet2016_forward.1}
  #allocation0 [shape = 'u32[]', space=smem, size = 0x4, offset = 0x4, fixed_abs, tag = 'smem constant byte address 0x4 - core index']
  #allocation1 [shape = 'u32[144,128]{1,0:T(1,128)}', space=vmem, size = 0x12000, scoped, tag = 'internal scratch']
  %s0 = inlined_call_operand.vmem [shape: f32[1,7168], index: 0, kind: input, shape index: {}]
  %s1 = inlined_call_operand.vmem [shape: bf16[4,36], index: 1, kind: input, shape index: {}]
  %s2 = inlined_call_operand.vmem [shape: f32[4,1], index: 2, kind: input, shape index: {}]
  %s3 = inlined_call_operand.vmem [shape: bf16[4,144], index: 3, kind: input, shape index: {}]
  %s4 = inlined_call_operand.vmem [shape: f32[4,1], index: 4, kind: input, shape index: {}]
  %s5 = inlined_call_operand.vmem [shape: bf16[8,144], index: 5, kind: input, shape index: {}]
  %s6 = inlined_call_operand.vmem [shape: f32[8,1], index: 6, kind: input, shape index: {}]
  %s7 = inlined_call_operand.hbm [shape: bf16[512,512], index: 7, kind: input, shape index: {}]
  %s8 = inlined_call_operand.vmem [shape: f32[1,512], index: 8, kind: input, shape index: {}]
  %s9 = inlined_call_operand.vmem [shape: bf16[512,88], index: 9, kind: input, shape index: {}]
  %s10 = inlined_call_operand.vmem [shape: f32[1,88], index: 10, kind: input, shape index: {}]
  %s11 = inlined_call_operand.hbm [shape: f32[2,88], index: 11, kind: output, shape index: {}]
  %s12 = sld [smem:[#allocation0]]
  $region58: #{vggnet2016_forward.1} parent=0
    _
  %s14 = ssub.s32 1, %s12
  %s15 = scalar_select 0, %s14, %s12
  $region1: #{vggnet2016_forward.1} parent=0
    #allocation2 [shape = 'u8[524288]{0}', space=vmem, size = 0x80000, scoped, tag = 'input window, operand 7, single buffered']
    #allocation3 [shape = 's32[1]{0}', space=sflag, size = 0x4, scoped, tag = 'scoped memory for vggnet2016_forward.1']
    #allocation4 [shape = 's32[1]{0}', space=sflag, size = 0x4, scoped, tag = 'scoped memory for vggnet2016_forward.1']
    #allocation5 [shape = 'u8[1024]{0}', space=vmem, size = 0x400, scoped, tag = 'output window, operand 0, single buffered']
    %16 = vsyncpa [#allocation3], 0
    %17 = vsyncpa [#allocation4], 0
    // Predicated region
    $region2: #{vggnet2016_forward.1} parent=1 // pred_check
      _
    $region3: #{vggnet2016_forward.1} parent=1 // pred_check_branch
      %19 = sbr.rel (0) target = $region5
    $region4: #{vggnet2016_forward.1} parent=1 // pred_region
      _
    $region5: #{vggnet2016_forward.1} parent=1 // pred_fallthru
      _
    // Predicated region
    $region6: #{vggnet2016_forward.1} parent=1 // pred_check
      _
    $region7: #{vggnet2016_forward.1} parent=1 // pred_check_branch
      %21 = sbr.rel (0) target = $region9
    $region8: #{vggnet2016_forward.1} parent=1 // pred_region
      _
    $region9: #{vggnet2016_forward.1} parent=1 // pred_fallthru
      _
    // Predicated region
    $region10: #{vggnet2016_forward.1} parent=1 // pred_check
      _
    $region11: #{vggnet2016_forward.1} parent=1 // pred_check_branch
      %23 = sbr.rel (0) target = $region13
    $region12: #{vggnet2016_forward.1} parent=1 // pred_region
      _
    $region13: #{vggnet2016_forward.1} parent=1 // pred_fallthru
      _
    // Predicated region
    $region14: #{vggnet2016_forward.1} parent=1 // pred_check
      _
    $region15: #{vggnet2016_forward.1} parent=1 // pred_check_branch
      %25 = sbr.rel (0) target = $region17
    $region16: #{vggnet2016_forward.1} parent=1 // pred_region
      _
    $region17: #{vggnet2016_forward.1} parent=1 // pred_fallthru
      _
    // Predicated region
    $region18: #{vggnet2016_forward.1} parent=1 // pred_check
      _
    $region19: #{vggnet2016_forward.1} parent=1 // pred_check_branch
      %27 = sbr.rel (0) target = $region21
    $region20: #{vggnet2016_forward.1} parent=1 // pred_region
      _
    $region21: #{vggnet2016_forward.1} parent=1 // pred_fallthru
      _
    // Predicated region
    $region22: #{vggnet2016_forward.1} parent=1 // pred_check
      _
    $region23: #{vggnet2016_forward.1} parent=1 // pred_check_branch
      %29 = sbr.rel (0) target = $region25
    $region24: #{vggnet2016_forward.1} parent=1 // pred_region
      _
    $region25: #{vggnet2016_forward.1} parent=1 // pred_fallthru
      _
    // Predicated region
    $region26: #{vggnet2016_forward.1} parent=1 // pred_check
      _
    $region27: #{vggnet2016_forward.1} parent=1 // pred_check_branch
      %31 = sbr.rel (0) target = $region29
    $region28: #{vggnet2016_forward.1} parent=1 // pred_region
      _
    $region29: #{vggnet2016_forward.1} parent=1 // pred_fallthru
      _
    // Predicated region
    $region30: #{vggnet2016_forward.1} parent=1 // pred_check
      _
    $region31: #{vggnet2016_forward.1} parent=1 // pred_check_branch
      %33 = sbr.rel (0) target = $region33
    $region32: #{vggnet2016_forward.1} parent=1 // pred_region
      %s35 = ssub.s32 16384, 16384
      %36 = vsyncadd [#allocation3], %s35
      %s37 = sshll.u32 [#allocation2], 4
      %s38 = int_to_ptr.vmem [resolvable:$true] %s37
      %43 = dma.hbm_to_vmem [thread:$0]  %s7, 16384, %s38, [#allocation3], 256, 256, 16
    $region33: #{vggnet2016_forward.1} parent=1 // pred_fallthru
      _
    // Predicated region
    $region34: #{vggnet2016_forward.1} parent=1 // pred_check
      _
    $region35: #{vggnet2016_forward.1} parent=1 // pred_check_branch
      %45 = sbr.rel (0) target = $region37
    $region36: #{vggnet2016_forward.1} parent=1 // pred_region
      _
    $region37: #{vggnet2016_forward.1} parent=1 // pred_fallthru
      _
    // Predicated region
    $region38: #{vggnet2016_forward.1} parent=1 // pred_check
      _
    $region39: #{vggnet2016_forward.1} parent=1 // pred_check_branch
      %47 = sbr.rel (0) target = $region41
    $region40: #{vggnet2016_forward.1} parent=1 // pred_region
      _
    $region41: #{vggnet2016_forward.1} parent=1 // pred_fallthru
      _
    // Predicated region
    $region42: #{vggnet2016_forward.1} parent=1 // pred_check
      _
    $region43: #{vggnet2016_forward.1} parent=1 // pred_check_branch
      %49 = sbr.rel (0) target = $region45
    $region44: #{vggnet2016_forward.1} parent=1 // pred_region
      _
    $region45: #{vggnet2016_forward.1} parent=1 // pred_fallthru
      _
    // Predicated region
    $region46: #{vggnet2016_forward.1} parent=1 // pred_check
      _
    $region47: #{vggnet2016_forward.1} parent=1 // pred_check_branch
      %51 = sbr.rel (0) target = $region49
    $region48: #{vggnet2016_forward.1} parent=1 // pred_region
      %52 = dma.done [#allocation3], 16384
    $region49: #{vggnet2016_forward.1} parent=1 // pred_fallthru
      _
    %v54 = vlaneseq
    %v55 = vand.u32 %v54, 127
    %v56 = vadd.s32 %v55, 128
    %v57 = vadd.s32 %v55, 256
    %v58 = vadd.s32 %v55, 384
    %v59 = vadd.s32 %v55, 512
    %v60 = vadd.s32 %v55, 640
    %v61 = vadd.s32 %v55, 768
    %v62 = vadd.s32 %v55, 896
    %v63 = vadd.s32 %v55, 1024
    %v64 = vadd.s32 %v55, 1152
    %v65 = vadd.s32 %v55, 1280
    %v66 = vadd.s32 %v55, 1408
    %v67 = vadd.s32 %v55, 1536
    %v68 = vadd.s32 %v55, 1664
    %v69 = vadd.s32 %v55, 1792
    %v70 = vadd.s32 %v55, 1920
    %v71 = vadd.s32 %v55, 2048
    %v72 = vadd.s32 %v55, 2176
    %v73 = vadd.s32 %v55, 2304
    %v74 = vadd.s32 %v55, 2432
    %v75 = vadd.s32 %v55, 2560
    %v76 = vadd.s32 %v55, 2688
    %v77 = vadd.s32 %v55, 2816
    %v78 = vadd.s32 %v55, 2944
    %v79 = vadd.s32 %v55, 3072
    %v80 = vadd.s32 %v55, 3200
    %v81 = vadd.s32 %v55, 3328
    %v82 = vadd.s32 %v55, 3456
    %v83 = vadd.s32 %v55, 3584
    %v84 = vadd.s32 %v55, 3712
    %v85 = vadd.s32 %v55, 3840
    %v86 = vadd.s32 %v55, 3968
    %v87 = vadd.s32 %v55, 4096
    %v88 = vadd.s32 %v55, 4224
    %v89 = vadd.s32 %v55, 4352
    %v90 = vadd.s32 %v55, 4480
    %v91 = vadd.s32 %v55, 4608
    %v92 = vadd.s32 %v55, 4736
    %v93 = vadd.s32 %v55, 4864
    %v94 = vadd.s32 %v55, 4992
    %v95 = vadd.s32 %v55, 5120
    %v96 = vadd.s32 %v55, 5248
    %v97 = vadd.s32 %v55, 5376
    %v98 = vadd.s32 %v55, 5504
    %v99 = vadd.s32 %v55, 5632
    %v100 = vadd.s32 %v55, 5760
    %v101 = vadd.s32 %v55, 5888
    %v102 = vadd.s32 %v55, 6016
    %v103 = vadd.s32 %v55, 6144
    %v104 = vadd.s32 %v55, 6272
    %v105 = vadd.s32 %v55, 6400
    %v106 = vadd.s32 %v55, 6528
    %v107 = vadd.s32 %v55, 6656
    %v108 = vadd.s32 %v55, 6784
    %v109 = vadd.s32 %v55, 6912
    %v110 = vadd.s32 %v55, 7040
    %v111 = vand.u32 %v55, 511
    %v112 = vand.u32 %v56, 511
    %v113 = vand.u32 %v57, 511
    %v114 = vand.u32 %v58, 511
    %v115 = vand.u32 %v59, 511
    %v116 = vand.u32 %v60, 511
    %v117 = vand.u32 %v61, 511
    %v118 = vand.u32 %v62, 511
    %v119 = vand.u32 %v63, 511
    %v120 = vand.u32 %v64, 511
    %v121 = vand.u32 %v65, 511
    %v122 = vand.u32 %v66, 511
    %v123 = vand.u32 %v67, 511
    %v124 = vand.u32 %v68, 511
    %v125 = vand.u32 %v69, 511
    %v126 = vand.u32 %v70, 511
    %v127 = vand.u32 %v71, 511
    %v128 = vand.u32 %v72, 511
    %v129 = vand.u32 %v73, 511
    %v130 = vand.u32 %v74, 511
    %v131 = vand.u32 %v75, 511
    %v132 = vand.u32 %v76, 511
    %v133 = vand.u32 %v77, 511
    %v134 = vand.u32 %v78, 511
    %v135 = vand.u32 %v79, 511
    %v136 = vand.u32 %v80, 511
    %v137 = vand.u32 %v81, 511
    %v138 = vand.u32 %v82, 511
    %v139 = vand.u32 %v83, 511
    %v140 = vand.u32 %v84, 511
    %v141 = vand.u32 %v85, 511
    %v142 = vand.u32 %v86, 511
    %v143 = vand.u32 %v87, 511
    %v144 = vand.u32 %v88, 511
    %v145 = vand.u32 %v89, 511
    %v146 = vand.u32 %v90, 511
    %v147 = vand.u32 %v91, 511
    %v148 = vand.u32 %v92, 511
    %v149 = vand.u32 %v93, 511
    %v150 = vand.u32 %v94, 511
    %v151 = vand.u32 %v95, 511
    %v152 = vand.u32 %v96, 511
    %v153 = vand.u32 %v97, 511
    %v154 = vand.u32 %v98, 511
    %v155 = vand.u32 %v99, 511
    %v156 = vand.u32 %v100, 511
    %v157 = vand.u32 %v101, 511
    %v158 = vand.u32 %v102, 511
    %v159 = vand.u32 %v103, 511
    %v160 = vand.u32 %v104, 511
    %v161 = vand.u32 %v105, 511
    %v162 = vand.u32 %v106, 511
    %v163 = vand.u32 %v107, 511
    %v164 = vand.u32 %v108, 511
    %v165 = vand.u32 %v109, 511
    %v166 = vand.u32 %v110, 511
    %vm167 = vcmp.ge.s32.totalorder %v111, 1
    %vm168 = vcmp.ge.s32.totalorder %v112, 1
    %vm169 = vcmp.ge.s32.totalorder %v113, 1
    %vm170 = vcmp.ge.s32.totalorder %v114, 1
    %vm171 = vcmp.ge.s32.totalorder %v115, 1
    %vm172 = vcmp.ge.s32.totalorder %v116, 1
    %vm173 = vcmp.ge.s32.totalorder %v117, 1
    %vm174 = vcmp.ge.s32.totalorder %v118, 1
    %vm175 = vcmp.ge.s32.totalorder %v119, 1
    %vm176 = vcmp.ge.s32.totalorder %v120, 1
    %vm177 = vcmp.ge.s32.totalorder %v121, 1
    %vm178 = vcmp.ge.s32.totalorder %v122, 1
    %vm179 = vcmp.ge.s32.totalorder %v123, 1
    %vm180 = vcmp.ge.s32.totalorder %v124, 1
    %vm181 = vcmp.ge.s32.totalorder %v125, 1
    %vm182 = vcmp.ge.s32.totalorder %v126, 1
    %vm183 = vcmp.ge.s32.totalorder %v127, 1
    %vm184 = vcmp.ge.s32.totalorder %v128, 1
    %vm185 = vcmp.ge.s32.totalorder %v129, 1
    %vm186 = vcmp.ge.s32.totalorder %v130, 1
    %vm187 = vcmp.ge.s32.totalorder %v131, 1
    %vm188 = vcmp.ge.s32.totalorder %v132, 1
    %vm189 = vcmp.ge.s32.totalorder %v133, 1
    %vm190 = vcmp.ge.s32.totalorder %v134, 1
    %vm191 = vcmp.ge.s32.totalorder %v135, 1
    %vm192 = vcmp.ge.s32.totalorder %v136, 1
    %vm193 = vcmp.ge.s32.totalorder %v137, 1
    %vm194 = vcmp.ge.s32.totalorder %v138, 1
    %vm195 = vcmp.ge.s32.totalorder %v139, 1
    %vm196 = vcmp.ge.s32.totalorder %v140, 1
    %vm197 = vcmp.ge.s32.totalorder %v141, 1
    %vm198 = vcmp.ge.s32.totalorder %v142, 1
    %vm199 = vcmp.ge.s32.totalorder %v143, 1
    %vm200 = vcmp.ge.s32.totalorder %v144, 1
    %vm201 = vcmp.ge.s32.totalorder %v145, 1
    %vm202 = vcmp.ge.s32.totalorder %v146, 1
    %vm203 = vcmp.ge.s32.totalorder %v147, 1
    %vm204 = vcmp.ge.s32.totalorder %v148, 1
    %vm205 = vcmp.ge.s32.totalorder %v149, 1
    %vm206 = vcmp.ge.s32.totalorder %v150, 1
    %vm207 = vcmp.ge.s32.totalorder %v151, 1
    %vm208 = vcmp.ge.s32.totalorder %v152, 1
    %vm209 = vcmp.ge.s32.totalorder %v153, 1
    %vm210 = vcmp.ge.s32.totalorder %v154, 1
    %vm211 = vcmp.ge.s32.totalorder %v155, 1
    %vm212 = vcmp.ge.s32.totalorder %v156, 1
    %vm213 = vcmp.ge.s32.totalorder %v157, 1
    %vm214 = vcmp.ge.s32.totalorder %v158, 1
    %vm215 = vcmp.ge.s32.totalorder %v159, 1
    %vm216 = vcmp.ge.s32.totalorder %v160, 1
    %vm217 = vcmp.ge.s32.totalorder %v161, 1
    %vm218 = vcmp.ge.s32.totalorder %v162, 1
    %vm219 = vcmp.ge.s32.totalorder %v163, 1
    %vm220 = vcmp.ge.s32.totalorder %v164, 1
    %vm221 = vcmp.ge.s32.totalorder %v165, 1
    %vm222 = vcmp.ge.s32.totalorder %v166, 1
    %vm223 = vcmp.lt.s32.totalorder %v111, 227
    %vm224 = vcmp.lt.s32.totalorder %v112, 227
    %vm225 = vcmp.lt.s32.totalorder %v113, 227
    %vm226 = vcmp.lt.s32.totalorder %v114, 227
    %vm227 = vcmp.lt.s32.totalorder %v115, 227
    %vm228 = vcmp.lt.s32.totalorder %v116, 227
    %vm229 = vcmp.lt.s32.totalorder %v117, 227
    %vm230 = vcmp.lt.s32.totalorder %v118, 227
    %vm231 = vcmp.lt.s32.totalorder %v119, 227
    %vm232 = vcmp.lt.s32.totalorder %v120, 227
    %vm233 = vcmp.lt.s32.totalorder %v121, 227
    %vm234 = vcmp.lt.s32.totalorder %v122, 227
    %vm235 = vcmp.lt.s32.totalorder %v123, 227
    %vm236 = vcmp.lt.s32.totalorder %v124, 227
    %vm237 = vcmp.lt.s32.totalorder %v125, 227
    %vm238 = vcmp.lt.s32.totalorder %v126, 227
    %vm239 = vcmp.lt.s32.totalorder %v127, 227
    %vm240 = vcmp.lt.s32.totalorder %v128, 227
    %vm241 = vcmp.lt.s32.totalorder %v129, 227
    %vm242 = vcmp.lt.s32.totalorder %v130, 227
    %vm243 = vcmp.lt.s32.totalorder %v131, 227
    %vm244 = vcmp.lt.s32.totalorder %v132, 227
    %vm245 = vcmp.lt.s32.totalorder %v133, 227
    %vm246 = vcmp.lt.s32.totalorder %v134, 227
    %vm247 = vcmp.lt.s32.totalorder %v135, 227
    %vm248 = vcmp.lt.s32.totalorder %v136, 227
    %vm249 = vcmp.lt.s32.totalorder %v137, 227
    %vm250 = vcmp.lt.s32.totalorder %v138, 227
    %vm251 = vcmp.lt.s32.totalorder %v139, 227
    %vm252 = vcmp.lt.s32.totalorder %v140, 227
    %vm253 = vcmp.lt.s32.totalorder %v141, 227
    %vm254 = vcmp.lt.s32.totalorder %v142, 227
    %vm255 = vcmp.lt.s32.totalorder %v143, 227
    %vm256 = vcmp.lt.s32.totalorder %v144, 227
    %vm257 = vcmp.lt.s32.totalorder %v145, 227
    %vm258 = vcmp.lt.s32.totalorder %v146, 227
    %vm259 = vcmp.lt.s32.totalorder %v147, 227
    %vm260 = vcmp.lt.s32.totalorder %v148, 227
    %vm261 = vcmp.lt.s32.totalorder %v149, 227
    %vm262 = vcmp.lt.s32.totalorder %v150, 227
    %vm263 = vcmp.lt.s32.totalorder %v151, 227
    %vm264 = vcmp.lt.s32.totalorder %v152, 227
    %vm265 = vcmp.lt.s32.totalorder %v153, 227
    %vm266 = vcmp.lt.s32.totalorder %v154, 227
    %vm267 = vcmp.lt.s32.totalorder %v155, 227
    %vm268 = vcmp.lt.s32.totalorder %v156, 227
    %vm269 = vcmp.lt.s32.totalorder %v157, 227
    %vm270 = vcmp.lt.s32.totalorder %v158, 227
    %vm271 = vcmp.lt.s32.totalorder %v159, 227
    %vm272 = vcmp.lt.s32.totalorder %v160, 227
    %vm273 = vcmp.lt.s32.totalorder %v161, 227
    %vm274 = vcmp.lt.s32.totalorder %v162, 227
    %vm275 = vcmp.lt.s32.totalorder %v163, 227
    %vm276 = vcmp.lt.s32.totalorder %v164, 227
    %vm277 = vcmp.lt.s32.totalorder %v165, 227
    %vm278 = vcmp.lt.s32.totalorder %v166, 227
    %vm279 = vmand %vm167, %vm223
    %vm280 = vmand %vm168, %vm224
    %vm281 = vmand %vm169, %vm225
    %vm282 = vmand %vm170, %vm226
    %vm283 = vmand %vm171, %vm227
    %vm284 = vmand %vm172, %vm228
    %vm285 = vmand %vm173, %vm229
    %vm286 = vmand %vm174, %vm230
    %vm287 = vmand %vm175, %vm231
    %vm288 = vmand %vm176, %vm232
    %vm289 = vmand %vm177, %vm233
    %vm290 = vmand %vm178, %vm234
    %vm291 = vmand %vm179, %vm235
    %vm292 = vmand %vm180, %vm236
    %vm293 = vmand %vm181, %vm237
    %vm294 = vmand %vm182, %vm238
    %vm295 = vmand %vm183, %vm239
    %vm296 = vmand %vm184, %vm240
    %vm297 = vmand %vm185, %vm241
    %vm298 = vmand %vm186, %vm242
    %vm299 = vmand %vm187, %vm243
    %vm300 = vmand %vm188, %vm244
    %vm301 = vmand %vm189, %vm245
    %vm302 = vmand %vm190, %vm246
    %vm303 = vmand %vm191, %vm247
    %vm304 = vmand %vm192, %vm248
    %vm305 = vmand %vm193, %vm249
    %vm306 = vmand %vm194, %vm250
    %vm307 = vmand %vm195, %vm251
    %vm308 = vmand %vm196, %vm252
    %vm309 = vmand %vm197, %vm253
    %vm310 = vmand %vm198, %vm254
    %vm311 = vmand %vm199, %vm255
    %vm312 = vmand %vm200, %vm256
    %vm313 = vmand %vm201, %vm257
    %vm314 = vmand %vm202, %vm258
    %vm315 = vmand %vm203, %vm259
    %vm316 = vmand %vm204, %vm260
    %vm317 = vmand %vm205, %vm261
    %vm318 = vmand %vm206, %vm262
    %vm319 = vmand %vm207, %vm263
    %vm320 = vmand %vm208, %vm264
    %vm321 = vmand %vm209, %vm265
    %vm322 = vmand %vm210, %vm266
    %vm323 = vmand %vm211, %vm267
    %vm324 = vmand %vm212, %vm268
    %vm325 = vmand %vm213, %vm269
    %vm326 = vmand %vm214, %vm270
    %vm327 = vmand %vm215, %vm271
    %vm328 = vmand %vm216, %vm272
    %vm329 = vmand %vm217, %vm273
    %vm330 = vmand %vm218, %vm274
    %vm331 = vmand %vm219, %vm275
    %vm332 = vmand %vm220, %vm276
    %vm333 = vmand %vm221, %vm277
    %vm334 = vmand %vm222, %vm278
    %v335 = vsel %vm279, 1.0, 0.0
    %v336 = vsel %vm280, 1.0, 0.0
    %v337 = vsel %vm281, 1.0, 0.0
    %v338 = vsel %vm282, 1.0, 0.0
    %v339 = vsel %vm283, 1.0, 0.0
    %v340 = vsel %vm284, 1.0, 0.0
    %v341 = vsel %vm285, 1.0, 0.0
    %v342 = vsel %vm286, 1.0, 0.0
    %v343 = vsel %vm287, 1.0, 0.0
    %v344 = vsel %vm288, 1.0, 0.0
    %v345 = vsel %vm289, 1.0, 0.0
    %v346 = vsel %vm290, 1.0, 0.0
    %v347 = vsel %vm291, 1.0, 0.0
    %v348 = vsel %vm292, 1.0, 0.0
    %v349 = vsel %vm293, 1.0, 0.0
    %v350 = vsel %vm294, 1.0, 0.0
    %v351 = vsel %vm295, 1.0, 0.0
    %v352 = vsel %vm296, 1.0, 0.0
    %v353 = vsel %vm297, 1.0, 0.0
    %v354 = vsel %vm298, 1.0, 0.0
    %v355 = vsel %vm299, 1.0, 0.0
    %v356 = vsel %vm300, 1.0, 0.0
    %v357 = vsel %vm301, 1.0, 0.0
    %v358 = vsel %vm302, 1.0, 0.0
    %v359 = vsel %vm303, 1.0, 0.0
    %v360 = vsel %vm304, 1.0, 0.0
    %v361 = vsel %vm305, 1.0, 0.0
    %v362 = vsel %vm306, 1.0, 0.0
    %v363 = vsel %vm307, 1.0, 0.0
    %v364 = vsel %vm308, 1.0, 0.0
    %v365 = vsel %vm309, 1.0, 0.0
    %v366 = vsel %vm310, 1.0, 0.0
    %v367 = vsel %vm311, 1.0, 0.0
    %v368 = vsel %vm312, 1.0, 0.0
    %v369 = vsel %vm313, 1.0, 0.0
    %v370 = vsel %vm314, 1.0, 0.0
    %v371 = vsel %vm315, 1.0, 0.0
    %v372 = vsel %vm316, 1.0, 0.0
    %v373 = vsel %vm317, 1.0, 0.0
    %v374 = vsel %vm318, 1.0, 0.0
    %v375 = vsel %vm319, 1.0, 0.0
    %v376 = vsel %vm320, 1.0, 0.0
    %v377 = vsel %vm321, 1.0, 0.0
    %v378 = vsel %vm322, 1.0, 0.0
    %v379 = vsel %vm323, 1.0, 0.0
    %v380 = vsel %vm324, 1.0, 0.0
    %v381 = vsel %vm325, 1.0, 0.0
    %v382 = vsel %vm326, 1.0, 0.0
    %v383 = vsel %vm327, 1.0, 0.0
    %v384 = vsel %vm328, 1.0, 0.0
    %v385 = vsel %vm329, 1.0, 0.0
    %v386 = vsel %vm330, 1.0, 0.0
    %v387 = vsel %vm331, 1.0, 0.0
    %v388 = vsel %vm332, 1.0, 0.0
    %v389 = vsel %vm333, 1.0, 0.0
    %v390 = vsel %vm334, 1.0, 0.0
    %vm391 = vcmp.lt.s32.totalorder %v111, 226
    %vm392 = vcmp.lt.s32.totalorder %v112, 226
    %vm393 = vcmp.lt.s32.totalorder %v113, 226
    %vm394 = vcmp.lt.s32.totalorder %v114, 226
    %vm395 = vcmp.lt.s32.totalorder %v115, 226
    %vm396 = vcmp.lt.s32.totalorder %v116, 226
    %vm397 = vcmp.lt.s32.totalorder %v117, 226
    %vm398 = vcmp.lt.s32.totalorder %v118, 226
    %vm399 = vcmp.lt.s32.totalorder %v119, 226
    %vm400 = vcmp.lt.s32.totalorder %v120, 226
    %vm401 = vcmp.lt.s32.totalorder %v121, 226
    %vm402 = vcmp.lt.s32.totalorder %v122, 226
    %vm403 = vcmp.lt.s32.totalorder %v123, 226
    %vm404 = vcmp.lt.s32.totalorder %v124, 226
    %vm405 = vcmp.lt.s32.totalorder %v125, 226
    %vm406 = vcmp.lt.s32.totalorder %v126, 226
    %vm407 = vcmp.lt.s32.totalorder %v127, 226
    %vm408 = vcmp.lt.s32.totalorder %v128, 226
    %vm409 = vcmp.lt.s32.totalorder %v129, 226
    %vm410 = vcmp.lt.s32.totalorder %v130, 226
    %vm411 = vcmp.lt.s32.totalorder %v131, 226
    %vm412 = vcmp.lt.s32.totalorder %v132, 226
    %vm413 = vcmp.lt.s32.totalorder %v133, 226
    %vm414 = vcmp.lt.s32.totalorder %v134, 226
    %vm415 = vcmp.lt.s32.totalorder %v135, 226
    %vm416 = vcmp.lt.s32.totalorder %v136, 226
    %vm417 = vcmp.lt.s32.totalorder %v137, 226
    %vm418 = vcmp.lt.s32.totalorder %v138, 226
    %vm419 = vcmp.lt.s32.totalorder %v139, 226
    %vm420 = vcmp.lt.s32.totalorder %v140, 226
    %vm421 = vcmp.lt.s32.totalorder %v141, 226
    %vm422 = vcmp.lt.s32.totalorder %v142, 226
    %vm423 = vcmp.lt.s32.totalorder %v143, 226
    %vm424 = vcmp.lt.s32.totalorder %v144, 226
    %vm425 = vcmp.lt.s32.totalorder %v145, 226
    %vm426 = vcmp.lt.s32.totalorder %v146, 226
    %vm427 = vcmp.lt.s32.totalorder %v147, 226
    %vm428 = vcmp.lt.s32.totalorder %v148, 226
    %vm429 = vcmp.lt.s32.totalorder %v149, 226
    %vm430 = vcmp.lt.s32.totalorder %v150, 226
    %vm431 = vcmp.lt.s32.totalorder %v151, 226
    %vm432 = vcmp.lt.s32.totalorder %v152, 226
    %vm433 = vcmp.lt.s32.totalorder %v153, 226
    %vm434 = vcmp.lt.s32.totalorder %v154, 226
    %vm435 = vcmp.lt.s32.totalorder %v155, 226
    %vm436 = vcmp.lt.s32.totalorder %v156, 226
    %vm437 = vcmp.lt.s32.totalorder %v157, 226
    %vm438 = vcmp.lt.s32.totalorder %v158, 226
    %vm439 = vcmp.lt.s32.totalorder %v159, 226
    %vm440 = vcmp.lt.s32.totalorder %v160, 226
    %vm441 = vcmp.lt.s32.totalorder %v161, 226
    %vm442 = vcmp.lt.s32.totalorder %v162, 226
    %vm443 = vcmp.lt.s32.totalorder %v163, 226
    %vm444 = vcmp.lt.s32.totalorder %v164, 226
    %vm445 = vcmp.lt.s32.totalorder %v165, 226
    %vm446 = vcmp.lt.s32.totalorder %v166, 226
    %v447 = vsel %vm391, 1.0, 0.0
    %v448 = vsel %vm392, 1.0, 0.0
    %v449 = vsel %vm393, 1.0, 0.0
    %v450 = vsel %vm394, 1.0, 0.0
    %v451 = vsel %vm395, 1.0, 0.0
    %v452 = vsel %vm396, 1.0, 0.0
    %v453 = vsel %vm397, 1.0, 0.0
    %v454 = vsel %vm398, 1.0, 0.0
    %v455 = vsel %vm399, 1.0, 0.0
    %v456 = vsel %vm400, 1.0, 0.0
    %v457 = vsel %vm401, 1.0, 0.0
    %v458 = vsel %vm402, 1.0, 0.0
    %v459 = vsel %vm403, 1.0, 0.0
    %v460 = vsel %vm404, 1.0, 0.0
    %v461 = vsel %vm405, 1.0, 0.0
    %v462 = vsel %vm406, 1.0, 0.0
    %v463 = vsel %vm407, 1.0, 0.0
    %v464 = vsel %vm408, 1.0, 0.0
    %v465 = vsel %vm409, 1.0, 0.0
    %v466 = vsel %vm410, 1.0, 0.0
    %v467 = vsel %vm411, 1.0, 0.0
    %v468 = vsel %vm412, 1.0, 0.0
    %v469 = vsel %vm413, 1.0, 0.0
    %v470 = vsel %vm414, 1.0, 0.0
    %v471 = vsel %vm415, 1.0, 0.0
    %v472 = vsel %vm416, 1.0, 0.0
    %v473 = vsel %vm417, 1.0, 0.0
    %v474 = vsel %vm418, 1.0, 0.0
    %v475 = vsel %vm419, 1.0, 0.0
    %v476 = vsel %vm420, 1.0, 0.0
    %v477 = vsel %vm421, 1.0, 0.0
    %v478 = vsel %vm422, 1.0, 0.0
    %v479 = vsel %vm423, 1.0, 0.0
    %v480 = vsel %vm424, 1.0, 0.0
    %v481 = vsel %vm425, 1.0, 0.0
    %v482 = vsel %vm426, 1.0, 0.0
    %v483 = vsel %vm427, 1.0, 0.0
    %v484 = vsel %vm428, 1.0, 0.0
    %v485 = vsel %vm429, 1.0, 0.0
    %v486 = vsel %vm430, 1.0, 0.0
    %v487 = vsel %vm431, 1.0, 0.0
    %v488 = vsel %vm432, 1.0, 0.0
    %v489 = vsel %vm433, 1.0, 0.0
    %v490 = vsel %vm434, 1.0, 0.0
    %v491 = vsel %vm435, 1.0, 0.0
    %v492 = vsel %vm436, 1.0, 0.0
    %v493 = vsel %vm437, 1.0, 0.0
    %v494 = vsel %vm438, 1.0, 0.0
    %v495 = vsel %vm439, 1.0, 0.0
    %v496 = vsel %vm440, 1.0, 0.0
    %v497 = vsel %vm441, 1.0, 0.0
    %v498 = vsel %vm442, 1.0, 0.0
    %v499 = vsel %vm443, 1.0, 0.0
    %v500 = vsel %vm444, 1.0, 0.0
    %v501 = vsel %vm445, 1.0, 0.0
    %v502 = vsel %vm446, 1.0, 0.0
    %vm503 = vcmp.lt.s32.totalorder %v111, 224
    %vm504 = vcmp.lt.s32.totalorder %v112, 224
    %vm505 = vcmp.lt.s32.totalorder %v113, 224
    %vm506 = vcmp.lt.s32.totalorder %v114, 224
    %vm507 = vcmp.lt.s32.totalorder %v115, 224
    %vm508 = vcmp.lt.s32.totalorder %v116, 224
    %vm509 = vcmp.lt.s32.totalorder %v117, 224
    %vm510 = vcmp.lt.s32.totalorder %v118, 224
    %vm511 = vcmp.lt.s32.totalorder %v119, 224
    %vm512 = vcmp.lt.s32.totalorder %v120, 224
    %vm513 = vcmp.lt.s32.totalorder %v121, 224
    %vm514 = vcmp.lt.s32.totalorder %v122, 224
    %vm515 = vcmp.lt.s32.totalorder %v123, 224
    %vm516 = vcmp.lt.s32.totalorder %v124, 224
    %vm517 = vcmp.lt.s32.totalorder %v125, 224
    %vm518 = vcmp.lt.s32.totalorder %v138, 224
    %vm519 = vcmp.lt.s32.totalorder %v139, 224
    %vm520 = vcmp.lt.s32.totalorder %v140, 224
    %vm521 = vcmp.lt.s32.totalorder %v141, 224
    %vm522 = vcmp.lt.s32.totalorder %v142, 224
    %vm523 = vcmp.lt.s32.totalorder %v143, 224
    %vm524 = vcmp.lt.s32.totalorder %v144, 224
    %vm525 = vcmp.lt.s32.totalorder %v145, 224
    %vm526 = vcmp.lt.s32.totalorder %v146, 224
    %vm527 = vcmp.lt.s32.totalorder %v147, 224
    %vm528 = vcmp.lt.s32.totalorder %v148, 224
    %vm529 = vcmp.lt.s32.totalorder %v149, 224
    %vm530 = vcmp.lt.s32.totalorder %v150, 224
    %vm531 = vcmp.lt.s32.totalorder %v151, 224
    %vm532 = vcmp.lt.s32.totalorder %v152, 224
    %vm533 = vcmp.lt.s32.totalorder %v153, 224
    %vm534 = vcmp.lt.s32.totalorder %v166, 224
    %v535 = vsel %vm503, 1.0, 0.0
    %v536 = vsel %vm504, 1.0, 0.0
    %v537 = vsel %vm505, 1.0, 0.0
    %v538 = vsel %vm506, 1.0, 0.0
    %v539 = vsel %vm507, 1.0, 0.0
    %v540 = vsel %vm508, 1.0, 0.0
    %v541 = vsel %vm509, 1.0, 0.0
    %v542 = vsel %vm510, 1.0, 0.0
    %v543 = vsel %vm511, 1.0, 0.0
    %v544 = vsel %vm512, 1.0, 0.0
    %v545 = vsel %vm513, 1.0, 0.0
    %v546 = vsel %vm514, 1.0, 0.0
    %v547 = vsel %vm515, 1.0, 0.0
    %v548 = vsel %vm516, 1.0, 0.0
    %v549 = vsel %vm517, 1.0, 0.0
    %v550 = vsel %vm518, 1.0, 0.0
    %v551 = vsel %vm519, 1.0, 0.0
    %v552 = vsel %vm520, 1.0, 0.0
    %v553 = vsel %vm521, 1.0, 0.0
    %v554 = vsel %vm522, 1.0, 0.0
    %v555 = vsel %vm523, 1.0, 0.0
    %v556 = vsel %vm524, 1.0, 0.0
    %v557 = vsel %vm525, 1.0, 0.0
    %v558 = vsel %vm526, 1.0, 0.0
    %v559 = vsel %vm527, 1.0, 0.0
    %v560 = vsel %vm528, 1.0, 0.0
    %v561 = vsel %vm529, 1.0, 0.0
    %v562 = vsel %vm530, 1.0, 0.0
    %v563 = vsel %vm531, 1.0, 0.0
    %v564 = vsel %vm532, 1.0, 0.0
    %v565 = vsel %vm533, 1.0, 0.0
    %v566 = vsel %vm534, 1.0, 0.0
    %v567 = vld [vmem:[%s0] sm:$0xff]
    %v568 = vld [vmem:[%s0 + $0x8] sm:$0xff]
    %v569 = vld [vmem:[%s0 + $0x10] sm:$0xff]
    %v570 = vld [vmem:[%s0 + $0x18] sm:$0xff]
    %v571 = vld [vmem:[%s0 + $0x20] sm:$0xff]
    %v572 = vld [vmem:[%s0 + $0x28] sm:$0xff]
    %v573 = vld [vmem:[%s0 + $0x30] sm:$0xff]
    %v575 = vlaneseq
    %v576 = vshrl.u32 %v575, 7
    %v577 = vsub.s32 7, %v576
    %v578 = vrot.slane %v573, %v577
    %579 = vrot.lane.b32.xlu0 %v578, 48
    %v580 = vpop.permute.xlu0 %579
    %v588 = vlaneseq
    %v589 = vshrl.u32 %v588, 7
    %v590 = vsub.s32 0, %v589
    %v591 = vrot.slane %v567, %v590
    %v592 = vlaneseq
    %v593 = vshrl.u32 %v592, 7
    %v594 = vsub.s32 1, %v593
    %v595 = vrot.slane %v567, %v594
    %v596 = vlaneseq
    %v597 = vshrl.u32 %v596, 7
    %v598 = vsub.s32 2, %v597
    %v599 = vrot.slane %v567, %v598
    %v600 = vlaneseq
    %v601 = vshrl.u32 %v600, 7
    %v602 = vsub.s32 3, %v601
    %v603 = vrot.slane %v567, %v602
    %v604 = vlaneseq
    %v605 = vshrl.u32 %v604, 7
    %v606 = vsub.s32 4, %v605
    %v607 = vrot.slane %v567, %v606
    %v608 = vlaneseq
    %v609 = vshrl.u32 %v608, 7
    %v610 = vsub.s32 5, %v609
    %v611 = vrot.slane %v567, %v610
    %v612 = vlaneseq
    %v613 = vshrl.u32 %v612, 7
    %v614 = vsub.s32 6, %v613
    %v615 = vrot.slane %v567, %v614
    %v616 = vlaneseq
    %v617 = vshrl.u32 %v616, 7
    %v618 = vsub.s32 7, %v617
    %v619 = vrot.slane %v567, %v618
    %v620 = vlaneseq
    %v621 = vshrl.u32 %v620, 7
    %v622 = vsub.s32 0, %v621
    %v623 = vrot.slane %v568, %v622
    %v624 = vlaneseq
    %v625 = vshrl.u32 %v624, 7
    %v626 = vsub.s32 1, %v625
    %v627 = vrot.slane %v568, %v626
    %v628 = vlaneseq
    %v629 = vshrl.u32 %v628, 7
    %v630 = vsub.s32 2, %v629
    %v631 = vrot.slane %v568, %v630
    %v632 = vlaneseq
    %v633 = vshrl.u32 %v632, 7
    %v634 = vsub.s32 3, %v633
    %v635 = vrot.slane %v568, %v634
    %v636 = vlaneseq
    %v637 = vshrl.u32 %v636, 7
    %v638 = vsub.s32 4, %v637
    %v639 = vrot.slane %v568, %v638
    %v640 = vlaneseq
    %v641 = vshrl.u32 %v640, 7
    %v642 = vsub.s32 5, %v641
    %v643 = vrot.slane %v568, %v642
    %v644 = vlaneseq
    %v645 = vshrl.u32 %v644, 7
    %v646 = vsub.s32 6, %v645
    %v647 = vrot.slane %v568, %v646
    %v648 = vlaneseq
    %v649 = vshrl.u32 %v648, 7
    %v650 = vsub.s32 7, %v649
    %v651 = vrot.slane %v568, %v650
    %v652 = vlaneseq
    %v653 = vshrl.u32 %v652, 7
    %v654 = vsub.s32 0, %v653
    %v655 = vrot.slane %v569, %v654
    %v656 = vlaneseq
    %v657 = vshrl.u32 %v656, 7
    %v658 = vsub.s32 1, %v657
    %v659 = vrot.slane %v569, %v658
    %v660 = vlaneseq
    %v661 = vshrl.u32 %v660, 7
    %v662 = vsub.s32 2, %v661
    %v663 = vrot.slane %v569, %v662
    %v664 = vlaneseq
    %v665 = vshrl.u32 %v664, 7
    %v666 = vsub.s32 3, %v665
    %v667 = vrot.slane %v569, %v666
    %v668 = vlaneseq
    %v669 = vshrl.u32 %v668, 7
    %v670 = vsub.s32 4, %v669
    %v671 = vrot.slane %v569, %v670
    %v672 = vlaneseq
    %v673 = vshrl.u32 %v672, 7
    %v674 = vsub.s32 5, %v673
    %v675 = vrot.slane %v569, %v674
    %v676 = vlaneseq
    %v677 = vshrl.u32 %v676, 7
    %v678 = vsub.s32 6, %v677
    %v679 = vrot.slane %v569, %v678
    %v680 = vlaneseq
    %v681 = vshrl.u32 %v680, 7
    %v682 = vsub.s32 7, %v681
    %v683 = vrot.slane %v569, %v682
    %v684 = vlaneseq
    %v685 = vshrl.u32 %v684, 7
    %v686 = vsub.s32 0, %v685
    %v687 = vrot.slane %v570, %v686
    %v688 = vlaneseq
    %v689 = vshrl.u32 %v688, 7
    %v690 = vsub.s32 1, %v689
    %v691 = vrot.slane %v570, %v690
    %v692 = vlaneseq
    %v693 = vshrl.u32 %v692, 7
    %v694 = vsub.s32 2, %v693
    %v695 = vrot.slane %v570, %v694
    %v696 = vlaneseq
    %v697 = vshrl.u32 %v696, 7
    %v698 = vsub.s32 3, %v697
    %v699 = vrot.slane %v570, %v698
    %v700 = vlaneseq
    %v701 = vshrl.u32 %v700, 7
    %v702 = vsub.s32 4, %v701
    %v703 = vrot.slane %v570, %v702
    %v704 = vlaneseq
    %v705 = vshrl.u32 %v704, 7
    %v706 = vsub.s32 5, %v705
    %v707 = vrot.slane %v570, %v706
    %v708 = vlaneseq
    %v709 = vshrl.u32 %v708, 7
    %v710 = vsub.s32 6, %v709
    %v711 = vrot.slane %v570, %v710
    %v712 = vlaneseq
    %v713 = vshrl.u32 %v712, 7
    %v714 = vsub.s32 7, %v713
    %v715 = vrot.slane %v570, %v714
    %v716 = vlaneseq
    %v717 = vshrl.u32 %v716, 7
    %v718 = vsub.s32 0, %v717
    %v719 = vrot.slane %v571, %v718
    %v720 = vlaneseq
    %v721 = vshrl.u32 %v720, 7
    %v722 = vsub.s32 1, %v721
    %v723 = vrot.slane %v571, %v722
    %v724 = vlaneseq
    %v725 = vshrl.u32 %v724, 7
    %v726 = vsub.s32 2, %v725
    %v727 = vrot.slane %v571, %v726
    %v728 = vlaneseq
    %v729 = vshrl.u32 %v728, 7
    %v730 = vsub.s32 3, %v729
    %v731 = vrot.slane %v571, %v730
    %v732 = vlaneseq
    %v733 = vshrl.u32 %v732, 7
    %v734 = vsub.s32 4, %v733
    %v735 = vrot.slane %v571, %v734
    %v736 = vlaneseq
    %v737 = vshrl.u32 %v736, 7
    %v738 = vsub.s32 5, %v737
    %v739 = vrot.slane %v571, %v738
    %v740 = vlaneseq
    %v741 = vshrl.u32 %v740, 7
    %v742 = vsub.s32 6, %v741
    %v743 = vrot.slane %v571, %v742
    %v744 = vlaneseq
    %v745 = vshrl.u32 %v744, 7
    %v746 = vsub.s32 7, %v745
    %v747 = vrot.slane %v571, %v746
    %v748 = vlaneseq
    %v749 = vshrl.u32 %v748, 7
    %v750 = vsub.s32 0, %v749
    %v751 = vrot.slane %v572, %v750
    %v752 = vlaneseq
    %v753 = vshrl.u32 %v752, 7
    %v754 = vsub.s32 1, %v753
    %v755 = vrot.slane %v572, %v754
    %v756 = vlaneseq
    %v757 = vshrl.u32 %v756, 7
    %v758 = vsub.s32 2, %v757
    %v759 = vrot.slane %v572, %v758
    %v760 = vlaneseq
    %v761 = vshrl.u32 %v760, 7
    %v762 = vsub.s32 3, %v761
    %v763 = vrot.slane %v572, %v762
    %v764 = vlaneseq
    %v765 = vshrl.u32 %v764, 7
    %v766 = vsub.s32 4, %v765
    %v767 = vrot.slane %v572, %v766
    %v768 = vlaneseq
    %v769 = vshrl.u32 %v768, 7
    %v770 = vsub.s32 5, %v769
    %v771 = vrot.slane %v572, %v770
    %v772 = vlaneseq
    %v773 = vshrl.u32 %v772, 7
    %v774 = vsub.s32 6, %v773
    %v775 = vrot.slane %v572, %v774
    %v776 = vlaneseq
    %v777 = vshrl.u32 %v776, 7
    %v778 = vsub.s32 7, %v777
    %v779 = vrot.slane %v572, %v778
    %v780 = vlaneseq
    %v781 = vshrl.u32 %v780, 7
    %v782 = vsub.s32 0, %v781
    %v783 = vrot.slane %v573, %v782
    %v784 = vlaneseq
    %v785 = vshrl.u32 %v784, 7
    %v786 = vsub.s32 1, %v785
    %v787 = vrot.slane %v573, %v786
    %v788 = vlaneseq
    %v789 = vshrl.u32 %v788, 7
    %v790 = vsub.s32 2, %v789
    %v791 = vrot.slane %v573, %v790
    %v792 = vlaneseq
    %v793 = vshrl.u32 %v792, 7
    %v794 = vsub.s32 3, %v793
    %v795 = vrot.slane %v573, %v794
    %v796 = vlaneseq
    %v797 = vshrl.u32 %v796, 7
    %v798 = vsub.s32 4, %v797
    %v799 = vrot.slane %v573, %v798
    %v800 = vlaneseq
    %v801 = vshrl.u32 %v800, 7
    %v802 = vsub.s32 5, %v801
    %v803 = vrot.slane %v573, %v802
    %v804 = vlaneseq
    %v805 = vshrl.u32 %v804, 7
    %v806 = vsub.s32 6, %v805
    %v807 = vrot.slane %v573, %v806
    %808 = vrot.lane.b32.xlu0 %v591, 48
    %v809 = vpop.permute.xlu0 %808
    %810 = vrot.lane.b32.xlu0 %v595, 48
    %v811 = vpop.permute.xlu0 %810
    %812 = vrot.lane.b32.xlu0 %v599, 48
    %v813 = vpop.permute.xlu0 %812
    %814 = vrot.lane.b32.xlu0 %v603, 48
    %v815 = vpop.permute.xlu0 %814
    %816 = vrot.lane.b32.xlu0 %v607, 48
    %v817 = vpop.permute.xlu0 %816
    %818 = vrot.lane.b32.xlu0 %v611, 48
    %v819 = vpop.permute.xlu0 %818
    %820 = vrot.lane.b32.xlu0 %v615, 48
    %v821 = vpop.permute.xlu0 %820
    %822 = vrot.lane.b32.xlu0 %v619, 48
    %v823 = vpop.permute.xlu0 %822
    %824 = vrot.lane.b32.xlu0 %v623, 48
    %v825 = vpop.permute.xlu0 %824
    %826 = vrot.lane.b32.xlu0 %v627, 48
    %v827 = vpop.permute.xlu0 %826
    %828 = vrot.lane.b32.xlu0 %v631, 48
    %v829 = vpop.permute.xlu0 %828
    %830 = vrot.lane.b32.xlu0 %v635, 48
    %v831 = vpop.permute.xlu0 %830
    %832 = vrot.lane.b32.xlu0 %v639, 48
    %v833 = vpop.permute.xlu0 %832
    %834 = vrot.lane.b32.xlu0 %v643, 48
    %v835 = vpop.permute.xlu0 %834
    %836 = vrot.lane.b32.xlu0 %v647, 48
    %v837 = vpop.permute.xlu0 %836
    %838 = vrot.lane.b32.xlu0 %v651, 48
    %v839 = vpop.permute.xlu0 %838
    %840 = vrot.lane.b32.xlu0 %v655, 48
    %v841 = vpop.permute.xlu0 %840
    %842 = vrot.lane.b32.xlu0 %v659, 48
    %v843 = vpop.permute.xlu0 %842
    %844 = vrot.lane.b32.xlu0 %v663, 48
    %v845 = vpop.permute.xlu0 %844
    %846 = vrot.lane.b32.xlu0 %v667, 48
    %v847 = vpop.permute.xlu0 %846
    %848 = vrot.lane.b32.xlu0 %v671, 48
    %v849 = vpop.permute.xlu0 %848
    %850 = vrot.lane.b32.xlu0 %v675, 48
    %v851 = vpop.permute.xlu0 %850
    %852 = vrot.lane.b32.xlu0 %v679, 48
    %v853 = vpop.permute.xlu0 %852
    %854 = vrot.lane.b32.xlu0 %v683, 48
    %v855 = vpop.permute.xlu0 %854
    %856 = vrot.lane.b32.xlu0 %v687, 48
    %v857 = vpop.permute.xlu0 %856
    %858 = vrot.lane.b32.xlu0 %v691, 48
    %v859 = vpop.permute.xlu0 %858
    %860 = vrot.lane.b32.xlu0 %v695, 48
    %v861 = vpop.permute.xlu0 %860
    %862 = vrot.lane.b32.xlu0 %v699, 48
    %v863 = vpop.permute.xlu0 %862
    %864 = vrot.lane.b32.xlu0 %v703, 48
    %v865 = vpop.permute.xlu0 %864
    %866 = vrot.lane.b32.xlu0 %v707, 48
    %v867 = vpop.permute.xlu0 %866
    %868 = vrot.lane.b32.xlu0 %v711, 48
    %v869 = vpop.permute.xlu0 %868
    %870 = vrot.lane.b32.xlu0 %v715, 48
    %v871 = vpop.permute.xlu0 %870
    %872 = vrot.lane.b32.xlu0 %v719, 48
    %v873 = vpop.permute.xlu0 %872
    %874 = vrot.lane.b32.xlu0 %v723, 48
    %v875 = vpop.permute.xlu0 %874
    %876 = vrot.lane.b32.xlu0 %v727, 48
    %v877 = vpop.permute.xlu0 %876
    %878 = vrot.lane.b32.xlu0 %v731, 48
    %v879 = vpop.permute.xlu0 %878
    %880 = vrot.lane.b32.xlu0 %v735, 48
    %v881 = vpop.permute.xlu0 %880
    %882 = vrot.lane.b32.xlu0 %v739, 48
    %v883 = vpop.permute.xlu0 %882
    %884 = vrot.lane.b32.xlu0 %v743, 48
    %v885 = vpop.permute.xlu0 %884
    %886 = vrot.lane.b32.xlu0 %v747, 48
    %v887 = vpop.permute.xlu0 %886
    %888 = vrot.lane.b32.xlu0 %v751, 48
    %v889 = vpop.permute.xlu0 %888
    %890 = vrot.lane.b32.xlu0 %v755, 48
    %v891 = vpop.permute.xlu0 %890
    %892 = vrot.lane.b32.xlu0 %v759, 48
    %v893 = vpop.permute.xlu0 %892
    %894 = vrot.lane.b32.xlu0 %v763, 48
    %v895 = vpop.permute.xlu0 %894
    %896 = vrot.lane.b32.xlu0 %v767, 48
    %v897 = vpop.permute.xlu0 %896
    %898 = vrot.lane.b32.xlu0 %v771, 48
    %v899 = vpop.permute.xlu0 %898
    %900 = vrot.lane.b32.xlu0 %v775, 48
    %v901 = vpop.permute.xlu0 %900
    %902 = vrot.lane.b32.xlu0 %v779, 48
    %v903 = vpop.permute.xlu0 %902
    %904 = vrot.lane.b32.xlu0 %v783, 48
    %v905 = vpop.permute.xlu0 %904
    %906 = vrot.lane.b32.xlu0 %v787, 48
    %v907 = vpop.permute.xlu0 %906
    %908 = vrot.lane.b32.xlu0 %v791, 48
    %v909 = vpop.permute.xlu0 %908
    %910 = vrot.lane.b32.xlu0 %v795, 48
    %v911 = vpop.permute.xlu0 %910
    %912 = vrot.lane.b32.xlu0 %v799, 48
    %v913 = vpop.permute.xlu0 %912
    %914 = vrot.lane.b32.xlu0 %v803, 48
    %v915 = vpop.permute.xlu0 %914
    %916 = vrot.lane.b32.xlu0 %v807, 48
    %v917 = vpop.permute.xlu0 %916
    %vm918 = vcmask 392192
    %v919 = vsel %vm918, %v809, %v811
    %v920 = vsel %vm918, %v811, %v813
    %v921 = vsel %vm918, %v813, %v815
    %v922 = vsel %vm918, %v815, %v817
    %v923 = vsel %vm918, %v817, %v819
    %v924 = vsel %vm918, %v819, %v821
    %v925 = vsel %vm918, %v821, %v823
    %v926 = vsel %vm918, %v823, %v825
    %v927 = vsel %vm918, %v825, %v827
    %v928 = vsel %vm918, %v827, %v829
    %v929 = vsel %vm918, %v829, %v831
    %v930 = vsel %vm918, %v831, %v833
    %v931 = vsel %vm918, %v833, %v835
    %v932 = vsel %vm918, %v835, %v837
    %v933 = vsel %vm918, %v837, %v839
    %v934 = vsel %vm918, %v839, %v841
    %v935 = vsel %vm918, %v841, %v843
    %v936 = vsel %vm918, %v843, %v845
    %v937 = vsel %vm918, %v845, %v847
    %v938 = vsel %vm918, %v847, %v849
    %v939 = vsel %vm918, %v849, %v851
    %v940 = vsel %vm918, %v851, %v853
    %v941 = vsel %vm918, %v853, %v855
    %v942 = vsel %vm918, %v855, %v857
    %v943 = vsel %vm918, %v857, %v859
    %v944 = vsel %vm918, %v859, %v861
    %v945 = vsel %vm918, %v861, %v863
    %v946 = vsel %vm918, %v863, %v865
    %v947 = vsel %vm918, %v865, %v867
    %v948 = vsel %vm918, %v867, %v869
    %v949 = vsel %vm918, %v869, %v871
    %v950 = vsel %vm918, %v871, %v873
    %v951 = vsel %vm918, %v873, %v875
    %v952 = vsel %vm918, %v875, %v877
    %v953 = vsel %vm918, %v877, %v879
    %v954 = vsel %vm918, %v879, %v881
    %v955 = vsel %vm918, %v881, %v883
    %v956 = vsel %vm918, %v883, %v885
    %v957 = vsel %vm918, %v885, %v887
    %v958 = vsel %vm918, %v887, %v889
    %v959 = vsel %vm918, %v889, %v891
    %v960 = vsel %vm918, %v891, %v893
    %v961 = vsel %vm918, %v893, %v895
    %v962 = vsel %vm918, %v895, %v897
    %v963 = vsel %vm918, %v897, %v899
    %v964 = vsel %vm918, %v899, %v901
    %v965 = vsel %vm918, %v901, %v903
    %v966 = vsel %vm918, %v903, %v905
    %v967 = vsel %vm918, %v905, %v907
    %v968 = vsel %vm918, %v907, %v909
    %v969 = vsel %vm918, %v909, %v911
    %v970 = vsel %vm918, %v911, %v913
    %v971 = vsel %vm918, %v913, %v915
    %v972 = vsel %vm918, %v915, %v917
    %v973 = vsel %vm918, %v917, %v580
    %v1030 = vsel %vm918, %v580, %v809
    %v1031 = vmul.f32 %v1030, %v335
    %v1032 = vmul.f32 %v919, %v336
    %v1033 = vmul.f32 %v920, %v337
    %v1034 = vmul.f32 %v921, %v338
    %v1035 = vmul.f32 %v922, %v339
    %v1036 = vmul.f32 %v923, %v340
    %v1037 = vmul.f32 %v924, %v341
    %v1038 = vmul.f32 %v925, %v342
    %v1039 = vmul.f32 %v926, %v343
    %v1040 = vmul.f32 %v927, %v344
    %v1041 = vmul.f32 %v928, %v345
    %v1042 = vmul.f32 %v929, %v346
    %v1043 = vmul.f32 %v930, %v347
    %v1044 = vmul.f32 %v931, %v348
    %v1045 = vmul.f32 %v932, %v349
    %v1046 = vmul.f32 %v933, %v350
    %v1047 = vmul.f32 %v934, %v351
    %v1048 = vmul.f32 %v935, %v352
    %v1049 = vmul.f32 %v936, %v353
    %v1050 = vmul.f32 %v937, %v354
    %v1051 = vmul.f32 %v938, %v355
    %v1052 = vmul.f32 %v939, %v356
    %v1053 = vmul.f32 %v940, %v357
    %v1054 = vmul.f32 %v941, %v358
    %v1055 = vmul.f32 %v942, %v359
    %v1056 = vmul.f32 %v943, %v360
    %v1057 = vmul.f32 %v944, %v361
    %v1058 = vmul.f32 %v945, %v362
    %v1059 = vmul.f32 %v946, %v363
    %v1060 = vmul.f32 %v947, %v364
    %v1061 = vmul.f32 %v948, %v365
    %v1062 = vmul.f32 %v949, %v366
    %v1063 = vmul.f32 %v950, %v367
    %v1064 = vmul.f32 %v951, %v368
    %v1065 = vmul.f32 %v952, %v369
    %v1066 = vmul.f32 %v953, %v370
    %v1067 = vmul.f32 %v954, %v371
    %v1068 = vmul.f32 %v955, %v372
    %v1069 = vmul.f32 %v956, %v373
    %v1070 = vmul.f32 %v957, %v374
    %v1071 = vmul.f32 %v958, %v375
    %v1072 = vmul.f32 %v959, %v376
    %v1073 = vmul.f32 %v960, %v377
    %v1074 = vmul.f32 %v961, %v378
    %v1075 = vmul.f32 %v962, %v379
    %v1076 = vmul.f32 %v963, %v380
    %v1077 = vmul.f32 %v964, %v381
    %v1078 = vmul.f32 %v965, %v382
    %v1079 = vmul.f32 %v966, %v383
    %v1080 = vmul.f32 %v967, %v384
    %v1081 = vmul.f32 %v968, %v385
    %v1082 = vmul.f32 %v969, %v386
    %v1083 = vmul.f32 %v970, %v387
    %v1084 = vmul.f32 %v971, %v388
    %v1085 = vmul.f32 %v972, %v389
    %v1086 = vmul.f32 %v973, %v390
    %v1143 = vcombine.low %v335, %v336
    %v1144 = vcombine.low %v337, %v338
    %v1145 = vcombine.low %v339, %v340
    %v1146 = vcombine.low %v341, %v342
    %v1148 = vunpack.c.l.s4 1966171168
    %v1149 = vunpack.c.0.s8 %v1148
    %v1150 = vlaneseq
    %v1151 = vshrl.u32 %v1150, 7
    %v1152 = vsub.s32 %v1149, %v1151
    %v1153 = vrot.slane %v1143, %v1152
    %v1155 = vunpack.c.l.s4 1966171168
    %v1156 = vunpack.c.0.s8 %v1155
    %v1157 = vlaneseq
    %v1158 = vshrl.u32 %v1157, 7
    %v1159 = vsub.s32 %v1156, %v1158
    %v1160 = vrot.slane %v1144, %v1159
    %v1162 = vunpack.c.l.s4 1966171168
    %v1163 = vunpack.c.0.s8 %v1162
    %v1164 = vlaneseq
    %v1165 = vshrl.u32 %v1164, 7
    %v1166 = vsub.s32 %v1163, %v1165
    %v1167 = vrot.slane %v1145, %v1166
    %v1169 = vunpack.c.l.s4 1966171168
    %v1170 = vunpack.c.0.s8 %v1169
    %v1171 = vlaneseq
    %v1172 = vshrl.u32 %v1171, 7
    %v1173 = vsub.s32 %v1170, %v1172
    %v1174 = vrot.slane %v1146, %v1173
    %v1175 = vcombine.low %v1153, %v1160
    %v1176 = vcombine.low %v1167, %v1174
    %v1178 = vunpack.c.l.s4 1966171168
    %v1179 = vunpack.c.0.s8 %v1178
    %v1180 = vlaneseq
    %v1181 = vshrl.u32 %v1180, 7
    %v1182 = vsub.s32 %v1179, %v1181
    %v1183 = vrot.slane %v1175, %v1182
    %v1185 = vunpack.c.l.s4 1966171168
    %v1186 = vunpack.c.0.s8 %v1185
    %v1187 = vlaneseq
    %v1188 = vshrl.u32 %v1187, 7
    %v1189 = vsub.s32 %v1186, %v1188
    %v1190 = vrot.slane %v1176, %v1189
    %v1191 = vcombine.low %v1183, %v1190
    %v1192 = vcombine.low %v343, %v344
    %v1193 = vcombine.low %v345, %v346
    %v1194 = vcombine.low %v347, %v348
    %v1195 = vcombine.low %v349, %v350
    %v1197 = vunpack.c.l.s4 1966171168
    %v1198 = vunpack.c.0.s8 %v1197
    %v1199 = vlaneseq
    %v1200 = vshrl.u32 %v1199, 7
    %v1201 = vsub.s32 %v1198, %v1200
    %v1202 = vrot.slane %v1192, %v1201
    %v1204 = vunpack.c.l.s4 1966171168
    %v1205 = vunpack.c.0.s8 %v1204
    %v1206 = vlaneseq
    %v1207 = vshrl.u32 %v1206, 7
    %v1208 = vsub.s32 %v1205, %v1207
    %v1209 = vrot.slane %v1193, %v1208
    %v1211 = vunpack.c.l.s4 1966171168
    %v1212 = vunpack.c.0.s8 %v1211
    %v1213 = vlaneseq
    %v1214 = vshrl.u32 %v1213, 7
    %v1215 = vsub.s32 %v1212, %v1214
    %v1216 = vrot.slane %v1194, %v1215
    %v1218 = vunpack.c.l.s4 1966171168
    %v1219 = vunpack.c.0.s8 %v1218
    %v1220 = vlaneseq
    %v1221 = vshrl.u32 %v1220, 7
    %v1222 = vsub.s32 %v1219, %v1221
    %v1223 = vrot.slane %v1195, %v1222
    %v1224 = vcombine.low %v1202, %v1209
    %v1225 = vcombine.low %v1216, %v1223
    %v1227 = vunpack.c.l.s4 1966171168
    %v1228 = vunpack.c.0.s8 %v1227
    %v1229 = vlaneseq
    %v1230 = vshrl.u32 %v1229, 7
    %v1231 = vsub.s32 %v1228, %v1230
    %v1232 = vrot.slane %v1224, %v1231
    %v1234 = vunpack.c.l.s4 1966171168
    %v1235 = vunpack.c.0.s8 %v1234
    %v1236 = vlaneseq
    %v1237 = vshrl.u32 %v1236, 7
    %v1238 = vsub.s32 %v1235, %v1237
    %v1239 = vrot.slane %v1225, %v1238
    %v1240 = vcombine.low %v1232, %v1239
    %v1241 = vcombine.low %v351, %v352
    %v1242 = vcombine.low %v353, %v354
    %v1243 = vcombine.low %v355, %v356
    %v1244 = vcombine.low %v357, %v358
    %v1246 = vunpack.c.l.s4 1966171168
    %v1247 = vunpack.c.0.s8 %v1246
    %v1248 = vlaneseq
    %v1249 = vshrl.u32 %v1248, 7
    %v1250 = vsub.s32 %v1247, %v1249
    %v1251 = vrot.slane %v1241, %v1250
    %v1253 = vunpack.c.l.s4 1966171168
    %v1254 = vunpack.c.0.s8 %v1253
    %v1255 = vlaneseq
    %v1256 = vshrl.u32 %v1255, 7
    %v1257 = vsub.s32 %v1254, %v1256
    %v1258 = vrot.slane %v1242, %v1257
    %v1260 = vunpack.c.l.s4 1966171168
    %v1261 = vunpack.c.0.s8 %v1260
    %v1262 = vlaneseq
    %v1263 = vshrl.u32 %v1262, 7
    %v1264 = vsub.s32 %v1261, %v1263
    %v1265 = vrot.slane %v1243, %v1264
    %v1267 = vunpack.c.l.s4 1966171168
    %v1268 = vunpack.c.0.s8 %v1267
    %v1269 = vlaneseq
    %v1270 = vshrl.u32 %v1269, 7
    %v1271 = vsub.s32 %v1268, %v1270
    %v1272 = vrot.slane %v1244, %v1271
    %v1273 = vcombine.low %v1251, %v1258
    %v1274 = vcombine.low %v1265, %v1272
    %v1276 = vunpack.c.l.s4 1966171168
    %v1277 = vunpack.c.0.s8 %v1276
    %v1278 = vlaneseq
    %v1279 = vshrl.u32 %v1278, 7
    %v1280 = vsub.s32 %v1277, %v1279
    %v1281 = vrot.slane %v1273, %v1280
    %v1283 = vunpack.c.l.s4 1966171168
    %v1284 = vunpack.c.0.s8 %v1283
    %v1285 = vlaneseq
    %v1286 = vshrl.u32 %v1285, 7
    %v1287 = vsub.s32 %v1284, %v1286
    %v1288 = vrot.slane %v1274, %v1287
    %v1289 = vcombine.low %v1281, %v1288
    %v1290 = vcombine.low %v359, %v360
    %v1291 = vcombine.low %v361, %v362
    %v1292 = vcombine.low %v363, %v364
    %v1293 = vcombine.low %v365, %v366
    %v1295 = vunpack.c.l.s4 1966171168
    %v1296 = vunpack.c.0.s8 %v1295
    %v1297 = vlaneseq
    %v1298 = vshrl.u32 %v1297, 7
    %v1299 = vsub.s32 %v1296, %v1298
    %v1300 = vrot.slane %v1290, %v1299
    %v1302 = vunpack.c.l.s4 1966171168
    %v1303 = vunpack.c.0.s8 %v1302
    %v1304 = vlaneseq
    %v1305 = vshrl.u32 %v1304, 7
    %v1306 = vsub.s32 %v1303, %v1305
    %v1307 = vrot.slane %v1291, %v1306
    %v1309 = vunpack.c.l.s4 1966171168
    %v1310 = vunpack.c.0.s8 %v1309
    %v1311 = vlaneseq
    %v1312 = vshrl.u32 %v1311, 7
    %v1313 = vsub.s32 %v1310, %v1312
    %v1314 = vrot.slane %v1292, %v1313
    %v1316 = vunpack.c.l.s4 1966171168
    %v1317 = vunpack.c.0.s8 %v1316
    %v1318 = vlaneseq
    %v1319 = vshrl.u32 %v1318, 7
    %v1320 = vsub.s32 %v1317, %v1319
    %v1321 = vrot.slane %v1293, %v1320
    %v1322 = vcombine.low %v1300, %v1307
    %v1323 = vcombine.low %v1314, %v1321
    %v1325 = vunpack.c.l.s4 1966171168
    %v1326 = vunpack.c.0.s8 %v1325
    %v1327 = vlaneseq
    %v1328 = vshrl.u32 %v1327, 7
    %v1329 = vsub.s32 %v1326, %v1328
    %v1330 = vrot.slane %v1322, %v1329
    %v1332 = vunpack.c.l.s4 1966171168
    %v1333 = vunpack.c.0.s8 %v1332
    %v1334 = vlaneseq
    %v1335 = vshrl.u32 %v1334, 7
    %v1336 = vsub.s32 %v1333, %v1335
    %v1337 = vrot.slane %v1323, %v1336
    %v1338 = vcombine.low %v1330, %v1337
    %v1339 = vcombine.low %v367, %v368
    %v1340 = vcombine.low %v369, %v370
    %v1341 = vcombine.low %v371, %v372
    %v1342 = vcombine.low %v373, %v374
    %v1344 = vunpack.c.l.s4 1966171168
    %v1345 = vunpack.c.0.s8 %v1344
    %v1346 = vlaneseq
    %v1347 = vshrl.u32 %v1346, 7
    %v1348 = vsub.s32 %v1345, %v1347
    %v1349 = vrot.slane %v1339, %v1348
    %v1351 = vunpack.c.l.s4 1966171168
    %v1352 = vunpack.c.0.s8 %v1351
    %v1353 = vlaneseq
    %v1354 = vshrl.u32 %v1353, 7
    %v1355 = vsub.s32 %v1352, %v1354
    %v1356 = vrot.slane %v1340, %v1355
    %v1358 = vunpack.c.l.s4 1966171168
    %v1359 = vunpack.c.0.s8 %v1358
    %v1360 = vlaneseq
    %v1361 = vshrl.u32 %v1360, 7
    %v1362 = vsub.s32 %v1359, %v1361
    %v1363 = vrot.slane %v1341, %v1362
    %v1365 = vunpack.c.l.s4 1966171168
    %v1366 = vunpack.c.0.s8 %v1365
    %v1367 = vlaneseq
    %v1368 = vshrl.u32 %v1367, 7
    %v1369 = vsub.s32 %v1366, %v1368
    %v1370 = vrot.slane %v1342, %v1369
    %v1371 = vcombine.low %v1349, %v1356
    %v1372 = vcombine.low %v1363, %v1370
    %v1374 = vunpack.c.l.s4 1966171168
    %v1375 = vunpack.c.0.s8 %v1374
    %v1376 = vlaneseq
    %v1377 = vshrl.u32 %v1376, 7
    %v1378 = vsub.s32 %v1375, %v1377
    %v1379 = vrot.slane %v1371, %v1378
    %v1381 = vunpack.c.l.s4 1966171168
    %v1382 = vunpack.c.0.s8 %v1381
    %v1383 = vlaneseq
    %v1384 = vshrl.u32 %v1383, 7
    %v1385 = vsub.s32 %v1382, %v1384
    %v1386 = vrot.slane %v1372, %v1385
    %v1387 = vcombine.low %v1379, %v1386
    %v1388 = vcombine.low %v375, %v376
    %v1389 = vcombine.low %v377, %v378
    %v1390 = vcombine.low %v379, %v380
    %v1391 = vcombine.low %v381, %v382
    %v1393 = vunpack.c.l.s4 1966171168
    %v1394 = vunpack.c.0.s8 %v1393
    %v1395 = vlaneseq
    %v1396 = vshrl.u32 %v1395, 7
    %v1397 = vsub.s32 %v1394, %v1396
    %v1398 = vrot.slane %v1388, %v1397
    %v1400 = vunpack.c.l.s4 1966171168
    %v1401 = vunpack.c.0.s8 %v1400
    %v1402 = vlaneseq
    %v1403 = vshrl.u32 %v1402, 7
    %v1404 = vsub.s32 %v1401, %v1403
    %v1405 = vrot.slane %v1389, %v1404
    %v1407 = vunpack.c.l.s4 1966171168
    %v1408 = vunpack.c.0.s8 %v1407
    %v1409 = vlaneseq
    %v1410 = vshrl.u32 %v1409, 7
    %v1411 = vsub.s32 %v1408, %v1410
    %v1412 = vrot.slane %v1390, %v1411
    %v1414 = vunpack.c.l.s4 1966171168
    %v1415 = vunpack.c.0.s8 %v1414
    %v1416 = vlaneseq
    %v1417 = vshrl.u32 %v1416, 7
    %v1418 = vsub.s32 %v1415, %v1417
    %v1419 = vrot.slane %v1391, %v1418
    %v1420 = vcombine.low %v1398, %v1405
    %v1421 = vcombine.low %v1412, %v1419
    %v1423 = vunpack.c.l.s4 1966171168
    %v1424 = vunpack.c.0.s8 %v1423
    %v1425 = vlaneseq
    %v1426 = vshrl.u32 %v1425, 7
    %v1427 = vsub.s32 %v1424, %v1426
    %v1428 = vrot.slane %v1420, %v1427
    %v1430 = vunpack.c.l.s4 1966171168
    %v1431 = vunpack.c.0.s8 %v1430
    %v1432 = vlaneseq
    %v1433 = vshrl.u32 %v1432, 7
    %v1434 = vsub.s32 %v1431, %v1433
    %v1435 = vrot.slane %v1421, %v1434
    %v1436 = vcombine.low %v1428, %v1435
    %v1437 = vcombine.low %v383, %v384
    %v1438 = vcombine.low %v385, %v386
    %v1439 = vcombine.low %v387, %v388
    %v1440 = vcombine.low %v389, %v390
    %v1442 = vunpack.c.l.s4 1966171168
    %v1443 = vunpack.c.0.s8 %v1442
    %v1444 = vlaneseq
    %v1445 = vshrl.u32 %v1444, 7
    %v1446 = vsub.s32 %v1443, %v1445
    %v1447 = vrot.slane %v1437, %v1446
    %v1449 = vunpack.c.l.s4 1966171168
    %v1450 = vunpack.c.0.s8 %v1449
    %v1451 = vlaneseq
    %v1452 = vshrl.u32 %v1451, 7
    %v1453 = vsub.s32 %v1450, %v1452
    %v1454 = vrot.slane %v1438, %v1453
    %v1456 = vunpack.c.l.s4 1966171168
    %v1457 = vunpack.c.0.s8 %v1456
    %v1458 = vlaneseq
    %v1459 = vshrl.u32 %v1458, 7
    %v1460 = vsub.s32 %v1457, %v1459
    %v1461 = vrot.slane %v1439, %v1460
    %v1463 = vunpack.c.l.s4 1966171168
    %v1464 = vunpack.c.0.s8 %v1463
    %v1465 = vlaneseq
    %v1466 = vshrl.u32 %v1465, 7
    %v1467 = vsub.s32 %v1464, %v1466
    %v1468 = vrot.slane %v1440, %v1467
    %v1469 = vcombine.low %v1447, %v1454
    %v1470 = vcombine.low %v1461, %v1468
    %v1472 = vunpack.c.l.s4 1966171168
    %v1473 = vunpack.c.0.s8 %v1472
    %v1474 = vlaneseq
    %v1475 = vshrl.u32 %v1474, 7
    %v1476 = vsub.s32 %v1473, %v1475
    %v1477 = vrot.slane %v1469, %v1476
    %v1479 = vunpack.c.l.s4 1966171168
    %v1480 = vunpack.c.0.s8 %v1479
    %v1481 = vlaneseq
    %v1482 = vshrl.u32 %v1481, 7
    %v1483 = vsub.s32 %v1480, %v1482
    %v1484 = vrot.slane %v1470, %v1483
    %v1485 = vcombine.low %v1477, %v1484
    %v1493 = vmul.f32 %v567, %v1191
    %v1494 = vmul.f32 %v568, %v1240
    %v1495 = vmul.f32 %v569, %v1289
    %v1496 = vmul.f32 %v570, %v1338
    %v1497 = vmul.f32 %v571, %v1387
    %v1498 = vmul.f32 %v572, %v1436
    %v1499 = vmul.f32 %v573, %v1485
    %1500 = vrot.lane.b32.xlu0 %v591, 80
    %v1501 = vpop.permute.xlu0 %1500
    %1502 = vrot.lane.b32.xlu0 %v595, 80
    %v1503 = vpop.permute.xlu0 %1502
    %1504 = vrot.lane.b32.xlu0 %v599, 80
    %v1505 = vpop.permute.xlu0 %1504
    %1506 = vrot.lane.b32.xlu0 %v603, 80
    %v1507 = vpop.permute.xlu0 %1506
    %1508 = vrot.lane.b32.xlu0 %v607, 80
    %v1509 = vpop.permute.xlu0 %1508
    %1510 = vrot.lane.b32.xlu0 %v611, 80
    %v1511 = vpop.permute.xlu0 %1510
    %1512 = vrot.lane.b32.xlu0 %v615, 80
    %v1513 = vpop.permute.xlu0 %1512
    %1514 = vrot.lane.b32.xlu0 %v619, 80
    %v1515 = vpop.permute.xlu0 %1514
    %1516 = vrot.lane.b32.xlu0 %v623, 80
    %v1517 = vpop.permute.xlu0 %1516
    %1518 = vrot.lane.b32.xlu0 %v627, 80
    %v1519 = vpop.permute.xlu0 %1518
    %1520 = vrot.lane.b32.xlu0 %v631, 80
    %v1521 = vpop.permute.xlu0 %1520
    %1522 = vrot.lane.b32.xlu0 %v635, 80
    %v1523 = vpop.permute.xlu0 %1522
    %1524 = vrot.lane.b32.xlu0 %v639, 80
    %v1525 = vpop.permute.xlu0 %1524
    %1526 = vrot.lane.b32.xlu0 %v643, 80
    %v1527 = vpop.permute.xlu0 %1526
    %1528 = vrot.lane.b32.xlu0 %v647, 80
    %v1529 = vpop.permute.xlu0 %1528
    %1530 = vrot.lane.b32.xlu0 %v651, 80
    %v1531 = vpop.permute.xlu0 %1530
    %1532 = vrot.lane.b32.xlu0 %v655, 80
    %v1533 = vpop.permute.xlu0 %1532
    %1534 = vrot.lane.b32.xlu0 %v659, 80
    %v1535 = vpop.permute.xlu0 %1534
    %1536 = vrot.lane.b32.xlu0 %v663, 80
    %v1537 = vpop.permute.xlu0 %1536
    %1538 = vrot.lane.b32.xlu0 %v667, 80
    %v1539 = vpop.permute.xlu0 %1538
    %1540 = vrot.lane.b32.xlu0 %v671, 80
    %v1541 = vpop.permute.xlu0 %1540
    %1542 = vrot.lane.b32.xlu0 %v675, 80
    %v1543 = vpop.permute.xlu0 %1542
    %1544 = vrot.lane.b32.xlu0 %v679, 80
    %v1545 = vpop.permute.xlu0 %1544
    %1546 = vrot.lane.b32.xlu0 %v683, 80
    %v1547 = vpop.permute.xlu0 %1546
    %1548 = vrot.lane.b32.xlu0 %v687, 80
    %v1549 = vpop.permute.xlu0 %1548
    %1550 = vrot.lane.b32.xlu0 %v691, 80
    %v1551 = vpop.permute.xlu0 %1550
    %1552 = vrot.lane.b32.xlu0 %v695, 80
    %v1553 = vpop.permute.xlu0 %1552
    %1554 = vrot.lane.b32.xlu0 %v699, 80
    %v1555 = vpop.permute.xlu0 %1554
    %1556 = vrot.lane.b32.xlu0 %v703, 80
    %v1557 = vpop.permute.xlu0 %1556
    %1558 = vrot.lane.b32.xlu0 %v707, 80
    %v1559 = vpop.permute.xlu0 %1558
    %1560 = vrot.lane.b32.xlu0 %v711, 80
    %v1561 = vpop.permute.xlu0 %1560
    %1562 = vrot.lane.b32.xlu0 %v715, 80
    %v1563 = vpop.permute.xlu0 %1562
    %1564 = vrot.lane.b32.xlu0 %v719, 80
    %v1565 = vpop.permute.xlu0 %1564
    %1566 = vrot.lane.b32.xlu0 %v723, 80
    %v1567 = vpop.permute.xlu0 %1566
    %1568 = vrot.lane.b32.xlu0 %v727, 80
    %v1569 = vpop.permute.xlu0 %1568
    %1570 = vrot.lane.b32.xlu0 %v731, 80
    %v1571 = vpop.permute.xlu0 %1570
    %1572 = vrot.lane.b32.xlu0 %v735, 80
    %v1573 = vpop.permute.xlu0 %1572
    %1574 = vrot.lane.b32.xlu0 %v739, 80
    %v1575 = vpop.permute.xlu0 %1574
    %1576 = vrot.lane.b32.xlu0 %v743, 80
    %v1577 = vpop.permute.xlu0 %1576
    %1578 = vrot.lane.b32.xlu0 %v747, 80
    %v1579 = vpop.permute.xlu0 %1578
    %1580 = vrot.lane.b32.xlu0 %v751, 80
    %v1581 = vpop.permute.xlu0 %1580
    %1582 = vrot.lane.b32.xlu0 %v755, 80
    %v1583 = vpop.permute.xlu0 %1582
    %1584 = vrot.lane.b32.xlu0 %v759, 80
    %v1585 = vpop.permute.xlu0 %1584
    %1586 = vrot.lane.b32.xlu0 %v763, 80
    %v1587 = vpop.permute.xlu0 %1586
    %1588 = vrot.lane.b32.xlu0 %v767, 80
    %v1589 = vpop.permute.xlu0 %1588
    %1590 = vrot.lane.b32.xlu0 %v771, 80
    %v1591 = vpop.permute.xlu0 %1590
    %1592 = vrot.lane.b32.xlu0 %v775, 80
    %v1593 = vpop.permute.xlu0 %1592
    %1594 = vrot.lane.b32.xlu0 %v779, 80
    %v1595 = vpop.permute.xlu0 %1594
    %1596 = vrot.lane.b32.xlu0 %v783, 80
    %v1597 = vpop.permute.xlu0 %1596
    %1598 = vrot.lane.b32.xlu0 %v787, 80
    %v1599 = vpop.permute.xlu0 %1598
    %1600 = vrot.lane.b32.xlu0 %v791, 80
    %v1601 = vpop.permute.xlu0 %1600
    %1602 = vrot.lane.b32.xlu0 %v795, 80
    %v1603 = vpop.permute.xlu0 %1602
    %1604 = vrot.lane.b32.xlu0 %v799, 80
    %v1605 = vpop.permute.xlu0 %1604
    %1606 = vrot.lane.b32.xlu0 %v803, 80
    %v1607 = vpop.permute.xlu0 %1606
    %1608 = vrot.lane.b32.xlu0 %v807, 80
    %v1609 = vpop.permute.xlu0 %1608
    %1610 = vrot.lane.b32.xlu0 %v578, 80
    %v1611 = vpop.permute.xlu0 %1610
    %vm1612 = vcmask 654336
    %v1613 = vsel %vm1612, %v1501, %v1503
    %v1614 = vsel %vm1612, %v1503, %v1505
    %v1615 = vsel %vm1612, %v1505, %v1507
    %v1616 = vsel %vm1612, %v1507, %v1509
    %v1617 = vsel %vm1612, %v1509, %v1511
    %v1618 = vsel %vm1612, %v1511, %v1513
    %v1619 = vsel %vm1612, %v1513, %v1515
    %v1620 = vsel %vm1612, %v1515, %v1517
    %v1621 = vsel %vm1612, %v1517, %v1519
    %v1622 = vsel %vm1612, %v1519, %v1521
    %v1623 = vsel %vm1612, %v1521, %v1523
    %v1624 = vsel %vm1612, %v1523, %v1525
    %v1625 = vsel %vm1612, %v1525, %v1527
    %v1626 = vsel %vm1612, %v1527, %v1529
    %v1627 = vsel %vm1612, %v1529, %v1531
    %v1628 = vsel %vm1612, %v1531, %v1533
    %v1629 = vsel %vm1612, %v1533, %v1535
    %v1630 = vsel %vm1612, %v1535, %v1537
    %v1631 = vsel %vm1612, %v1537, %v1539
    %v1632 = vsel %vm1612, %v1539, %v1541
    %v1633 = vsel %vm1612, %v1541, %v1543
    %v1634 = vsel %vm1612, %v1543, %v1545
    %v1635 = vsel %vm1612, %v1545, %v1547
    %v1636 = vsel %vm1612, %v1547, %v1549
    %v1637 = vsel %vm1612, %v1549, %v1551
    %v1638 = vsel %vm1612, %v1551, %v1553
    %v1639 = vsel %vm1612, %v1553, %v1555
    %v1640 = vsel %vm1612, %v1555, %v1557
    %v1641 = vsel %vm1612, %v1557, %v1559
    %v1642 = vsel %vm1612, %v1559, %v1561
    %v1643 = vsel %vm1612, %v1561, %v1563
    %v1644 = vsel %vm1612, %v1563, %v1565
    %v1645 = vsel %vm1612, %v1565, %v1567
    %v1646 = vsel %vm1612, %v1567, %v1569
    %v1647 = vsel %vm1612, %v1569, %v1571
    %v1648 = vsel %vm1612, %v1571, %v1573
    %v1649 = vsel %vm1612, %v1573, %v1575
    %v1650 = vsel %vm1612, %v1575, %v1577
    %v1651 = vsel %vm1612, %v1577, %v1579
    %v1652 = vsel %vm1612, %v1579, %v1581
    %v1653 = vsel %vm1612, %v1581, %v1583
    %v1654 = vsel %vm1612, %v1583, %v1585
    %v1655 = vsel %vm1612, %v1585, %v1587
    %v1656 = vsel %vm1612, %v1587, %v1589
    %v1657 = vsel %vm1612, %v1589, %v1591
    %v1658 = vsel %vm1612, %v1591, %v1593
    %v1659 = vsel %vm1612, %v1593, %v1595
    %v1660 = vsel %vm1612, %v1595, %v1597
    %v1661 = vsel %vm1612, %v1597, %v1599
    %v1662 = vsel %vm1612, %v1599, %v1601
    %v1663 = vsel %vm1612, %v1601, %v1603
    %v1664 = vsel %vm1612, %v1603, %v1605
    %v1665 = vsel %vm1612, %v1605, %v1607
    %v1666 = vsel %vm1612, %v1607, %v1609
    %v1667 = vsel %vm1612, %v1609, %v1611
    %v1725 = vsel %vm1612, %v1611, %v1501
    %v1726 = vmul.f32 %v1613, %v335
    %v1727 = vmul.f32 %v1614, %v336
    %v1728 = vmul.f32 %v1615, %v337
    %v1729 = vmul.f32 %v1616, %v338
    %v1730 = vmul.f32 %v1617, %v339
    %v1731 = vmul.f32 %v1618, %v340
    %v1732 = vmul.f32 %v1619, %v341
    %v1733 = vmul.f32 %v1620, %v342
    %v1734 = vmul.f32 %v1621, %v343
    %v1735 = vmul.f32 %v1622, %v344
    %v1736 = vmul.f32 %v1623, %v345
    %v1737 = vmul.f32 %v1624, %v346
    %v1738 = vmul.f32 %v1625, %v347
    %v1739 = vmul.f32 %v1626, %v348
    %v1740 = vmul.f32 %v1627, %v349
    %v1741 = vmul.f32 %v1628, %v350
    %v1742 = vmul.f32 %v1629, %v351
    %v1743 = vmul.f32 %v1630, %v352
    %v1744 = vmul.f32 %v1631, %v353
    %v1745 = vmul.f32 %v1632, %v354
    %v1746 = vmul.f32 %v1633, %v355
    %v1747 = vmul.f32 %v1634, %v356
    %v1748 = vmul.f32 %v1635, %v357
    %v1749 = vmul.f32 %v1636, %v358
    %v1750 = vmul.f32 %v1637, %v359
    %v1751 = vmul.f32 %v1638, %v360
    %v1752 = vmul.f32 %v1639, %v361
    %v1753 = vmul.f32 %v1640, %v362
    %v1754 = vmul.f32 %v1641, %v363
    %v1755 = vmul.f32 %v1642, %v364
    %v1756 = vmul.f32 %v1643, %v365
    %v1757 = vmul.f32 %v1644, %v366
    %v1758 = vmul.f32 %v1645, %v367
    %v1759 = vmul.f32 %v1646, %v368
    %v1760 = vmul.f32 %v1647, %v369
    %v1761 = vmul.f32 %v1648, %v370
    %v1762 = vmul.f32 %v1649, %v371
    %v1763 = vmul.f32 %v1650, %v372
    %v1764 = vmul.f32 %v1651, %v373
    %v1765 = vmul.f32 %v1652, %v374
    %v1766 = vmul.f32 %v1653, %v375
    %v1767 = vmul.f32 %v1654, %v376
    %v1768 = vmul.f32 %v1655, %v377
    %v1769 = vmul.f32 %v1656, %v378
    %v1770 = vmul.f32 %v1657, %v379
    %v1771 = vmul.f32 %v1658, %v380
    %v1772 = vmul.f32 %v1659, %v381
    %v1773 = vmul.f32 %v1660, %v382
    %v1774 = vmul.f32 %v1661, %v383
    %v1775 = vmul.f32 %v1662, %v384
    %v1776 = vmul.f32 %v1663, %v385
    %v1777 = vmul.f32 %v1664, %v386
    %v1778 = vmul.f32 %v1665, %v387
    %v1779 = vmul.f32 %v1666, %v388
    %v1780 = vmul.f32 %v1667, %v389
    %v1781 = vmul.f32 %v1725, %v390
    %1782 = vrot.lane.b32.xlu0 %v591, 52
    %v1783 = vpop.permute.xlu0 %1782
    %1784 = vrot.lane.b32.xlu0 %v595, 52
    %v1785 = vpop.permute.xlu0 %1784
    %1786 = vrot.lane.b32.xlu0 %v599, 52
    %v1787 = vpop.permute.xlu0 %1786
    %1788 = vrot.lane.b32.xlu0 %v603, 52
    %v1789 = vpop.permute.xlu0 %1788
    %1790 = vrot.lane.b32.xlu0 %v607, 52
    %v1791 = vpop.permute.xlu0 %1790
    %1792 = vrot.lane.b32.xlu0 %v611, 52
    %v1793 = vpop.permute.xlu0 %1792
    %1794 = vrot.lane.b32.xlu0 %v615, 52
    %v1795 = vpop.permute.xlu0 %1794
    %1796 = vrot.lane.b32.xlu0 %v619, 52
    %v1797 = vpop.permute.xlu0 %1796
    %1798 = vrot.lane.b32.xlu0 %v623, 52
    %v1799 = vpop.permute.xlu0 %1798
    %1800 = vrot.lane.b32.xlu0 %v627, 52
    %v1801 = vpop.permute.xlu0 %1800
    %1802 = vrot.lane.b32.xlu0 %v631, 52
    %v1803 = vpop.permute.xlu0 %1802
    %1804 = vrot.lane.b32.xlu0 %v635, 52
    %v1805 = vpop.permute.xlu0 %1804
    %1806 = vrot.lane.b32.xlu0 %v639, 52
    %v1807 = vpop.permute.xlu0 %1806
    %1808 = vrot.lane.b32.xlu0 %v643, 52
    %v1809 = vpop.permute.xlu0 %1808
    %1810 = vrot.lane.b32.xlu0 %v647, 52
    %v1811 = vpop.permute.xlu0 %1810
    %1812 = vrot.lane.b32.xlu0 %v651, 52
    %v1813 = vpop.permute.xlu0 %1812
    %1814 = vrot.lane.b32.xlu0 %v655, 52
    %v1815 = vpop.permute.xlu0 %1814
    %1816 = vrot.lane.b32.xlu0 %v659, 52
    %v1817 = vpop.permute.xlu0 %1816
    %1818 = vrot.lane.b32.xlu0 %v663, 52
    %v1819 = vpop.permute.xlu0 %1818
    %1820 = vrot.lane.b32.xlu0 %v667, 52
    %v1821 = vpop.permute.xlu0 %1820
    %1822 = vrot.lane.b32.xlu0 %v671, 52
    %v1823 = vpop.permute.xlu0 %1822
    %1824 = vrot.lane.b32.xlu0 %v675, 52
    %v1825 = vpop.permute.xlu0 %1824
    %1826 = vrot.lane.b32.xlu0 %v679, 52
    %v1827 = vpop.permute.xlu0 %1826
    %1828 = vrot.lane.b32.xlu0 %v683, 52
    %v1829 = vpop.permute.xlu0 %1828
    %1830 = vrot.lane.b32.xlu0 %v687, 52
    %v1831 = vpop.permute.xlu0 %1830
    %1832 = vrot.lane.b32.xlu0 %v691, 52
    %v1833 = vpop.permute.xlu0 %1832
    %1834 = vrot.lane.b32.xlu0 %v695, 52
    %v1835 = vpop.permute.xlu0 %1834
    %1836 = vrot.lane.b32.xlu0 %v699, 52
    %v1837 = vpop.permute.xlu0 %1836
    %1838 = vrot.lane.b32.xlu0 %v703, 52
    %v1839 = vpop.permute.xlu0 %1838
    %1840 = vrot.lane.b32.xlu0 %v707, 52
    %v1841 = vpop.permute.xlu0 %1840
    %1842 = vrot.lane.b32.xlu0 %v711, 52
    %v1843 = vpop.permute.xlu0 %1842
    %1844 = vrot.lane.b32.xlu0 %v715, 52
    %v1845 = vpop.permute.xlu0 %1844
    %1846 = vrot.lane.b32.xlu0 %v719, 52
    %v1847 = vpop.permute.xlu0 %1846
    %1848 = vrot.lane.b32.xlu0 %v723, 52
    %v1849 = vpop.permute.xlu0 %1848
    %1850 = vrot.lane.b32.xlu0 %v727, 52
    %v1851 = vpop.permute.xlu0 %1850
    %1852 = vrot.lane.b32.xlu0 %v731, 52
    %v1853 = vpop.permute.xlu0 %1852
    %1854 = vrot.lane.b32.xlu0 %v735, 52
    %v1855 = vpop.permute.xlu0 %1854
    %1856 = vrot.lane.b32.xlu0 %v739, 52
    %v1857 = vpop.permute.xlu0 %1856
    %1858 = vrot.lane.b32.xlu0 %v743, 52
    %v1859 = vpop.permute.xlu0 %1858
    %1860 = vrot.lane.b32.xlu0 %v747, 52
    %v1861 = vpop.permute.xlu0 %1860
    %1862 = vrot.lane.b32.xlu0 %v751, 52
    %v1863 = vpop.permute.xlu0 %1862
    %1864 = vrot.lane.b32.xlu0 %v755, 52
    %v1865 = vpop.permute.xlu0 %1864
    %1866 = vrot.lane.b32.xlu0 %v759, 52
    %v1867 = vpop.permute.xlu0 %1866
    %1868 = vrot.lane.b32.xlu0 %v763, 52
    %v1869 = vpop.permute.xlu0 %1868
    %1870 = vrot.lane.b32.xlu0 %v767, 52
    %v1871 = vpop.permute.xlu0 %1870
    %1872 = vrot.lane.b32.xlu0 %v771, 52
    %v1873 = vpop.permute.xlu0 %1872
    %1874 = vrot.lane.b32.xlu0 %v775, 52
    %v1875 = vpop.permute.xlu0 %1874
    %1876 = vrot.lane.b32.xlu0 %v779, 52
    %v1877 = vpop.permute.xlu0 %1876
    %1878 = vrot.lane.b32.xlu0 %v783, 52
    %v1879 = vpop.permute.xlu0 %1878
    %1880 = vrot.lane.b32.xlu0 %v787, 52
    %v1881 = vpop.permute.xlu0 %1880
    %1882 = vrot.lane.b32.xlu0 %v791, 52
    %v1883 = vpop.permute.xlu0 %1882
    %1884 = vrot.lane.b32.xlu0 %v795, 52
    %v1885 = vpop.permute.xlu0 %1884
    %1886 = vrot.lane.b32.xlu0 %v799, 52
    %v1887 = vpop.permute.xlu0 %1886
    %1888 = vrot.lane.b32.xlu0 %v803, 52
    %v1889 = vpop.permute.xlu0 %1888
    %1890 = vrot.lane.b32.xlu0 %v807, 52
    %v1891 = vpop.permute.xlu0 %1890
    %1892 = vrot.lane.b32.xlu0 %v578, 52
    %v1893 = vpop.permute.xlu0 %1892
    %vm1894 = vcmask 424960
    %v1895 = vsel %vm1894, %v1783, %v1785
    %v1896 = vsel %vm1894, %v1785, %v1787
    %v1897 = vsel %vm1894, %v1787, %v1789
    %v1898 = vsel %vm1894, %v1789, %v1791
    %v1899 = vsel %vm1894, %v1791, %v1793
    %v1900 = vsel %vm1894, %v1793, %v1795
    %v1901 = vsel %vm1894, %v1795, %v1797
    %v1902 = vsel %vm1894, %v1797, %v1799
    %v1903 = vsel %vm1894, %v1799, %v1801
    %v1904 = vsel %vm1894, %v1801, %v1803
    %v1905 = vsel %vm1894, %v1803, %v1805
    %v1906 = vsel %vm1894, %v1805, %v1807
    %v1907 = vsel %vm1894, %v1807, %v1809
    %v1908 = vsel %vm1894, %v1809, %v1811
    %v1909 = vsel %vm1894, %v1811, %v1813
    %v1910 = vsel %vm1894, %v1813, %v1815
    %v1911 = vsel %vm1894, %v1815, %v1817
    %v1912 = vsel %vm1894, %v1817, %v1819
    %v1913 = vsel %vm1894, %v1819, %v1821
    %v1914 = vsel %vm1894, %v1821, %v1823
    %v1915 = vsel %vm1894, %v1823, %v1825
    %v1916 = vsel %vm1894, %v1825, %v1827
    %v1917 = vsel %vm1894, %v1827, %v1829
    %v1918 = vsel %vm1894, %v1829, %v1831
    %v1919 = vsel %vm1894, %v1831, %v1833
    %v1920 = vsel %vm1894, %v1833, %v1835
    %v1921 = vsel %vm1894, %v1835, %v1837
    %v1922 = vsel %vm1894, %v1837, %v1839
    %v1923 = vsel %vm1894, %v1839, %v1841
    %v1924 = vsel %vm1894, %v1841, %v1843
    %v1925 = vsel %vm1894, %v1843, %v1845
    %v1926 = vsel %vm1894, %v1845, %v1847
    %v1927 = vsel %vm1894, %v1847, %v1849
    %v1928 = vsel %vm1894, %v1849, %v1851
    %v1929 = vsel %vm1894, %v1851, %v1853
    %v1930 = vsel %vm1894, %v1853, %v1855
    %v1931 = vsel %vm1894, %v1855, %v1857
    %v1932 = vsel %vm1894, %v1857, %v1859
    %v1933 = vsel %vm1894, %v1859, %v1861
    %v1934 = vsel %vm1894, %v1861, %v1863
    %v1935 = vsel %vm1894, %v1863, %v1865
    %v1936 = vsel %vm1894, %v1865, %v1867
    %v1937 = vsel %vm1894, %v1867, %v1869
    %v1938 = vsel %vm1894, %v1869, %v1871
    %v1939 = vsel %vm1894, %v1871, %v1873
    %v1940 = vsel %vm1894, %v1873, %v1875
    %v1941 = vsel %vm1894, %v1875, %v1877
    %v1942 = vsel %vm1894, %v1877, %v1879
    %v1943 = vsel %vm1894, %v1879, %v1881
    %v1944 = vsel %vm1894, %v1881, %v1883
    %v1945 = vsel %vm1894, %v1883, %v1885
    %v1946 = vsel %vm1894, %v1885, %v1887
    %v1947 = vsel %vm1894, %v1887, %v1889
    %v1948 = vsel %vm1894, %v1889, %v1891
    %v1949 = vsel %vm1894, %v1891, %v1893
    %v2007 = vsel %vm1894, %v1893, %v1783
    %v2008 = vmul.f32 %v1895, %v335
    %v2009 = vmul.f32 %v1896, %v336
    %v2010 = vmul.f32 %v1897, %v337
    %v2011 = vmul.f32 %v1898, %v338
    %v2012 = vmul.f32 %v1899, %v339
    %v2013 = vmul.f32 %v1900, %v340
    %v2014 = vmul.f32 %v1901, %v341
    %v2015 = vmul.f32 %v1902, %v342
    %v2016 = vmul.f32 %v1903, %v343
    %v2017 = vmul.f32 %v1904, %v344
    %v2018 = vmul.f32 %v1905, %v345
    %v2019 = vmul.f32 %v1906, %v346
    %v2020 = vmul.f32 %v1907, %v347
    %v2021 = vmul.f32 %v1908, %v348
    %v2022 = vmul.f32 %v1909, %v349
    %v2023 = vmul.f32 %v1910, %v350
    %v2024 = vmul.f32 %v1911, %v351
    %v2025 = vmul.f32 %v1912, %v352
    %v2026 = vmul.f32 %v1913, %v353
    %v2027 = vmul.f32 %v1914, %v354
    %v2028 = vmul.f32 %v1915, %v355
    %v2029 = vmul.f32 %v1916, %v356
    %v2030 = vmul.f32 %v1917, %v357
    %v2031 = vmul.f32 %v1918, %v358
    %v2032 = vmul.f32 %v1919, %v359
    %v2033 = vmul.f32 %v1920, %v360
    %v2034 = vmul.f32 %v1921, %v361
    %v2035 = vmul.f32 %v1922, %v362
    %v2036 = vmul.f32 %v1923, %v363
    %v2037 = vmul.f32 %v1924, %v364
    %v2038 = vmul.f32 %v1925, %v365
    %v2039 = vmul.f32 %v1926, %v366
    %v2040 = vmul.f32 %v1927, %v367
    %v2041 = vmul.f32 %v1928, %v368
    %v2042 = vmul.f32 %v1929, %v369
    %v2043 = vmul.f32 %v1930, %v370
    %v2044 = vmul.f32 %v1931, %v371
    %v2045 = vmul.f32 %v1932, %v372
    %v2046 = vmul.f32 %v1933, %v373
    %v2047 = vmul.f32 %v1934, %v374
    %v2048 = vmul.f32 %v1935, %v375
    %v2049 = vmul.f32 %v1936, %v376
    %v2050 = vmul.f32 %v1937, %v377
    %v2051 = vmul.f32 %v1938, %v378
    %v2052 = vmul.f32 %v1939, %v379
    %v2053 = vmul.f32 %v1940, %v380
    %v2054 = vmul.f32 %v1941, %v381
    %v2055 = vmul.f32 %v1942, %v382
    %v2056 = vmul.f32 %v1943, %v383
    %v2057 = vmul.f32 %v1944, %v384
    %v2058 = vmul.f32 %v1945, %v385
    %v2059 = vmul.f32 %v1946, %v386
    %v2060 = vmul.f32 %v1947, %v387
    %v2061 = vmul.f32 %v1948, %v388
    %v2062 = vmul.f32 %v1949, %v389
    %v2063 = vmul.f32 %v2007, %v390
    %v2071 = vlaneseq
    %v2072 = vshrl.u32 %v2071, 7
    %v2073 = vsub.s32 0, %v2072
    %v2074 = vrot.slane %v1493, %v2073
    %v2075 = vlaneseq
    %v2076 = vshrl.u32 %v2075, 7
    %v2077 = vsub.s32 1, %v2076
    %v2078 = vrot.slane %v1493, %v2077
    %v2079 = vlaneseq
    %v2080 = vshrl.u32 %v2079, 7
    %v2081 = vsub.s32 2, %v2080
    %v2082 = vrot.slane %v1493, %v2081
    %v2083 = vlaneseq
    %v2084 = vshrl.u32 %v2083, 7
    %v2085 = vsub.s32 3, %v2084
    %v2086 = vrot.slane %v1493, %v2085
    %v2087 = vlaneseq
    %v2088 = vshrl.u32 %v2087, 7
    %v2089 = vsub.s32 4, %v2088
    %v2090 = vrot.slane %v1493, %v2089
    %v2091 = vlaneseq
    %v2092 = vshrl.u32 %v2091, 7
    %v2093 = vsub.s32 5, %v2092
    %v2094 = vrot.slane %v1493, %v2093
    %v2095 = vlaneseq
    %v2096 = vshrl.u32 %v2095, 7
    %v2097 = vsub.s32 6, %v2096
    %v2098 = vrot.slane %v1493, %v2097
    %v2099 = vlaneseq
    %v2100 = vshrl.u32 %v2099, 7
    %v2101 = vsub.s32 7, %v2100
    %v2102 = vrot.slane %v1493, %v2101
    %v2103 = vlaneseq
    %v2104 = vshrl.u32 %v2103, 7
    %v2105 = vsub.s32 0, %v2104
    %v2106 = vrot.slane %v1494, %v2105
    %v2107 = vlaneseq
    %v2108 = vshrl.u32 %v2107, 7
    %v2109 = vsub.s32 1, %v2108
    %v2110 = vrot.slane %v1494, %v2109
    %v2111 = vlaneseq
    %v2112 = vshrl.u32 %v2111, 7
    %v2113 = vsub.s32 2, %v2112
    %v2114 = vrot.slane %v1494, %v2113
    %v2115 = vlaneseq
    %v2116 = vshrl.u32 %v2115, 7
    %v2117 = vsub.s32 3, %v2116
    %v2118 = vrot.slane %v1494, %v2117
    %v2119 = vlaneseq
    %v2120 = vshrl.u32 %v2119, 7
    %v2121 = vsub.s32 4, %v2120
    %v2122 = vrot.slane %v1494, %v2121
    %v2123 = vlaneseq
    %v2124 = vshrl.u32 %v2123, 7
    %v2125 = vsub.s32 5, %v2124
    %v2126 = vrot.slane %v1494, %v2125
    %v2127 = vlaneseq
    %v2128 = vshrl.u32 %v2127, 7
    %v2129 = vsub.s32 6, %v2128
    %v2130 = vrot.slane %v1494, %v2129
    %v2131 = vlaneseq
    %v2132 = vshrl.u32 %v2131, 7
    %v2133 = vsub.s32 7, %v2132
    %v2134 = vrot.slane %v1494, %v2133
    %v2135 = vlaneseq
    %v2136 = vshrl.u32 %v2135, 7
    %v2137 = vsub.s32 0, %v2136
    %v2138 = vrot.slane %v1495, %v2137
    %v2139 = vlaneseq
    %v2140 = vshrl.u32 %v2139, 7
    %v2141 = vsub.s32 1, %v2140
    %v2142 = vrot.slane %v1495, %v2141
    %v2143 = vlaneseq
    %v2144 = vshrl.u32 %v2143, 7
    %v2145 = vsub.s32 2, %v2144
    %v2146 = vrot.slane %v1495, %v2145
    %v2147 = vlaneseq
    %v2148 = vshrl.u32 %v2147, 7
    %v2149 = vsub.s32 3, %v2148
    %v2150 = vrot.slane %v1495, %v2149
    %v2151 = vlaneseq
    %v2152 = vshrl.u32 %v2151, 7
    %v2153 = vsub.s32 4, %v2152
    %v2154 = vrot.slane %v1495, %v2153
    %v2155 = vlaneseq
    %v2156 = vshrl.u32 %v2155, 7
    %v2157 = vsub.s32 5, %v2156
    %v2158 = vrot.slane %v1495, %v2157
    %v2159 = vlaneseq
    %v2160 = vshrl.u32 %v2159, 7
    %v2161 = vsub.s32 6, %v2160
    %v2162 = vrot.slane %v1495, %v2161
    %v2163 = vlaneseq
    %v2164 = vshrl.u32 %v2163, 7
    %v2165 = vsub.s32 7, %v2164
    %v2166 = vrot.slane %v1495, %v2165
    %v2167 = vlaneseq
    %v2168 = vshrl.u32 %v2167, 7
    %v2169 = vsub.s32 0, %v2168
    %v2170 = vrot.slane %v1496, %v2169
    %v2171 = vlaneseq
    %v2172 = vshrl.u32 %v2171, 7
    %v2173 = vsub.s32 1, %v2172
    %v2174 = vrot.slane %v1496, %v2173
    %v2175 = vlaneseq
    %v2176 = vshrl.u32 %v2175, 7
    %v2177 = vsub.s32 2, %v2176
    %v2178 = vrot.slane %v1496, %v2177
    %v2179 = vlaneseq
    %v2180 = vshrl.u32 %v2179, 7
    %v2181 = vsub.s32 3, %v2180
    %v2182 = vrot.slane %v1496, %v2181
    %v2183 = vlaneseq
    %v2184 = vshrl.u32 %v2183, 7
    %v2185 = vsub.s32 4, %v2184
    %v2186 = vrot.slane %v1496, %v2185
    %v2187 = vlaneseq
    %v2188 = vshrl.u32 %v2187, 7
    %v2189 = vsub.s32 5, %v2188
    %v2190 = vrot.slane %v1496, %v2189
    %v2191 = vlaneseq
    %v2192 = vshrl.u32 %v2191, 7
    %v2193 = vsub.s32 6, %v2192
    %v2194 = vrot.slane %v1496, %v2193
    %v2195 = vlaneseq
    %v2196 = vshrl.u32 %v2195, 7
    %v2197 = vsub.s32 7, %v2196
    %v2198 = vrot.slane %v1496, %v2197
    %v2199 = vlaneseq
    %v2200 = vshrl.u32 %v2199, 7
    %v2201 = vsub.s32 0, %v2200
    %v2202 = vrot.slane %v1497, %v2201
    %v2203 = vlaneseq
    %v2204 = vshrl.u32 %v2203, 7
    %v2205 = vsub.s32 1, %v2204
    %v2206 = vrot.slane %v1497, %v2205
    %v2207 = vlaneseq
    %v2208 = vshrl.u32 %v2207, 7
    %v2209 = vsub.s32 2, %v2208
    %v2210 = vrot.slane %v1497, %v2209
    %v2211 = vlaneseq
    %v2212 = vshrl.u32 %v2211, 7
    %v2213 = vsub.s32 3, %v2212
    %v2214 = vrot.slane %v1497, %v2213
    %v2215 = vlaneseq
    %v2216 = vshrl.u32 %v2215, 7
    %v2217 = vsub.s32 4, %v2216
    %v2218 = vrot.slane %v1497, %v2217
    %v2219 = vlaneseq
    %v2220 = vshrl.u32 %v2219, 7
    %v2221 = vsub.s32 5, %v2220
    %v2222 = vrot.slane %v1497, %v2221
    %v2223 = vlaneseq
    %v2224 = vshrl.u32 %v2223, 7
    %v2225 = vsub.s32 6, %v2224
    %v2226 = vrot.slane %v1497, %v2225
    %v2227 = vlaneseq
    %v2228 = vshrl.u32 %v2227, 7
    %v2229 = vsub.s32 7, %v2228
    %v2230 = vrot.slane %v1497, %v2229
    %v2231 = vlaneseq
    %v2232 = vshrl.u32 %v2231, 7
    %v2233 = vsub.s32 0, %v2232
    %v2234 = vrot.slane %v1498, %v2233
    %v2235 = vlaneseq
    %v2236 = vshrl.u32 %v2235, 7
    %v2237 = vsub.s32 1, %v2236
    %v2238 = vrot.slane %v1498, %v2237
    %v2239 = vlaneseq
    %v2240 = vshrl.u32 %v2239, 7
    %v2241 = vsub.s32 2, %v2240
    %v2242 = vrot.slane %v1498, %v2241
    %v2243 = vlaneseq
    %v2244 = vshrl.u32 %v2243, 7
    %v2245 = vsub.s32 3, %v2244
    %v2246 = vrot.slane %v1498, %v2245
    %v2247 = vlaneseq
    %v2248 = vshrl.u32 %v2247, 7
    %v2249 = vsub.s32 4, %v2248
    %v2250 = vrot.slane %v1498, %v2249
    %v2251 = vlaneseq
    %v2252 = vshrl.u32 %v2251, 7
    %v2253 = vsub.s32 5, %v2252
    %v2254 = vrot.slane %v1498, %v2253
    %v2255 = vlaneseq
    %v2256 = vshrl.u32 %v2255, 7
    %v2257 = vsub.s32 6, %v2256
    %v2258 = vrot.slane %v1498, %v2257
    %v2259 = vlaneseq
    %v2260 = vshrl.u32 %v2259, 7
    %v2261 = vsub.s32 7, %v2260
    %v2262 = vrot.slane %v1498, %v2261
    %v2263 = vlaneseq
    %v2264 = vshrl.u32 %v2263, 7
    %v2265 = vsub.s32 0, %v2264
    %v2266 = vrot.slane %v1499, %v2265
    %v2267 = vlaneseq
    %v2268 = vshrl.u32 %v2267, 7
    %v2269 = vsub.s32 1, %v2268
    %v2270 = vrot.slane %v1499, %v2269
    %v2271 = vlaneseq
    %v2272 = vshrl.u32 %v2271, 7
    %v2273 = vsub.s32 2, %v2272
    %v2274 = vrot.slane %v1499, %v2273
    %v2275 = vlaneseq
    %v2276 = vshrl.u32 %v2275, 7
    %v2277 = vsub.s32 3, %v2276
    %v2278 = vrot.slane %v1499, %v2277
    %v2279 = vlaneseq
    %v2280 = vshrl.u32 %v2279, 7
    %v2281 = vsub.s32 4, %v2280
    %v2282 = vrot.slane %v1499, %v2281
    %v2283 = vlaneseq
    %v2284 = vshrl.u32 %v2283, 7
    %v2285 = vsub.s32 5, %v2284
    %v2286 = vrot.slane %v1499, %v2285
    %v2287 = vlaneseq
    %v2288 = vshrl.u32 %v2287, 7
    %v2289 = vsub.s32 6, %v2288
    %v2290 = vrot.slane %v1499, %v2289
    %v2291 = vlaneseq
    %v2292 = vshrl.u32 %v2291, 7
    %v2293 = vsub.s32 7, %v2292
    %v2294 = vrot.slane %v1499, %v2293
    %v2407 = vrot.slane %v1726, 6
    %v2408 = vrot.slane %v1727, 6
    %v2409 = vrot.slane %v1728, 6
    %v2410 = vrot.slane %v1729, 6
    %v2411 = vrot.slane %v1730, 6
    %v2412 = vrot.slane %v1731, 6
    %v2413 = vrot.slane %v1732, 6
    %v2414 = vrot.slane %v1733, 6
    %v2415 = vrot.slane %v1734, 6
    %v2416 = vrot.slane %v1735, 6
    %v2417 = vrot.slane %v1736, 6
    %v2418 = vrot.slane %v1737, 6
    %v2419 = vrot.slane %v1738, 6
    %v2420 = vrot.slane %v1739, 6
    %v2421 = vrot.slane %v1740, 6
    %v2422 = vrot.slane %v1741, 6
    %v2423 = vrot.slane %v1742, 6
    %v2424 = vrot.slane %v1743, 6
    %v2425 = vrot.slane %v1744, 6
    %v2426 = vrot.slane %v1745, 6
    %v2427 = vrot.slane %v1746, 6
    %v2428 = vrot.slane %v1747, 6
    %v2429 = vrot.slane %v1748, 6
    %v2430 = vrot.slane %v1749, 6
    %v2431 = vrot.slane %v1750, 6
    %v2432 = vrot.slane %v1751, 6
    %v2433 = vrot.slane %v1752, 6
    %v2434 = vrot.slane %v1753, 6
    %v2435 = vrot.slane %v1754, 6
    %v2436 = vrot.slane %v1755, 6
    %v2437 = vrot.slane %v1756, 6
    %v2438 = vrot.slane %v1757, 6
    %v2439 = vrot.slane %v1758, 6
    %v2440 = vrot.slane %v1759, 6
    %v2441 = vrot.slane %v1760, 6
    %v2442 = vrot.slane %v1761, 6
    %v2443 = vrot.slane %v1762, 6
    %v2444 = vrot.slane %v1763, 6
    %v2445 = vrot.slane %v1764, 6
    %v2446 = vrot.slane %v1765, 6
    %v2447 = vrot.slane %v1766, 6
    %v2448 = vrot.slane %v1767, 6
    %v2449 = vrot.slane %v1768, 6
    %v2450 = vrot.slane %v1769, 6
    %v2451 = vrot.slane %v1770, 6
    %v2452 = vrot.slane %v1771, 6
    %v2453 = vrot.slane %v1772, 6
    %v2454 = vrot.slane %v1773, 6
    %v2455 = vrot.slane %v1774, 6
    %v2456 = vrot.slane %v1775, 6
    %v2457 = vrot.slane %v1776, 6
    %v2458 = vrot.slane %v1777, 6
    %v2459 = vrot.slane %v1778, 6
    %v2460 = vrot.slane %v1779, 6
    %v2461 = vrot.slane %v1780, 6
    %v2462 = vrot.slane %v1781, 6
    %v2575 = vrot.slane %v2008, 5
    %v2576 = vrot.slane %v2009, 5
    %v2577 = vrot.slane %v2010, 5
    %v2578 = vrot.slane %v2011, 5
    %v2579 = vrot.slane %v2012, 5
    %v2580 = vrot.slane %v2013, 5
    %v2581 = vrot.slane %v2014, 5
    %v2582 = vrot.slane %v2015, 5
    %v2583 = vrot.slane %v2016, 5
    %v2584 = vrot.slane %v2017, 5
    %v2585 = vrot.slane %v2018, 5
    %v2586 = vrot.slane %v2019, 5
    %v2587 = vrot.slane %v2020, 5
    %v2588 = vrot.slane %v2021, 5
    %v2589 = vrot.slane %v2022, 5
    %v2590 = vrot.slane %v2023, 5
    %v2591 = vrot.slane %v2024, 5
    %v2592 = vrot.slane %v2025, 5
    %v2593 = vrot.slane %v2026, 5
    %v2594 = vrot.slane %v2027, 5
    %v2595 = vrot.slane %v2028, 5
    %v2596 = vrot.slane %v2029, 5
    %v2597 = vrot.slane %v2030, 5
    %v2598 = vrot.slane %v2031, 5
    %v2599 = vrot.slane %v2032, 5
    %v2600 = vrot.slane %v2033, 5
    %v2601 = vrot.slane %v2034, 5
    %v2602 = vrot.slane %v2035, 5
    %v2603 = vrot.slane %v2036, 5
    %v2604 = vrot.slane %v2037, 5
    %v2605 = vrot.slane %v2038, 5
    %v2606 = vrot.slane %v2039, 5
    %v2607 = vrot.slane %v2040, 5
    %v2608 = vrot.slane %v2041, 5
    %v2609 = vrot.slane %v2042, 5
    %v2610 = vrot.slane %v2043, 5
    %v2611 = vrot.slane %v2044, 5
    %v2612 = vrot.slane %v2045, 5
    %v2613 = vrot.slane %v2046, 5
    %v2614 = vrot.slane %v2047, 5
    %v2615 = vrot.slane %v2048, 5
    %v2616 = vrot.slane %v2049, 5
    %v2617 = vrot.slane %v2050, 5
    %v2618 = vrot.slane %v2051, 5
    %v2619 = vrot.slane %v2052, 5
    %v2620 = vrot.slane %v2053, 5
    %v2621 = vrot.slane %v2054, 5
    %v2622 = vrot.slane %v2055, 5
    %v2623 = vrot.slane %v2056, 5
    %v2624 = vrot.slane %v2057, 5
    %v2625 = vrot.slane %v2058, 5
    %v2626 = vrot.slane %v2059, 5
    %v2627 = vrot.slane %v2060, 5
    %v2628 = vrot.slane %v2061, 5
    %v2629 = vrot.slane %v2062, 5
    %v2630 = vrot.slane %v2063, 5
    %vm2687 = vcmask 1040384
    %v2688 = vsel %vm2687, %v1031, %v2074
    %v2689 = vsel %vm2687, %v1032, %v2078
    %v2690 = vsel %vm2687, %v1033, %v2082
    %v2691 = vsel %vm2687, %v1034, %v2086
    %v2692 = vsel %vm2687, %v1035, %v2090
    %v2693 = vsel %vm2687, %v1036, %v2094
    %v2694 = vsel %vm2687, %v1037, %v2098
    %v2695 = vsel %vm2687, %v1038, %v2102
    %v2696 = vsel %vm2687, %v1039, %v2106
    %v2697 = vsel %vm2687, %v1040, %v2110
    %v2698 = vsel %vm2687, %v1041, %v2114
    %v2699 = vsel %vm2687, %v1042, %v2118
    %v2700 = vsel %vm2687, %v1043, %v2122
    %v2701 = vsel %vm2687, %v1044, %v2126
    %v2702 = vsel %vm2687, %v1045, %v2130
    %v2703 = vsel %vm2687, %v1046, %v2134
    %v2704 = vsel %vm2687, %v1047, %v2138
    %v2705 = vsel %vm2687, %v1048, %v2142
    %v2706 = vsel %vm2687, %v1049, %v2146
    %v2707 = vsel %vm2687, %v1050, %v2150
    %v2708 = vsel %vm2687, %v1051, %v2154
    %v2709 = vsel %vm2687, %v1052, %v2158
    %v2710 = vsel %vm2687, %v1053, %v2162
    %v2711 = vsel %vm2687, %v1054, %v2166
    %v2712 = vsel %vm2687, %v1055, %v2170
    %v2713 = vsel %vm2687, %v1056, %v2174
    %v2714 = vsel %vm2687, %v1057, %v2178
    %v2715 = vsel %vm2687, %v1058, %v2182
    %v2716 = vsel %vm2687, %v1059, %v2186
    %v2717 = vsel %vm2687, %v1060, %v2190
    %v2718 = vsel %vm2687, %v1061, %v2194
    %v2719 = vsel %vm2687, %v1062, %v2198
    %v2720 = vsel %vm2687, %v1063, %v2202
    %v2721 = vsel %vm2687, %v1064, %v2206
    %v2722 = vsel %vm2687, %v1065, %v2210
    %v2723 = vsel %vm2687, %v1066, %v2214
    %v2724 = vsel %vm2687, %v1067, %v2218
    %v2725 = vsel %vm2687, %v1068, %v2222
    %v2726 = vsel %vm2687, %v1069, %v2226
    %v2727 = vsel %vm2687, %v1070, %v2230
    %v2728 = vsel %vm2687, %v1071, %v2234
    %v2729 = vsel %vm2687, %v1072, %v2238
    %v2730 = vsel %vm2687, %v1073, %v2242
    %v2731 = vsel %vm2687, %v1074, %v2246
    %v2732 = vsel %vm2687, %v1075, %v2250
    %v2733 = vsel %vm2687, %v1076, %v2254
    %v2734 = vsel %vm2687, %v1077, %v2258
    %v2735 = vsel %vm2687, %v1078, %v2262
    %v2736 = vsel %vm2687, %v1079, %v2266
    %v2737 = vsel %vm2687, %v1080, %v2270
    %v2738 = vsel %vm2687, %v1081, %v2274
    %v2739 = vsel %vm2687, %v1082, %v2278
    %v2740 = vsel %vm2687, %v1083, %v2282
    %v2741 = vsel %vm2687, %v1084, %v2286
    %v2742 = vsel %vm2687, %v1085, %v2290
    %v2743 = vsel %vm2687, %v1086, %v2294
    %vm2744 = vcmask 1041408
    %v2745 = vsel %vm2744, %v2688, %v2407
    %v2746 = vsel %vm2744, %v2689, %v2408
    %v2747 = vsel %vm2744, %v2690, %v2409
    %v2748 = vsel %vm2744, %v2691, %v2410
    %v2749 = vsel %vm2744, %v2692, %v2411
    %v2750 = vsel %vm2744, %v2693, %v2412
    %v2751 = vsel %vm2744, %v2694, %v2413
    %v2752 = vsel %vm2744, %v2695, %v2414
    %v2753 = vsel %vm2744, %v2696, %v2415
    %v2754 = vsel %vm2744, %v2697, %v2416
    %v2755 = vsel %vm2744, %v2698, %v2417
    %v2756 = vsel %vm2744, %v2699, %v2418
    %v2757 = vsel %vm2744, %v2700, %v2419
    %v2758 = vsel %vm2744, %v2701, %v2420
    %v2759 = vsel %vm2744, %v2702, %v2421
    %v2760 = vsel %vm2744, %v2703, %v2422
    %v2761 = vsel %vm2744, %v2704, %v2423
    %v2762 = vsel %vm2744, %v2705, %v2424
    %v2763 = vsel %vm2744, %v2706, %v2425
    %v2764 = vsel %vm2744, %v2707, %v2426
    %v2765 = vsel %vm2744, %v2708, %v2427
    %v2766 = vsel %vm2744, %v2709, %v2428
    %v2767 = vsel %vm2744, %v2710, %v2429
    %v2768 = vsel %vm2744, %v2711, %v2430
    %v2769 = vsel %vm2744, %v2712, %v2431
    %v2770 = vsel %vm2744, %v2713, %v2432
    %v2771 = vsel %vm2744, %v2714, %v2433
    %v2772 = vsel %vm2744, %v2715, %v2434
    %v2773 = vsel %vm2744, %v2716, %v2435
    %v2774 = vsel %vm2744, %v2717, %v2436
    %v2775 = vsel %vm2744, %v2718, %v2437
    %v2776 = vsel %vm2744, %v2719, %v2438
    %v2777 = vsel %vm2744, %v2720, %v2439
    %v2778 = vsel %vm2744, %v2721, %v2440
    %v2779 = vsel %vm2744, %v2722, %v2441
    %v2780 = vsel %vm2744, %v2723, %v2442
    %v2781 = vsel %vm2744, %v2724, %v2443
    %v2782 = vsel %vm2744, %v2725, %v2444
    %v2783 = vsel %vm2744, %v2726, %v2445
    %v2784 = vsel %vm2744, %v2727, %v2446
    %v2785 = vsel %vm2744, %v2728, %v2447
    %v2786 = vsel %vm2744, %v2729, %v2448
    %v2787 = vsel %vm2744, %v2730, %v2449
    %v2788 = vsel %vm2744, %v2731, %v2450
    %v2789 = vsel %vm2744, %v2732, %v2451
    %v2790 = vsel %vm2744, %v2733, %v2452
    %v2791 = vsel %vm2744, %v2734, %v2453
    %v2792 = vsel %vm2744, %v2735, %v2454
    %v2793 = vsel %vm2744, %v2736, %v2455
    %v2794 = vsel %vm2744, %v2737, %v2456
    %v2795 = vsel %vm2744, %v2738, %v2457
    %v2796 = vsel %vm2744, %v2739, %v2458
    %v2797 = vsel %vm2744, %v2740, %v2459
    %v2798 = vsel %vm2744, %v2741, %v2460
    %v2799 = vsel %vm2744, %v2742, %v2461
    %v2800 = vsel %vm2744, %v2743, %v2462
    %vm2801 = vcmask 1042432
    %v2802 = vsel %vm2801, %v2745, %v2575
    %v2803 = vsel %vm2801, %v2746, %v2576
    %v2804 = vsel %vm2801, %v2747, %v2577
    %v2805 = vsel %vm2801, %v2748, %v2578
    %v2806 = vsel %vm2801, %v2749, %v2579
    %v2807 = vsel %vm2801, %v2750, %v2580
    %v2808 = vsel %vm2801, %v2751, %v2581
    %v2809 = vsel %vm2801, %v2752, %v2582
    %v2810 = vsel %vm2801, %v2753, %v2583
    %v2811 = vsel %vm2801, %v2754, %v2584
    %v2812 = vsel %vm2801, %v2755, %v2585
    %v2813 = vsel %vm2801, %v2756, %v2586
    %v2814 = vsel %vm2801, %v2757, %v2587
    %v2815 = vsel %vm2801, %v2758, %v2588
    %v2816 = vsel %vm2801, %v2759, %v2589
    %v2817 = vsel %vm2801, %v2760, %v2590
    %v2818 = vsel %vm2801, %v2761, %v2591
    %v2819 = vsel %vm2801, %v2762, %v2592
    %v2820 = vsel %vm2801, %v2763, %v2593
    %v2821 = vsel %vm2801, %v2764, %v2594
    %v2822 = vsel %vm2801, %v2765, %v2595
    %v2823 = vsel %vm2801, %v2766, %v2596
    %v2824 = vsel %vm2801, %v2767, %v2597
    %v2825 = vsel %vm2801, %v2768, %v2598
    %v2826 = vsel %vm2801, %v2769, %v2599
    %v2827 = vsel %vm2801, %v2770, %v2600
    %v2828 = vsel %vm2801, %v2771, %v2601
    %v2829 = vsel %vm2801, %v2772, %v2602
    %v2830 = vsel %vm2801, %v2773, %v2603
    %v2831 = vsel %vm2801, %v2774, %v2604
    %v2832 = vsel %vm2801, %v2775, %v2605
    %v2833 = vsel %vm2801, %v2776, %v2606
    %v2834 = vsel %vm2801, %v2777, %v2607
    %v2835 = vsel %vm2801, %v2778, %v2608
    %v2836 = vsel %vm2801, %v2779, %v2609
    %v2837 = vsel %vm2801, %v2780, %v2610
    %v2838 = vsel %vm2801, %v2781, %v2611
    %v2839 = vsel %vm2801, %v2782, %v2612
    %v2840 = vsel %vm2801, %v2783, %v2613
    %v2841 = vsel %vm2801, %v2784, %v2614
    %v2842 = vsel %vm2801, %v2785, %v2615
    %v2843 = vsel %vm2801, %v2786, %v2616
    %v2844 = vsel %vm2801, %v2787, %v2617
    %v2845 = vsel %vm2801, %v2788, %v2618
    %v2846 = vsel %vm2801, %v2789, %v2619
    %v2847 = vsel %vm2801, %v2790, %v2620
    %v2848 = vsel %vm2801, %v2791, %v2621
    %v2849 = vsel %vm2801, %v2792, %v2622
    %v2850 = vsel %vm2801, %v2793, %v2623
    %v2851 = vsel %vm2801, %v2794, %v2624
    %v2852 = vsel %vm2801, %v2795, %v2625
    %v2853 = vsel %vm2801, %v2796, %v2626
    %v2854 = vsel %vm2801, %v2797, %v2627
    %v2855 = vsel %vm2801, %v2798, %v2628
    %v2856 = vsel %vm2801, %v2799, %v2629
    %v2857 = vsel %vm2801, %v2800, %v2630
    %v2858 = vld [vmem:[%s1] sm:$0x3]
    %v2859 = vld [vmem:[%s2] sm:$0xf]
    %v2860 = vpack.c.bf16 %v2802, %v2802
    %v2861 = vpack.c.bf16 %v2803, %v2803
    %v2862 = vpack.c.bf16 %v2804, %v2804
    %v2863 = vpack.c.bf16 %v2805, %v2805
    %v2864 = vpack.c.bf16 %v2806, %v2806
    %v2865 = vpack.c.bf16 %v2807, %v2807
    %v2866 = vpack.c.bf16 %v2808, %v2808
    %v2867 = vpack.c.bf16 %v2809, %v2809
    %v2868 = vpack.c.bf16 %v2810, %v2810
    %v2869 = vpack.c.bf16 %v2811, %v2811
    %v2870 = vpack.c.bf16 %v2812, %v2812
    %v2871 = vpack.c.bf16 %v2813, %v2813
    %v2872 = vpack.c.bf16 %v2814, %v2814
    %v2873 = vpack.c.bf16 %v2815, %v2815
    %v2874 = vpack.c.bf16 %v2816, %v2816
    %v2875 = vpack.c.bf16 %v2817, %v2817
    %v2876 = vpack.c.bf16 %v2818, %v2818
    %v2877 = vpack.c.bf16 %v2819, %v2819
    %v2878 = vpack.c.bf16 %v2820, %v2820
    %v2879 = vpack.c.bf16 %v2821, %v2821
    %v2880 = vpack.c.bf16 %v2822, %v2822
    %v2881 = vpack.c.bf16 %v2823, %v2823
    %v2882 = vpack.c.bf16 %v2824, %v2824
    %v2883 = vpack.c.bf16 %v2825, %v2825
    %v2884 = vpack.c.bf16 %v2826, %v2826
    %v2885 = vpack.c.bf16 %v2827, %v2827
    %v2886 = vpack.c.bf16 %v2828, %v2828
    %v2887 = vpack.c.bf16 %v2829, %v2829
    %v2888 = vpack.c.bf16 %v2830, %v2830
    %v2889 = vpack.c.bf16 %v2831, %v2831
    %v2890 = vpack.c.bf16 %v2832, %v2832
    %v2891 = vpack.c.bf16 %v2833, %v2833
    %v2892 = vpack.c.bf16 %v2834, %v2834
    %v2893 = vpack.c.bf16 %v2835, %v2835
    %v2894 = vpack.c.bf16 %v2836, %v2836
    %v2895 = vpack.c.bf16 %v2837, %v2837
    %v2896 = vpack.c.bf16 %v2838, %v2838
    %v2897 = vpack.c.bf16 %v2839, %v2839
    %v2898 = vpack.c.bf16 %v2840, %v2840
    %v2899 = vpack.c.bf16 %v2841, %v2841
    %v2900 = vpack.c.bf16 %v2842, %v2842
    %v2901 = vpack.c.bf16 %v2843, %v2843
    %v2902 = vpack.c.bf16 %v2844, %v2844
    %v2903 = vpack.c.bf16 %v2845, %v2845
    %v2904 = vpack.c.bf16 %v2846, %v2846
    %v2905 = vpack.c.bf16 %v2847, %v2847
    %v2906 = vpack.c.bf16 %v2848, %v2848
    %v2907 = vpack.c.bf16 %v2849, %v2849
    %v2908 = vpack.c.bf16 %v2850, %v2850
    %v2909 = vpack.c.bf16 %v2851, %v2851
    %v2910 = vpack.c.bf16 %v2852, %v2852
    %v2911 = vpack.c.bf16 %v2853, %v2853
    %v2912 = vpack.c.bf16 %v2854, %v2854
    %v2913 = vpack.c.bf16 %v2855, %v2855
    %v2914 = vpack.c.bf16 %v2856, %v2856
    %v2915 = vpack.c.bf16 %v2857, %v2857
    %v2916 = vpack.c.bf16 0.0, 0.0
    %2973 = vrot.lane.b32.xlu0 %v2802, 127
    %v2974 = vpop.permute.xlu0 %2973
    %2975 = vrot.lane.b32.xlu0 %v2803, 127
    %v2976 = vpop.permute.xlu0 %2975
    %2977 = vrot.lane.b32.xlu0 %v2804, 127
    %v2978 = vpop.permute.xlu0 %2977
    %2979 = vrot.lane.b32.xlu0 %v2805, 127
    %v2980 = vpop.permute.xlu0 %2979
    %2981 = vrot.lane.b32.xlu0 %v2806, 127
    %v2982 = vpop.permute.xlu0 %2981
    %2983 = vrot.lane.b32.xlu0 %v2807, 127
    %v2984 = vpop.permute.xlu0 %2983
    %2985 = vrot.lane.b32.xlu0 %v2808, 127
    %v2986 = vpop.permute.xlu0 %2985
    %2987 = vrot.lane.b32.xlu0 %v2809, 127
    %v2988 = vpop.permute.xlu0 %2987
    %2989 = vrot.lane.b32.xlu0 %v2810, 127
    %v2990 = vpop.permute.xlu0 %2989
    %2991 = vrot.lane.b32.xlu0 %v2811, 127
    %v2992 = vpop.permute.xlu0 %2991
    %2993 = vrot.lane.b32.xlu0 %v2812, 127
    %v2994 = vpop.permute.xlu0 %2993
    %2995 = vrot.lane.b32.xlu0 %v2813, 127
    %v2996 = vpop.permute.xlu0 %2995
    %2997 = vrot.lane.b32.xlu0 %v2814, 127
    %v2998 = vpop.permute.xlu0 %2997
    %2999 = vrot.lane.b32.xlu0 %v2815, 127
    %v3000 = vpop.permute.xlu0 %2999
    %3001 = vrot.lane.b32.xlu0 %v2816, 127
    %v3002 = vpop.permute.xlu0 %3001
    %3003 = vrot.lane.b32.xlu0 %v2817, 127
    %v3004 = vpop.permute.xlu0 %3003
    %3005 = vrot.lane.b32.xlu0 %v2818, 127
    %v3006 = vpop.permute.xlu0 %3005
    %3007 = vrot.lane.b32.xlu0 %v2819, 127
    %v3008 = vpop.permute.xlu0 %3007
    %3009 = vrot.lane.b32.xlu0 %v2820, 127
    %v3010 = vpop.permute.xlu0 %3009
    %3011 = vrot.lane.b32.xlu0 %v2821, 127
    %v3012 = vpop.permute.xlu0 %3011
    %3013 = vrot.lane.b32.xlu0 %v2822, 127
    %v3014 = vpop.permute.xlu0 %3013
    %3015 = vrot.lane.b32.xlu0 %v2823, 127
    %v3016 = vpop.permute.xlu0 %3015
    %3017 = vrot.lane.b32.xlu0 %v2824, 127
    %v3018 = vpop.permute.xlu0 %3017
    %3019 = vrot.lane.b32.xlu0 %v2825, 127
    %v3020 = vpop.permute.xlu0 %3019
    %3021 = vrot.lane.b32.xlu0 %v2826, 127
    %v3022 = vpop.permute.xlu0 %3021
    %3023 = vrot.lane.b32.xlu0 %v2827, 127
    %v3024 = vpop.permute.xlu0 %3023
    %3025 = vrot.lane.b32.xlu0 %v2828, 127
    %v3026 = vpop.permute.xlu0 %3025
    %3027 = vrot.lane.b32.xlu0 %v2829, 127
    %v3028 = vpop.permute.xlu0 %3027
    %3029 = vrot.lane.b32.xlu0 %v2830, 127
    %v3030 = vpop.permute.xlu0 %3029
    %3031 = vrot.lane.b32.xlu0 %v2831, 127
    %v3032 = vpop.permute.xlu0 %3031
    %3033 = vrot.lane.b32.xlu0 %v2832, 127
    %v3034 = vpop.permute.xlu0 %3033
    %3035 = vrot.lane.b32.xlu0 %v2833, 127
    %v3036 = vpop.permute.xlu0 %3035
    %3037 = vrot.lane.b32.xlu0 %v2834, 127
    %v3038 = vpop.permute.xlu0 %3037
    %3039 = vrot.lane.b32.xlu0 %v2835, 127
    %v3040 = vpop.permute.xlu0 %3039
    %3041 = vrot.lane.b32.xlu0 %v2836, 127
    %v3042 = vpop.permute.xlu0 %3041
    %3043 = vrot.lane.b32.xlu0 %v2837, 127
    %v3044 = vpop.permute.xlu0 %3043
    %3045 = vrot.lane.b32.xlu0 %v2838, 127
    %v3046 = vpop.permute.xlu0 %3045
    %3047 = vrot.lane.b32.xlu0 %v2839, 127
    %v3048 = vpop.permute.xlu0 %3047
    %3049 = vrot.lane.b32.xlu0 %v2840, 127
    %v3050 = vpop.permute.xlu0 %3049
    %3051 = vrot.lane.b32.xlu0 %v2841, 127
    %v3052 = vpop.permute.xlu0 %3051
    %3053 = vrot.lane.b32.xlu0 %v2842, 127
    %v3054 = vpop.permute.xlu0 %3053
    %3055 = vrot.lane.b32.xlu0 %v2843, 127
    %v3056 = vpop.permute.xlu0 %3055
    %3057 = vrot.lane.b32.xlu0 %v2844, 127
    %v3058 = vpop.permute.xlu0 %3057
    %3059 = vrot.lane.b32.xlu0 %v2845, 127
    %v3060 = vpop.permute.xlu0 %3059
    %3061 = vrot.lane.b32.xlu0 %v2846, 127
    %v3062 = vpop.permute.xlu0 %3061
    %3063 = vrot.lane.b32.xlu0 %v2847, 127
    %v3064 = vpop.permute.xlu0 %3063
    %3065 = vrot.lane.b32.xlu0 %v2848, 127
    %v3066 = vpop.permute.xlu0 %3065
    %3067 = vrot.lane.b32.xlu0 %v2849, 127
    %v3068 = vpop.permute.xlu0 %3067
    %3069 = vrot.lane.b32.xlu0 %v2850, 127
    %v3070 = vpop.permute.xlu0 %3069
    %3071 = vrot.lane.b32.xlu0 %v2851, 127
    %v3072 = vpop.permute.xlu0 %3071
    %3073 = vrot.lane.b32.xlu0 %v2852, 127
    %v3074 = vpop.permute.xlu0 %3073
    %3075 = vrot.lane.b32.xlu0 %v2853, 127
    %v3076 = vpop.permute.xlu0 %3075
    %3077 = vrot.lane.b32.xlu0 %v2854, 127
    %v3078 = vpop.permute.xlu0 %3077
    %3079 = vrot.lane.b32.xlu0 %v2855, 127
    %v3080 = vpop.permute.xlu0 %3079
    %3081 = vrot.lane.b32.xlu0 %v2856, 127
    %v3082 = vpop.permute.xlu0 %3081
    %3083 = vrot.lane.b32.xlu0 %v2857, 127
    %v3084 = vpop.permute.xlu0 %3083
    %vm3085 = vcmask 1039360
    %v3086 = vsel %vm3085, %v2974, %v2976
    %v3087 = vsel %vm3085, %v2976, %v2978
    %v3088 = vsel %vm3085, %v2978, %v2980
    %v3089 = vsel %vm3085, %v2980, %v2982
    %v3090 = vsel %vm3085, %v2982, %v2984
    %v3091 = vsel %vm3085, %v2984, %v2986
    %v3092 = vsel %vm3085, %v2986, %v2988
    %v3093 = vsel %vm3085, %v2988, %v2990
    %v3094 = vsel %vm3085, %v2990, %v2992
    %v3095 = vsel %vm3085, %v2992, %v2994
    %v3096 = vsel %vm3085, %v2994, %v2996
    %v3097 = vsel %vm3085, %v2996, %v2998
    %v3098 = vsel %vm3085, %v2998, %v3000
    %v3099 = vsel %vm3085, %v3000, %v3002
    %v3100 = vsel %vm3085, %v3002, %v3004
    %v3101 = vsel %vm3085, %v3004, %v3006
    %v3102 = vsel %vm3085, %v3006, %v3008
    %v3103 = vsel %vm3085, %v3008, %v3010
    %v3104 = vsel %vm3085, %v3010, %v3012
    %v3105 = vsel %vm3085, %v3012, %v3014
    %v3106 = vsel %vm3085, %v3014, %v3016
    %v3107 = vsel %vm3085, %v3016, %v3018
    %v3108 = vsel %vm3085, %v3018, %v3020
    %v3109 = vsel %vm3085, %v3020, %v3022
    %v3110 = vsel %vm3085, %v3022, %v3024
    %v3111 = vsel %vm3085, %v3024, %v3026
    %v3112 = vsel %vm3085, %v3026, %v3028
    %v3113 = vsel %vm3085, %v3028, %v3030
    %v3114 = vsel %vm3085, %v3030, %v3032
    %v3115 = vsel %vm3085, %v3032, %v3034
    %v3116 = vsel %vm3085, %v3034, %v3036
    %v3117 = vsel %vm3085, %v3036, %v3038
    %v3118 = vsel %vm3085, %v3038, %v3040
    %v3119 = vsel %vm3085, %v3040, %v3042
    %v3120 = vsel %vm3085, %v3042, %v3044
    %v3121 = vsel %vm3085, %v3044, %v3046
    %v3122 = vsel %vm3085, %v3046, %v3048
    %v3123 = vsel %vm3085, %v3048, %v3050
    %v3124 = vsel %vm3085, %v3050, %v3052
    %v3125 = vsel %vm3085, %v3052, %v3054
    %v3126 = vsel %vm3085, %v3054, %v3056
    %v3127 = vsel %vm3085, %v3056, %v3058
    %v3128 = vsel %vm3085, %v3058, %v3060
    %v3129 = vsel %vm3085, %v3060, %v3062
    %v3130 = vsel %vm3085, %v3062, %v3064
    %v3131 = vsel %vm3085, %v3064, %v3066
    %v3132 = vsel %vm3085, %v3066, %v3068
    %v3133 = vsel %vm3085, %v3068, %v3070
    %v3134 = vsel %vm3085, %v3070, %v3072
    %v3135 = vsel %vm3085, %v3072, %v3074
    %v3136 = vsel %vm3085, %v3074, %v3076
    %v3137 = vsel %vm3085, %v3076, %v3078
    %v3138 = vsel %vm3085, %v3078, %v3080
    %v3139 = vsel %vm3085, %v3080, %v3082
    %v3140 = vsel %vm3085, %v3082, %v3084
    %v3198 = vsel %vm3085, %v3084, %v2974
    %v3199 = vpack.c.bf16 %v3086, %v3086
    %v3200 = vpack.c.bf16 %v3087, %v3087
    %v3201 = vpack.c.bf16 %v3088, %v3088
    %v3202 = vpack.c.bf16 %v3089, %v3089
    %v3203 = vpack.c.bf16 %v3090, %v3090
    %v3204 = vpack.c.bf16 %v3091, %v3091
    %v3205 = vpack.c.bf16 %v3092, %v3092
    %v3206 = vpack.c.bf16 %v3093, %v3093
    %v3207 = vpack.c.bf16 %v3094, %v3094
    %v3208 = vpack.c.bf16 %v3095, %v3095
    %v3209 = vpack.c.bf16 %v3096, %v3096
    %v3210 = vpack.c.bf16 %v3097, %v3097
    %v3211 = vpack.c.bf16 %v3098, %v3098
    %v3212 = vpack.c.bf16 %v3099, %v3099
    %v3213 = vpack.c.bf16 %v3100, %v3100
    %v3214 = vpack.c.bf16 %v3101, %v3101
    %v3215 = vpack.c.bf16 %v3102, %v3102
    %v3216 = vpack.c.bf16 %v3103, %v3103
    %v3217 = vpack.c.bf16 %v3104, %v3104
    %v3218 = vpack.c.bf16 %v3105, %v3105
    %v3219 = vpack.c.bf16 %v3106, %v3106
    %v3220 = vpack.c.bf16 %v3107, %v3107
    %v3221 = vpack.c.bf16 %v3108, %v3108
    %v3222 = vpack.c.bf16 %v3109, %v3109
    %v3223 = vpack.c.bf16 %v3110, %v3110
    %v3224 = vpack.c.bf16 %v3111, %v3111
    %v3225 = vpack.c.bf16 %v3112, %v3112
    %v3226 = vpack.c.bf16 %v3113, %v3113
    %v3227 = vpack.c.bf16 %v3114, %v3114
    %v3228 = vpack.c.bf16 %v3115, %v3115
    %v3229 = vpack.c.bf16 %v3116, %v3116
    %v3230 = vpack.c.bf16 %v3117, %v3117
    %v3231 = vpack.c.bf16 %v3118, %v3118
    %v3232 = vpack.c.bf16 %v3119, %v3119
    %v3233 = vpack.c.bf16 %v3120, %v3120
    %v3234 = vpack.c.bf16 %v3121, %v3121
    %v3235 = vpack.c.bf16 %v3122, %v3122
    %v3236 = vpack.c.bf16 %v3123, %v3123
    %v3237 = vpack.c.bf16 %v3124, %v3124
    %v3238 = vpack.c.bf16 %v3125, %v3125
    %v3239 = vpack.c.bf16 %v3126, %v3126
    %v3240 = vpack.c.bf16 %v3127, %v3127
    %v3241 = vpack.c.bf16 %v3128, %v3128
    %v3242 = vpack.c.bf16 %v3129, %v3129
    %v3243 = vpack.c.bf16 %v3130, %v3130
    %v3244 = vpack.c.bf16 %v3131, %v3131
    %v3245 = vpack.c.bf16 %v3132, %v3132
    %v3246 = vpack.c.bf16 %v3133, %v3133
    %v3247 = vpack.c.bf16 %v3134, %v3134
    %v3248 = vpack.c.bf16 %v3135, %v3135
    %v3249 = vpack.c.bf16 %v3136, %v3136
    %v3250 = vpack.c.bf16 %v3137, %v3137
    %v3251 = vpack.c.bf16 %v3138, %v3138
    %v3252 = vpack.c.bf16 %v3139, %v3139
    %v3253 = vpack.c.bf16 %v3140, %v3140
    %v3254 = vpack.c.bf16 %v3198, %v3198
    %3255 = vrot.lane.b32.xlu0 %v2802, 126
    %v3256 = vpop.permute.xlu0 %3255
    %3257 = vrot.lane.b32.xlu0 %v2803, 126
    %v3258 = vpop.permute.xlu0 %3257
    %3259 = vrot.lane.b32.xlu0 %v2804, 126
    %v3260 = vpop.permute.xlu0 %3259
    %3261 = vrot.lane.b32.xlu0 %v2805, 126
    %v3262 = vpop.permute.xlu0 %3261
    %3263 = vrot.lane.b32.xlu0 %v2806, 126
    %v3264 = vpop.permute.xlu0 %3263
    %3265 = vrot.lane.b32.xlu0 %v2807, 126
    %v3266 = vpop.permute.xlu0 %3265
    %3267 = vrot.lane.b32.xlu0 %v2808, 126
    %v3268 = vpop.permute.xlu0 %3267
    %3269 = vrot.lane.b32.xlu0 %v2809, 126
    %v3270 = vpop.permute.xlu0 %3269
    %3271 = vrot.lane.b32.xlu0 %v2810, 126
    %v3272 = vpop.permute.xlu0 %3271
    %3273 = vrot.lane.b32.xlu0 %v2811, 126
    %v3274 = vpop.permute.xlu0 %3273
    %3275 = vrot.lane.b32.xlu0 %v2812, 126
    %v3276 = vpop.permute.xlu0 %3275
    %3277 = vrot.lane.b32.xlu0 %v2813, 126
    %v3278 = vpop.permute.xlu0 %3277
    %3279 = vrot.lane.b32.xlu0 %v2814, 126
    %v3280 = vpop.permute.xlu0 %3279
    %3281 = vrot.lane.b32.xlu0 %v2815, 126
    %v3282 = vpop.permute.xlu0 %3281
    %3283 = vrot.lane.b32.xlu0 %v2816, 126
    %v3284 = vpop.permute.xlu0 %3283
    %3285 = vrot.lane.b32.xlu0 %v2817, 126
    %v3286 = vpop.permute.xlu0 %3285
    %3287 = vrot.lane.b32.xlu0 %v2818, 126
    %v3288 = vpop.permute.xlu0 %3287
    %3289 = vrot.lane.b32.xlu0 %v2819, 126
    %v3290 = vpop.permute.xlu0 %3289
    %3291 = vrot.lane.b32.xlu0 %v2820, 126
    %v3292 = vpop.permute.xlu0 %3291
    %3293 = vrot.lane.b32.xlu0 %v2821, 126
    %v3294 = vpop.permute.xlu0 %3293
    %3295 = vrot.lane.b32.xlu0 %v2822, 126
    %v3296 = vpop.permute.xlu0 %3295
    %3297 = vrot.lane.b32.xlu0 %v2823, 126
    %v3298 = vpop.permute.xlu0 %3297
    %3299 = vrot.lane.b32.xlu0 %v2824, 126
    %v3300 = vpop.permute.xlu0 %3299
    %3301 = vrot.lane.b32.xlu0 %v2825, 126
    %v3302 = vpop.permute.xlu0 %3301
    %3303 = vrot.lane.b32.xlu0 %v2826, 126
    %v3304 = vpop.permute.xlu0 %3303
    %3305 = vrot.lane.b32.xlu0 %v2827, 126
    %v3306 = vpop.permute.xlu0 %3305
    %3307 = vrot.lane.b32.xlu0 %v2828, 126
    %v3308 = vpop.permute.xlu0 %3307
    %3309 = vrot.lane.b32.xlu0 %v2829, 126
    %v3310 = vpop.permute.xlu0 %3309
    %3311 = vrot.lane.b32.xlu0 %v2830, 126
    %v3312 = vpop.permute.xlu0 %3311
    %3313 = vrot.lane.b32.xlu0 %v2831, 126
    %v3314 = vpop.permute.xlu0 %3313
    %3315 = vrot.lane.b32.xlu0 %v2832, 126
    %v3316 = vpop.permute.xlu0 %3315
    %3317 = vrot.lane.b32.xlu0 %v2833, 126
    %v3318 = vpop.permute.xlu0 %3317
    %3319 = vrot.lane.b32.xlu0 %v2834, 126
    %v3320 = vpop.permute.xlu0 %3319
    %3321 = vrot.lane.b32.xlu0 %v2835, 126
    %v3322 = vpop.permute.xlu0 %3321
    %3323 = vrot.lane.b32.xlu0 %v2836, 126
    %v3324 = vpop.permute.xlu0 %3323
    %3325 = vrot.lane.b32.xlu0 %v2837, 126
    %v3326 = vpop.permute.xlu0 %3325
    %3327 = vrot.lane.b32.xlu0 %v2838, 126
    %v3328 = vpop.permute.xlu0 %3327
    %3329 = vrot.lane.b32.xlu0 %v2839, 126
    %v3330 = vpop.permute.xlu0 %3329
    %3331 = vrot.lane.b32.xlu0 %v2840, 126
    %v3332 = vpop.permute.xlu0 %3331
    %3333 = vrot.lane.b32.xlu0 %v2841, 126
    %v3334 = vpop.permute.xlu0 %3333
    %3335 = vrot.lane.b32.xlu0 %v2842, 126
    %v3336 = vpop.permute.xlu0 %3335
    %3337 = vrot.lane.b32.xlu0 %v2843, 126
    %v3338 = vpop.permute.xlu0 %3337
    %3339 = vrot.lane.b32.xlu0 %v2844, 126
    %v3340 = vpop.permute.xlu0 %3339
    %3341 = vrot.lane.b32.xlu0 %v2845, 126
    %v3342 = vpop.permute.xlu0 %3341
    %3343 = vrot.lane.b32.xlu0 %v2846, 126
    %v3344 = vpop.permute.xlu0 %3343
    %3345 = vrot.lane.b32.xlu0 %v2847, 126
    %v3346 = vpop.permute.xlu0 %3345
    %3347 = vrot.lane.b32.xlu0 %v2848, 126
    %v3348 = vpop.permute.xlu0 %3347
    %3349 = vrot.lane.b32.xlu0 %v2849, 126
    %v3350 = vpop.permute.xlu0 %3349
    %3351 = vrot.lane.b32.xlu0 %v2850, 126
    %v3352 = vpop.permute.xlu0 %3351
    %3353 = vrot.lane.b32.xlu0 %v2851, 126
    %v3354 = vpop.permute.xlu0 %3353
    %3355 = vrot.lane.b32.xlu0 %v2852, 126
    %v3356 = vpop.permute.xlu0 %3355
    %3357 = vrot.lane.b32.xlu0 %v2853, 126
    %v3358 = vpop.permute.xlu0 %3357
    %3359 = vrot.lane.b32.xlu0 %v2854, 126
    %v3360 = vpop.permute.xlu0 %3359
    %3361 = vrot.lane.b32.xlu0 %v2855, 126
    %v3362 = vpop.permute.xlu0 %3361
    %3363 = vrot.lane.b32.xlu0 %v2856, 126
    %v3364 = vpop.permute.xlu0 %3363
    %3365 = vrot.lane.b32.xlu0 %v2857, 126
    %v3366 = vpop.permute.xlu0 %3365
    %vm3367 = vcmask 1031168
    %v3368 = vsel %vm3367, %v3256, %v3258
    %v3369 = vsel %vm3367, %v3258, %v3260
    %v3370 = vsel %vm3367, %v3260, %v3262
    %v3371 = vsel %vm3367, %v3262, %v3264
    %v3372 = vsel %vm3367, %v3264, %v3266
    %v3373 = vsel %vm3367, %v3266, %v3268
    %v3374 = vsel %vm3367, %v3268, %v3270
    %v3375 = vsel %vm3367, %v3270, %v3272
    %v3376 = vsel %vm3367, %v3272, %v3274
    %v3377 = vsel %vm3367, %v3274, %v3276
    %v3378 = vsel %vm3367, %v3276, %v3278
    %v3379 = vsel %vm3367, %v3278, %v3280
    %v3380 = vsel %vm3367, %v3280, %v3282
    %v3381 = vsel %vm3367, %v3282, %v3284
    %v3382 = vsel %vm3367, %v3284, %v3286
    %v3383 = vsel %vm3367, %v3286, %v3288
    %v3384 = vsel %vm3367, %v3288, %v3290
    %v3385 = vsel %vm3367, %v3290, %v3292
    %v3386 = vsel %vm3367, %v3292, %v3294
    %v3387 = vsel %vm3367, %v3294, %v3296
    %v3388 = vsel %vm3367, %v3296, %v3298
    %v3389 = vsel %vm3367, %v3298, %v3300
    %v3390 = vsel %vm3367, %v3300, %v3302
    %v3391 = vsel %vm3367, %v3302, %v3304
    %v3392 = vsel %vm3367, %v3304, %v3306
    %v3393 = vsel %vm3367, %v3306, %v3308
    %v3394 = vsel %vm3367, %v3308, %v3310
    %v3395 = vsel %vm3367, %v3310, %v3312
    %v3396 = vsel %vm3367, %v3312, %v3314
    %v3397 = vsel %vm3367, %v3314, %v3316
    %v3398 = vsel %vm3367, %v3316, %v3318
    %v3399 = vsel %vm3367, %v3318, %v3320
    %v3400 = vsel %vm3367, %v3320, %v3322
    %v3401 = vsel %vm3367, %v3322, %v3324
    %v3402 = vsel %vm3367, %v3324, %v3326
    %v3403 = vsel %vm3367, %v3326, %v3328
    %v3404 = vsel %vm3367, %v3328, %v3330
    %v3405 = vsel %vm3367, %v3330, %v3332
    %v3406 = vsel %vm3367, %v3332, %v3334
    %v3407 = vsel %vm3367, %v3334, %v3336
    %v3408 = vsel %vm3367, %v3336, %v3338
    %v3409 = vsel %vm3367, %v3338, %v3340
    %v3410 = vsel %vm3367, %v3340, %v3342
    %v3411 = vsel %vm3367, %v3342, %v3344
    %v3412 = vsel %vm3367, %v3344, %v3346
    %v3413 = vsel %vm3367, %v3346, %v3348
    %v3414 = vsel %vm3367, %v3348, %v3350
    %v3415 = vsel %vm3367, %v3350, %v3352
    %v3416 = vsel %vm3367, %v3352, %v3354
    %v3417 = vsel %vm3367, %v3354, %v3356
    %v3418 = vsel %vm3367, %v3356, %v3358
    %v3419 = vsel %vm3367, %v3358, %v3360
    %v3420 = vsel %vm3367, %v3360, %v3362
    %v3421 = vsel %vm3367, %v3362, %v3364
    %v3422 = vsel %vm3367, %v3364, %v3366
    %v3480 = vsel %vm3367, %v3366, %v3256
    %v3481 = vpack.c.bf16 %v3368, %v3368
    %v3482 = vpack.c.bf16 %v3369, %v3369
    %v3483 = vpack.c.bf16 %v3370, %v3370
    %v3484 = vpack.c.bf16 %v3371, %v3371
    %v3485 = vpack.c.bf16 %v3372, %v3372
    %v3486 = vpack.c.bf16 %v3373, %v3373
    %v3487 = vpack.c.bf16 %v3374, %v3374
    %v3488 = vpack.c.bf16 %v3375, %v3375
    %v3489 = vpack.c.bf16 %v3376, %v3376
    %v3490 = vpack.c.bf16 %v3377, %v3377
    %v3491 = vpack.c.bf16 %v3378, %v3378
    %v3492 = vpack.c.bf16 %v3379, %v3379
    %v3493 = vpack.c.bf16 %v3380, %v3380
    %v3494 = vpack.c.bf16 %v3381, %v3381
    %v3495 = vpack.c.bf16 %v3382, %v3382
    %v3496 = vpack.c.bf16 %v3383, %v3383
    %v3497 = vpack.c.bf16 %v3384, %v3384
    %v3498 = vpack.c.bf16 %v3385, %v3385
    %v3499 = vpack.c.bf16 %v3386, %v3386
    %v3500 = vpack.c.bf16 %v3387, %v3387
    %v3501 = vpack.c.bf16 %v3388, %v3388
    %v3502 = vpack.c.bf16 %v3389, %v3389
    %v3503 = vpack.c.bf16 %v3390, %v3390
    %v3504 = vpack.c.bf16 %v3391, %v3391
    %v3505 = vpack.c.bf16 %v3392, %v3392
    %v3506 = vpack.c.bf16 %v3393, %v3393
    %v3507 = vpack.c.bf16 %v3394, %v3394
    %v3508 = vpack.c.bf16 %v3395, %v3395
    %v3509 = vpack.c.bf16 %v3396, %v3396
    %v3510 = vpack.c.bf16 %v3397, %v3397
    %v3511 = vpack.c.bf16 %v3398, %v3398
    %v3512 = vpack.c.bf16 %v3399, %v3399
    %v3513 = vpack.c.bf16 %v3400, %v3400
    %v3514 = vpack.c.bf16 %v3401, %v3401
    %v3515 = vpack.c.bf16 %v3402, %v3402
    %v3516 = vpack.c.bf16 %v3403, %v3403
    %v3517 = vpack.c.bf16 %v3404, %v3404
    %v3518 = vpack.c.bf16 %v3405, %v3405
    %v3519 = vpack.c.bf16 %v3406, %v3406
    %v3520 = vpack.c.bf16 %v3407, %v3407
    %v3521 = vpack.c.bf16 %v3408, %v3408
    %v3522 = vpack.c.bf16 %v3409, %v3409
    %v3523 = vpack.c.bf16 %v3410, %v3410
    %v3524 = vpack.c.bf16 %v3411, %v3411
    %v3525 = vpack.c.bf16 %v3412, %v3412
    %v3526 = vpack.c.bf16 %v3413, %v3413
    %v3527 = vpack.c.bf16 %v3414, %v3414
    %v3528 = vpack.c.bf16 %v3415, %v3415
    %v3529 = vpack.c.bf16 %v3416, %v3416
    %v3530 = vpack.c.bf16 %v3417, %v3417
    %v3531 = vpack.c.bf16 %v3418, %v3418
    %v3532 = vpack.c.bf16 %v3419, %v3419
    %v3533 = vpack.c.bf16 %v3420, %v3420
    %v3534 = vpack.c.bf16 %v3421, %v3421
    %v3535 = vpack.c.bf16 %v3422, %v3422
    %v3536 = vpack.c.bf16 %v3480, %v3480
    %v3593 = vrot.slane %v3199, 6
    %v3594 = vrot.slane %v3200, 6
    %v3595 = vrot.slane %v3201, 6
    %v3596 = vrot.slane %v3202, 6
    %v3597 = vrot.slane %v3203, 6
    %v3598 = vrot.slane %v3204, 6
    %v3599 = vrot.slane %v3205, 6
    %v3600 = vrot.slane %v3206, 6
    %v3601 = vrot.slane %v3207, 6
    %v3602 = vrot.slane %v3208, 6
    %v3603 = vrot.slane %v3209, 6
    %v3604 = vrot.slane %v3210, 6
    %v3605 = vrot.slane %v3211, 6
    %v3606 = vrot.slane %v3212, 6
    %v3607 = vrot.slane %v3213, 6
    %v3608 = vrot.slane %v3214, 6
    %v3609 = vrot.slane %v3215, 6
    %v3610 = vrot.slane %v3216, 6
    %v3611 = vrot.slane %v3217, 6
    %v3612 = vrot.slane %v3218, 6
    %v3613 = vrot.slane %v3219, 6
    %v3614 = vrot.slane %v3220, 6
    %v3615 = vrot.slane %v3221, 6
    %v3616 = vrot.slane %v3222, 6
    %v3617 = vrot.slane %v3223, 6
    %v3618 = vrot.slane %v3224, 6
    %v3619 = vrot.slane %v3225, 6
    %v3620 = vrot.slane %v3226, 6
    %v3621 = vrot.slane %v3227, 6
    %v3622 = vrot.slane %v3228, 6
    %v3623 = vrot.slane %v3229, 6
    %v3624 = vrot.slane %v3230, 6
    %v3625 = vrot.slane %v3231, 6
    %v3626 = vrot.slane %v3232, 6
    %v3627 = vrot.slane %v3233, 6
    %v3628 = vrot.slane %v3234, 6
    %v3629 = vrot.slane %v3235, 6
    %v3630 = vrot.slane %v3236, 6
    %v3631 = vrot.slane %v3237, 6
    %v3632 = vrot.slane %v3238, 6
    %v3633 = vrot.slane %v3239, 6
    %v3634 = vrot.slane %v3240, 6
    %v3635 = vrot.slane %v3241, 6
    %v3636 = vrot.slane %v3242, 6
    %v3637 = vrot.slane %v3243, 6
    %v3638 = vrot.slane %v3244, 6
    %v3639 = vrot.slane %v3245, 6
    %v3640 = vrot.slane %v3246, 6
    %v3641 = vrot.slane %v3247, 6
    %v3642 = vrot.slane %v3248, 6
    %v3643 = vrot.slane %v3249, 6
    %v3644 = vrot.slane %v3250, 6
    %v3645 = vrot.slane %v3251, 6
    %v3646 = vrot.slane %v3252, 6
    %v3647 = vrot.slane %v3253, 6
    %v3648 = vrot.slane %v3254, 6
    %v3705 = vrot.slane %v3481, 4
    %v3706 = vrot.slane %v3482, 4
    %v3707 = vrot.slane %v3483, 4
    %v3708 = vrot.slane %v3484, 4
    %v3709 = vrot.slane %v3485, 4
    %v3710 = vrot.slane %v3486, 4
    %v3711 = vrot.slane %v3487, 4
    %v3712 = vrot.slane %v3488, 4
    %v3713 = vrot.slane %v3489, 4
    %v3714 = vrot.slane %v3490, 4
    %v3715 = vrot.slane %v3491, 4
    %v3716 = vrot.slane %v3492, 4
    %v3717 = vrot.slane %v3493, 4
    %v3718 = vrot.slane %v3494, 4
    %v3719 = vrot.slane %v3495, 4
    %v3720 = vrot.slane %v3496, 4
    %v3721 = vrot.slane %v3497, 4
    %v3722 = vrot.slane %v3498, 4
    %v3723 = vrot.slane %v3499, 4
    %v3724 = vrot.slane %v3500, 4
    %v3725 = vrot.slane %v3501, 4
    %v3726 = vrot.slane %v3502, 4
    %v3727 = vrot.slane %v3503, 4
    %v3728 = vrot.slane %v3504, 4
    %v3729 = vrot.slane %v3505, 4
    %v3730 = vrot.slane %v3506, 4
    %v3731 = vrot.slane %v3507, 4
    %v3732 = vrot.slane %v3508, 4
    %v3733 = vrot.slane %v3509, 4
    %v3734 = vrot.slane %v3510, 4
    %v3735 = vrot.slane %v3511, 4
    %v3736 = vrot.slane %v3512, 4
    %v3737 = vrot.slane %v3513, 4
    %v3738 = vrot.slane %v3514, 4
    %v3739 = vrot.slane %v3515, 4
    %v3740 = vrot.slane %v3516, 4
    %v3741 = vrot.slane %v3517, 4
    %v3742 = vrot.slane %v3518, 4
    %v3743 = vrot.slane %v3519, 4
    %v3744 = vrot.slane %v3520, 4
    %v3745 = vrot.slane %v3521, 4
    %v3746 = vrot.slane %v3522, 4
    %v3747 = vrot.slane %v3523, 4
    %v3748 = vrot.slane %v3524, 4
    %v3749 = vrot.slane %v3525, 4
    %v3750 = vrot.slane %v3526, 4
    %v3751 = vrot.slane %v3527, 4
    %v3752 = vrot.slane %v3528, 4
    %v3753 = vrot.slane %v3529, 4
    %v3754 = vrot.slane %v3530, 4
    %v3755 = vrot.slane %v3531, 4
    %v3756 = vrot.slane %v3532, 4
    %v3757 = vrot.slane %v3533, 4
    %v3758 = vrot.slane %v3534, 4
    %v3759 = vrot.slane %v3535, 4
    %v3760 = vrot.slane %v3536, 4
    %v3814 = vrot.slane %v2864, 2
    %v3815 = vrot.slane %v2865, 2
    %v3816 = vrot.slane %v2866, 2
    %v3817 = vrot.slane %v2867, 2
    %v3818 = vrot.slane %v2868, 2
    %v3819 = vrot.slane %v2869, 2
    %v3820 = vrot.slane %v2870, 2
    %v3821 = vrot.slane %v2871, 2
    %v3822 = vrot.slane %v2872, 2
    %v3823 = vrot.slane %v2873, 2
    %v3824 = vrot.slane %v2874, 2
    %v3825 = vrot.slane %v2875, 2
    %v3826 = vrot.slane %v2876, 2
    %v3827 = vrot.slane %v2877, 2
    %v3828 = vrot.slane %v2878, 2
    %v3829 = vrot.slane %v2879, 2
    %v3830 = vrot.slane %v2880, 2
    %v3831 = vrot.slane %v2881, 2
    %v3832 = vrot.slane %v2882, 2
    %v3833 = vrot.slane %v2883, 2
    %v3834 = vrot.slane %v2884, 2
    %v3835 = vrot.slane %v2885, 2
    %v3836 = vrot.slane %v2886, 2
    %v3837 = vrot.slane %v2887, 2
    %v3838 = vrot.slane %v2888, 2
    %v3839 = vrot.slane %v2889, 2
    %v3840 = vrot.slane %v2890, 2
    %v3841 = vrot.slane %v2891, 2
    %v3842 = vrot.slane %v2892, 2
    %v3843 = vrot.slane %v2893, 2
    %v3844 = vrot.slane %v2894, 2
    %v3845 = vrot.slane %v2895, 2
    %v3846 = vrot.slane %v2896, 2
    %v3847 = vrot.slane %v2897, 2
    %v3848 = vrot.slane %v2898, 2
    %v3849 = vrot.slane %v2899, 2
    %v3850 = vrot.slane %v2900, 2
    %v3851 = vrot.slane %v2901, 2
    %v3852 = vrot.slane %v2902, 2
    %v3853 = vrot.slane %v2903, 2
    %v3854 = vrot.slane %v2904, 2
    %v3855 = vrot.slane %v2905, 2
    %v3856 = vrot.slane %v2906, 2
    %v3857 = vrot.slane %v2907, 2
    %v3858 = vrot.slane %v2908, 2
    %v3859 = vrot.slane %v2909, 2
    %v3860 = vrot.slane %v2910, 2
    %v3861 = vrot.slane %v2911, 2
    %v3862 = vrot.slane %v2912, 2
    %v3863 = vrot.slane %v2913, 2
    %v3864 = vrot.slane %v2914, 2
    %v3865 = vrot.slane %v2915, 2
    %v3866 = vrot.slane %v2916, 2
    %v3867 = vrot.slane %v3485, 6
    %v3868 = vrot.slane %v3486, 6
    %v3869 = vrot.slane %v3487, 6
    %v3870 = vrot.slane %v3488, 6
    %v3871 = vrot.slane %v3489, 6
    %v3872 = vrot.slane %v3490, 6
    %v3873 = vrot.slane %v3491, 6
    %v3874 = vrot.slane %v3492, 6
    %v3875 = vrot.slane %v3493, 6
    %v3876 = vrot.slane %v3494, 6
    %v3877 = vrot.slane %v3495, 6
    %v3878 = vrot.slane %v3496, 6
    %v3879 = vrot.slane %v3497, 6
    %v3880 = vrot.slane %v3498, 6
    %v3881 = vrot.slane %v3499, 6
    %v3882 = vrot.slane %v3500, 6
    %v3883 = vrot.slane %v3501, 6
    %v3884 = vrot.slane %v3502, 6
    %v3885 = vrot.slane %v3503, 6
    %v3886 = vrot.slane %v3504, 6
    %v3887 = vrot.slane %v3505, 6
    %v3888 = vrot.slane %v3506, 6
    %v3889 = vrot.slane %v3507, 6
    %v3890 = vrot.slane %v3508, 6
    %v3891 = vrot.slane %v3509, 6
    %v3892 = vrot.slane %v3510, 6
    %v3893 = vrot.slane %v3511, 6
    %v3894 = vrot.slane %v3512, 6
    %v3895 = vrot.slane %v3513, 6
    %v3896 = vrot.slane %v3514, 6
    %v3897 = vrot.slane %v3515, 6
    %v3898 = vrot.slane %v3516, 6
    %v3899 = vrot.slane %v3517, 6
    %v3900 = vrot.slane %v3518, 6
    %v3901 = vrot.slane %v3519, 6
    %v3902 = vrot.slane %v3520, 6
    %v3903 = vrot.slane %v3521, 6
    %v3904 = vrot.slane %v3522, 6
    %v3905 = vrot.slane %v3523, 6
    %v3906 = vrot.slane %v3524, 6
    %v3907 = vrot.slane %v3525, 6
    %v3908 = vrot.slane %v3526, 6
    %v3909 = vrot.slane %v3527, 6
    %v3910 = vrot.slane %v3528, 6
    %v3911 = vrot.slane %v3529, 6
    %v3912 = vrot.slane %v3530, 6
    %v3913 = vrot.slane %v3531, 6
    %v3914 = vrot.slane %v3532, 6
    %v3915 = vrot.slane %v3533, 6
    %v3916 = vrot.slane %v3534, 6
    %v3917 = vrot.slane %v3535, 6
    %v3918 = vrot.slane %v3536, 6
    %v3919 = vrot.slane %v2916, 6
    %v3920 = vrot.slane %v2868, 4
    %v3921 = vrot.slane %v2869, 4
    %v3922 = vrot.slane %v2870, 4
    %v3923 = vrot.slane %v2871, 4
    %v3924 = vrot.slane %v2872, 4
    %v3925 = vrot.slane %v2873, 4
    %v3926 = vrot.slane %v2874, 4
    %v3927 = vrot.slane %v2875, 4
    %v3928 = vrot.slane %v2876, 4
    %v3929 = vrot.slane %v2877, 4
    %v3930 = vrot.slane %v2878, 4
    %v3931 = vrot.slane %v2879, 4
    %v3932 = vrot.slane %v2880, 4
    %v3933 = vrot.slane %v2881, 4
    %v3934 = vrot.slane %v2882, 4
    %v3935 = vrot.slane %v2883, 4
    %v3936 = vrot.slane %v2884, 4
    %v3937 = vrot.slane %v2885, 4
    %v3938 = vrot.slane %v2886, 4
    %v3939 = vrot.slane %v2887, 4
    %v3940 = vrot.slane %v2888, 4
    %v3941 = vrot.slane %v2889, 4
    %v3942 = vrot.slane %v2890, 4
    %v3943 = vrot.slane %v2891, 4
    %v3944 = vrot.slane %v2892, 4
    %v3945 = vrot.slane %v2893, 4
    %v3946 = vrot.slane %v2894, 4
    %v3947 = vrot.slane %v2895, 4
    %v3948 = vrot.slane %v2896, 4
    %v3949 = vrot.slane %v2897, 4
    %v3950 = vrot.slane %v2898, 4
    %v3951 = vrot.slane %v2899, 4
    %v3952 = vrot.slane %v2900, 4
    %v3953 = vrot.slane %v2901, 4
    %v3954 = vrot.slane %v2902, 4
    %v3955 = vrot.slane %v2903, 4
    %v3956 = vrot.slane %v2904, 4
    %v3957 = vrot.slane %v2905, 4
    %v3958 = vrot.slane %v2906, 4
    %v3959 = vrot.slane %v2907, 4
    %v3960 = vrot.slane %v2908, 4
    %v3961 = vrot.slane %v2909, 4
    %v3962 = vrot.slane %v2910, 4
    %v3963 = vrot.slane %v2911, 4
    %v3964 = vrot.slane %v2912, 4
    %v3965 = vrot.slane %v2913, 4
    %v3966 = vrot.slane %v2914, 4
    %v3967 = vrot.slane %v2915, 4
    %v3968 = vrot.slane %v2916, 4
    %v3969 = vrot.slane %v3207, 2
    %v3970 = vrot.slane %v3208, 2
    %v3971 = vrot.slane %v3209, 2
    %v3972 = vrot.slane %v3210, 2
    %v3973 = vrot.slane %v3211, 2
    %v3974 = vrot.slane %v3212, 2
    %v3975 = vrot.slane %v3213, 2
    %v3976 = vrot.slane %v3214, 2
    %v3977 = vrot.slane %v3215, 2
    %v3978 = vrot.slane %v3216, 2
    %v3979 = vrot.slane %v3217, 2
    %v3980 = vrot.slane %v3218, 2
    %v3981 = vrot.slane %v3219, 2
    %v3982 = vrot.slane %v3220, 2
    %v3983 = vrot.slane %v3221, 2
    %v3984 = vrot.slane %v3222, 2
    %v3985 = vrot.slane %v3223, 2
    %v3986 = vrot.slane %v3224, 2
    %v3987 = vrot.slane %v3225, 2
    %v3988 = vrot.slane %v3226, 2
    %v3989 = vrot.slane %v3227, 2
    %v3990 = vrot.slane %v3228, 2
    %v3991 = vrot.slane %v3229, 2
    %v3992 = vrot.slane %v3230, 2
    %v3993 = vrot.slane %v3231, 2
    %v3994 = vrot.slane %v3232, 2
    %v3995 = vrot.slane %v3233, 2
    %v3996 = vrot.slane %v3234, 2
    %v3997 = vrot.slane %v3235, 2
    %v3998 = vrot.slane %v3236, 2
    %v3999 = vrot.slane %v3237, 2
    %v4000 = vrot.slane %v3238, 2
    %v4001 = vrot.slane %v3239, 2
    %v4002 = vrot.slane %v3240, 2
    %v4003 = vrot.slane %v3241, 2
    %v4004 = vrot.slane %v3242, 2
    %v4005 = vrot.slane %v3243, 2
    %v4006 = vrot.slane %v3244, 2
    %v4007 = vrot.slane %v3245, 2
    %v4008 = vrot.slane %v3246, 2
    %v4009 = vrot.slane %v3247, 2
    %v4010 = vrot.slane %v3248, 2
    %v4011 = vrot.slane %v3249, 2
    %v4012 = vrot.slane %v3250, 2
    %v4013 = vrot.slane %v3251, 2
    %v4014 = vrot.slane %v3252, 2
    %v4015 = vrot.slane %v3253, 2
    %v4016 = vrot.slane %v3254, 2
    %v4019 = vsel %vm2744, %v2860, %v3593
    %v4022 = vsel %vm2744, %v2861, %v3594
    %v4025 = vsel %vm2744, %v2862, %v3595
    %v4028 = vsel %vm2744, %v2863, %v3596
    %v4031 = vsel %vm2744, %v2864, %v3597
    %v4034 = vsel %vm2744, %v2865, %v3598
    %v4037 = vsel %vm2744, %v2866, %v3599
    %v4040 = vsel %vm2744, %v2867, %v3600
    %v4043 = vsel %vm2744, %v2868, %v3601
    %v4046 = vsel %vm2744, %v2869, %v3602
    %v4049 = vsel %vm2744, %v2870, %v3603
    %v4052 = vsel %vm2744, %v2871, %v3604
    %v4055 = vsel %vm2744, %v2872, %v3605
    %v4058 = vsel %vm2744, %v2873, %v3606
    %v4061 = vsel %vm2744, %v2874, %v3607
    %v4064 = vsel %vm2744, %v2875, %v3608
    %v4067 = vsel %vm2744, %v2876, %v3609
    %v4070 = vsel %vm2744, %v2877, %v3610
    %v4073 = vsel %vm2744, %v2878, %v3611
    %v4076 = vsel %vm2744, %v2879, %v3612
    %v4079 = vsel %vm2744, %v2880, %v3613
    %v4082 = vsel %vm2744, %v2881, %v3614
    %v4085 = vsel %vm2744, %v2882, %v3615
    %v4088 = vsel %vm2744, %v2883, %v3616
    %v4091 = vsel %vm2744, %v2884, %v3617
    %v4094 = vsel %vm2744, %v2885, %v3618
    %v4097 = vsel %vm2744, %v2886, %v3619
    %v4100 = vsel %vm2744, %v2887, %v3620
    %v4103 = vsel %vm2744, %v2888, %v3621
    %v4106 = vsel %vm2744, %v2889, %v3622
    %v4109 = vsel %vm2744, %v2890, %v3623
    %v4112 = vsel %vm2744, %v2891, %v3624
    %v4115 = vsel %vm2744, %v2892, %v3625
    %v4118 = vsel %vm2744, %v2893, %v3626
    %v4121 = vsel %vm2744, %v2894, %v3627
    %v4124 = vsel %vm2744, %v2895, %v3628
    %v4127 = vsel %vm2744, %v2896, %v3629
    %v4130 = vsel %vm2744, %v2897, %v3630
    %v4133 = vsel %vm2744, %v2898, %v3631
    %v4136 = vsel %vm2744, %v2899, %v3632
    %v4139 = vsel %vm2744, %v2900, %v3633
    %v4142 = vsel %vm2744, %v2901, %v3634
    %v4145 = vsel %vm2744, %v2902, %v3635
    %v4148 = vsel %vm2744, %v2903, %v3636
    %v4151 = vsel %vm2744, %v2904, %v3637
    %v4154 = vsel %vm2744, %v2905, %v3638
    %v4157 = vsel %vm2744, %v2906, %v3639
    %v4160 = vsel %vm2744, %v2907, %v3640
    %v4163 = vsel %vm2744, %v2908, %v3641
    %v4166 = vsel %vm2744, %v2909, %v3642
    %v4169 = vsel %vm2744, %v2910, %v3643
    %v4172 = vsel %vm2744, %v2911, %v3644
    %v4175 = vsel %vm2744, %v2912, %v3645
    %v4178 = vsel %vm2744, %v2913, %v3646
    %v4181 = vsel %vm2744, %v2914, %v3647
    %v4184 = vsel %vm2744, %v2915, %v3648
    %vm4185 = vcmask 1043456
    %v4187 = vsel %vm4185, %v4019, %v3705
    %v4189 = vsel %vm4185, %v4022, %v3706
    %v4191 = vsel %vm4185, %v4025, %v3707
    %v4193 = vsel %vm4185, %v4028, %v3708
    %v4195 = vsel %vm4185, %v4031, %v3709
    %v4197 = vsel %vm4185, %v4034, %v3710
    %v4199 = vsel %vm4185, %v4037, %v3711
    %v4201 = vsel %vm4185, %v4040, %v3712
    %v4203 = vsel %vm4185, %v4043, %v3713
    %v4205 = vsel %vm4185, %v4046, %v3714
    %v4207 = vsel %vm4185, %v4049, %v3715
    %v4209 = vsel %vm4185, %v4052, %v3716
    %v4211 = vsel %vm4185, %v4055, %v3717
    %v4213 = vsel %vm4185, %v4058, %v3718
    %v4215 = vsel %vm4185, %v4061, %v3719
    %v4217 = vsel %vm4185, %v4064, %v3720
    %v4219 = vsel %vm4185, %v4067, %v3721
    %v4221 = vsel %vm4185, %v4070, %v3722
    %v4223 = vsel %vm4185, %v4073, %v3723
    %v4225 = vsel %vm4185, %v4076, %v3724
    %v4227 = vsel %vm4185, %v4079, %v3725
    %v4229 = vsel %vm4185, %v4082, %v3726
    %v4231 = vsel %vm4185, %v4085, %v3727
    %v4233 = vsel %vm4185, %v4088, %v3728
    %v4235 = vsel %vm4185, %v4091, %v3729
    %v4237 = vsel %vm4185, %v4094, %v3730
    %v4239 = vsel %vm4185, %v4097, %v3731
    %v4241 = vsel %vm4185, %v4100, %v3732
    %v4243 = vsel %vm4185, %v4103, %v3733
    %v4245 = vsel %vm4185, %v4106, %v3734
    %v4247 = vsel %vm4185, %v4109, %v3735
    %v4249 = vsel %vm4185, %v4112, %v3736
    %v4251 = vsel %vm4185, %v4115, %v3737
    %v4253 = vsel %vm4185, %v4118, %v3738
    %v4255 = vsel %vm4185, %v4121, %v3739
    %v4257 = vsel %vm4185, %v4124, %v3740
    %v4259 = vsel %vm4185, %v4127, %v3741
    %v4261 = vsel %vm4185, %v4130, %v3742
    %v4263 = vsel %vm4185, %v4133, %v3743
    %v4265 = vsel %vm4185, %v4136, %v3744
    %v4267 = vsel %vm4185, %v4139, %v3745
    %v4269 = vsel %vm4185, %v4142, %v3746
    %v4271 = vsel %vm4185, %v4145, %v3747
    %v4273 = vsel %vm4185, %v4148, %v3748
    %v4275 = vsel %vm4185, %v4151, %v3749
    %v4277 = vsel %vm4185, %v4154, %v3750
    %v4279 = vsel %vm4185, %v4157, %v3751
    %v4281 = vsel %vm4185, %v4160, %v3752
    %v4283 = vsel %vm4185, %v4163, %v3753
    %v4285 = vsel %vm4185, %v4166, %v3754
    %v4287 = vsel %vm4185, %v4169, %v3755
    %v4289 = vsel %vm4185, %v4172, %v3756
    %v4291 = vsel %vm4185, %v4175, %v3757
    %v4293 = vsel %vm4185, %v4178, %v3758
    %v4295 = vsel %vm4185, %v4181, %v3759
    %v4297 = vsel %vm4185, %v4184, %v3760
    %vm4298 = vcmask 1045504
    %v4300 = vsel %vm4298, %v4187, %v3814
    %v4303 = vsel %vm4298, %v4189, %v3815
    %v4306 = vsel %vm4298, %v4191, %v3816
    %v4309 = vsel %vm4298, %v4193, %v3817
    %v4312 = vsel %vm4298, %v4195, %v3818
    %v4315 = vsel %vm4298, %v4197, %v3819
    %v4318 = vsel %vm4298, %v4199, %v3820
    %v4321 = vsel %vm4298, %v4201, %v3821
    %v4324 = vsel %vm4298, %v4203, %v3822
    %v4327 = vsel %vm4298, %v4205, %v3823
    %v4330 = vsel %vm4298, %v4207, %v3824
    %v4333 = vsel %vm4298, %v4209, %v3825
    %v4336 = vsel %vm4298, %v4211, %v3826
    %v4339 = vsel %vm4298, %v4213, %v3827
    %v4342 = vsel %vm4298, %v4215, %v3828
    %v4345 = vsel %vm4298, %v4217, %v3829
    %v4348 = vsel %vm4298, %v4219, %v3830
    %v4351 = vsel %vm4298, %v4221, %v3831
    %v4354 = vsel %vm4298, %v4223, %v3832
    %v4357 = vsel %vm4298, %v4225, %v3833
    %v4360 = vsel %vm4298, %v4227, %v3834
    %v4363 = vsel %vm4298, %v4229, %v3835
    %v4366 = vsel %vm4298, %v4231, %v3836
    %v4369 = vsel %vm4298, %v4233, %v3837
    %v4372 = vsel %vm4298, %v4235, %v3838
    %v4375 = vsel %vm4298, %v4237, %v3839
    %v4378 = vsel %vm4298, %v4239, %v3840
    %v4381 = vsel %vm4298, %v4241, %v3841
    %v4384 = vsel %vm4298, %v4243, %v3842
    %v4387 = vsel %vm4298, %v4245, %v3843
    %v4390 = vsel %vm4298, %v4247, %v3844
    %v4393 = vsel %vm4298, %v4249, %v3845
    %v4396 = vsel %vm4298, %v4251, %v3846
    %v4399 = vsel %vm4298, %v4253, %v3847
    %v4402 = vsel %vm4298, %v4255, %v3848
    %v4405 = vsel %vm4298, %v4257, %v3849
    %v4408 = vsel %vm4298, %v4259, %v3850
    %v4411 = vsel %vm4298, %v4261, %v3851
    %v4414 = vsel %vm4298, %v4263, %v3852
    %v4417 = vsel %vm4298, %v4265, %v3853
    %v4420 = vsel %vm4298, %v4267, %v3854
    %v4423 = vsel %vm4298, %v4269, %v3855
    %v4426 = vsel %vm4298, %v4271, %v3856
    %v4429 = vsel %vm4298, %v4273, %v3857
    %v4432 = vsel %vm4298, %v4275, %v3858
    %v4435 = vsel %vm4298, %v4277, %v3859
    %v4438 = vsel %vm4298, %v4279, %v3860
    %v4441 = vsel %vm4298, %v4281, %v3861
    %v4444 = vsel %vm4298, %v4283, %v3862
    %v4447 = vsel %vm4298, %v4285, %v3863
    %v4450 = vsel %vm4298, %v4287, %v3864
    %v4453 = vsel %vm4298, %v4289, %v3865
    %v4456 = vsel %vm4298, %v4291, %v3866
    %v4458 = vsel %vm4298, %v4293, %v3866
    %v4460 = vsel %vm4298, %v4295, %v3866
    %v4462 = vsel %vm4298, %v4297, %v3866
    %v4466 = vsel %vm2744, %v3203, %v3867
    %v4469 = vsel %vm2744, %v3204, %v3868
    %v4472 = vsel %vm2744, %v3205, %v3869
    %v4475 = vsel %vm2744, %v3206, %v3870
    %v4478 = vsel %vm2744, %v3207, %v3871
    %v4481 = vsel %vm2744, %v3208, %v3872
    %v4484 = vsel %vm2744, %v3209, %v3873
    %v4487 = vsel %vm2744, %v3210, %v3874
    %v4490 = vsel %vm2744, %v3211, %v3875
    %v4493 = vsel %vm2744, %v3212, %v3876
    %v4496 = vsel %vm2744, %v3213, %v3877
    %v4499 = vsel %vm2744, %v3214, %v3878
    %v4502 = vsel %vm2744, %v3215, %v3879
    %v4505 = vsel %vm2744, %v3216, %v3880
    %v4508 = vsel %vm2744, %v3217, %v3881
    %v4511 = vsel %vm2744, %v3218, %v3882
    %v4514 = vsel %vm2744, %v3219, %v3883
    %v4517 = vsel %vm2744, %v3220, %v3884
    %v4520 = vsel %vm2744, %v3221, %v3885
    %v4523 = vsel %vm2744, %v3222, %v3886
    %v4526 = vsel %vm2744, %v3223, %v3887
    %v4529 = vsel %vm2744, %v3224, %v3888
    %v4532 = vsel %vm2744, %v3225, %v3889
    %v4535 = vsel %vm2744, %v3226, %v3890
    %v4538 = vsel %vm2744, %v3227, %v3891
    %v4541 = vsel %vm2744, %v3228, %v3892
    %v4544 = vsel %vm2744, %v3229, %v3893
    %v4547 = vsel %vm2744, %v3230, %v3894
    %v4550 = vsel %vm2744, %v3231, %v3895
    %v4553 = vsel %vm2744, %v3232, %v3896
    %v4556 = vsel %vm2744, %v3233, %v3897
    %v4559 = vsel %vm2744, %v3234, %v3898
    %v4562 = vsel %vm2744, %v3235, %v3899
    %v4565 = vsel %vm2744, %v3236, %v3900
    %v4568 = vsel %vm2744, %v3237, %v3901
    %v4571 = vsel %vm2744, %v3238, %v3902
    %v4574 = vsel %vm2744, %v3239, %v3903
    %v4577 = vsel %vm2744, %v3240, %v3904
    %v4580 = vsel %vm2744, %v3241, %v3905
    %v4583 = vsel %vm2744, %v3242, %v3906
    %v4586 = vsel %vm2744, %v3243, %v3907
    %v4589 = vsel %vm2744, %v3244, %v3908
    %v4592 = vsel %vm2744, %v3245, %v3909
    %v4595 = vsel %vm2744, %v3246, %v3910
    %v4598 = vsel %vm2744, %v3247, %v3911
    %v4601 = vsel %vm2744, %v3248, %v3912
    %v4604 = vsel %vm2744, %v3249, %v3913
    %v4607 = vsel %vm2744, %v3250, %v3914
    %v4610 = vsel %vm2744, %v3251, %v3915
    %v4613 = vsel %vm2744, %v3252, %v3916
    %v4616 = vsel %vm2744, %v3253, %v3917
    %v4619 = vsel %vm2744, %v3254, %v3918
    %v4622 = vsel %vm2744, %v2916, %v3919
    %v4624 = vsel %vm4185, %v4466, %v3920
    %v4626 = vsel %vm4185, %v4469, %v3921
    %v4628 = vsel %vm4185, %v4472, %v3922
    %v4630 = vsel %vm4185, %v4475, %v3923
    %v4632 = vsel %vm4185, %v4478, %v3924
    %v4634 = vsel %vm4185, %v4481, %v3925
    %v4636 = vsel %vm4185, %v4484, %v3926
    %v4638 = vsel %vm4185, %v4487, %v3927
    %v4640 = vsel %vm4185, %v4490, %v3928
    %v4642 = vsel %vm4185, %v4493, %v3929
    %v4644 = vsel %vm4185, %v4496, %v3930
    %v4646 = vsel %vm4185, %v4499, %v3931
    %v4648 = vsel %vm4185, %v4502, %v3932
    %v4650 = vsel %vm4185, %v4505, %v3933
    %v4652 = vsel %vm4185, %v4508, %v3934
    %v4654 = vsel %vm4185, %v4511, %v3935
    %v4656 = vsel %vm4185, %v4514, %v3936
    %v4658 = vsel %vm4185, %v4517, %v3937
    %v4660 = vsel %vm4185, %v4520, %v3938
    %v4662 = vsel %vm4185, %v4523, %v3939
    %v4664 = vsel %vm4185, %v4526, %v3940
    %v4666 = vsel %vm4185, %v4529, %v3941
    %v4668 = vsel %vm4185, %v4532, %v3942
    %v4670 = vsel %vm4185, %v4535, %v3943
    %v4672 = vsel %vm4185, %v4538, %v3944
    %v4674 = vsel %vm4185, %v4541, %v3945
    %v4676 = vsel %vm4185, %v4544, %v3946
    %v4678 = vsel %vm4185, %v4547, %v3947
    %v4680 = vsel %vm4185, %v4550, %v3948
    %v4682 = vsel %vm4185, %v4553, %v3949
    %v4684 = vsel %vm4185, %v4556, %v3950
    %v4686 = vsel %vm4185, %v4559, %v3951
    %v4688 = vsel %vm4185, %v4562, %v3952
    %v4690 = vsel %vm4185, %v4565, %v3953
    %v4692 = vsel %vm4185, %v4568, %v3954
    %v4694 = vsel %vm4185, %v4571, %v3955
    %v4696 = vsel %vm4185, %v4574, %v3956
    %v4698 = vsel %vm4185, %v4577, %v3957
    %v4700 = vsel %vm4185, %v4580, %v3958
    %v4702 = vsel %vm4185, %v4583, %v3959
    %v4704 = vsel %vm4185, %v4586, %v3960
    %v4706 = vsel %vm4185, %v4589, %v3961
    %v4708 = vsel %vm4185, %v4592, %v3962
    %v4710 = vsel %vm4185, %v4595, %v3963
    %v4712 = vsel %vm4185, %v4598, %v3964
    %v4714 = vsel %vm4185, %v4601, %v3965
    %v4716 = vsel %vm4185, %v4604, %v3966
    %v4718 = vsel %vm4185, %v4607, %v3967
    %v4720 = vsel %vm4185, %v4610, %v3968
    %v4721 = vsel %vm4185, %v4613, %v3968
    %v4722 = vsel %vm4185, %v4616, %v3968
    %v4723 = vsel %vm4185, %v4619, %v3968
    %v4724 = vsel %vm4185, %v4622, %v3968
    %v4726 = vsel %vm4298, %v4624, %v3969
    %v4729 = vsel %vm4298, %v4626, %v3970
    %v4732 = vsel %vm4298, %v4628, %v3971
    %v4735 = vsel %vm4298, %v4630, %v3972
    %v4738 = vsel %vm4298, %v4632, %v3973
    %v4741 = vsel %vm4298, %v4634, %v3974
    %v4744 = vsel %vm4298, %v4636, %v3975
    %v4747 = vsel %vm4298, %v4638, %v3976
    %v4750 = vsel %vm4298, %v4640, %v3977
    %v4753 = vsel %vm4298, %v4642, %v3978
    %v4756 = vsel %vm4298, %v4644, %v3979
    %v4759 = vsel %vm4298, %v4646, %v3980
    %v4762 = vsel %vm4298, %v4648, %v3981
    %v4765 = vsel %vm4298, %v4650, %v3982
    %v4768 = vsel %vm4298, %v4652, %v3983
    %v4771 = vsel %vm4298, %v4654, %v3984
    %v4774 = vsel %vm4298, %v4656, %v3985
    %v4777 = vsel %vm4298, %v4658, %v3986
    %v4780 = vsel %vm4298, %v4660, %v3987
    %v4783 = vsel %vm4298, %v4662, %v3988
    %v4786 = vsel %vm4298, %v4664, %v3989
    %v4789 = vsel %vm4298, %v4666, %v3990
    %v4792 = vsel %vm4298, %v4668, %v3991
    %v4795 = vsel %vm4298, %v4670, %v3992
    %v4798 = vsel %vm4298, %v4672, %v3993
    %v4801 = vsel %vm4298, %v4674, %v3994
    %v4804 = vsel %vm4298, %v4676, %v3995
    %v4807 = vsel %vm4298, %v4678, %v3996
    %v4810 = vsel %vm4298, %v4680, %v3997
    %v4813 = vsel %vm4298, %v4682, %v3998
    %v4816 = vsel %vm4298, %v4684, %v3999
    %v4819 = vsel %vm4298, %v4686, %v4000
    %v4822 = vsel %vm4298, %v4688, %v4001
    %v4825 = vsel %vm4298, %v4690, %v4002
    %v4828 = vsel %vm4298, %v4692, %v4003
    %v4831 = vsel %vm4298, %v4694, %v4004
    %v4834 = vsel %vm4298, %v4696, %v4005
    %v4837 = vsel %vm4298, %v4698, %v4006
    %v4840 = vsel %vm4298, %v4700, %v4007
    %v4843 = vsel %vm4298, %v4702, %v4008
    %v4846 = vsel %vm4298, %v4704, %v4009
    %v4849 = vsel %vm4298, %v4706, %v4010
    %v4852 = vsel %vm4298, %v4708, %v4011
    %v4855 = vsel %vm4298, %v4710, %v4012
    %v4858 = vsel %vm4298, %v4712, %v4013
    %v4861 = vsel %vm4298, %v4714, %v4014
    %v4864 = vsel %vm4298, %v4716, %v4015
    %v4867 = vsel %vm4298, %v4718, %v4016
    %v4869 = vsel %vm4298, %v4720, %v3866
    %v4871 = vsel %vm4298, %v4721, %v3866
    %v4873 = vsel %vm4298, %v4722, %v3866
    %v4875 = vsel %vm4298, %v4723, %v3866
    %v4877 = vsel %vm4298, %v4724, %v3866
    %4880 = vset.pattern.permute.xlu0 0
    %4881 = vperm.xlu0 %4880, %v2859
    %v4882 = vpop.permute.xlu0 %4881
    %vm4884 = vcmask 293888
    %v4886 = vsel %vm4884, %v2858, 0
    %v4889 = vsel %vm2744, %v3489, 0
    %v4892 = vsel %vm2744, %v3490, 0
    %v4895 = vsel %vm2744, %v3491, 0
    %v4898 = vsel %vm2744, %v3492, 0
    %v4901 = vsel %vm2744, %v3493, 0
    %v4904 = vsel %vm2744, %v3494, 0
    %v4907 = vsel %vm2744, %v3495, 0
    %v4910 = vsel %vm2744, %v3496, 0
    %v4913 = vsel %vm2744, %v3497, 0
    %v4916 = vsel %vm2744, %v3498, 0
    %v4919 = vsel %vm2744, %v3499, 0
    %v4922 = vsel %vm2744, %v3500, 0
    %v4925 = vsel %vm2744, %v3501, 0
    %v4928 = vsel %vm2744, %v3502, 0
    %v4931 = vsel %vm2744, %v3503, 0
    %v4934 = vsel %vm2744, %v3504, 0
    %v4937 = vsel %vm2744, %v3505, 0
    %v4940 = vsel %vm2744, %v3506, 0
    %v4943 = vsel %vm2744, %v3507, 0
    %v4946 = vsel %vm2744, %v3508, 0
    %v4949 = vsel %vm2744, %v3509, 0
    %v4952 = vsel %vm2744, %v3510, 0
    %v4955 = vsel %vm2744, %v3511, 0
    %v4958 = vsel %vm2744, %v3512, 0
    %v4961 = vsel %vm2744, %v3513, 0
    %v4964 = vsel %vm2744, %v3514, 0
    %v4967 = vsel %vm2744, %v3515, 0
    %v4970 = vsel %vm2744, %v3516, 0
    %v4973 = vsel %vm2744, %v3517, 0
    %v4976 = vsel %vm2744, %v3518, 0
    %v4979 = vsel %vm2744, %v3519, 0
    %v4982 = vsel %vm2744, %v3520, 0
    %v4985 = vsel %vm2744, %v3521, 0
    %v4988 = vsel %vm2744, %v3522, 0
    %v4991 = vsel %vm2744, %v3523, 0
    %v4994 = vsel %vm2744, %v3524, 0
    %v4997 = vsel %vm2744, %v3525, 0
    %v5000 = vsel %vm2744, %v3526, 0
    %v5003 = vsel %vm2744, %v3527, 0
    %v5006 = vsel %vm2744, %v3528, 0
    %v5009 = vsel %vm2744, %v3529, 0
    %v5012 = vsel %vm2744, %v3530, 0
    %v5015 = vsel %vm2744, %v3531, 0
    %v5018 = vsel %vm2744, %v3532, 0
    %v5021 = vsel %vm2744, %v3533, 0
    %v5024 = vsel %vm2744, %v3534, 0
    %v5027 = vsel %vm2744, %v3535, 0
    %v5030 = vsel %vm2744, %v3536, 0
    %v5032 = vsel %vm2744, %v2916, 0
    %5034 = vmatprep.subr.bf16.mxu0 0
    %5035 = vmatpush1.bf16.msra.mxu0 0
    %5036 = vmatprep.subr.bf16.mxu0 0
    %5037 = vmatpush1.bf16.msra.mxu0 0
    %5038 = vmatprep.subr.bf16.mxu0 0
    %5039 = vmatpush1.bf16.msra.mxu0 0
    %5040 = vmatprep.subr.bf16.mxu0 0
    %5041 = vmatpush1.bf16.msra.mxu0 0
    %5042 = vmatprep.subr.bf16.mxu0 0
    %5043 = vmatpush1.bf16.msra.mxu0 0
    %5044 = vmatprep.subr.bf16.mxu0 %v4892
    %5045 = vmatpush1.bf16.msra.mxu0 %v4889
    %5046 = vmatprep.subr.bf16.mxu0 %v4729
    %5047 = vmatpush1.bf16.msra.mxu0 %v4726
    %5048 = vmatprep.subr.bf16.mxu0 %v4303
    %5049 = vmatpush1.bf16.msra.mxu0 %v4300
    %5050 = vmatprep.subr.bf16.mxu0 0
    %5051 = vmatpush2.bf16.msra.mxu0 0
    %5052 = vmatprep.subr.bf16.mxu0 0
    %5053 = vmatpush2.bf16.msra.mxu0 0
    %5054 = vmatprep.subr.bf16.mxu0 0
    %5055 = vmatpush2.bf16.msra.mxu0 0
    %5056 = vmatprep.subr.bf16.mxu0 0
    %5057 = vmatpush2.bf16.msra.mxu0 0
    %5058 = vmatprep.subr.bf16.mxu0 0
    %5059 = vmatpush2.bf16.msra.mxu0 0
    %5060 = vmatprep.subr.bf16.mxu0 0
    %5061 = vmatpush2.bf16.msra.mxu0 0
    %5062 = vmatprep.subr.bf16.mxu0 0
    %5063 = vmatpush2.bf16.msra.mxu0 0
    %5064 = vmatprep.subr.bf16.mxu0 0
    %5065 = vmatpush2.bf16.msra.mxu0 0
    %5066 = vmatprep.mubr.bf16.mxu0 0
    %5067 = vmatmul.mubr.bf16.gmra.mxu0 %v4886
    %v5068 = vpop.f32.mrf.mxu0
    %v5069 = vadd.f32 %v4882, %v5068
    %v5070 = vpop.f32.mrf.mxu0
    %v5071 = vadd.f32 %v4882, %v5070
    %v5072 = vpop.f32.mrf.mxu0
    %v5073 = vpop.f32.mrf.mxu0
    %5074 = vdwg.mxu0
    %5075 = vmatprep.subr.bf16.mxu0 0
    %5076 = vmatpush1.bf16.msra.mxu0 0
    %5077 = vmatprep.subr.bf16.mxu0 0
    %5078 = vmatpush1.bf16.msra.mxu0 0
    %5079 = vmatprep.subr.bf16.mxu0 0
    %5080 = vmatpush1.bf16.msra.mxu0 0
    %5081 = vmatprep.subr.bf16.mxu0 0
    %5082 = vmatpush1.bf16.msra.mxu0 0
    %5083 = vmatprep.subr.bf16.mxu0 0
    %5084 = vmatpush1.bf16.msra.mxu0 0
    %5085 = vmatprep.subr.bf16.mxu0 %v4898
    %5086 = vmatpush1.bf16.msra.mxu0 %v4895
    %5087 = vmatprep.subr.bf16.mxu0 %v4735
    %5088 = vmatpush1.bf16.msra.mxu0 %v4732
    %5089 = vmatprep.subr.bf16.mxu0 %v4309
    %5090 = vmatpush1.bf16.msra.mxu0 %v4306
    %5091 = vmatprep.subr.bf16.mxu0 0
    %5092 = vmatpush2.bf16.msra.mxu0 0
    %5093 = vmatprep.subr.bf16.mxu0 0
    %5094 = vmatpush2.bf16.msra.mxu0 0
    %5095 = vmatprep.subr.bf16.mxu0 0
    %5096 = vmatpush2.bf16.msra.mxu0 0
    %5097 = vmatprep.subr.bf16.mxu0 0
    %5098 = vmatpush2.bf16.msra.mxu0 0
    %5099 = vmatprep.subr.bf16.mxu0 0
    %5100 = vmatpush2.bf16.msra.mxu0 0
    %5101 = vmatprep.subr.bf16.mxu0 0
    %5102 = vmatpush2.bf16.msra.mxu0 0
    %5103 = vmatprep.subr.bf16.mxu0 0
    %5104 = vmatpush2.bf16.msra.mxu0 0
    %5105 = vmatprep.subr.bf16.mxu0 0
    %5106 = vmatpush2.bf16.msra.mxu0 0
    %5107 = vmatprep.mubr.bf16.mxu0 0
    %5108 = vmatmul.mubr.bf16.gmra.mxu0 %v4886
    %v5109 = vpop.f32.mrf.mxu0
    %v5110 = vadd.f32 %v4882, %v5109
    %v5111 = vpop.f32.mrf.mxu0
    %v5112 = vadd.f32 %v4882, %v5111
    %v5113 = vpop.f32.mrf.mxu0
    %v5114 = vpop.f32.mrf.mxu0
    %5115 = vdwg.mxu0
    %5116 = vmatprep.subr.bf16.mxu0 0
    %5117 = vmatpush1.bf16.msra.mxu0 0
    %5118 = vmatprep.subr.bf16.mxu0 0
    %5119 = vmatpush1.bf16.msra.mxu0 0
    %5120 = vmatprep.subr.bf16.mxu0 0
    %5121 = vmatpush1.bf16.msra.mxu0 0
    %5122 = vmatprep.subr.bf16.mxu0 0
    %5123 = vmatpush1.bf16.msra.mxu0 0
    %5124 = vmatprep.subr.bf16.mxu0 0
    %5125 = vmatpush1.bf16.msra.mxu0 0
    %5126 = vmatprep.subr.bf16.mxu0 %v4904
    %5127 = vmatpush1.bf16.msra.mxu0 %v4901
    %5128 = vmatprep.subr.bf16.mxu0 %v4741
    %5129 = vmatpush1.bf16.msra.mxu0 %v4738
    %5130 = vmatprep.subr.bf16.mxu0 %v4315
    %5131 = vmatpush1.bf16.msra.mxu0 %v4312
    %5132 = vmatprep.subr.bf16.mxu0 0
    %5133 = vmatpush2.bf16.msra.mxu0 0
    %5134 = vmatprep.subr.bf16.mxu0 0
    %5135 = vmatpush2.bf16.msra.mxu0 0
    %5136 = vmatprep.subr.bf16.mxu0 0
    %5137 = vmatpush2.bf16.msra.mxu0 0
    %5138 = vmatprep.subr.bf16.mxu0 0
    %5139 = vmatpush2.bf16.msra.mxu0 0
    %5140 = vmatprep.subr.bf16.mxu0 0
    %5141 = vmatpush2.bf16.msra.mxu0 0
    %5142 = vmatprep.subr.bf16.mxu0 0
    %5143 = vmatpush2.bf16.msra.mxu0 0
    %5144 = vmatprep.subr.bf16.mxu0 0
    %5145 = vmatpush2.bf16.msra.mxu0 0
    %5146 = vmatprep.subr.bf16.mxu0 0
    %5147 = vmatpush2.bf16.msra.mxu0 0
    %5148 = vmatprep.mubr.bf16.mxu0 0
    %5149 = vmatmul.mubr.bf16.gmra.mxu0 %v4886
    %v5150 = vpop.f32.mrf.mxu0
    %v5151 = vadd.f32 %v4882, %v5150
    %v5152 = vpop.f32.mrf.mxu0
    %v5153 = vadd.f32 %v4882, %v5152
    %v5154 = vpop.f32.mrf.mxu0
    %v5155 = vpop.f32.mrf.mxu0
    %5156 = vdwg.mxu0
    %5157 = vmatprep.subr.bf16.mxu0 0
    %5158 = vmatpush1.bf16.msra.mxu0 0
    %5159 = vmatprep.subr.bf16.mxu0 0
    %5160 = vmatpush1.bf16.msra.mxu0 0
    %5161 = vmatprep.subr.bf16.mxu0 0
    %5162 = vmatpush1.bf16.msra.mxu0 0
    %5163 = vmatprep.subr.bf16.mxu0 0
    %5164 = vmatpush1.bf16.msra.mxu0 0
    %5165 = vmatprep.subr.bf16.mxu0 0
    %5166 = vmatpush1.bf16.msra.mxu0 0
    %5167 = vmatprep.subr.bf16.mxu0 %v4910
    %5168 = vmatpush1.bf16.msra.mxu0 %v4907
    %5169 = vmatprep.subr.bf16.mxu0 %v4747
    %5170 = vmatpush1.bf16.msra.mxu0 %v4744
    %5171 = vmatprep.subr.bf16.mxu0 %v4321
    %5172 = vmatpush1.bf16.msra.mxu0 %v4318
    %5173 = vmatprep.subr.bf16.mxu0 0
    %5174 = vmatpush2.bf16.msra.mxu0 0
    %5175 = vmatprep.subr.bf16.mxu0 0
    %5176 = vmatpush2.bf16.msra.mxu0 0
    %5177 = vmatprep.subr.bf16.mxu0 0
    %5178 = vmatpush2.bf16.msra.mxu0 0
    %5179 = vmatprep.subr.bf16.mxu0 0
    %5180 = vmatpush2.bf16.msra.mxu0 0
    %5181 = vmatprep.subr.bf16.mxu0 0
    %5182 = vmatpush2.bf16.msra.mxu0 0
    %5183 = vmatprep.subr.bf16.mxu0 0
    %5184 = vmatpush2.bf16.msra.mxu0 0
    %5185 = vmatprep.subr.bf16.mxu0 0
    %5186 = vmatpush2.bf16.msra.mxu0 0
    %5187 = vmatprep.subr.bf16.mxu0 0
    %5188 = vmatpush2.bf16.msra.mxu0 0
    %5189 = vmatprep.mubr.bf16.mxu0 0
    %5190 = vmatmul.mubr.bf16.gmra.mxu0 %v4886
    %v5191 = vpop.f32.mrf.mxu0
    %v5192 = vadd.f32 %v4882, %v5191
    %v5193 = vpop.f32.mrf.mxu0
    %v5194 = vadd.f32 %v4882, %v5193
    %v5195 = vpop.f32.mrf.mxu0
    %v5196 = vpop.f32.mrf.mxu0
    %5197 = vdwg.mxu0
    %5198 = vmatprep.subr.bf16.mxu0 0
    %5199 = vmatpush1.bf16.msra.mxu0 0
    %5200 = vmatprep.subr.bf16.mxu0 0
    %5201 = vmatpush1.bf16.msra.mxu0 0
    %5202 = vmatprep.subr.bf16.mxu0 0
    %5203 = vmatpush1.bf16.msra.mxu0 0
    %5204 = vmatprep.subr.bf16.mxu0 0
    %5205 = vmatpush1.bf16.msra.mxu0 0
    %5206 = vmatprep.subr.bf16.mxu0 0
    %5207 = vmatpush1.bf16.msra.mxu0 0
    %5208 = vmatprep.subr.bf16.mxu0 %v4916
    %5209 = vmatpush1.bf16.msra.mxu0 %v4913
    %5210 = vmatprep.subr.bf16.mxu0 %v4753
    %5211 = vmatpush1.bf16.msra.mxu0 %v4750
    %5212 = vmatprep.subr.bf16.mxu0 %v4327
    %5213 = vmatpush1.bf16.msra.mxu0 %v4324
    %5214 = vmatprep.subr.bf16.mxu0 0
    %5215 = vmatpush2.bf16.msra.mxu0 0
    %5216 = vmatprep.subr.bf16.mxu0 0
    %5217 = vmatpush2.bf16.msra.mxu0 0
    %5218 = vmatprep.subr.bf16.mxu0 0
    %5219 = vmatpush2.bf16.msra.mxu0 0
    %5220 = vmatprep.subr.bf16.mxu0 0
    %5221 = vmatpush2.bf16.msra.mxu0 0
    %5222 = vmatprep.subr.bf16.mxu0 0
    %5223 = vmatpush2.bf16.msra.mxu0 0
    %5224 = vmatprep.subr.bf16.mxu0 0
    %5225 = vmatpush2.bf16.msra.mxu0 0
    %5226 = vmatprep.subr.bf16.mxu0 0
    %5227 = vmatpush2.bf16.msra.mxu0 0
    %5228 = vmatprep.subr.bf16.mxu0 0
    %5229 = vmatpush2.bf16.msra.mxu0 0
    %5230 = vmatprep.mubr.bf16.mxu0 0
    %5231 = vmatmul.mubr.bf16.gmra.mxu0 %v4886
    %v5232 = vpop.f32.mrf.mxu0
    %v5233 = vadd.f32 %v4882, %v5232
    %v5234 = vpop.f32.mrf.mxu0
    %v5235 = vadd.f32 %v4882, %v5234
    %v5236 = vpop.f32.mrf.mxu0
    %v5237 = vpop.f32.mrf.mxu0
    %5238 = vdwg.mxu0
    %5239 = vmatprep.subr.bf16.mxu0 0
    %5240 = vmatpush1.bf16.msra.mxu0 0
    %5241 = vmatprep.subr.bf16.mxu0 0
    %5242 = vmatpush1.bf16.msra.mxu0 0
    %5243 = vmatprep.subr.bf16.mxu0 0
    %5244 = vmatpush1.bf16.msra.mxu0 0
    %5245 = vmatprep.subr.bf16.mxu0 0
    %5246 = vmatpush1.bf16.msra.mxu0 0
    %5247 = vmatprep.subr.bf16.mxu0 0
    %5248 = vmatpush1.bf16.msra.mxu0 0
    %5249 = vmatprep.subr.bf16.mxu0 %v4922
    %5250 = vmatpush1.bf16.msra.mxu0 %v4919
    %5251 = vmatprep.subr.bf16.mxu0 %v4759
    %5252 = vmatpush1.bf16.msra.mxu0 %v4756
    %5253 = vmatprep.subr.bf16.mxu0 %v4333
    %5254 = vmatpush1.bf16.msra.mxu0 %v4330
    %5255 = vmatprep.subr.bf16.mxu0 0
    %5256 = vmatpush2.bf16.msra.mxu0 0
    %5257 = vmatprep.subr.bf16.mxu0 0
    %5258 = vmatpush2.bf16.msra.mxu0 0
    %5259 = vmatprep.subr.bf16.mxu0 0
    %5260 = vmatpush2.bf16.msra.mxu0 0
    %5261 = vmatprep.subr.bf16.mxu0 0
    %5262 = vmatpush2.bf16.msra.mxu0 0
    %5263 = vmatprep.subr.bf16.mxu0 0
    %5264 = vmatpush2.bf16.msra.mxu0 0
    %5265 = vmatprep.subr.bf16.mxu0 0
    %5266 = vmatpush2.bf16.msra.mxu0 0
    %5267 = vmatprep.subr.bf16.mxu0 0
    %5268 = vmatpush2.bf16.msra.mxu0 0
    %5269 = vmatprep.subr.bf16.mxu0 0
    %5270 = vmatpush2.bf16.msra.mxu0 0
    %5271 = vmatprep.mubr.bf16.mxu0 0
    %5272 = vmatmul.mubr.bf16.gmra.mxu0 %v4886
    %v5273 = vpop.f32.mrf.mxu0
    %v5274 = vadd.f32 %v4882, %v5273
    %v5275 = vpop.f32.mrf.mxu0
    %v5276 = vadd.f32 %v4882, %v5275
    %v5277 = vpop.f32.mrf.mxu0
    %v5278 = vpop.f32.mrf.mxu0
    %5279 = vdwg.mxu0
    %5280 = vmatprep.subr.bf16.mxu0 0
    %5281 = vmatpush1.bf16.msra.mxu0 0
    %5282 = vmatprep.subr.bf16.mxu0 0
    %5283 = vmatpush1.bf16.msra.mxu0 0
    %5284 = vmatprep.subr.bf16.mxu0 0
    %5285 = vmatpush1.bf16.msra.mxu0 0
    %5286 = vmatprep.subr.bf16.mxu0 0
    %5287 = vmatpush1.bf16.msra.mxu0 0
    %5288 = vmatprep.subr.bf16.mxu0 0
    %5289 = vmatpush1.bf16.msra.mxu0 0
    %5290 = vmatprep.subr.bf16.mxu0 %v4928
    %5291 = vmatpush1.bf16.msra.mxu0 %v4925
    %5292 = vmatprep.subr.bf16.mxu0 %v4765
    %5293 = vmatpush1.bf16.msra.mxu0 %v4762
    %5294 = vmatprep.subr.bf16.mxu0 %v4339
    %5295 = vmatpush1.bf16.msra.mxu0 %v4336
    %5296 = vmatprep.subr.bf16.mxu0 0
    %5297 = vmatpush2.bf16.msra.mxu0 0
    %5298 = vmatprep.subr.bf16.mxu0 0
    %5299 = vmatpush2.bf16.msra.mxu0 0
    %5300 = vmatprep.subr.bf16.mxu0 0
    %5301 = vmatpush2.bf16.msra.mxu0 0
    %5302 = vmatprep.subr.bf16.mxu0 0
    %5303 = vmatpush2.bf16.msra.mxu0 0
    %5304 = vmatprep.subr.bf16.mxu0 0
    %5305 = vmatpush2.bf16.msra.mxu0 0
    %5306 = vmatprep.subr.bf16.mxu0 0
    %5307 = vmatpush2.bf16.msra.mxu0 0
    %5308 = vmatprep.subr.bf16.mxu0 0
    %5309 = vmatpush2.bf16.msra.mxu0 0
    %5310 = vmatprep.subr.bf16.mxu0 0
    %5311 = vmatpush2.bf16.msra.mxu0 0
    %5312 = vmatprep.mubr.bf16.mxu0 0
    %5313 = vmatmul.mubr.bf16.gmra.mxu0 %v4886
    %v5314 = vpop.f32.mrf.mxu0
    %v5315 = vadd.f32 %v4882, %v5314
    %v5316 = vpop.f32.mrf.mxu0
    %v5317 = vadd.f32 %v4882, %v5316
    %v5318 = vpop.f32.mrf.mxu0
    %v5319 = vpop.f32.mrf.mxu0
    %5320 = vdwg.mxu0
    %5321 = vmatprep.subr.bf16.mxu0 0
    %5322 = vmatpush1.bf16.msra.mxu0 0
    %5323 = vmatprep.subr.bf16.mxu0 0
    %5324 = vmatpush1.bf16.msra.mxu0 0
    %5325 = vmatprep.subr.bf16.mxu0 0
    %5326 = vmatpush1.bf16.msra.mxu0 0
    %5327 = vmatprep.subr.bf16.mxu0 0
    %5328 = vmatpush1.bf16.msra.mxu0 0
    %5329 = vmatprep.subr.bf16.mxu0 0
    %5330 = vmatpush1.bf16.msra.mxu0 0
    %5331 = vmatprep.subr.bf16.mxu0 %v4934
    %5332 = vmatpush1.bf16.msra.mxu0 %v4931
    %5333 = vmatprep.subr.bf16.mxu0 %v4771
    %5334 = vmatpush1.bf16.msra.mxu0 %v4768
    %5335 = vmatprep.subr.bf16.mxu0 %v4345
    %5336 = vmatpush1.bf16.msra.mxu0 %v4342
    %5337 = vmatprep.subr.bf16.mxu0 0
    %5338 = vmatpush2.bf16.msra.mxu0 0
    %5339 = vmatprep.subr.bf16.mxu0 0
    %5340 = vmatpush2.bf16.msra.mxu0 0
    %5341 = vmatprep.subr.bf16.mxu0 0
    %5342 = vmatpush2.bf16.msra.mxu0 0
    %5343 = vmatprep.subr.bf16.mxu0 0
    %5344 = vmatpush2.bf16.msra.mxu0 0
    %5345 = vmatprep.subr.bf16.mxu0 0
    %5346 = vmatpush2.bf16.msra.mxu0 0
    %5347 = vmatprep.subr.bf16.mxu0 0
    %5348 = vmatpush2.bf16.msra.mxu0 0
    %5349 = vmatprep.subr.bf16.mxu0 0
    %5350 = vmatpush2.bf16.msra.mxu0 0
    %5351 = vmatprep.subr.bf16.mxu0 0
    %5352 = vmatpush2.bf16.msra.mxu0 0
    %5353 = vmatprep.mubr.bf16.mxu0 0
    %5354 = vmatmul.mubr.bf16.gmra.mxu0 %v4886
    %v5355 = vpop.f32.mrf.mxu0
    %v5356 = vadd.f32 %v4882, %v5355
    %v5357 = vpop.f32.mrf.mxu0
    %v5358 = vadd.f32 %v4882, %v5357
    %v5359 = vpop.f32.mrf.mxu0
    %v5360 = vpop.f32.mrf.mxu0
    %5361 = vdwg.mxu0
    %5362 = vmatprep.subr.bf16.mxu0 0
    %5363 = vmatpush1.bf16.msra.mxu0 0
    %5364 = vmatprep.subr.bf16.mxu0 0
    %5365 = vmatpush1.bf16.msra.mxu0 0
    %5366 = vmatprep.subr.bf16.mxu0 0
    %5367 = vmatpush1.bf16.msra.mxu0 0
    %5368 = vmatprep.subr.bf16.mxu0 0
    %5369 = vmatpush1.bf16.msra.mxu0 0
    %5370 = vmatprep.subr.bf16.mxu0 0
    %5371 = vmatpush1.bf16.msra.mxu0 0
    %5372 = vmatprep.subr.bf16.mxu0 %v4940
    %5373 = vmatpush1.bf16.msra.mxu0 %v4937
    %5374 = vmatprep.subr.bf16.mxu0 %v4777
    %5375 = vmatpush1.bf16.msra.mxu0 %v4774
    %5376 = vmatprep.subr.bf16.mxu0 %v4351
    %5377 = vmatpush1.bf16.msra.mxu0 %v4348
    %5378 = vmatprep.subr.bf16.mxu0 0
    %5379 = vmatpush2.bf16.msra.mxu0 0
    %5380 = vmatprep.subr.bf16.mxu0 0
    %5381 = vmatpush2.bf16.msra.mxu0 0
    %5382 = vmatprep.subr.bf16.mxu0 0
    %5383 = vmatpush2.bf16.msra.mxu0 0
    %5384 = vmatprep.subr.bf16.mxu0 0
    %5385 = vmatpush2.bf16.msra.mxu0 0
    %5386 = vmatprep.subr.bf16.mxu0 0
    %5387 = vmatpush2.bf16.msra.mxu0 0
    %5388 = vmatprep.subr.bf16.mxu0 0
    %5389 = vmatpush2.bf16.msra.mxu0 0
    %5390 = vmatprep.subr.bf16.mxu0 0
    %5391 = vmatpush2.bf16.msra.mxu0 0
    %5392 = vmatprep.subr.bf16.mxu0 0
    %5393 = vmatpush2.bf16.msra.mxu0 0
    %5394 = vmatprep.mubr.bf16.mxu0 0
    %5395 = vmatmul.mubr.bf16.gmra.mxu0 %v4886
    %v5396 = vpop.f32.mrf.mxu0
    %v5397 = vadd.f32 %v4882, %v5396
    %v5398 = vpop.f32.mrf.mxu0
    %v5399 = vadd.f32 %v4882, %v5398
    %v5400 = vpop.f32.mrf.mxu0
    %v5401 = vpop.f32.mrf.mxu0
    %5402 = vdwg.mxu0
    %5403 = vmatprep.subr.bf16.mxu0 0
    %5404 = vmatpush1.bf16.msra.mxu0 0
    %5405 = vmatprep.subr.bf16.mxu0 0
    %5406 = vmatpush1.bf16.msra.mxu0 0
    %5407 = vmatprep.subr.bf16.mxu0 0
    %5408 = vmatpush1.bf16.msra.mxu0 0
    %5409 = vmatprep.subr.bf16.mxu0 0
    %5410 = vmatpush1.bf16.msra.mxu0 0
    %5411 = vmatprep.subr.bf16.mxu0 0
    %5412 = vmatpush1.bf16.msra.mxu0 0
    %5413 = vmatprep.subr.bf16.mxu0 %v4946
    %5414 = vmatpush1.bf16.msra.mxu0 %v4943
    %5415 = vmatprep.subr.bf16.mxu0 %v4783
    %5416 = vmatpush1.bf16.msra.mxu0 %v4780
    %5417 = vmatprep.subr.bf16.mxu0 %v4357
    %5418 = vmatpush1.bf16.msra.mxu0 %v4354
    %5419 = vmatprep.subr.bf16.mxu0 0
    %5420 = vmatpush2.bf16.msra.mxu0 0
    %5421 = vmatprep.subr.bf16.mxu0 0
    %5422 = vmatpush2.bf16.msra.mxu0 0
    %5423 = vmatprep.subr.bf16.mxu0 0
    %5424 = vmatpush2.bf16.msra.mxu0 0
    %5425 = vmatprep.subr.bf16.mxu0 0
    %5426 = vmatpush2.bf16.msra.mxu0 0
    %5427 = vmatprep.subr.bf16.mxu0 0
    %5428 = vmatpush2.bf16.msra.mxu0 0
    %5429 = vmatprep.subr.bf16.mxu0 0
    %5430 = vmatpush2.bf16.msra.mxu0 0
    %5431 = vmatprep.subr.bf16.mxu0 0
    %5432 = vmatpush2.bf16.msra.mxu0 0
    %5433 = vmatprep.subr.bf16.mxu0 0
    %5434 = vmatpush2.bf16.msra.mxu0 0
    %5435 = vmatprep.mubr.bf16.mxu0 0
    %5436 = vmatmul.mubr.bf16.gmra.mxu0 %v4886
    %v5437 = vpop.f32.mrf.mxu0
    %v5438 = vadd.f32 %v4882, %v5437
    %v5439 = vpop.f32.mrf.mxu0
    %v5440 = vadd.f32 %v4882, %v5439
    %v5441 = vpop.f32.mrf.mxu0
    %v5442 = vpop.f32.mrf.mxu0
    %5443 = vdwg.mxu0
    %5444 = vmatprep.subr.bf16.mxu0 0
    %5445 = vmatpush1.bf16.msra.mxu0 0
    %5446 = vmatprep.subr.bf16.mxu0 0
    %5447 = vmatpush1.bf16.msra.mxu0 0
    %5448 = vmatprep.subr.bf16.mxu0 0
    %5449 = vmatpush1.bf16.msra.mxu0 0
    %5450 = vmatprep.subr.bf16.mxu0 0
    %5451 = vmatpush1.bf16.msra.mxu0 0
    %5452 = vmatprep.subr.bf16.mxu0 0
    %5453 = vmatpush1.bf16.msra.mxu0 0
    %5454 = vmatprep.subr.bf16.mxu0 %v4952
    %5455 = vmatpush1.bf16.msra.mxu0 %v4949
    %5456 = vmatprep.subr.bf16.mxu0 %v4789
    %5457 = vmatpush1.bf16.msra.mxu0 %v4786
    %5458 = vmatprep.subr.bf16.mxu0 %v4363
    %5459 = vmatpush1.bf16.msra.mxu0 %v4360
    %5460 = vmatprep.subr.bf16.mxu0 0
    %5461 = vmatpush2.bf16.msra.mxu0 0
    %5462 = vmatprep.subr.bf16.mxu0 0
    %5463 = vmatpush2.bf16.msra.mxu0 0
    %5464 = vmatprep.subr.bf16.mxu0 0
    %5465 = vmatpush2.bf16.msra.mxu0 0
    %5466 = vmatprep.subr.bf16.mxu0 0
    %5467 = vmatpush2.bf16.msra.mxu0 0
    %5468 = vmatprep.subr.bf16.mxu0 0
    %5469 = vmatpush2.bf16.msra.mxu0 0
    %5470 = vmatprep.subr.bf16.mxu0 0
    %5471 = vmatpush2.bf16.msra.mxu0 0
    %5472 = vmatprep.subr.bf16.mxu0 0
    %5473 = vmatpush2.bf16.msra.mxu0 0
    %5474 = vmatprep.subr.bf16.mxu0 0
    %5475 = vmatpush2.bf16.msra.mxu0 0
    %5476 = vmatprep.mubr.bf16.mxu0 0
    %5477 = vmatmul.mubr.bf16.gmra.mxu0 %v4886
    %v5478 = vpop.f32.mrf.mxu0
    %v5479 = vadd.f32 %v4882, %v5478
    %v5480 = vpop.f32.mrf.mxu0
    %v5481 = vadd.f32 %v4882, %v5480
    %v5482 = vpop.f32.mrf.mxu0
    %v5483 = vpop.f32.mrf.mxu0
    %5484 = vdwg.mxu0
    %5485 = vmatprep.subr.bf16.mxu0 0
    %5486 = vmatpush1.bf16.msra.mxu0 0
    %5487 = vmatprep.subr.bf16.mxu0 0
    %5488 = vmatpush1.bf16.msra.mxu0 0
    %5489 = vmatprep.subr.bf16.mxu0 0
    %5490 = vmatpush1.bf16.msra.mxu0 0
    %5491 = vmatprep.subr.bf16.mxu0 0
    %5492 = vmatpush1.bf16.msra.mxu0 0
    %5493 = vmatprep.subr.bf16.mxu0 0
    %5494 = vmatpush1.bf16.msra.mxu0 0
    %5495 = vmatprep.subr.bf16.mxu0 %v4958
    %5496 = vmatpush1.bf16.msra.mxu0 %v4955
    %5497 = vmatprep.subr.bf16.mxu0 %v4795
    %5498 = vmatpush1.bf16.msra.mxu0 %v4792
    %5499 = vmatprep.subr.bf16.mxu0 %v4369
    %5500 = vmatpush1.bf16.msra.mxu0 %v4366
    %5501 = vmatprep.subr.bf16.mxu0 0
    %5502 = vmatpush2.bf16.msra.mxu0 0
    %5503 = vmatprep.subr.bf16.mxu0 0
    %5504 = vmatpush2.bf16.msra.mxu0 0
    %5505 = vmatprep.subr.bf16.mxu0 0
    %5506 = vmatpush2.bf16.msra.mxu0 0
    %5507 = vmatprep.subr.bf16.mxu0 0
    %5508 = vmatpush2.bf16.msra.mxu0 0
    %5509 = vmatprep.subr.bf16.mxu0 0
    %5510 = vmatpush2.bf16.msra.mxu0 0
    %5511 = vmatprep.subr.bf16.mxu0 0
    %5512 = vmatpush2.bf16.msra.mxu0 0
    %5513 = vmatprep.subr.bf16.mxu0 0
    %5514 = vmatpush2.bf16.msra.mxu0 0
    %5515 = vmatprep.subr.bf16.mxu0 0
    %5516 = vmatpush2.bf16.msra.mxu0 0
    %5517 = vmatprep.mubr.bf16.mxu0 0
    %5518 = vmatmul.mubr.bf16.gmra.mxu0 %v4886
    %v5519 = vpop.f32.mrf.mxu0
    %v5520 = vadd.f32 %v4882, %v5519
    %v5521 = vpop.f32.mrf.mxu0
    %v5522 = vadd.f32 %v4882, %v5521
    %v5523 = vpop.f32.mrf.mxu0
    %v5524 = vpop.f32.mrf.mxu0
    %5525 = vdwg.mxu0
    %5526 = vmatprep.subr.bf16.mxu0 0
    %5527 = vmatpush1.bf16.msra.mxu0 0
    %5528 = vmatprep.subr.bf16.mxu0 0
    %5529 = vmatpush1.bf16.msra.mxu0 0
    %5530 = vmatprep.subr.bf16.mxu0 0
    %5531 = vmatpush1.bf16.msra.mxu0 0
    %5532 = vmatprep.subr.bf16.mxu0 0
    %5533 = vmatpush1.bf16.msra.mxu0 0
    %5534 = vmatprep.subr.bf16.mxu0 0
    %5535 = vmatpush1.bf16.msra.mxu0 0
    %5536 = vmatprep.subr.bf16.mxu0 %v4964
    %5537 = vmatpush1.bf16.msra.mxu0 %v4961
    %5538 = vmatprep.subr.bf16.mxu0 %v4801
    %5539 = vmatpush1.bf16.msra.mxu0 %v4798
    %5540 = vmatprep.subr.bf16.mxu0 %v4375
    %5541 = vmatpush1.bf16.msra.mxu0 %v4372
    %5542 = vmatprep.subr.bf16.mxu0 0
    %5543 = vmatpush2.bf16.msra.mxu0 0
    %5544 = vmatprep.subr.bf16.mxu0 0
    %5545 = vmatpush2.bf16.msra.mxu0 0
    %5546 = vmatprep.subr.bf16.mxu0 0
    %5547 = vmatpush2.bf16.msra.mxu0 0
    %5548 = vmatprep.subr.bf16.mxu0 0
    %5549 = vmatpush2.bf16.msra.mxu0 0
    %5550 = vmatprep.subr.bf16.mxu0 0
    %5551 = vmatpush2.bf16.msra.mxu0 0
    %5552 = vmatprep.subr.bf16.mxu0 0
    %5553 = vmatpush2.bf16.msra.mxu0 0
    %5554 = vmatprep.subr.bf16.mxu0 0
    %5555 = vmatpush2.bf16.msra.mxu0 0
    %5556 = vmatprep.subr.bf16.mxu0 0
    %5557 = vmatpush2.bf16.msra.mxu0 0
    %5558 = vmatprep.mubr.bf16.mxu0 0
    %5559 = vmatmul.mubr.bf16.gmra.mxu0 %v4886
    %v5560 = vpop.f32.mrf.mxu0
    %v5561 = vadd.f32 %v4882, %v5560
    %v5562 = vpop.f32.mrf.mxu0
    %v5563 = vadd.f32 %v4882, %v5562
    %v5564 = vpop.f32.mrf.mxu0
    %v5565 = vpop.f32.mrf.mxu0
    %5566 = vdwg.mxu0
    %5567 = vmatprep.subr.bf16.mxu0 0
    %5568 = vmatpush1.bf16.msra.mxu0 0
    %5569 = vmatprep.subr.bf16.mxu0 0
    %5570 = vmatpush1.bf16.msra.mxu0 0
    %5571 = vmatprep.subr.bf16.mxu0 0
    %5572 = vmatpush1.bf16.msra.mxu0 0
    %5573 = vmatprep.subr.bf16.mxu0 0
    %5574 = vmatpush1.bf16.msra.mxu0 0
    %5575 = vmatprep.subr.bf16.mxu0 0
    %5576 = vmatpush1.bf16.msra.mxu0 0
    %5577 = vmatprep.subr.bf16.mxu0 %v4970
    %5578 = vmatpush1.bf16.msra.mxu0 %v4967
    %5579 = vmatprep.subr.bf16.mxu0 %v4807
    %5580 = vmatpush1.bf16.msra.mxu0 %v4804
    %5581 = vmatprep.subr.bf16.mxu0 %v4381
    %5582 = vmatpush1.bf16.msra.mxu0 %v4378
    %5583 = vmatprep.subr.bf16.mxu0 0
    %5584 = vmatpush2.bf16.msra.mxu0 0
    %5585 = vmatprep.subr.bf16.mxu0 0
    %5586 = vmatpush2.bf16.msra.mxu0 0
    %5587 = vmatprep.subr.bf16.mxu0 0
    %5588 = vmatpush2.bf16.msra.mxu0 0
    %5589 = vmatprep.subr.bf16.mxu0 0
    %5590 = vmatpush2.bf16.msra.mxu0 0
    %5591 = vmatprep.subr.bf16.mxu0 0
    %5592 = vmatpush2.bf16.msra.mxu0 0
    %5593 = vmatprep.subr.bf16.mxu0 0
    %5594 = vmatpush2.bf16.msra.mxu0 0
    %5595 = vmatprep.subr.bf16.mxu0 0
    %5596 = vmatpush2.bf16.msra.mxu0 0
    %5597 = vmatprep.subr.bf16.mxu0 0
    %5598 = vmatpush2.bf16.msra.mxu0 0
    %5599 = vmatprep.mubr.bf16.mxu0 0
    %5600 = vmatmul.mubr.bf16.gmra.mxu0 %v4886
    %v5601 = vpop.f32.mrf.mxu0
    %v5602 = vadd.f32 %v4882, %v5601
    %v5603 = vpop.f32.mrf.mxu0
    %v5604 = vadd.f32 %v4882, %v5603
    %v5605 = vpop.f32.mrf.mxu0
    %v5606 = vpop.f32.mrf.mxu0
    %5607 = vdwg.mxu0
    %5608 = vmatprep.subr.bf16.mxu0 0
    %5609 = vmatpush1.bf16.msra.mxu0 0
    %5610 = vmatprep.subr.bf16.mxu0 0
    %5611 = vmatpush1.bf16.msra.mxu0 0
    %5612 = vmatprep.subr.bf16.mxu0 0
    %5613 = vmatpush1.bf16.msra.mxu0 0
    %5614 = vmatprep.subr.bf16.mxu0 0
    %5615 = vmatpush1.bf16.msra.mxu0 0
    %5616 = vmatprep.subr.bf16.mxu0 0
    %5617 = vmatpush1.bf16.msra.mxu0 0
    %5618 = vmatprep.subr.bf16.mxu0 %v4976
    %5619 = vmatpush1.bf16.msra.mxu0 %v4973
    %5620 = vmatprep.subr.bf16.mxu0 %v4813
    %5621 = vmatpush1.bf16.msra.mxu0 %v4810
    %5622 = vmatprep.subr.bf16.mxu0 %v4387
    %5623 = vmatpush1.bf16.msra.mxu0 %v4384
    %5624 = vmatprep.subr.bf16.mxu0 0
    %5625 = vmatpush2.bf16.msra.mxu0 0
    %5626 = vmatprep.subr.bf16.mxu0 0
    %5627 = vmatpush2.bf16.msra.mxu0 0
    %5628 = vmatprep.subr.bf16.mxu0 0
    %5629 = vmatpush2.bf16.msra.mxu0 0
    %5630 = vmatprep.subr.bf16.mxu0 0
    %5631 = vmatpush2.bf16.msra.mxu0 0
    %5632 = vmatprep.subr.bf16.mxu0 0
    %5633 = vmatpush2.bf16.msra.mxu0 0
    %5634 = vmatprep.subr.bf16.mxu0 0
    %5635 = vmatpush2.bf16.msra.mxu0 0
    %5636 = vmatprep.subr.bf16.mxu0 0
    %5637 = vmatpush2.bf16.msra.mxu0 0
    %5638 = vmatprep.subr.bf16.mxu0 0
    %5639 = vmatpush2.bf16.msra.mxu0 0
    %5640 = vmatprep.mubr.bf16.mxu0 0
    %5641 = vmatmul.mubr.bf16.gmra.mxu0 %v4886
    %v5642 = vpop.f32.mrf.mxu0
    %v5643 = vadd.f32 %v4882, %v5642
    %v5644 = vpop.f32.mrf.mxu0
    %v5645 = vadd.f32 %v4882, %v5644
    %v5646 = vpop.f32.mrf.mxu0
    %v5647 = vpop.f32.mrf.mxu0
    %5648 = vdwg.mxu0
    %5649 = vmatprep.subr.bf16.mxu0 0
    %5650 = vmatpush1.bf16.msra.mxu0 0
    %5651 = vmatprep.subr.bf16.mxu0 0
    %5652 = vmatpush1.bf16.msra.mxu0 0
    %5653 = vmatprep.subr.bf16.mxu0 0
    %5654 = vmatpush1.bf16.msra.mxu0 0
    %5655 = vmatprep.subr.bf16.mxu0 0
    %5656 = vmatpush1.bf16.msra.mxu0 0
    %5657 = vmatprep.subr.bf16.mxu0 0
    %5658 = vmatpush1.bf16.msra.mxu0 0
    %5659 = vmatprep.subr.bf16.mxu0 %v4982
    %5660 = vmatpush1.bf16.msra.mxu0 %v4979
    %5661 = vmatprep.subr.bf16.mxu0 %v4819
    %5662 = vmatpush1.bf16.msra.mxu0 %v4816
    %5663 = vmatprep.subr.bf16.mxu0 %v4393
    %5664 = vmatpush1.bf16.msra.mxu0 %v4390
    %5665 = vmatprep.subr.bf16.mxu0 0
    %5666 = vmatpush2.bf16.msra.mxu0 0
    %5667 = vmatprep.subr.bf16.mxu0 0
    %5668 = vmatpush2.bf16.msra.mxu0 0
    %5669 = vmatprep.subr.bf16.mxu0 0
    %5670 = vmatpush2.bf16.msra.mxu0 0
    %5671 = vmatprep.subr.bf16.mxu0 0
    %5672 = vmatpush2.bf16.msra.mxu0 0
    %5673 = vmatprep.subr.bf16.mxu0 0
    %5674 = vmatpush2.bf16.msra.mxu0 0
    %5675 = vmatprep.subr.bf16.mxu0 0
    %5676 = vmatpush2.bf16.msra.mxu0 0
    %5677 = vmatprep.subr.bf16.mxu0 0
    %5678 = vmatpush2.bf16.msra.mxu0 0
    %5679 = vmatprep.subr.bf16.mxu0 0
    %5680 = vmatpush2.bf16.msra.mxu0 0
    %5681 = vmatprep.mubr.bf16.mxu0 0
    %5682 = vmatmul.mubr.bf16.gmra.mxu0 %v4886
    %v5683 = vpop.f32.mrf.mxu0
    %v5684 = vadd.f32 %v4882, %v5683
    %v5685 = vpop.f32.mrf.mxu0
    %v5686 = vadd.f32 %v4882, %v5685
    %v5687 = vpop.f32.mrf.mxu0
    %v5688 = vpop.f32.mrf.mxu0
    %5689 = vdwg.mxu0
    %5690 = vmatprep.subr.bf16.mxu0 0
    %5691 = vmatpush1.bf16.msra.mxu0 0
    %5692 = vmatprep.subr.bf16.mxu0 0
    %5693 = vmatpush1.bf16.msra.mxu0 0
    %5694 = vmatprep.subr.bf16.mxu0 0
    %5695 = vmatpush1.bf16.msra.mxu0 0
    %5696 = vmatprep.subr.bf16.mxu0 0
    %5697 = vmatpush1.bf16.msra.mxu0 0
    %5698 = vmatprep.subr.bf16.mxu0 0
    %5699 = vmatpush1.bf16.msra.mxu0 0
    %5700 = vmatprep.subr.bf16.mxu0 %v4988
    %5701 = vmatpush1.bf16.msra.mxu0 %v4985
    %5702 = vmatprep.subr.bf16.mxu0 %v4825
    %5703 = vmatpush1.bf16.msra.mxu0 %v4822
    %5704 = vmatprep.subr.bf16.mxu0 %v4399
    %5705 = vmatpush1.bf16.msra.mxu0 %v4396
    %5706 = vmatprep.subr.bf16.mxu0 0
    %5707 = vmatpush2.bf16.msra.mxu0 0
    %5708 = vmatprep.subr.bf16.mxu0 0
    %5709 = vmatpush2.bf16.msra.mxu0 0
    %5710 = vmatprep.subr.bf16.mxu0 0
    %5711 = vmatpush2.bf16.msra.mxu0 0
    %5712 = vmatprep.subr.bf16.mxu0 0
    %5713 = vmatpush2.bf16.msra.mxu0 0
    %5714 = vmatprep.subr.bf16.mxu0 0
    %5715 = vmatpush2.bf16.msra.mxu0 0
    %5716 = vmatprep.subr.bf16.mxu0 0
    %5717 = vmatpush2.bf16.msra.mxu0 0
    %5718 = vmatprep.subr.bf16.mxu0 0
    %5719 = vmatpush2.bf16.msra.mxu0 0
    %5720 = vmatprep.subr.bf16.mxu0 0
    %5721 = vmatpush2.bf16.msra.mxu0 0
    %5722 = vmatprep.mubr.bf16.mxu0 0
    %5723 = vmatmul.mubr.bf16.gmra.mxu0 %v4886
    %v5724 = vpop.f32.mrf.mxu0
    %v5725 = vadd.f32 %v4882, %v5724
    %v5726 = vpop.f32.mrf.mxu0
    %v5727 = vadd.f32 %v4882, %v5726
    %v5728 = vpop.f32.mrf.mxu0
    %v5729 = vpop.f32.mrf.mxu0
    %5730 = vdwg.mxu0
    %5731 = vmatprep.subr.bf16.mxu0 0
    %5732 = vmatpush1.bf16.msra.mxu0 0
    %5733 = vmatprep.subr.bf16.mxu0 0
    %5734 = vmatpush1.bf16.msra.mxu0 0
    %5735 = vmatprep.subr.bf16.mxu0 0
    %5736 = vmatpush1.bf16.msra.mxu0 0
    %5737 = vmatprep.subr.bf16.mxu0 0
    %5738 = vmatpush1.bf16.msra.mxu0 0
    %5739 = vmatprep.subr.bf16.mxu0 0
    %5740 = vmatpush1.bf16.msra.mxu0 0
    %5741 = vmatprep.subr.bf16.mxu0 %v4994
    %5742 = vmatpush1.bf16.msra.mxu0 %v4991
    %5743 = vmatprep.subr.bf16.mxu0 %v4831
    %5744 = vmatpush1.bf16.msra.mxu0 %v4828
    %5745 = vmatprep.subr.bf16.mxu0 %v4405
    %5746 = vmatpush1.bf16.msra.mxu0 %v4402
    %5747 = vmatprep.subr.bf16.mxu0 0
    %5748 = vmatpush2.bf16.msra.mxu0 0
    %5749 = vmatprep.subr.bf16.mxu0 0
    %5750 = vmatpush2.bf16.msra.mxu0 0
    %5751 = vmatprep.subr.bf16.mxu0 0
    %5752 = vmatpush2.bf16.msra.mxu0 0
    %5753 = vmatprep.subr.bf16.mxu0 0
    %5754 = vmatpush2.bf16.msra.mxu0 0
    %5755 = vmatprep.subr.bf16.mxu0 0
    %5756 = vmatpush2.bf16.msra.mxu0 0
    %5757 = vmatprep.subr.bf16.mxu0 0
    %5758 = vmatpush2.bf16.msra.mxu0 0
    %5759 = vmatprep.subr.bf16.mxu0 0
    %5760 = vmatpush2.bf16.msra.mxu0 0
    %5761 = vmatprep.subr.bf16.mxu0 0
    %5762 = vmatpush2.bf16.msra.mxu0 0
    %5763 = vmatprep.mubr.bf16.mxu0 0
    %5764 = vmatmul.mubr.bf16.gmra.mxu0 %v4886
    %v5765 = vpop.f32.mrf.mxu0
    %v5766 = vadd.f32 %v4882, %v5765
    %v5767 = vpop.f32.mrf.mxu0
    %v5768 = vadd.f32 %v4882, %v5767
    %v5769 = vpop.f32.mrf.mxu0
    %v5770 = vpop.f32.mrf.mxu0
    %5771 = vdwg.mxu0
    %5772 = vmatprep.subr.bf16.mxu0 0
    %5773 = vmatpush1.bf16.msra.mxu0 0
    %5774 = vmatprep.subr.bf16.mxu0 0
    %5775 = vmatpush1.bf16.msra.mxu0 0
    %5776 = vmatprep.subr.bf16.mxu0 0
    %5777 = vmatpush1.bf16.msra.mxu0 0
    %5778 = vmatprep.subr.bf16.mxu0 0
    %5779 = vmatpush1.bf16.msra.mxu0 0
    %5780 = vmatprep.subr.bf16.mxu0 0
    %5781 = vmatpush1.bf16.msra.mxu0 0
    %5782 = vmatprep.subr.bf16.mxu0 %v5000
    %5783 = vmatpush1.bf16.msra.mxu0 %v4997
    %5784 = vmatprep.subr.bf16.mxu0 %v4837
    %5785 = vmatpush1.bf16.msra.mxu0 %v4834
    %5786 = vmatprep.subr.bf16.mxu0 %v4411
    %5787 = vmatpush1.bf16.msra.mxu0 %v4408
    %5788 = vmatprep.subr.bf16.mxu0 0
    %5789 = vmatpush2.bf16.msra.mxu0 0
    %5790 = vmatprep.subr.bf16.mxu0 0
    %5791 = vmatpush2.bf16.msra.mxu0 0
    %5792 = vmatprep.subr.bf16.mxu0 0
    %5793 = vmatpush2.bf16.msra.mxu0 0
    %5794 = vmatprep.subr.bf16.mxu0 0
    %5795 = vmatpush2.bf16.msra.mxu0 0
    %5796 = vmatprep.subr.bf16.mxu0 0
    %5797 = vmatpush2.bf16.msra.mxu0 0
    %5798 = vmatprep.subr.bf16.mxu0 0
    %5799 = vmatpush2.bf16.msra.mxu0 0
    %5800 = vmatprep.subr.bf16.mxu0 0
    %5801 = vmatpush2.bf16.msra.mxu0 0
    %5802 = vmatprep.subr.bf16.mxu0 0
    %5803 = vmatpush2.bf16.msra.mxu0 0
    %5804 = vmatprep.mubr.bf16.mxu0 0
    %5805 = vmatmul.mubr.bf16.gmra.mxu0 %v4886
    %v5806 = vpop.f32.mrf.mxu0
    %v5807 = vadd.f32 %v4882, %v5806
    %v5808 = vpop.f32.mrf.mxu0
    %v5809 = vadd.f32 %v4882, %v5808
    %v5810 = vpop.f32.mrf.mxu0
    %v5811 = vpop.f32.mrf.mxu0
    %5812 = vdwg.mxu0
    %5813 = vmatprep.subr.bf16.mxu0 0
    %5814 = vmatpush1.bf16.msra.mxu0 0
    %5815 = vmatprep.subr.bf16.mxu0 0
    %5816 = vmatpush1.bf16.msra.mxu0 0
    %5817 = vmatprep.subr.bf16.mxu0 0
    %5818 = vmatpush1.bf16.msra.mxu0 0
    %5819 = vmatprep.subr.bf16.mxu0 0
    %5820 = vmatpush1.bf16.msra.mxu0 0
    %5821 = vmatprep.subr.bf16.mxu0 0
    %5822 = vmatpush1.bf16.msra.mxu0 0
    %5823 = vmatprep.subr.bf16.mxu0 %v5006
    %5824 = vmatpush1.bf16.msra.mxu0 %v5003
    %5825 = vmatprep.subr.bf16.mxu0 %v4843
    %5826 = vmatpush1.bf16.msra.mxu0 %v4840
    %5827 = vmatprep.subr.bf16.mxu0 %v4417
    %5828 = vmatpush1.bf16.msra.mxu0 %v4414
    %5829 = vmatprep.subr.bf16.mxu0 0
    %5830 = vmatpush2.bf16.msra.mxu0 0
    %5831 = vmatprep.subr.bf16.mxu0 0
    %5832 = vmatpush2.bf16.msra.mxu0 0
    %5833 = vmatprep.subr.bf16.mxu0 0
    %5834 = vmatpush2.bf16.msra.mxu0 0
    %5835 = vmatprep.subr.bf16.mxu0 0
    %5836 = vmatpush2.bf16.msra.mxu0 0
    %5837 = vmatprep.subr.bf16.mxu0 0
    %5838 = vmatpush2.bf16.msra.mxu0 0
    %5839 = vmatprep.subr.bf16.mxu0 0
    %5840 = vmatpush2.bf16.msra.mxu0 0
    %5841 = vmatprep.subr.bf16.mxu0 0
    %5842 = vmatpush2.bf16.msra.mxu0 0
    %5843 = vmatprep.subr.bf16.mxu0 0
    %5844 = vmatpush2.bf16.msra.mxu0 0
    %5845 = vmatprep.mubr.bf16.mxu0 0
    %5846 = vmatmul.mubr.bf16.gmra.mxu0 %v4886
    %v5847 = vpop.f32.mrf.mxu0
    %v5848 = vadd.f32 %v4882, %v5847
    %v5849 = vpop.f32.mrf.mxu0
    %v5850 = vadd.f32 %v4882, %v5849
    %v5851 = vpop.f32.mrf.mxu0
    %v5852 = vpop.f32.mrf.mxu0
    %5853 = vdwg.mxu0
    %5854 = vmatprep.subr.bf16.mxu0 0
    %5855 = vmatpush1.bf16.msra.mxu0 0
    %5856 = vmatprep.subr.bf16.mxu0 0
    %5857 = vmatpush1.bf16.msra.mxu0 0
    %5858 = vmatprep.subr.bf16.mxu0 0
    %5859 = vmatpush1.bf16.msra.mxu0 0
    %5860 = vmatprep.subr.bf16.mxu0 0
    %5861 = vmatpush1.bf16.msra.mxu0 0
    %5862 = vmatprep.subr.bf16.mxu0 0
    %5863 = vmatpush1.bf16.msra.mxu0 0
    %5864 = vmatprep.subr.bf16.mxu0 %v5012
    %5865 = vmatpush1.bf16.msra.mxu0 %v5009
    %5866 = vmatprep.subr.bf16.mxu0 %v4849
    %5867 = vmatpush1.bf16.msra.mxu0 %v4846
    %5868 = vmatprep.subr.bf16.mxu0 %v4423
    %5869 = vmatpush1.bf16.msra.mxu0 %v4420
    %5870 = vmatprep.subr.bf16.mxu0 0
    %5871 = vmatpush2.bf16.msra.mxu0 0
    %5872 = vmatprep.subr.bf16.mxu0 0
    %5873 = vmatpush2.bf16.msra.mxu0 0
    %5874 = vmatprep.subr.bf16.mxu0 0
    %5875 = vmatpush2.bf16.msra.mxu0 0
    %5876 = vmatprep.subr.bf16.mxu0 0
    %5877 = vmatpush2.bf16.msra.mxu0 0
    %5878 = vmatprep.subr.bf16.mxu0 0
    %5879 = vmatpush2.bf16.msra.mxu0 0
    %5880 = vmatprep.subr.bf16.mxu0 0
    %5881 = vmatpush2.bf16.msra.mxu0 0
    %5882 = vmatprep.subr.bf16.mxu0 0
    %5883 = vmatpush2.bf16.msra.mxu0 0
    %5884 = vmatprep.subr.bf16.mxu0 0
    %5885 = vmatpush2.bf16.msra.mxu0 0
    %5886 = vmatprep.mubr.bf16.mxu0 0
    %5887 = vmatmul.mubr.bf16.gmra.mxu0 %v4886
    %v5888 = vpop.f32.mrf.mxu0
    %v5889 = vadd.f32 %v4882, %v5888
    %v5890 = vpop.f32.mrf.mxu0
    %v5891 = vadd.f32 %v4882, %v5890
    %v5892 = vpop.f32.mrf.mxu0
    %v5893 = vpop.f32.mrf.mxu0
    %5894 = vdwg.mxu0
    %5895 = vmatprep.subr.bf16.mxu0 0
    %5896 = vmatpush1.bf16.msra.mxu0 0
    %5897 = vmatprep.subr.bf16.mxu0 0
    %5898 = vmatpush1.bf16.msra.mxu0 0
    %5899 = vmatprep.subr.bf16.mxu0 0
    %5900 = vmatpush1.bf16.msra.mxu0 0
    %5901 = vmatprep.subr.bf16.mxu0 0
    %5902 = vmatpush1.bf16.msra.mxu0 0
    %5903 = vmatprep.subr.bf16.mxu0 0
    %5904 = vmatpush1.bf16.msra.mxu0 0
    %5905 = vmatprep.subr.bf16.mxu0 %v5018
    %5906 = vmatpush1.bf16.msra.mxu0 %v5015
    %5907 = vmatprep.subr.bf16.mxu0 %v4855
    %5908 = vmatpush1.bf16.msra.mxu0 %v4852
    %5909 = vmatprep.subr.bf16.mxu0 %v4429
    %5910 = vmatpush1.bf16.msra.mxu0 %v4426
    %5911 = vmatprep.subr.bf16.mxu0 0
    %5912 = vmatpush2.bf16.msra.mxu0 0
    %5913 = vmatprep.subr.bf16.mxu0 0
    %5914 = vmatpush2.bf16.msra.mxu0 0
    %5915 = vmatprep.subr.bf16.mxu0 0
    %5916 = vmatpush2.bf16.msra.mxu0 0
    %5917 = vmatprep.subr.bf16.mxu0 0
    %5918 = vmatpush2.bf16.msra.mxu0 0
    %5919 = vmatprep.subr.bf16.mxu0 0
    %5920 = vmatpush2.bf16.msra.mxu0 0
    %5921 = vmatprep.subr.bf16.mxu0 0
    %5922 = vmatpush2.bf16.msra.mxu0 0
    %5923 = vmatprep.subr.bf16.mxu0 0
    %5924 = vmatpush2.bf16.msra.mxu0 0
    %5925 = vmatprep.subr.bf16.mxu0 0
    %5926 = vmatpush2.bf16.msra.mxu0 0
    %5927 = vmatprep.mubr.bf16.mxu0 0
    %5928 = vmatmul.mubr.bf16.gmra.mxu0 %v4886
    %v5929 = vpop.f32.mrf.mxu0
    %v5930 = vadd.f32 %v4882, %v5929
    %v5931 = vpop.f32.mrf.mxu0
    %v5932 = vadd.f32 %v4882, %v5931
    %v5933 = vpop.f32.mrf.mxu0
    %v5934 = vpop.f32.mrf.mxu0
    %5935 = vdwg.mxu0
    %5936 = vmatprep.subr.bf16.mxu0 0
    %5937 = vmatpush1.bf16.msra.mxu0 0
    %5938 = vmatprep.subr.bf16.mxu0 0
    %5939 = vmatpush1.bf16.msra.mxu0 0
    %5940 = vmatprep.subr.bf16.mxu0 0
    %5941 = vmatpush1.bf16.msra.mxu0 0
    %5942 = vmatprep.subr.bf16.mxu0 0
    %5943 = vmatpush1.bf16.msra.mxu0 0
    %5944 = vmatprep.subr.bf16.mxu0 0
    %5945 = vmatpush1.bf16.msra.mxu0 0
    %5946 = vmatprep.subr.bf16.mxu0 %v5024
    %5947 = vmatpush1.bf16.msra.mxu0 %v5021
    %5948 = vmatprep.subr.bf16.mxu0 %v4861
    %5949 = vmatpush1.bf16.msra.mxu0 %v4858
    %5950 = vmatprep.subr.bf16.mxu0 %v4435
    %5951 = vmatpush1.bf16.msra.mxu0 %v4432
    %5952 = vmatprep.subr.bf16.mxu0 0
    %5953 = vmatpush2.bf16.msra.mxu0 0
    %5954 = vmatprep.subr.bf16.mxu0 0
    %5955 = vmatpush2.bf16.msra.mxu0 0
    %5956 = vmatprep.subr.bf16.mxu0 0
    %5957 = vmatpush2.bf16.msra.mxu0 0
    %5958 = vmatprep.subr.bf16.mxu0 0
    %5959 = vmatpush2.bf16.msra.mxu0 0
    %5960 = vmatprep.subr.bf16.mxu0 0
    %5961 = vmatpush2.bf16.msra.mxu0 0
    %5962 = vmatprep.subr.bf16.mxu0 0
    %5963 = vmatpush2.bf16.msra.mxu0 0
    %5964 = vmatprep.subr.bf16.mxu0 0
    %5965 = vmatpush2.bf16.msra.mxu0 0
    %5966 = vmatprep.subr.bf16.mxu0 0
    %5967 = vmatpush2.bf16.msra.mxu0 0
    %5968 = vmatprep.mubr.bf16.mxu0 0
    %5969 = vmatmul.mubr.bf16.gmra.mxu0 %v4886
    %v5970 = vpop.f32.mrf.mxu0
    %v5971 = vadd.f32 %v4882, %v5970
    %v5972 = vpop.f32.mrf.mxu0
    %v5973 = vadd.f32 %v4882, %v5972
    %v5974 = vpop.f32.mrf.mxu0
    %v5975 = vpop.f32.mrf.mxu0
    %5976 = vdwg.mxu0
    %5977 = vmatprep.subr.bf16.mxu0 0
    %5978 = vmatpush1.bf16.msra.mxu0 0
    %5979 = vmatprep.subr.bf16.mxu0 0
    %5980 = vmatpush1.bf16.msra.mxu0 0
    %5981 = vmatprep.subr.bf16.mxu0 0
    %5982 = vmatpush1.bf16.msra.mxu0 0
    %5983 = vmatprep.subr.bf16.mxu0 0
    %5984 = vmatpush1.bf16.msra.mxu0 0
    %5985 = vmatprep.subr.bf16.mxu0 0
    %5986 = vmatpush1.bf16.msra.mxu0 0
    %5987 = vmatprep.subr.bf16.mxu0 %v5030
    %5988 = vmatpush1.bf16.msra.mxu0 %v5027
    %5989 = vmatprep.subr.bf16.mxu0 %v4867
    %5990 = vmatpush1.bf16.msra.mxu0 %v4864
    %5991 = vmatprep.subr.bf16.mxu0 %v4441
    %5992 = vmatpush1.bf16.msra.mxu0 %v4438
    %5993 = vmatprep.subr.bf16.mxu0 0
    %5994 = vmatpush2.bf16.msra.mxu0 0
    %5995 = vmatprep.subr.bf16.mxu0 0
    %5996 = vmatpush2.bf16.msra.mxu0 0
    %5997 = vmatprep.subr.bf16.mxu0 0
    %5998 = vmatpush2.bf16.msra.mxu0 0
    %5999 = vmatprep.subr.bf16.mxu0 0
    %6000 = vmatpush2.bf16.msra.mxu0 0
    %6001 = vmatprep.subr.bf16.mxu0 0
    %6002 = vmatpush2.bf16.msra.mxu0 0
    %6003 = vmatprep.subr.bf16.mxu0 0
    %6004 = vmatpush2.bf16.msra.mxu0 0
    %6005 = vmatprep.subr.bf16.mxu0 0
    %6006 = vmatpush2.bf16.msra.mxu0 0
    %6007 = vmatprep.subr.bf16.mxu0 0
    %6008 = vmatpush2.bf16.msra.mxu0 0
    %6009 = vmatprep.mubr.bf16.mxu0 0
    %6010 = vmatmul.mubr.bf16.gmra.mxu0 %v4886
    %v6011 = vpop.f32.mrf.mxu0
    %v6012 = vadd.f32 %v4882, %v6011
    %v6013 = vpop.f32.mrf.mxu0
    %v6014 = vadd.f32 %v4882, %v6013
    %v6015 = vpop.f32.mrf.mxu0
    %v6016 = vpop.f32.mrf.mxu0
    %6017 = vdwg.mxu0
    %6018 = vmatprep.subr.bf16.mxu0 0
    %6019 = vmatpush1.bf16.msra.mxu0 0
    %6020 = vmatprep.subr.bf16.mxu0 0
    %6021 = vmatpush1.bf16.msra.mxu0 0
    %6022 = vmatprep.subr.bf16.mxu0 0
    %6023 = vmatpush1.bf16.msra.mxu0 0
    %6024 = vmatprep.subr.bf16.mxu0 0
    %6025 = vmatpush1.bf16.msra.mxu0 0
    %6026 = vmatprep.subr.bf16.mxu0 0
    %6027 = vmatpush1.bf16.msra.mxu0 0
    %6028 = vmatprep.subr.bf16.mxu0 %v5032
    %6029 = vmatpush1.bf16.msra.mxu0 %v5032
    %6030 = vmatprep.subr.bf16.mxu0 %v4871
    %6031 = vmatpush1.bf16.msra.mxu0 %v4869
    %6032 = vmatprep.subr.bf16.mxu0 %v4447
    %6033 = vmatpush1.bf16.msra.mxu0 %v4444
    %6034 = vmatprep.subr.bf16.mxu0 0
    %6035 = vmatpush2.bf16.msra.mxu0 0
    %6036 = vmatprep.subr.bf16.mxu0 0
    %6037 = vmatpush2.bf16.msra.mxu0 0
    %6038 = vmatprep.subr.bf16.mxu0 0
    %6039 = vmatpush2.bf16.msra.mxu0 0
    %6040 = vmatprep.subr.bf16.mxu0 0
    %6041 = vmatpush2.bf16.msra.mxu0 0
    %6042 = vmatprep.subr.bf16.mxu0 0
    %6043 = vmatpush2.bf16.msra.mxu0 0
    %6044 = vmatprep.subr.bf16.mxu0 0
    %6045 = vmatpush2.bf16.msra.mxu0 0
    %6046 = vmatprep.subr.bf16.mxu0 0
    %6047 = vmatpush2.bf16.msra.mxu0 0
    %6048 = vmatprep.subr.bf16.mxu0 0
    %6049 = vmatpush2.bf16.msra.mxu0 0
    %6050 = vmatprep.mubr.bf16.mxu0 0
    %6051 = vmatmul.mubr.bf16.gmra.mxu0 %v4886
    %v6052 = vpop.f32.mrf.mxu0
    %v6053 = vadd.f32 %v4882, %v6052
    %v6054 = vpop.f32.mrf.mxu0
    %v6055 = vadd.f32 %v4882, %v6054
    %v6056 = vpop.f32.mrf.mxu0
    %v6057 = vpop.f32.mrf.mxu0
    %6058 = vdwg.mxu0
    %6059 = vmatprep.subr.bf16.mxu0 0
    %6060 = vmatpush1.bf16.msra.mxu0 0
    %6061 = vmatprep.subr.bf16.mxu0 0
    %6062 = vmatpush1.bf16.msra.mxu0 0
    %6063 = vmatprep.subr.bf16.mxu0 0
    %6064 = vmatpush1.bf16.msra.mxu0 0
    %6065 = vmatprep.subr.bf16.mxu0 0
    %6066 = vmatpush1.bf16.msra.mxu0 0
    %6067 = vmatprep.subr.bf16.mxu0 0
    %6068 = vmatpush1.bf16.msra.mxu0 0
    %6069 = vmatprep.subr.bf16.mxu0 %v5032
    %6070 = vmatpush1.bf16.msra.mxu0 %v5032
    %6071 = vmatprep.subr.bf16.mxu0 %v4875
    %6072 = vmatpush1.bf16.msra.mxu0 %v4873
    %6073 = vmatprep.subr.bf16.mxu0 %v4453
    %6074 = vmatpush1.bf16.msra.mxu0 %v4450
    %6075 = vmatprep.subr.bf16.mxu0 0
    %6076 = vmatpush2.bf16.msra.mxu0 0
    %6077 = vmatprep.subr.bf16.mxu0 0
    %6078 = vmatpush2.bf16.msra.mxu0 0
    %6079 = vmatprep.subr.bf16.mxu0 0
    %6080 = vmatpush2.bf16.msra.mxu0 0
    %6081 = vmatprep.subr.bf16.mxu0 0
    %6082 = vmatpush2.bf16.msra.mxu0 0
    %6083 = vmatprep.subr.bf16.mxu0 0
    %6084 = vmatpush2.bf16.msra.mxu0 0
    %6085 = vmatprep.subr.bf16.mxu0 0
    %6086 = vmatpush2.bf16.msra.mxu0 0
    %6087 = vmatprep.subr.bf16.mxu0 0
    %6088 = vmatpush2.bf16.msra.mxu0 0
    %6089 = vmatprep.subr.bf16.mxu0 0
    %6090 = vmatpush2.bf16.msra.mxu0 0
    %6091 = vmatprep.mubr.bf16.mxu0 0
    %6092 = vmatmul.mubr.bf16.gmra.mxu0 %v4886
    %v6093 = vpop.f32.mrf.mxu0
    %v6094 = vadd.f32 %v4882, %v6093
    %v6095 = vpop.f32.mrf.mxu0
    %v6096 = vadd.f32 %v4882, %v6095
    %v6097 = vpop.f32.mrf.mxu0
    %v6098 = vpop.f32.mrf.mxu0
    %6099 = vdwg.mxu0
    %6100 = vmatprep.subr.bf16.mxu0 0
    %6101 = vmatpush1.bf16.msra.mxu0 0
    %6102 = vmatprep.subr.bf16.mxu0 0
    %6103 = vmatpush1.bf16.msra.mxu0 0
    %6104 = vmatprep.subr.bf16.mxu0 0
    %6105 = vmatpush1.bf16.msra.mxu0 0
    %6106 = vmatprep.subr.bf16.mxu0 0
    %6107 = vmatpush1.bf16.msra.mxu0 0
    %6108 = vmatprep.subr.bf16.mxu0 0
    %6109 = vmatpush1.bf16.msra.mxu0 0
    %6110 = vmatprep.subr.bf16.mxu0 %v5032
    %6111 = vmatpush1.bf16.msra.mxu0 %v5032
    %6112 = vmatprep.subr.bf16.mxu0 %v4877
    %6113 = vmatpush1.bf16.msra.mxu0 %v4877
    %6114 = vmatprep.subr.bf16.mxu0 %v4458
    %6115 = vmatpush1.bf16.msra.mxu0 %v4456
    %6116 = vmatprep.subr.bf16.mxu0 0
    %6117 = vmatpush2.bf16.msra.mxu0 0
    %6118 = vmatprep.subr.bf16.mxu0 0
    %6119 = vmatpush2.bf16.msra.mxu0 0
    %6120 = vmatprep.subr.bf16.mxu0 0
    %6121 = vmatpush2.bf16.msra.mxu0 0
    %6122 = vmatprep.subr.bf16.mxu0 0
    %6123 = vmatpush2.bf16.msra.mxu0 0
    %6124 = vmatprep.subr.bf16.mxu0 0
    %6125 = vmatpush2.bf16.msra.mxu0 0
    %6126 = vmatprep.subr.bf16.mxu0 0
    %6127 = vmatpush2.bf16.msra.mxu0 0
    %6128 = vmatprep.subr.bf16.mxu0 0
    %6129 = vmatpush2.bf16.msra.mxu0 0
    %6130 = vmatprep.subr.bf16.mxu0 0
    %6131 = vmatpush2.bf16.msra.mxu0 0
    %6132 = vmatprep.mubr.bf16.mxu0 0
    %6133 = vmatmul.mubr.bf16.gmra.mxu0 %v4886
    %v6134 = vpop.f32.mrf.mxu0
    %v6135 = vadd.f32 %v4882, %v6134
    %v6136 = vpop.f32.mrf.mxu0
    %v6137 = vadd.f32 %v4882, %v6136
    %v6138 = vpop.f32.mrf.mxu0
    %v6139 = vpop.f32.mrf.mxu0
    %6140 = vdwg.mxu0
    %6141 = vmatprep.subr.bf16.mxu0 0
    %6142 = vmatpush1.bf16.msra.mxu0 0
    %6143 = vmatprep.subr.bf16.mxu0 0
    %6144 = vmatpush1.bf16.msra.mxu0 0
    %6145 = vmatprep.subr.bf16.mxu0 0
    %6146 = vmatpush1.bf16.msra.mxu0 0
    %6147 = vmatprep.subr.bf16.mxu0 0
    %6148 = vmatpush1.bf16.msra.mxu0 0
    %6149 = vmatprep.subr.bf16.mxu0 0
    %6150 = vmatpush1.bf16.msra.mxu0 0
    %6151 = vmatprep.subr.bf16.mxu0 %v5032
    %6152 = vmatpush1.bf16.msra.mxu0 %v5032
    %6153 = vmatprep.subr.bf16.mxu0 %v4877
    %6154 = vmatpush1.bf16.msra.mxu0 %v4877
    %6155 = vmatprep.subr.bf16.mxu0 %v4462
    %6156 = vmatpush1.bf16.msra.mxu0 %v4460
    %6157 = vmatprep.subr.bf16.mxu0 0
    %6158 = vmatpush2.bf16.msra.mxu0 0
    %6159 = vmatprep.subr.bf16.mxu0 0
    %6160 = vmatpush2.bf16.msra.mxu0 0
    %6161 = vmatprep.subr.bf16.mxu0 0
    %6162 = vmatpush2.bf16.msra.mxu0 0
    %6163 = vmatprep.subr.bf16.mxu0 0
    %6164 = vmatpush2.bf16.msra.mxu0 0
    %6165 = vmatprep.subr.bf16.mxu0 0
    %6166 = vmatpush2.bf16.msra.mxu0 0
    %6167 = vmatprep.subr.bf16.mxu0 0
    %6168 = vmatpush2.bf16.msra.mxu0 0
    %6169 = vmatprep.subr.bf16.mxu0 0
    %6170 = vmatpush2.bf16.msra.mxu0 0
    %6171 = vmatprep.subr.bf16.mxu0 0
    %6172 = vmatpush2.bf16.msra.mxu0 0
    %6173 = vmatprep.mubr.bf16.mxu0 0
    %6174 = vmatmul.mubr.bf16.gmra.mxu0 %v4886
    %v6175 = vpop.f32.mrf.mxu0
    %v6176 = vadd.f32 %v4882, %v6175
    %v6177 = vpop.f32.mrf.mxu0
    %v6178 = vadd.f32 %v4882, %v6177
    %v6179 = vpop.f32.mrf.mxu0
    %v6180 = vpop.f32.mrf.mxu0
    %6181 = vdwg.mxu0
    %v6182 = vmax.f32 %v5069, 0.0
    %v6183 = vmax.f32 %v5071, 0.0
    %v6184 = vmax.f32 %v5110, 0.0
    %v6185 = vmax.f32 %v5112, 0.0
    %v6186 = vmax.f32 %v5151, 0.0
    %v6187 = vmax.f32 %v5153, 0.0
    %v6188 = vmax.f32 %v5192, 0.0
    %v6189 = vmax.f32 %v5194, 0.0
    %v6190 = vmax.f32 %v5233, 0.0
    %v6191 = vmax.f32 %v5235, 0.0
    %v6192 = vmax.f32 %v5274, 0.0
    %v6193 = vmax.f32 %v5276, 0.0
    %v6194 = vmax.f32 %v5315, 0.0
    %v6195 = vmax.f32 %v5317, 0.0
    %v6196 = vmax.f32 %v5356, 0.0
    %v6197 = vmax.f32 %v5358, 0.0
    %v6198 = vmax.f32 %v5397, 0.0
    %v6199 = vmax.f32 %v5399, 0.0
    %v6200 = vmax.f32 %v5438, 0.0
    %v6201 = vmax.f32 %v5440, 0.0
    %v6202 = vmax.f32 %v5479, 0.0
    %v6203 = vmax.f32 %v5481, 0.0
    %v6204 = vmax.f32 %v5520, 0.0
    %v6205 = vmax.f32 %v5522, 0.0
    %v6206 = vmax.f32 %v5561, 0.0
    %v6207 = vmax.f32 %v5563, 0.0
    %v6208 = vmax.f32 %v5602, 0.0
    %v6209 = vmax.f32 %v5604, 0.0
    %v6210 = vmax.f32 %v5643, 0.0
    %v6211 = vmax.f32 %v5645, 0.0
    %v6212 = vmax.f32 %v5684, 0.0
    %v6213 = vmax.f32 %v5686, 0.0
    %v6214 = vmax.f32 %v5725, 0.0
    %v6215 = vmax.f32 %v5727, 0.0
    %v6216 = vmax.f32 %v5766, 0.0
    %v6217 = vmax.f32 %v5768, 0.0
    %v6218 = vmax.f32 %v5807, 0.0
    %v6219 = vmax.f32 %v5809, 0.0
    %v6220 = vmax.f32 %v5848, 0.0
    %v6221 = vmax.f32 %v5850, 0.0
    %v6222 = vmax.f32 %v5889, 0.0
    %v6223 = vmax.f32 %v5891, 0.0
    %v6224 = vmax.f32 %v5930, 0.0
    %v6225 = vmax.f32 %v5932, 0.0
    %v6226 = vmax.f32 %v5971, 0.0
    %v6227 = vmax.f32 %v5973, 0.0
    %v6228 = vmax.f32 %v6012, 0.0
    %v6229 = vmax.f32 %v6014, 0.0
    %v6230 = vmax.f32 %v6053, 0.0
    %v6231 = vmax.f32 %v6055, 0.0
    %v6232 = vmax.f32 %v6094, 0.0
    %v6233 = vmax.f32 %v6096, 0.0
    %v6234 = vmax.f32 %v6135, 0.0
    %v6235 = vmax.f32 %v6137, 0.0
    %v6236 = vmax.f32 %v6176, 0.0
    %v6237 = vmax.f32 %v6178, 0.0
    %v6238 = vmul.f32 %v6182, %v447
    %v6239 = vmul.f32 %v6183, %v448
    %v6240 = vmul.f32 %v6184, %v449
    %v6241 = vmul.f32 %v6185, %v450
    %v6242 = vmul.f32 %v6186, %v451
    %v6243 = vmul.f32 %v6187, %v452
    %v6244 = vmul.f32 %v6188, %v453
    %v6245 = vmul.f32 %v6189, %v454
    %v6246 = vmul.f32 %v6190, %v455
    %v6247 = vmul.f32 %v6191, %v456
    %v6248 = vmul.f32 %v6192, %v457
    %v6249 = vmul.f32 %v6193, %v458
    %v6250 = vmul.f32 %v6194, %v459
    %v6251 = vmul.f32 %v6195, %v460
    %v6252 = vmul.f32 %v6196, %v461
    %v6253 = vmul.f32 %v6197, %v462
    %v6254 = vmul.f32 %v6198, %v463
    %v6255 = vmul.f32 %v6199, %v464
    %v6256 = vmul.f32 %v6200, %v465
    %v6257 = vmul.f32 %v6201, %v466
    %v6258 = vmul.f32 %v6202, %v467
    %v6259 = vmul.f32 %v6203, %v468
    %v6260 = vmul.f32 %v6204, %v469
    %v6261 = vmul.f32 %v6205, %v470
    %v6262 = vmul.f32 %v6206, %v471
    %v6263 = vmul.f32 %v6207, %v472
    %v6264 = vmul.f32 %v6208, %v473
    %v6265 = vmul.f32 %v6209, %v474
    %v6266 = vmul.f32 %v6210, %v475
    %v6267 = vmul.f32 %v6211, %v476
    %v6268 = vmul.f32 %v6212, %v477
    %v6269 = vmul.f32 %v6213, %v478
    %v6270 = vmul.f32 %v6214, %v479
    %v6271 = vmul.f32 %v6215, %v480
    %v6272 = vmul.f32 %v6216, %v481
    %v6273 = vmul.f32 %v6217, %v482
    %v6274 = vmul.f32 %v6218, %v483
    %v6275 = vmul.f32 %v6219, %v484
    %v6276 = vmul.f32 %v6220, %v485
    %v6277 = vmul.f32 %v6221, %v486
    %v6278 = vmul.f32 %v6222, %v487
    %v6279 = vmul.f32 %v6223, %v488
    %v6280 = vmul.f32 %v6224, %v489
    %v6281 = vmul.f32 %v6225, %v490
    %v6282 = vmul.f32 %v6226, %v491
    %v6283 = vmul.f32 %v6227, %v492
    %v6284 = vmul.f32 %v6228, %v493
    %v6285 = vmul.f32 %v6229, %v494
    %v6286 = vmul.f32 %v6230, %v495
    %v6287 = vmul.f32 %v6231, %v496
    %v6288 = vmul.f32 %v6232, %v497
    %v6289 = vmul.f32 %v6233, %v498
    %v6290 = vmul.f32 %v6234, %v499
    %v6291 = vmul.f32 %v6235, %v500
    %v6292 = vmul.f32 %v6236, %v501
    %v6293 = vmul.f32 %v6237, %v502
    %6295 = vrot.lane.b32.xlu0 %v6293, 48
    %v6296 = vpop.permute.xlu0 %6295
    %6353 = vrot.lane.b32.xlu0 %v6238, 48
    %v6354 = vpop.permute.xlu0 %6353
    %6355 = vrot.lane.b32.xlu0 %v6239, 48
    %v6356 = vpop.permute.xlu0 %6355
    %6357 = vrot.lane.b32.xlu0 %v6240, 48
    %v6358 = vpop.permute.xlu0 %6357
    %6359 = vrot.lane.b32.xlu0 %v6241, 48
    %v6360 = vpop.permute.xlu0 %6359
    %6361 = vrot.lane.b32.xlu0 %v6242, 48
    %v6362 = vpop.permute.xlu0 %6361
    %6363 = vrot.lane.b32.xlu0 %v6243, 48
    %v6364 = vpop.permute.xlu0 %6363
    %6365 = vrot.lane.b32.xlu0 %v6244, 48
    %v6366 = vpop.permute.xlu0 %6365
    %6367 = vrot.lane.b32.xlu0 %v6245, 48
    %v6368 = vpop.permute.xlu0 %6367
    %6369 = vrot.lane.b32.xlu0 %v6246, 48
    %v6370 = vpop.permute.xlu0 %6369
    %6371 = vrot.lane.b32.xlu0 %v6247, 48
    %v6372 = vpop.permute.xlu0 %6371
    %6373 = vrot.lane.b32.xlu0 %v6248, 48
    %v6374 = vpop.permute.xlu0 %6373
    %6375 = vrot.lane.b32.xlu0 %v6249, 48
    %v6376 = vpop.permute.xlu0 %6375
    %6377 = vrot.lane.b32.xlu0 %v6250, 48
    %v6378 = vpop.permute.xlu0 %6377
    %6379 = vrot.lane.b32.xlu0 %v6251, 48
    %v6380 = vpop.permute.xlu0 %6379
    %6381 = vrot.lane.b32.xlu0 %v6252, 48
    %v6382 = vpop.permute.xlu0 %6381
    %6383 = vrot.lane.b32.xlu0 %v6253, 48
    %v6384 = vpop.permute.xlu0 %6383
    %6385 = vrot.lane.b32.xlu0 %v6254, 48
    %v6386 = vpop.permute.xlu0 %6385
    %6387 = vrot.lane.b32.xlu0 %v6255, 48
    %v6388 = vpop.permute.xlu0 %6387
    %6389 = vrot.lane.b32.xlu0 %v6256, 48
    %v6390 = vpop.permute.xlu0 %6389
    %6391 = vrot.lane.b32.xlu0 %v6257, 48
    %v6392 = vpop.permute.xlu0 %6391
    %6393 = vrot.lane.b32.xlu0 %v6258, 48
    %v6394 = vpop.permute.xlu0 %6393
    %6395 = vrot.lane.b32.xlu0 %v6259, 48
    %v6396 = vpop.permute.xlu0 %6395
    %6397 = vrot.lane.b32.xlu0 %v6260, 48
    %v6398 = vpop.permute.xlu0 %6397
    %6399 = vrot.lane.b32.xlu0 %v6261, 48
    %v6400 = vpop.permute.xlu0 %6399
    %6401 = vrot.lane.b32.xlu0 %v6262, 48
    %v6402 = vpop.permute.xlu0 %6401
    %6403 = vrot.lane.b32.xlu0 %v6263, 48
    %v6404 = vpop.permute.xlu0 %6403
    %6405 = vrot.lane.b32.xlu0 %v6264, 48
    %v6406 = vpop.permute.xlu0 %6405
    %6407 = vrot.lane.b32.xlu0 %v6265, 48
    %v6408 = vpop.permute.xlu0 %6407
    %6409 = vrot.lane.b32.xlu0 %v6266, 48
    %v6410 = vpop.permute.xlu0 %6409
    %6411 = vrot.lane.b32.xlu0 %v6267, 48
    %v6412 = vpop.permute.xlu0 %6411
    %6413 = vrot.lane.b32.xlu0 %v6268, 48
    %v6414 = vpop.permute.xlu0 %6413
    %6415 = vrot.lane.b32.xlu0 %v6269, 48
    %v6416 = vpop.permute.xlu0 %6415
    %6417 = vrot.lane.b32.xlu0 %v6270, 48
    %v6418 = vpop.permute.xlu0 %6417
    %6419 = vrot.lane.b32.xlu0 %v6271, 48
    %v6420 = vpop.permute.xlu0 %6419
    %6421 = vrot.lane.b32.xlu0 %v6272, 48
    %v6422 = vpop.permute.xlu0 %6421
    %6423 = vrot.lane.b32.xlu0 %v6273, 48
    %v6424 = vpop.permute.xlu0 %6423
    %6425 = vrot.lane.b32.xlu0 %v6274, 48
    %v6426 = vpop.permute.xlu0 %6425
    %6427 = vrot.lane.b32.xlu0 %v6275, 48
    %v6428 = vpop.permute.xlu0 %6427
    %6429 = vrot.lane.b32.xlu0 %v6276, 48
    %v6430 = vpop.permute.xlu0 %6429
    %6431 = vrot.lane.b32.xlu0 %v6277, 48
    %v6432 = vpop.permute.xlu0 %6431
    %6433 = vrot.lane.b32.xlu0 %v6278, 48
    %v6434 = vpop.permute.xlu0 %6433
    %6435 = vrot.lane.b32.xlu0 %v6279, 48
    %v6436 = vpop.permute.xlu0 %6435
    %6437 = vrot.lane.b32.xlu0 %v6280, 48
    %v6438 = vpop.permute.xlu0 %6437
    %6439 = vrot.lane.b32.xlu0 %v6281, 48
    %v6440 = vpop.permute.xlu0 %6439
    %6441 = vrot.lane.b32.xlu0 %v6282, 48
    %v6442 = vpop.permute.xlu0 %6441
    %6443 = vrot.lane.b32.xlu0 %v6283, 48
    %v6444 = vpop.permute.xlu0 %6443
    %6445 = vrot.lane.b32.xlu0 %v6284, 48
    %v6446 = vpop.permute.xlu0 %6445
    %6447 = vrot.lane.b32.xlu0 %v6285, 48
    %v6448 = vpop.permute.xlu0 %6447
    %6449 = vrot.lane.b32.xlu0 %v6286, 48
    %v6450 = vpop.permute.xlu0 %6449
    %6451 = vrot.lane.b32.xlu0 %v6287, 48
    %v6452 = vpop.permute.xlu0 %6451
    %6453 = vrot.lane.b32.xlu0 %v6288, 48
    %v6454 = vpop.permute.xlu0 %6453
    %6455 = vrot.lane.b32.xlu0 %v6289, 48
    %v6456 = vpop.permute.xlu0 %6455
    %6457 = vrot.lane.b32.xlu0 %v6290, 48
    %v6458 = vpop.permute.xlu0 %6457
    %6459 = vrot.lane.b32.xlu0 %v6291, 48
    %v6460 = vpop.permute.xlu0 %6459
    %6461 = vrot.lane.b32.xlu0 %v6292, 48
    %v6462 = vpop.permute.xlu0 %6461
    %v6463 = vsel %vm918, %v6354, %v6356
    %v6464 = vsel %vm918, %v6356, %v6358
    %v6465 = vsel %vm918, %v6358, %v6360
    %v6466 = vsel %vm918, %v6360, %v6362
    %v6467 = vsel %vm918, %v6362, %v6364
    %v6468 = vsel %vm918, %v6364, %v6366
    %v6469 = vsel %vm918, %v6366, %v6368
    %v6470 = vsel %vm918, %v6368, %v6370
    %v6471 = vsel %vm918, %v6370, %v6372
    %v6472 = vsel %vm918, %v6372, %v6374
    %v6473 = vsel %vm918, %v6374, %v6376
    %v6474 = vsel %vm918, %v6376, %v6378
    %v6475 = vsel %vm918, %v6378, %v6380
    %v6476 = vsel %vm918, %v6380, %v6382
    %v6477 = vsel %vm918, %v6382, %v6384
    %v6478 = vsel %vm918, %v6384, %v6386
    %v6479 = vsel %vm918, %v6386, %v6388
    %v6480 = vsel %vm918, %v6388, %v6390
    %v6481 = vsel %vm918, %v6390, %v6392
    %v6482 = vsel %vm918, %v6392, %v6394
    %v6483 = vsel %vm918, %v6394, %v6396
    %v6484 = vsel %vm918, %v6396, %v6398
    %v6485 = vsel %vm918, %v6398, %v6400
    %v6486 = vsel %vm918, %v6400, %v6402
    %v6487 = vsel %vm918, %v6404, %v6406
    %v6488 = vsel %vm918, %v6406, %v6408
    %v6489 = vsel %vm918, %v6408, %v6410
    %v6490 = vsel %vm918, %v6410, %v6412
    %v6491 = vsel %vm918, %v6412, %v6414
    %v6492 = vsel %vm918, %v6414, %v6416
    %v6493 = vsel %vm918, %v6416, %v6418
    %v6494 = vsel %vm918, %v6418, %v6420
    %v6495 = vsel %vm918, %v6420, %v6422
    %v6496 = vsel %vm918, %v6422, %v6424
    %v6497 = vsel %vm918, %v6424, %v6426
    %v6498 = vsel %vm918, %v6426, %v6428
    %v6499 = vsel %vm918, %v6428, %v6430
    %v6500 = vsel %vm918, %v6430, %v6432
    %v6501 = vsel %vm918, %v6432, %v6434
    %v6502 = vsel %vm918, %v6434, %v6436
    %v6503 = vsel %vm918, %v6436, %v6438
    %v6504 = vsel %vm918, %v6438, %v6440
    %v6505 = vsel %vm918, %v6440, %v6442
    %v6506 = vsel %vm918, %v6442, %v6444
    %v6507 = vsel %vm918, %v6444, %v6446
    %v6508 = vsel %vm918, %v6446, %v6448
    %v6509 = vsel %vm918, %v6448, %v6450
    %v6510 = vsel %vm918, %v6450, %v6452
    %v6511 = vsel %vm918, %v6452, %v6454
    %v6512 = vsel %vm918, %v6454, %v6456
    %v6513 = vsel %vm918, %v6456, %v6458
    %v6514 = vsel %vm918, %v6460, %v6462
    %v6515 = vsel %vm918, %v6462, %v6296
    %v6570 = vsel %vm918, %v6296, %v6354
    %6571 = vrot.lane.b32.xlu0 %v6238, 80
    %v6572 = vpop.permute.xlu0 %6571
    %6573 = vrot.lane.b32.xlu0 %v6239, 80
    %v6574 = vpop.permute.xlu0 %6573
    %6575 = vrot.lane.b32.xlu0 %v6240, 80
    %v6576 = vpop.permute.xlu0 %6575
    %6577 = vrot.lane.b32.xlu0 %v6241, 80
    %v6578 = vpop.permute.xlu0 %6577
    %6579 = vrot.lane.b32.xlu0 %v6242, 80
    %v6580 = vpop.permute.xlu0 %6579
    %6581 = vrot.lane.b32.xlu0 %v6243, 80
    %v6582 = vpop.permute.xlu0 %6581
    %6583 = vrot.lane.b32.xlu0 %v6244, 80
    %v6584 = vpop.permute.xlu0 %6583
    %6585 = vrot.lane.b32.xlu0 %v6245, 80
    %v6586 = vpop.permute.xlu0 %6585
    %6587 = vrot.lane.b32.xlu0 %v6246, 80
    %v6588 = vpop.permute.xlu0 %6587
    %6589 = vrot.lane.b32.xlu0 %v6247, 80
    %v6590 = vpop.permute.xlu0 %6589
    %6591 = vrot.lane.b32.xlu0 %v6248, 80
    %v6592 = vpop.permute.xlu0 %6591
    %6593 = vrot.lane.b32.xlu0 %v6249, 80
    %v6594 = vpop.permute.xlu0 %6593
    %6595 = vrot.lane.b32.xlu0 %v6250, 80
    %v6596 = vpop.permute.xlu0 %6595
    %6597 = vrot.lane.b32.xlu0 %v6251, 80
    %v6598 = vpop.permute.xlu0 %6597
    %6599 = vrot.lane.b32.xlu0 %v6252, 80
    %v6600 = vpop.permute.xlu0 %6599
    %6601 = vrot.lane.b32.xlu0 %v6253, 80
    %v6602 = vpop.permute.xlu0 %6601
    %6603 = vrot.lane.b32.xlu0 %v6254, 80
    %v6604 = vpop.permute.xlu0 %6603
    %6605 = vrot.lane.b32.xlu0 %v6255, 80
    %v6606 = vpop.permute.xlu0 %6605
    %6607 = vrot.lane.b32.xlu0 %v6256, 80
    %v6608 = vpop.permute.xlu0 %6607
    %6609 = vrot.lane.b32.xlu0 %v6257, 80
    %v6610 = vpop.permute.xlu0 %6609
    %6611 = vrot.lane.b32.xlu0 %v6258, 80
    %v6612 = vpop.permute.xlu0 %6611
    %6613 = vrot.lane.b32.xlu0 %v6259, 80
    %v6614 = vpop.permute.xlu0 %6613
    %6615 = vrot.lane.b32.xlu0 %v6260, 80
    %v6616 = vpop.permute.xlu0 %6615
    %6617 = vrot.lane.b32.xlu0 %v6261, 80
    %v6618 = vpop.permute.xlu0 %6617
    %6619 = vrot.lane.b32.xlu0 %v6262, 80
    %v6620 = vpop.permute.xlu0 %6619
    %6621 = vrot.lane.b32.xlu0 %v6263, 80
    %v6622 = vpop.permute.xlu0 %6621
    %6623 = vrot.lane.b32.xlu0 %v6264, 80
    %v6624 = vpop.permute.xlu0 %6623
    %6625 = vrot.lane.b32.xlu0 %v6265, 80
    %v6626 = vpop.permute.xlu0 %6625
    %6627 = vrot.lane.b32.xlu0 %v6266, 80
    %v6628 = vpop.permute.xlu0 %6627
    %6629 = vrot.lane.b32.xlu0 %v6267, 80
    %v6630 = vpop.permute.xlu0 %6629
    %6631 = vrot.lane.b32.xlu0 %v6268, 80
    %v6632 = vpop.permute.xlu0 %6631
    %6633 = vrot.lane.b32.xlu0 %v6269, 80
    %v6634 = vpop.permute.xlu0 %6633
    %6635 = vrot.lane.b32.xlu0 %v6270, 80
    %v6636 = vpop.permute.xlu0 %6635
    %6637 = vrot.lane.b32.xlu0 %v6271, 80
    %v6638 = vpop.permute.xlu0 %6637
    %6639 = vrot.lane.b32.xlu0 %v6272, 80
    %v6640 = vpop.permute.xlu0 %6639
    %6641 = vrot.lane.b32.xlu0 %v6273, 80
    %v6642 = vpop.permute.xlu0 %6641
    %6643 = vrot.lane.b32.xlu0 %v6274, 80
    %v6644 = vpop.permute.xlu0 %6643
    %6645 = vrot.lane.b32.xlu0 %v6275, 80
    %v6646 = vpop.permute.xlu0 %6645
    %6647 = vrot.lane.b32.xlu0 %v6276, 80
    %v6648 = vpop.permute.xlu0 %6647
    %6649 = vrot.lane.b32.xlu0 %v6277, 80
    %v6650 = vpop.permute.xlu0 %6649
    %6651 = vrot.lane.b32.xlu0 %v6278, 80
    %v6652 = vpop.permute.xlu0 %6651
    %6653 = vrot.lane.b32.xlu0 %v6279, 80
    %v6654 = vpop.permute.xlu0 %6653
    %6655 = vrot.lane.b32.xlu0 %v6280, 80
    %v6656 = vpop.permute.xlu0 %6655
    %6657 = vrot.lane.b32.xlu0 %v6281, 80
    %v6658 = vpop.permute.xlu0 %6657
    %6659 = vrot.lane.b32.xlu0 %v6282, 80
    %v6660 = vpop.permute.xlu0 %6659
    %6661 = vrot.lane.b32.xlu0 %v6283, 80
    %v6662 = vpop.permute.xlu0 %6661
    %6663 = vrot.lane.b32.xlu0 %v6284, 80
    %v6664 = vpop.permute.xlu0 %6663
    %6665 = vrot.lane.b32.xlu0 %v6285, 80
    %v6666 = vpop.permute.xlu0 %6665
    %6667 = vrot.lane.b32.xlu0 %v6286, 80
    %v6668 = vpop.permute.xlu0 %6667
    %6669 = vrot.lane.b32.xlu0 %v6287, 80
    %v6670 = vpop.permute.xlu0 %6669
    %6671 = vrot.lane.b32.xlu0 %v6288, 80
    %v6672 = vpop.permute.xlu0 %6671
    %6673 = vrot.lane.b32.xlu0 %v6289, 80
    %v6674 = vpop.permute.xlu0 %6673
    %6675 = vrot.lane.b32.xlu0 %v6290, 80
    %v6676 = vpop.permute.xlu0 %6675
    %6677 = vrot.lane.b32.xlu0 %v6291, 80
    %v6678 = vpop.permute.xlu0 %6677
    %6679 = vrot.lane.b32.xlu0 %v6292, 80
    %v6680 = vpop.permute.xlu0 %6679
    %6681 = vrot.lane.b32.xlu0 %v6293, 80
    %v6682 = vpop.permute.xlu0 %6681
    %v6683 = vsel %vm1612, %v6572, %v6574
    %v6684 = vsel %vm1612, %v6574, %v6576
    %v6685 = vsel %vm1612, %v6576, %v6578
    %v6686 = vsel %vm1612, %v6578, %v6580
    %v6687 = vsel %vm1612, %v6580, %v6582
    %v6688 = vsel %vm1612, %v6582, %v6584
    %v6689 = vsel %vm1612, %v6584, %v6586
    %v6690 = vsel %vm1612, %v6586, %v6588
    %v6691 = vsel %vm1612, %v6588, %v6590
    %v6692 = vsel %vm1612, %v6590, %v6592
    %v6693 = vsel %vm1612, %v6592, %v6594
    %v6694 = vsel %vm1612, %v6594, %v6596
    %v6695 = vsel %vm1612, %v6596, %v6598
    %v6696 = vsel %vm1612, %v6598, %v6600
    %v6697 = vsel %vm1612, %v6600, %v6602
    %v6698 = vsel %vm1612, %v6602, %v6604
    %v6699 = vsel %vm1612, %v6604, %v6606
    %v6700 = vsel %vm1612, %v6606, %v6608
    %v6701 = vsel %vm1612, %v6608, %v6610
    %v6702 = vsel %vm1612, %v6610, %v6612
    %v6703 = vsel %vm1612, %v6612, %v6614
    %v6704 = vsel %vm1612, %v6614, %v6616
    %v6705 = vsel %vm1612, %v6616, %v6618
    %v6706 = vsel %vm1612, %v6618, %v6620
    %v6707 = vsel %vm1612, %v6620, %v6622
    %v6708 = vsel %vm1612, %v6624, %v6626
    %v6709 = vsel %vm1612, %v6626, %v6628
    %v6710 = vsel %vm1612, %v6628, %v6630
    %v6711 = vsel %vm1612, %v6630, %v6632
    %v6712 = vsel %vm1612, %v6632, %v6634
    %v6713 = vsel %vm1612, %v6634, %v6636
    %v6714 = vsel %vm1612, %v6636, %v6638
    %v6715 = vsel %vm1612, %v6638, %v6640
    %v6716 = vsel %vm1612, %v6640, %v6642
    %v6717 = vsel %vm1612, %v6642, %v6644
    %v6718 = vsel %vm1612, %v6644, %v6646
    %v6719 = vsel %vm1612, %v6646, %v6648
    %v6720 = vsel %vm1612, %v6648, %v6650
    %v6721 = vsel %vm1612, %v6650, %v6652
    %v6722 = vsel %vm1612, %v6652, %v6654
    %v6723 = vsel %vm1612, %v6654, %v6656
    %v6724 = vsel %vm1612, %v6656, %v6658
    %v6725 = vsel %vm1612, %v6658, %v6660
    %v6726 = vsel %vm1612, %v6660, %v6662
    %v6727 = vsel %vm1612, %v6662, %v6664
    %v6728 = vsel %vm1612, %v6664, %v6666
    %v6729 = vsel %vm1612, %v6666, %v6668
    %v6730 = vsel %vm1612, %v6668, %v6670
    %v6731 = vsel %vm1612, %v6670, %v6672
    %v6732 = vsel %vm1612, %v6672, %v6674
    %v6733 = vsel %vm1612, %v6674, %v6676
    %v6734 = vsel %vm1612, %v6676, %v6678
    %v6735 = vsel %vm1612, %v6680, %v6682
    %v6791 = vsel %vm1612, %v6682, %v6572
    %6792 = vrot.lane.b32.xlu0 %v6238, 52
    %v6793 = vpop.permute.xlu0 %6792
    %6794 = vrot.lane.b32.xlu0 %v6239, 52
    %v6795 = vpop.permute.xlu0 %6794
    %6796 = vrot.lane.b32.xlu0 %v6240, 52
    %v6797 = vpop.permute.xlu0 %6796
    %6798 = vrot.lane.b32.xlu0 %v6241, 52
    %v6799 = vpop.permute.xlu0 %6798
    %6800 = vrot.lane.b32.xlu0 %v6242, 52
    %v6801 = vpop.permute.xlu0 %6800
    %6802 = vrot.lane.b32.xlu0 %v6243, 52
    %v6803 = vpop.permute.xlu0 %6802
    %6804 = vrot.lane.b32.xlu0 %v6244, 52
    %v6805 = vpop.permute.xlu0 %6804
    %6806 = vrot.lane.b32.xlu0 %v6245, 52
    %v6807 = vpop.permute.xlu0 %6806
    %6808 = vrot.lane.b32.xlu0 %v6246, 52
    %v6809 = vpop.permute.xlu0 %6808
    %6810 = vrot.lane.b32.xlu0 %v6247, 52
    %v6811 = vpop.permute.xlu0 %6810
    %6812 = vrot.lane.b32.xlu0 %v6248, 52
    %v6813 = vpop.permute.xlu0 %6812
    %6814 = vrot.lane.b32.xlu0 %v6249, 52
    %v6815 = vpop.permute.xlu0 %6814
    %6816 = vrot.lane.b32.xlu0 %v6250, 52
    %v6817 = vpop.permute.xlu0 %6816
    %6818 = vrot.lane.b32.xlu0 %v6251, 52
    %v6819 = vpop.permute.xlu0 %6818
    %6820 = vrot.lane.b32.xlu0 %v6252, 52
    %v6821 = vpop.permute.xlu0 %6820
    %6822 = vrot.lane.b32.xlu0 %v6253, 52
    %v6823 = vpop.permute.xlu0 %6822
    %6824 = vrot.lane.b32.xlu0 %v6254, 52
    %v6825 = vpop.permute.xlu0 %6824
    %6826 = vrot.lane.b32.xlu0 %v6255, 52
    %v6827 = vpop.permute.xlu0 %6826
    %6828 = vrot.lane.b32.xlu0 %v6256, 52
    %v6829 = vpop.permute.xlu0 %6828
    %6830 = vrot.lane.b32.xlu0 %v6257, 52
    %v6831 = vpop.permute.xlu0 %6830
    %6832 = vrot.lane.b32.xlu0 %v6258, 52
    %v6833 = vpop.permute.xlu0 %6832
    %6834 = vrot.lane.b32.xlu0 %v6259, 52
    %v6835 = vpop.permute.xlu0 %6834
    %6836 = vrot.lane.b32.xlu0 %v6260, 52
    %v6837 = vpop.permute.xlu0 %6836
    %6838 = vrot.lane.b32.xlu0 %v6261, 52
    %v6839 = vpop.permute.xlu0 %6838
    %6840 = vrot.lane.b32.xlu0 %v6262, 52
    %v6841 = vpop.permute.xlu0 %6840
    %6842 = vrot.lane.b32.xlu0 %v6263, 52
    %v6843 = vpop.permute.xlu0 %6842
    %6844 = vrot.lane.b32.xlu0 %v6264, 52
    %v6845 = vpop.permute.xlu0 %6844
    %6846 = vrot.lane.b32.xlu0 %v6265, 52
    %v6847 = vpop.permute.xlu0 %6846
    %6848 = vrot.lane.b32.xlu0 %v6266, 52
    %v6849 = vpop.permute.xlu0 %6848
    %6850 = vrot.lane.b32.xlu0 %v6267, 52
    %v6851 = vpop.permute.xlu0 %6850
    %6852 = vrot.lane.b32.xlu0 %v6268, 52
    %v6853 = vpop.permute.xlu0 %6852
    %6854 = vrot.lane.b32.xlu0 %v6269, 52
    %v6855 = vpop.permute.xlu0 %6854
    %6856 = vrot.lane.b32.xlu0 %v6270, 52
    %v6857 = vpop.permute.xlu0 %6856
    %6858 = vrot.lane.b32.xlu0 %v6271, 52
    %v6859 = vpop.permute.xlu0 %6858
    %6860 = vrot.lane.b32.xlu0 %v6272, 52
    %v6861 = vpop.permute.xlu0 %6860
    %6862 = vrot.lane.b32.xlu0 %v6273, 52
    %v6863 = vpop.permute.xlu0 %6862
    %6864 = vrot.lane.b32.xlu0 %v6274, 52
    %v6865 = vpop.permute.xlu0 %6864
    %6866 = vrot.lane.b32.xlu0 %v6275, 52
    %v6867 = vpop.permute.xlu0 %6866
    %6868 = vrot.lane.b32.xlu0 %v6276, 52
    %v6869 = vpop.permute.xlu0 %6868
    %6870 = vrot.lane.b32.xlu0 %v6277, 52
    %v6871 = vpop.permute.xlu0 %6870
    %6872 = vrot.lane.b32.xlu0 %v6278, 52
    %v6873 = vpop.permute.xlu0 %6872
    %6874 = vrot.lane.b32.xlu0 %v6279, 52
    %v6875 = vpop.permute.xlu0 %6874
    %6876 = vrot.lane.b32.xlu0 %v6280, 52
    %v6877 = vpop.permute.xlu0 %6876
    %6878 = vrot.lane.b32.xlu0 %v6281, 52
    %v6879 = vpop.permute.xlu0 %6878
    %6880 = vrot.lane.b32.xlu0 %v6282, 52
    %v6881 = vpop.permute.xlu0 %6880
    %6882 = vrot.lane.b32.xlu0 %v6283, 52
    %v6883 = vpop.permute.xlu0 %6882
    %6884 = vrot.lane.b32.xlu0 %v6284, 52
    %v6885 = vpop.permute.xlu0 %6884
    %6886 = vrot.lane.b32.xlu0 %v6285, 52
    %v6887 = vpop.permute.xlu0 %6886
    %6888 = vrot.lane.b32.xlu0 %v6286, 52
    %v6889 = vpop.permute.xlu0 %6888
    %6890 = vrot.lane.b32.xlu0 %v6287, 52
    %v6891 = vpop.permute.xlu0 %6890
    %6892 = vrot.lane.b32.xlu0 %v6288, 52
    %v6893 = vpop.permute.xlu0 %6892
    %6894 = vrot.lane.b32.xlu0 %v6289, 52
    %v6895 = vpop.permute.xlu0 %6894
    %6896 = vrot.lane.b32.xlu0 %v6290, 52
    %v6897 = vpop.permute.xlu0 %6896
    %6898 = vrot.lane.b32.xlu0 %v6291, 52
    %v6899 = vpop.permute.xlu0 %6898
    %6900 = vrot.lane.b32.xlu0 %v6292, 52
    %v6901 = vpop.permute.xlu0 %6900
    %6902 = vrot.lane.b32.xlu0 %v6293, 52
    %v6903 = vpop.permute.xlu0 %6902
    %v6904 = vsel %vm1894, %v6793, %v6795
    %v6905 = vsel %vm1894, %v6795, %v6797
    %v6906 = vsel %vm1894, %v6797, %v6799
    %v6907 = vsel %vm1894, %v6799, %v6801
    %v6908 = vsel %vm1894, %v6801, %v6803
    %v6909 = vsel %vm1894, %v6803, %v6805
    %v6910 = vsel %vm1894, %v6805, %v6807
    %v6911 = vsel %vm1894, %v6807, %v6809
    %v6912 = vsel %vm1894, %v6809, %v6811
    %v6913 = vsel %vm1894, %v6811, %v6813
    %v6914 = vsel %vm1894, %v6813, %v6815
    %v6915 = vsel %vm1894, %v6815, %v6817
    %v6916 = vsel %vm1894, %v6817, %v6819
    %v6917 = vsel %vm1894, %v6819, %v6821
    %v6918 = vsel %vm1894, %v6821, %v6823
    %v6919 = vsel %vm1894, %v6823, %v6825
    %v6920 = vsel %vm1894, %v6825, %v6827
    %v6921 = vsel %vm1894, %v6827, %v6829
    %v6922 = vsel %vm1894, %v6829, %v6831
    %v6923 = vsel %vm1894, %v6831, %v6833
    %v6924 = vsel %vm1894, %v6833, %v6835
    %v6925 = vsel %vm1894, %v6835, %v6837
    %v6926 = vsel %vm1894, %v6837, %v6839
    %v6927 = vsel %vm1894, %v6839, %v6841
    %v6928 = vsel %vm1894, %v6841, %v6843
    %v6929 = vsel %vm1894, %v6845, %v6847
    %v6930 = vsel %vm1894, %v6847, %v6849
    %v6931 = vsel %vm1894, %v6849, %v6851
    %v6932 = vsel %vm1894, %v6851, %v6853
    %v6933 = vsel %vm1894, %v6853, %v6855
    %v6934 = vsel %vm1894, %v6855, %v6857
    %v6935 = vsel %vm1894, %v6857, %v6859
    %v6936 = vsel %vm1894, %v6859, %v6861
    %v6937 = vsel %vm1894, %v6861, %v6863
    %v6938 = vsel %vm1894, %v6863, %v6865
    %v6939 = vsel %vm1894, %v6865, %v6867
    %v6940 = vsel %vm1894, %v6867, %v6869
    %v6941 = vsel %vm1894, %v6869, %v6871
    %v6942 = vsel %vm1894, %v6871, %v6873
    %v6943 = vsel %vm1894, %v6873, %v6875
    %v6944 = vsel %vm1894, %v6875, %v6877
    %v6945 = vsel %vm1894, %v6877, %v6879
    %v6946 = vsel %vm1894, %v6879, %v6881
    %v6947 = vsel %vm1894, %v6881, %v6883
    %v6948 = vsel %vm1894, %v6883, %v6885
    %v6949 = vsel %vm1894, %v6885, %v6887
    %v6950 = vsel %vm1894, %v6887, %v6889
    %v6951 = vsel %vm1894, %v6889, %v6891
    %v6952 = vsel %vm1894, %v6891, %v6893
    %v6953 = vsel %vm1894, %v6893, %v6895
    %v6954 = vsel %vm1894, %v6895, %v6897
    %v6955 = vsel %vm1894, %v6897, %v6899
    %v6956 = vsel %vm1894, %v6901, %v6903
    %v6959 = vsel %vm1894, %v6903, %v6793
    %v6960 = vrot.slane %v6238, 4
    %v6961 = vrot.slane %v6239, 4
    %v6962 = vrot.slane %v6240, 4
    %v6963 = vrot.slane %v6241, 4
    %v6964 = vrot.slane %v6242, 4
    %v6965 = vrot.slane %v6243, 4
    %v6966 = vrot.slane %v6244, 4
    %v6967 = vrot.slane %v6245, 4
    %v6968 = vrot.slane %v6246, 4
    %v6969 = vrot.slane %v6247, 4
    %v6970 = vrot.slane %v6248, 4
    %v6971 = vrot.slane %v6249, 4
    %v6972 = vrot.slane %v6250, 4
    %v6973 = vrot.slane %v6251, 4
    %v6974 = vrot.slane %v6252, 4
    %v6975 = vrot.slane %v6253, 4
    %v6976 = vrot.slane %v6254, 4
    %v6977 = vrot.slane %v6255, 4
    %v6978 = vrot.slane %v6256, 4
    %v6979 = vrot.slane %v6257, 4
    %v6980 = vrot.slane %v6258, 4
    %v6981 = vrot.slane %v6259, 4
    %v6982 = vrot.slane %v6260, 4
    %v6983 = vrot.slane %v6261, 4
    %v6984 = vrot.slane %v6262, 4
    %v6985 = vrot.slane %v6264, 4
    %v6986 = vrot.slane %v6265, 4
    %v6987 = vrot.slane %v6266, 4
    %v6988 = vrot.slane %v6267, 4
    %v6989 = vrot.slane %v6268, 4
    %v6990 = vrot.slane %v6269, 4
    %v6991 = vrot.slane %v6270, 4
    %v6992 = vrot.slane %v6271, 4
    %v6993 = vrot.slane %v6272, 4
    %v6994 = vrot.slane %v6273, 4
    %v6995 = vrot.slane %v6274, 4
    %v6996 = vrot.slane %v6275, 4
    %v6997 = vrot.slane %v6276, 4
    %v6998 = vrot.slane %v6277, 4
    %v6999 = vrot.slane %v6278, 4
    %v7000 = vrot.slane %v6279, 4
    %v7001 = vrot.slane %v6280, 4
    %v7002 = vrot.slane %v6281, 4
    %v7003 = vrot.slane %v6282, 4
    %v7004 = vrot.slane %v6283, 4
    %v7005 = vrot.slane %v6284, 4
    %v7006 = vrot.slane %v6285, 4
    %v7007 = vrot.slane %v6286, 4
    %v7008 = vrot.slane %v6287, 4
    %v7009 = vrot.slane %v6288, 4
    %v7010 = vrot.slane %v6289, 4
    %v7011 = vrot.slane %v6290, 4
    %v7012 = vrot.slane %v6292, 4
    %v7013 = vrot.slane %v6293, 4
    %v7069 = vrot.slane %v6904, 4
    %v7070 = vrot.slane %v6905, 4
    %v7071 = vrot.slane %v6906, 4
    %v7072 = vrot.slane %v6907, 4
    %v7073 = vrot.slane %v6908, 4
    %v7074 = vrot.slane %v6909, 4
    %v7075 = vrot.slane %v6910, 4
    %v7076 = vrot.slane %v6911, 4
    %v7077 = vrot.slane %v6912, 4
    %v7078 = vrot.slane %v6913, 4
    %v7079 = vrot.slane %v6914, 4
    %v7080 = vrot.slane %v6915, 4
    %v7081 = vrot.slane %v6916, 4
    %v7082 = vrot.slane %v6917, 4
    %v7083 = vrot.slane %v6918, 4
    %v7084 = vrot.slane %v6919, 4
    %v7085 = vrot.slane %v6920, 4
    %v7086 = vrot.slane %v6921, 4
    %v7087 = vrot.slane %v6922, 4
    %v7088 = vrot.slane %v6923, 4
    %v7089 = vrot.slane %v6924, 4
    %v7090 = vrot.slane %v6925, 4
    %v7091 = vrot.slane %v6926, 4
    %v7092 = vrot.slane %v6927, 4
    %v7093 = vrot.slane %v6928, 4
    %v7094 = vrot.slane %v6929, 4
    %v7095 = vrot.slane %v6930, 4
    %v7096 = vrot.slane %v6931, 4
    %v7097 = vrot.slane %v6932, 4
    %v7098 = vrot.slane %v6933, 4
    %v7099 = vrot.slane %v6934, 4
    %v7100 = vrot.slane %v6935, 4
    %v7101 = vrot.slane %v6936, 4
    %v7102 = vrot.slane %v6937, 4
    %v7103 = vrot.slane %v6938, 4
    %v7104 = vrot.slane %v6939, 4
    %v7105 = vrot.slane %v6940, 4
    %v7106 = vrot.slane %v6941, 4
    %v7107 = vrot.slane %v6942, 4
    %v7108 = vrot.slane %v6943, 4
    %v7109 = vrot.slane %v6944, 4
    %v7110 = vrot.slane %v6945, 4
    %v7111 = vrot.slane %v6946, 4
    %v7112 = vrot.slane %v6947, 4
    %v7113 = vrot.slane %v6948, 4
    %v7114 = vrot.slane %v6949, 4
    %v7115 = vrot.slane %v6950, 4
    %v7116 = vrot.slane %v6951, 4
    %v7117 = vrot.slane %v6952, 4
    %v7118 = vrot.slane %v6953, 4
    %v7119 = vrot.slane %v6954, 4
    %v7120 = vrot.slane %v6955, 4
    %v7121 = vrot.slane %v6956, 4
    %v7122 = vrot.slane %v6959, 4
    %v7177 = vsel %vm4185, %v6570, %v6960
    %v7178 = vsel %vm4185, %v6463, %v6961
    %v7179 = vsel %vm4185, %v6464, %v6962
    %v7180 = vsel %vm4185, %v6465, %v6963
    %v7181 = vsel %vm4185, %v6466, %v6964
    %v7182 = vsel %vm4185, %v6467, %v6965
    %v7183 = vsel %vm4185, %v6468, %v6966
    %v7184 = vsel %vm4185, %v6469, %v6967
    %v7185 = vsel %vm4185, %v6470, %v6968
    %v7186 = vsel %vm4185, %v6471, %v6969
    %v7187 = vsel %vm4185, %v6472, %v6970
    %v7188 = vsel %vm4185, %v6473, %v6971
    %v7189 = vsel %vm4185, %v6474, %v6972
    %v7190 = vsel %vm4185, %v6475, %v6973
    %v7191 = vsel %vm4185, %v6476, %v6974
    %v7192 = vsel %vm4185, %v6477, %v6975
    %v7193 = vsel %vm4185, %v6478, %v6976
    %v7194 = vsel %vm4185, %v6479, %v6977
    %v7195 = vsel %vm4185, %v6480, %v6978
    %v7196 = vsel %vm4185, %v6481, %v6979
    %v7197 = vsel %vm4185, %v6482, %v6980
    %v7198 = vsel %vm4185, %v6483, %v6981
    %v7199 = vsel %vm4185, %v6484, %v6982
    %v7200 = vsel %vm4185, %v6485, %v6983
    %v7201 = vsel %vm4185, %v6486, %v6984
    %v7202 = vsel %vm4185, %v6487, %v6985
    %v7203 = vsel %vm4185, %v6488, %v6986
    %v7204 = vsel %vm4185, %v6489, %v6987
    %v7205 = vsel %vm4185, %v6490, %v6988
    %v7206 = vsel %vm4185, %v6491, %v6989
    %v7207 = vsel %vm4185, %v6492, %v6990
    %v7208 = vsel %vm4185, %v6493, %v6991
    %v7209 = vsel %vm4185, %v6494, %v6992
    %v7210 = vsel %vm4185, %v6495, %v6993
    %v7211 = vsel %vm4185, %v6496, %v6994
    %v7212 = vsel %vm4185, %v6497, %v6995
    %v7213 = vsel %vm4185, %v6498, %v6996
    %v7214 = vsel %vm4185, %v6499, %v6997
    %v7215 = vsel %vm4185, %v6500, %v6998
    %v7216 = vsel %vm4185, %v6501, %v6999
    %v7217 = vsel %vm4185, %v6502, %v7000
    %v7218 = vsel %vm4185, %v6503, %v7001
    %v7219 = vsel %vm4185, %v6504, %v7002
    %v7220 = vsel %vm4185, %v6505, %v7003
    %v7221 = vsel %vm4185, %v6506, %v7004
    %v7222 = vsel %vm4185, %v6507, %v7005
    %v7223 = vsel %vm4185, %v6508, %v7006
    %v7224 = vsel %vm4185, %v6509, %v7007
    %v7225 = vsel %vm4185, %v6510, %v7008
    %v7226 = vsel %vm4185, %v6511, %v7009
    %v7227 = vsel %vm4185, %v6512, %v7010
    %v7228 = vsel %vm4185, %v6513, %v7011
    %v7229 = vsel %vm4185, %v6514, %v7012
    %v7230 = vsel %vm4185, %v6515, %v7013
    %v7231 = vsel %vm4185, %v6683, %v7069
    %v7232 = vsel %vm4185, %v6684, %v7070
    %v7233 = vsel %vm4185, %v6685, %v7071
    %v7234 = vsel %vm4185, %v6686, %v7072
    %v7235 = vsel %vm4185, %v6687, %v7073
    %v7236 = vsel %vm4185, %v6688, %v7074
    %v7237 = vsel %vm4185, %v6689, %v7075
    %v7238 = vsel %vm4185, %v6690, %v7076
    %v7239 = vsel %vm4185, %v6691, %v7077
    %v7240 = vsel %vm4185, %v6692, %v7078
    %v7241 = vsel %vm4185, %v6693, %v7079
    %v7242 = vsel %vm4185, %v6694, %v7080
    %v7243 = vsel %vm4185, %v6695, %v7081
    %v7244 = vsel %vm4185, %v6696, %v7082
    %v7245 = vsel %vm4185, %v6697, %v7083
    %v7246 = vsel %vm4185, %v6698, %v7084
    %v7247 = vsel %vm4185, %v6699, %v7085
    %v7248 = vsel %vm4185, %v6700, %v7086
    %v7249 = vsel %vm4185, %v6701, %v7087
    %v7250 = vsel %vm4185, %v6702, %v7088
    %v7251 = vsel %vm4185, %v6703, %v7089
    %v7252 = vsel %vm4185, %v6704, %v7090
    %v7253 = vsel %vm4185, %v6705, %v7091
    %v7254 = vsel %vm4185, %v6706, %v7092
    %v7255 = vsel %vm4185, %v6707, %v7093
    %v7256 = vsel %vm4185, %v6708, %v7094
    %v7257 = vsel %vm4185, %v6709, %v7095
    %v7258 = vsel %vm4185, %v6710, %v7096
    %v7259 = vsel %vm4185, %v6711, %v7097
    %v7260 = vsel %vm4185, %v6712, %v7098
    %v7261 = vsel %vm4185, %v6713, %v7099
    %v7262 = vsel %vm4185, %v6714, %v7100
    %v7263 = vsel %vm4185, %v6715, %v7101
    %v7264 = vsel %vm4185, %v6716, %v7102
    %v7265 = vsel %vm4185, %v6717, %v7103
    %v7266 = vsel %vm4185, %v6718, %v7104
    %v7267 = vsel %vm4185, %v6719, %v7105
    %v7268 = vsel %vm4185, %v6720, %v7106
    %v7269 = vsel %vm4185, %v6721, %v7107
    %v7270 = vsel %vm4185, %v6722, %v7108
    %v7271 = vsel %vm4185, %v6723, %v7109
    %v7272 = vsel %vm4185, %v6724, %v7110
    %v7273 = vsel %vm4185, %v6725, %v7111
    %v7274 = vsel %vm4185, %v6726, %v7112
    %v7275 = vsel %vm4185, %v6727, %v7113
    %v7276 = vsel %vm4185, %v6728, %v7114
    %v7277 = vsel %vm4185, %v6729, %v7115
    %v7278 = vsel %vm4185, %v6730, %v7116
    %v7279 = vsel %vm4185, %v6731, %v7117
    %v7280 = vsel %vm4185, %v6732, %v7118
    %v7281 = vsel %vm4185, %v6733, %v7119
    %v7282 = vsel %vm4185, %v6734, %v7120
    %v7283 = vsel %vm4185, %v6735, %v7121
    %v7284 = vsel %vm4185, %v6791, %v7122
    %v7285 = vld [vmem:[%s3] sm:$0xf]
    %v7286 = vld [vmem:[%s4] sm:$0xf]
    %v7287 = vpack.c.bf16 %v7231, %v7177
    %v7288 = vpack.c.bf16 %v7232, %v7178
    %v7289 = vpack.c.bf16 %v7233, %v7179
    %v7290 = vpack.c.bf16 %v7234, %v7180
    %v7291 = vpack.c.bf16 %v7235, %v7181
    %v7292 = vpack.c.bf16 %v7236, %v7182
    %v7293 = vpack.c.bf16 %v7237, %v7183
    %v7294 = vpack.c.bf16 %v7238, %v7184
    %v7295 = vpack.c.bf16 %v7239, %v7185
    %v7296 = vpack.c.bf16 %v7240, %v7186
    %v7297 = vpack.c.bf16 %v7241, %v7187
    %v7298 = vpack.c.bf16 %v7242, %v7188
    %v7299 = vpack.c.bf16 %v7243, %v7189
    %v7300 = vpack.c.bf16 %v7244, %v7190
    %v7301 = vpack.c.bf16 %v7245, %v7191
    %v7302 = vpack.c.bf16 %v7246, %v7192
    %v7303 = vpack.c.bf16 %v7247, %v7193
    %v7304 = vpack.c.bf16 %v7248, %v7194
    %v7305 = vpack.c.bf16 %v7249, %v7195
    %v7306 = vpack.c.bf16 %v7250, %v7196
    %v7307 = vpack.c.bf16 %v7251, %v7197
    %v7308 = vpack.c.bf16 %v7252, %v7198
    %v7309 = vpack.c.bf16 %v7253, %v7199
    %v7310 = vpack.c.bf16 %v7254, %v7200
    %v7311 = vpack.c.bf16 %v7256, %v7202
    %v7312 = vpack.c.bf16 %v7257, %v7203
    %v7313 = vpack.c.bf16 %v7258, %v7204
    %v7314 = vpack.c.bf16 %v7259, %v7205
    %v7315 = vpack.c.bf16 %v7260, %v7206
    %v7316 = vpack.c.bf16 %v7261, %v7207
    %v7317 = vpack.c.bf16 %v7262, %v7208
    %v7318 = vpack.c.bf16 %v7263, %v7209
    %v7319 = vpack.c.bf16 %v7264, %v7210
    %v7320 = vpack.c.bf16 %v7265, %v7211
    %v7321 = vpack.c.bf16 %v7266, %v7212
    %v7322 = vpack.c.bf16 %v7267, %v7213
    %v7323 = vpack.c.bf16 %v7268, %v7214
    %v7324 = vpack.c.bf16 %v7269, %v7215
    %v7325 = vpack.c.bf16 %v7270, %v7216
    %v7326 = vpack.c.bf16 %v7271, %v7217
    %v7327 = vpack.c.bf16 %v7272, %v7218
    %v7328 = vpack.c.bf16 %v7273, %v7219
    %v7329 = vpack.c.bf16 %v7274, %v7220
    %v7330 = vpack.c.bf16 %v7275, %v7221
    %v7331 = vpack.c.bf16 %v7276, %v7222
    %v7332 = vpack.c.bf16 %v7277, %v7223
    %v7333 = vpack.c.bf16 %v7278, %v7224
    %v7334 = vpack.c.bf16 %v7279, %v7225
    %v7335 = vpack.c.bf16 %v7280, %v7226
    %v7336 = vpack.c.bf16 %v7281, %v7227
    %v7337 = vpack.c.bf16 %v7283, %v7229
    %v7338 = vpack.c.bf16 %v7284, %v7230
    %7447 = vrot.lane.b32.xlu0 %v7177, 127
    %v7448 = vpop.permute.xlu0 %7447
    %7449 = vrot.lane.b32.xlu0 %v7178, 127
    %v7450 = vpop.permute.xlu0 %7449
    %7451 = vrot.lane.b32.xlu0 %v7179, 127
    %v7452 = vpop.permute.xlu0 %7451
    %7453 = vrot.lane.b32.xlu0 %v7180, 127
    %v7454 = vpop.permute.xlu0 %7453
    %7455 = vrot.lane.b32.xlu0 %v7181, 127
    %v7456 = vpop.permute.xlu0 %7455
    %7457 = vrot.lane.b32.xlu0 %v7182, 127
    %v7458 = vpop.permute.xlu0 %7457
    %7459 = vrot.lane.b32.xlu0 %v7183, 127
    %v7460 = vpop.permute.xlu0 %7459
    %7461 = vrot.lane.b32.xlu0 %v7184, 127
    %v7462 = vpop.permute.xlu0 %7461
    %7463 = vrot.lane.b32.xlu0 %v7185, 127
    %v7464 = vpop.permute.xlu0 %7463
    %7465 = vrot.lane.b32.xlu0 %v7186, 127
    %v7466 = vpop.permute.xlu0 %7465
    %7467 = vrot.lane.b32.xlu0 %v7187, 127
    %v7468 = vpop.permute.xlu0 %7467
    %7469 = vrot.lane.b32.xlu0 %v7188, 127
    %v7470 = vpop.permute.xlu0 %7469
    %7471 = vrot.lane.b32.xlu0 %v7189, 127
    %v7472 = vpop.permute.xlu0 %7471
    %7473 = vrot.lane.b32.xlu0 %v7190, 127
    %v7474 = vpop.permute.xlu0 %7473
    %7475 = vrot.lane.b32.xlu0 %v7191, 127
    %v7476 = vpop.permute.xlu0 %7475
    %7477 = vrot.lane.b32.xlu0 %v7192, 127
    %v7478 = vpop.permute.xlu0 %7477
    %7479 = vrot.lane.b32.xlu0 %v7193, 127
    %v7480 = vpop.permute.xlu0 %7479
    %7481 = vrot.lane.b32.xlu0 %v7194, 127
    %v7482 = vpop.permute.xlu0 %7481
    %7483 = vrot.lane.b32.xlu0 %v7195, 127
    %v7484 = vpop.permute.xlu0 %7483
    %7485 = vrot.lane.b32.xlu0 %v7196, 127
    %v7486 = vpop.permute.xlu0 %7485
    %7487 = vrot.lane.b32.xlu0 %v7197, 127
    %v7488 = vpop.permute.xlu0 %7487
    %7489 = vrot.lane.b32.xlu0 %v7198, 127
    %v7490 = vpop.permute.xlu0 %7489
    %7491 = vrot.lane.b32.xlu0 %v7199, 127
    %v7492 = vpop.permute.xlu0 %7491
    %7493 = vrot.lane.b32.xlu0 %v7200, 127
    %v7494 = vpop.permute.xlu0 %7493
    %7495 = vrot.lane.b32.xlu0 %v7201, 127
    %v7496 = vpop.permute.xlu0 %7495
    %7497 = vrot.lane.b32.xlu0 %v7202, 127
    %v7498 = vpop.permute.xlu0 %7497
    %7499 = vrot.lane.b32.xlu0 %v7203, 127
    %v7500 = vpop.permute.xlu0 %7499
    %7501 = vrot.lane.b32.xlu0 %v7204, 127
    %v7502 = vpop.permute.xlu0 %7501
    %7503 = vrot.lane.b32.xlu0 %v7205, 127
    %v7504 = vpop.permute.xlu0 %7503
    %7505 = vrot.lane.b32.xlu0 %v7206, 127
    %v7506 = vpop.permute.xlu0 %7505
    %7507 = vrot.lane.b32.xlu0 %v7207, 127
    %v7508 = vpop.permute.xlu0 %7507
    %7509 = vrot.lane.b32.xlu0 %v7208, 127
    %v7510 = vpop.permute.xlu0 %7509
    %7511 = vrot.lane.b32.xlu0 %v7209, 127
    %v7512 = vpop.permute.xlu0 %7511
    %7513 = vrot.lane.b32.xlu0 %v7210, 127
    %v7514 = vpop.permute.xlu0 %7513
    %7515 = vrot.lane.b32.xlu0 %v7211, 127
    %v7516 = vpop.permute.xlu0 %7515
    %7517 = vrot.lane.b32.xlu0 %v7212, 127
    %v7518 = vpop.permute.xlu0 %7517
    %7519 = vrot.lane.b32.xlu0 %v7213, 127
    %v7520 = vpop.permute.xlu0 %7519
    %7521 = vrot.lane.b32.xlu0 %v7214, 127
    %v7522 = vpop.permute.xlu0 %7521
    %7523 = vrot.lane.b32.xlu0 %v7215, 127
    %v7524 = vpop.permute.xlu0 %7523
    %7525 = vrot.lane.b32.xlu0 %v7216, 127
    %v7526 = vpop.permute.xlu0 %7525
    %7527 = vrot.lane.b32.xlu0 %v7217, 127
    %v7528 = vpop.permute.xlu0 %7527
    %7529 = vrot.lane.b32.xlu0 %v7218, 127
    %v7530 = vpop.permute.xlu0 %7529
    %7531 = vrot.lane.b32.xlu0 %v7219, 127
    %v7532 = vpop.permute.xlu0 %7531
    %7533 = vrot.lane.b32.xlu0 %v7220, 127
    %v7534 = vpop.permute.xlu0 %7533
    %7535 = vrot.lane.b32.xlu0 %v7221, 127
    %v7536 = vpop.permute.xlu0 %7535
    %7537 = vrot.lane.b32.xlu0 %v7222, 127
    %v7538 = vpop.permute.xlu0 %7537
    %7539 = vrot.lane.b32.xlu0 %v7223, 127
    %v7540 = vpop.permute.xlu0 %7539
    %7541 = vrot.lane.b32.xlu0 %v7224, 127
    %v7542 = vpop.permute.xlu0 %7541
    %7543 = vrot.lane.b32.xlu0 %v7225, 127
    %v7544 = vpop.permute.xlu0 %7543
    %7545 = vrot.lane.b32.xlu0 %v7226, 127
    %v7546 = vpop.permute.xlu0 %7545
    %7547 = vrot.lane.b32.xlu0 %v7227, 127
    %v7548 = vpop.permute.xlu0 %7547
    %7549 = vrot.lane.b32.xlu0 %v7228, 127
    %v7550 = vpop.permute.xlu0 %7549
    %7551 = vrot.lane.b32.xlu0 %v7229, 127
    %v7552 = vpop.permute.xlu0 %7551
    %7553 = vrot.lane.b32.xlu0 %v7230, 127
    %v7554 = vpop.permute.xlu0 %7553
    %7555 = vrot.lane.b32.xlu0 %v7231, 127
    %v7556 = vpop.permute.xlu0 %7555
    %7557 = vrot.lane.b32.xlu0 %v7232, 127
    %v7558 = vpop.permute.xlu0 %7557
    %7559 = vrot.lane.b32.xlu0 %v7233, 127
    %v7560 = vpop.permute.xlu0 %7559
    %7561 = vrot.lane.b32.xlu0 %v7234, 127
    %v7562 = vpop.permute.xlu0 %7561
    %7563 = vrot.lane.b32.xlu0 %v7235, 127
    %v7564 = vpop.permute.xlu0 %7563
    %7565 = vrot.lane.b32.xlu0 %v7236, 127
    %v7566 = vpop.permute.xlu0 %7565
    %7567 = vrot.lane.b32.xlu0 %v7237, 127
    %v7568 = vpop.permute.xlu0 %7567
    %7569 = vrot.lane.b32.xlu0 %v7238, 127
    %v7570 = vpop.permute.xlu0 %7569
    %7571 = vrot.lane.b32.xlu0 %v7239, 127
    %v7572 = vpop.permute.xlu0 %7571
    %7573 = vrot.lane.b32.xlu0 %v7240, 127
    %v7574 = vpop.permute.xlu0 %7573
    %7575 = vrot.lane.b32.xlu0 %v7241, 127
    %v7576 = vpop.permute.xlu0 %7575
    %7577 = vrot.lane.b32.xlu0 %v7242, 127
    %v7578 = vpop.permute.xlu0 %7577
    %7579 = vrot.lane.b32.xlu0 %v7243, 127
    %v7580 = vpop.permute.xlu0 %7579
    %7581 = vrot.lane.b32.xlu0 %v7244, 127
    %v7582 = vpop.permute.xlu0 %7581
    %7583 = vrot.lane.b32.xlu0 %v7245, 127
    %v7584 = vpop.permute.xlu0 %7583
    %7585 = vrot.lane.b32.xlu0 %v7246, 127
    %v7586 = vpop.permute.xlu0 %7585
    %7587 = vrot.lane.b32.xlu0 %v7247, 127
    %v7588 = vpop.permute.xlu0 %7587
    %7589 = vrot.lane.b32.xlu0 %v7248, 127
    %v7590 = vpop.permute.xlu0 %7589
    %7591 = vrot.lane.b32.xlu0 %v7249, 127
    %v7592 = vpop.permute.xlu0 %7591
    %7593 = vrot.lane.b32.xlu0 %v7250, 127
    %v7594 = vpop.permute.xlu0 %7593
    %7595 = vrot.lane.b32.xlu0 %v7251, 127
    %v7596 = vpop.permute.xlu0 %7595
    %7597 = vrot.lane.b32.xlu0 %v7252, 127
    %v7598 = vpop.permute.xlu0 %7597
    %7599 = vrot.lane.b32.xlu0 %v7253, 127
    %v7600 = vpop.permute.xlu0 %7599
    %7601 = vrot.lane.b32.xlu0 %v7254, 127
    %v7602 = vpop.permute.xlu0 %7601
    %7603 = vrot.lane.b32.xlu0 %v7255, 127
    %v7604 = vpop.permute.xlu0 %7603
    %7605 = vrot.lane.b32.xlu0 %v7256, 127
    %v7606 = vpop.permute.xlu0 %7605
    %7607 = vrot.lane.b32.xlu0 %v7257, 127
    %v7608 = vpop.permute.xlu0 %7607
    %7609 = vrot.lane.b32.xlu0 %v7258, 127
    %v7610 = vpop.permute.xlu0 %7609
    %7611 = vrot.lane.b32.xlu0 %v7259, 127
    %v7612 = vpop.permute.xlu0 %7611
    %7613 = vrot.lane.b32.xlu0 %v7260, 127
    %v7614 = vpop.permute.xlu0 %7613
    %7615 = vrot.lane.b32.xlu0 %v7261, 127
    %v7616 = vpop.permute.xlu0 %7615
    %7617 = vrot.lane.b32.xlu0 %v7262, 127
    %v7618 = vpop.permute.xlu0 %7617
    %7619 = vrot.lane.b32.xlu0 %v7263, 127
    %v7620 = vpop.permute.xlu0 %7619
    %7621 = vrot.lane.b32.xlu0 %v7264, 127
    %v7622 = vpop.permute.xlu0 %7621
    %7623 = vrot.lane.b32.xlu0 %v7265, 127
    %v7624 = vpop.permute.xlu0 %7623
    %7625 = vrot.lane.b32.xlu0 %v7266, 127
    %v7626 = vpop.permute.xlu0 %7625
    %7627 = vrot.lane.b32.xlu0 %v7267, 127
    %v7628 = vpop.permute.xlu0 %7627
    %7629 = vrot.lane.b32.xlu0 %v7268, 127
    %v7630 = vpop.permute.xlu0 %7629
    %7631 = vrot.lane.b32.xlu0 %v7269, 127
    %v7632 = vpop.permute.xlu0 %7631
    %7633 = vrot.lane.b32.xlu0 %v7270, 127
    %v7634 = vpop.permute.xlu0 %7633
    %7635 = vrot.lane.b32.xlu0 %v7271, 127
    %v7636 = vpop.permute.xlu0 %7635
    %7637 = vrot.lane.b32.xlu0 %v7272, 127
    %v7638 = vpop.permute.xlu0 %7637
    %7639 = vrot.lane.b32.xlu0 %v7273, 127
    %v7640 = vpop.permute.xlu0 %7639
    %7641 = vrot.lane.b32.xlu0 %v7274, 127
    %v7642 = vpop.permute.xlu0 %7641
    %7643 = vrot.lane.b32.xlu0 %v7275, 127
    %v7644 = vpop.permute.xlu0 %7643
    %7645 = vrot.lane.b32.xlu0 %v7276, 127
    %v7646 = vpop.permute.xlu0 %7645
    %7647 = vrot.lane.b32.xlu0 %v7277, 127
    %v7648 = vpop.permute.xlu0 %7647
    %7649 = vrot.lane.b32.xlu0 %v7278, 127
    %v7650 = vpop.permute.xlu0 %7649
    %7651 = vrot.lane.b32.xlu0 %v7279, 127
    %v7652 = vpop.permute.xlu0 %7651
    %7653 = vrot.lane.b32.xlu0 %v7280, 127
    %v7654 = vpop.permute.xlu0 %7653
    %7655 = vrot.lane.b32.xlu0 %v7281, 127
    %v7656 = vpop.permute.xlu0 %7655
    %7657 = vrot.lane.b32.xlu0 %v7282, 127
    %v7658 = vpop.permute.xlu0 %7657
    %7659 = vrot.lane.b32.xlu0 %v7283, 127
    %v7660 = vpop.permute.xlu0 %7659
    %7661 = vrot.lane.b32.xlu0 %v7284, 127
    %v7662 = vpop.permute.xlu0 %7661
    %v7663 = vsel %vm3085, %v7448, %v7450
    %v7664 = vsel %vm3085, %v7450, %v7452
    %v7665 = vsel %vm3085, %v7452, %v7454
    %v7666 = vsel %vm3085, %v7454, %v7456
    %v7667 = vsel %vm3085, %v7456, %v7458
    %v7668 = vsel %vm3085, %v7458, %v7460
    %v7669 = vsel %vm3085, %v7460, %v7462
    %v7670 = vsel %vm3085, %v7462, %v7464
    %v7671 = vsel %vm3085, %v7464, %v7466
    %v7672 = vsel %vm3085, %v7466, %v7468
    %v7673 = vsel %vm3085, %v7468, %v7470
    %v7674 = vsel %vm3085, %v7470, %v7472
    %v7675 = vsel %vm3085, %v7472, %v7474
    %v7676 = vsel %vm3085, %v7474, %v7476
    %v7677 = vsel %vm3085, %v7476, %v7478
    %v7678 = vsel %vm3085, %v7478, %v7480
    %v7679 = vsel %vm3085, %v7480, %v7482
    %v7680 = vsel %vm3085, %v7482, %v7484
    %v7681 = vsel %vm3085, %v7484, %v7486
    %v7682 = vsel %vm3085, %v7486, %v7488
    %v7683 = vsel %vm3085, %v7488, %v7490
    %v7684 = vsel %vm3085, %v7490, %v7492
    %v7685 = vsel %vm3085, %v7492, %v7494
    %v7686 = vsel %vm3085, %v7494, %v7496
    %v7687 = vsel %vm3085, %v7498, %v7500
    %v7688 = vsel %vm3085, %v7500, %v7502
    %v7689 = vsel %vm3085, %v7502, %v7504
    %v7690 = vsel %vm3085, %v7504, %v7506
    %v7691 = vsel %vm3085, %v7506, %v7508
    %v7692 = vsel %vm3085, %v7508, %v7510
    %v7693 = vsel %vm3085, %v7510, %v7512
    %v7694 = vsel %vm3085, %v7512, %v7514
    %v7695 = vsel %vm3085, %v7514, %v7516
    %v7696 = vsel %vm3085, %v7516, %v7518
    %v7697 = vsel %vm3085, %v7518, %v7520
    %v7698 = vsel %vm3085, %v7520, %v7522
    %v7699 = vsel %vm3085, %v7522, %v7524
    %v7700 = vsel %vm3085, %v7524, %v7526
    %v7701 = vsel %vm3085, %v7526, %v7528
    %v7702 = vsel %vm3085, %v7528, %v7530
    %v7703 = vsel %vm3085, %v7530, %v7532
    %v7704 = vsel %vm3085, %v7532, %v7534
    %v7705 = vsel %vm3085, %v7534, %v7536
    %v7706 = vsel %vm3085, %v7536, %v7538
    %v7707 = vsel %vm3085, %v7538, %v7540
    %v7708 = vsel %vm3085, %v7540, %v7542
    %v7709 = vsel %vm3085, %v7542, %v7544
    %v7710 = vsel %vm3085, %v7544, %v7546
    %v7711 = vsel %vm3085, %v7546, %v7548
    %v7712 = vsel %vm3085, %v7548, %v7550
    %v7713 = vsel %vm3085, %v7552, %v7554
    %v7714 = vsel %vm3085, %v7556, %v7558
    %v7715 = vsel %vm3085, %v7558, %v7560
    %v7716 = vsel %vm3085, %v7560, %v7562
    %v7717 = vsel %vm3085, %v7562, %v7564
    %v7718 = vsel %vm3085, %v7564, %v7566
    %v7719 = vsel %vm3085, %v7566, %v7568
    %v7720 = vsel %vm3085, %v7568, %v7570
    %v7721 = vsel %vm3085, %v7570, %v7572
    %v7722 = vsel %vm3085, %v7572, %v7574
    %v7723 = vsel %vm3085, %v7574, %v7576
    %v7724 = vsel %vm3085, %v7576, %v7578
    %v7725 = vsel %vm3085, %v7578, %v7580
    %v7726 = vsel %vm3085, %v7580, %v7582
    %v7727 = vsel %vm3085, %v7582, %v7584
    %v7728 = vsel %vm3085, %v7584, %v7586
    %v7729 = vsel %vm3085, %v7586, %v7588
    %v7730 = vsel %vm3085, %v7588, %v7590
    %v7731 = vsel %vm3085, %v7590, %v7592
    %v7732 = vsel %vm3085, %v7592, %v7594
    %v7733 = vsel %vm3085, %v7594, %v7596
    %v7734 = vsel %vm3085, %v7596, %v7598
    %v7735 = vsel %vm3085, %v7598, %v7600
    %v7736 = vsel %vm3085, %v7600, %v7602
    %v7737 = vsel %vm3085, %v7602, %v7604
    %v7738 = vsel %vm3085, %v7606, %v7608
    %v7739 = vsel %vm3085, %v7608, %v7610
    %v7740 = vsel %vm3085, %v7610, %v7612
    %v7741 = vsel %vm3085, %v7612, %v7614
    %v7742 = vsel %vm3085, %v7614, %v7616
    %v7743 = vsel %vm3085, %v7616, %v7618
    %v7744 = vsel %vm3085, %v7618, %v7620
    %v7745 = vsel %vm3085, %v7620, %v7622
    %v7746 = vsel %vm3085, %v7622, %v7624
    %v7747 = vsel %vm3085, %v7624, %v7626
    %v7748 = vsel %vm3085, %v7626, %v7628
    %v7749 = vsel %vm3085, %v7628, %v7630
    %v7750 = vsel %vm3085, %v7630, %v7632
    %v7751 = vsel %vm3085, %v7632, %v7634
    %v7752 = vsel %vm3085, %v7634, %v7636
    %v7753 = vsel %vm3085, %v7636, %v7638
    %v7754 = vsel %vm3085, %v7638, %v7640
    %v7755 = vsel %vm3085, %v7640, %v7642
    %v7756 = vsel %vm3085, %v7642, %v7644
    %v7757 = vsel %vm3085, %v7644, %v7646
    %v7758 = vsel %vm3085, %v7646, %v7648
    %v7759 = vsel %vm3085, %v7648, %v7650
    %v7760 = vsel %vm3085, %v7650, %v7652
    %v7761 = vsel %vm3085, %v7652, %v7654
    %v7762 = vsel %vm3085, %v7654, %v7656
    %v7763 = vsel %vm3085, %v7656, %v7658
    %v7764 = vsel %vm3085, %v7660, %v7662
    %v7871 = vsel %vm3085, %v7554, %v7448
    %v7872 = vsel %vm3085, %v7662, %v7556
    %v7873 = vpack.c.bf16 %v7714, %v7663
    %v7874 = vpack.c.bf16 %v7715, %v7664
    %v7875 = vpack.c.bf16 %v7716, %v7665
    %v7876 = vpack.c.bf16 %v7717, %v7666
    %v7877 = vpack.c.bf16 %v7718, %v7667
    %v7878 = vpack.c.bf16 %v7719, %v7668
    %v7879 = vpack.c.bf16 %v7720, %v7669
    %v7880 = vpack.c.bf16 %v7721, %v7670
    %v7881 = vpack.c.bf16 %v7722, %v7671
    %v7882 = vpack.c.bf16 %v7723, %v7672
    %v7883 = vpack.c.bf16 %v7724, %v7673
    %v7884 = vpack.c.bf16 %v7725, %v7674
    %v7885 = vpack.c.bf16 %v7726, %v7675
    %v7886 = vpack.c.bf16 %v7727, %v7676
    %v7887 = vpack.c.bf16 %v7728, %v7677
    %v7888 = vpack.c.bf16 %v7729, %v7678
    %v7889 = vpack.c.bf16 %v7730, %v7679
    %v7890 = vpack.c.bf16 %v7731, %v7680
    %v7891 = vpack.c.bf16 %v7732, %v7681
    %v7892 = vpack.c.bf16 %v7733, %v7682
    %v7893 = vpack.c.bf16 %v7734, %v7683
    %v7894 = vpack.c.bf16 %v7735, %v7684
    %v7895 = vpack.c.bf16 %v7736, %v7685
    %v7896 = vpack.c.bf16 %v7737, %v7686
    %v7897 = vpack.c.bf16 %v7738, %v7687
    %v7898 = vpack.c.bf16 %v7739, %v7688
    %v7899 = vpack.c.bf16 %v7740, %v7689
    %v7900 = vpack.c.bf16 %v7741, %v7690
    %v7901 = vpack.c.bf16 %v7742, %v7691
    %v7902 = vpack.c.bf16 %v7743, %v7692
    %v7903 = vpack.c.bf16 %v7744, %v7693
    %v7904 = vpack.c.bf16 %v7745, %v7694
    %v7905 = vpack.c.bf16 %v7746, %v7695
    %v7906 = vpack.c.bf16 %v7747, %v7696
    %v7907 = vpack.c.bf16 %v7748, %v7697
    %v7908 = vpack.c.bf16 %v7749, %v7698
    %v7909 = vpack.c.bf16 %v7750, %v7699
    %v7910 = vpack.c.bf16 %v7751, %v7700
    %v7911 = vpack.c.bf16 %v7752, %v7701
    %v7912 = vpack.c.bf16 %v7753, %v7702
    %v7913 = vpack.c.bf16 %v7754, %v7703
    %v7914 = vpack.c.bf16 %v7755, %v7704
    %v7915 = vpack.c.bf16 %v7756, %v7705
    %v7916 = vpack.c.bf16 %v7757, %v7706
    %v7917 = vpack.c.bf16 %v7758, %v7707
    %v7918 = vpack.c.bf16 %v7759, %v7708
    %v7919 = vpack.c.bf16 %v7760, %v7709
    %v7920 = vpack.c.bf16 %v7761, %v7710
    %v7921 = vpack.c.bf16 %v7762, %v7711
    %v7922 = vpack.c.bf16 %v7763, %v7712
    %v7923 = vpack.c.bf16 %v7764, %v7713
    %v7924 = vpack.c.bf16 %v7872, %v7871
    %7925 = vrot.lane.b32.xlu0 %v7177, 126
    %v7926 = vpop.permute.xlu0 %7925
    %7927 = vrot.lane.b32.xlu0 %v7178, 126
    %v7928 = vpop.permute.xlu0 %7927
    %7929 = vrot.lane.b32.xlu0 %v7179, 126
    %v7930 = vpop.permute.xlu0 %7929
    %7931 = vrot.lane.b32.xlu0 %v7180, 126
    %v7932 = vpop.permute.xlu0 %7931
    %7933 = vrot.lane.b32.xlu0 %v7181, 126
    %v7934 = vpop.permute.xlu0 %7933
    %7935 = vrot.lane.b32.xlu0 %v7182, 126
    %v7936 = vpop.permute.xlu0 %7935
    %7937 = vrot.lane.b32.xlu0 %v7183, 126
    %v7938 = vpop.permute.xlu0 %7937
    %7939 = vrot.lane.b32.xlu0 %v7184, 126
    %v7940 = vpop.permute.xlu0 %7939
    %7941 = vrot.lane.b32.xlu0 %v7185, 126
    %v7942 = vpop.permute.xlu0 %7941
    %7943 = vrot.lane.b32.xlu0 %v7186, 126
    %v7944 = vpop.permute.xlu0 %7943
    %7945 = vrot.lane.b32.xlu0 %v7187, 126
    %v7946 = vpop.permute.xlu0 %7945
    %7947 = vrot.lane.b32.xlu0 %v7188, 126
    %v7948 = vpop.permute.xlu0 %7947
    %7949 = vrot.lane.b32.xlu0 %v7189, 126
    %v7950 = vpop.permute.xlu0 %7949
    %7951 = vrot.lane.b32.xlu0 %v7190, 126
    %v7952 = vpop.permute.xlu0 %7951
    %7953 = vrot.lane.b32.xlu0 %v7191, 126
    %v7954 = vpop.permute.xlu0 %7953
    %7955 = vrot.lane.b32.xlu0 %v7192, 126
    %v7956 = vpop.permute.xlu0 %7955
    %7957 = vrot.lane.b32.xlu0 %v7193, 126
    %v7958 = vpop.permute.xlu0 %7957
    %7959 = vrot.lane.b32.xlu0 %v7194, 126
    %v7960 = vpop.permute.xlu0 %7959
    %7961 = vrot.lane.b32.xlu0 %v7195, 126
    %v7962 = vpop.permute.xlu0 %7961
    %7963 = vrot.lane.b32.xlu0 %v7196, 126
    %v7964 = vpop.permute.xlu0 %7963
    %7965 = vrot.lane.b32.xlu0 %v7197, 126
    %v7966 = vpop.permute.xlu0 %7965
    %7967 = vrot.lane.b32.xlu0 %v7198, 126
    %v7968 = vpop.permute.xlu0 %7967
    %7969 = vrot.lane.b32.xlu0 %v7199, 126
    %v7970 = vpop.permute.xlu0 %7969
    %7971 = vrot.lane.b32.xlu0 %v7200, 126
    %v7972 = vpop.permute.xlu0 %7971
    %7973 = vrot.lane.b32.xlu0 %v7201, 126
    %v7974 = vpop.permute.xlu0 %7973
    %7975 = vrot.lane.b32.xlu0 %v7202, 126
    %v7976 = vpop.permute.xlu0 %7975
    %7977 = vrot.lane.b32.xlu0 %v7203, 126
    %v7978 = vpop.permute.xlu0 %7977
    %7979 = vrot.lane.b32.xlu0 %v7204, 126
    %v7980 = vpop.permute.xlu0 %7979
    %7981 = vrot.lane.b32.xlu0 %v7205, 126
    %v7982 = vpop.permute.xlu0 %7981
    %7983 = vrot.lane.b32.xlu0 %v7206, 126
    %v7984 = vpop.permute.xlu0 %7983
    %7985 = vrot.lane.b32.xlu0 %v7207, 126
    %v7986 = vpop.permute.xlu0 %7985
    %7987 = vrot.lane.b32.xlu0 %v7208, 126
    %v7988 = vpop.permute.xlu0 %7987
    %7989 = vrot.lane.b32.xlu0 %v7209, 126
    %v7990 = vpop.permute.xlu0 %7989
    %7991 = vrot.lane.b32.xlu0 %v7210, 126
    %v7992 = vpop.permute.xlu0 %7991
    %7993 = vrot.lane.b32.xlu0 %v7211, 126
    %v7994 = vpop.permute.xlu0 %7993
    %7995 = vrot.lane.b32.xlu0 %v7212, 126
    %v7996 = vpop.permute.xlu0 %7995
    %7997 = vrot.lane.b32.xlu0 %v7213, 126
    %v7998 = vpop.permute.xlu0 %7997
    %7999 = vrot.lane.b32.xlu0 %v7214, 126
    %v8000 = vpop.permute.xlu0 %7999
    %8001 = vrot.lane.b32.xlu0 %v7215, 126
    %v8002 = vpop.permute.xlu0 %8001
    %8003 = vrot.lane.b32.xlu0 %v7216, 126
    %v8004 = vpop.permute.xlu0 %8003
    %8005 = vrot.lane.b32.xlu0 %v7217, 126
    %v8006 = vpop.permute.xlu0 %8005
    %8007 = vrot.lane.b32.xlu0 %v7218, 126
    %v8008 = vpop.permute.xlu0 %8007
    %8009 = vrot.lane.b32.xlu0 %v7219, 126
    %v8010 = vpop.permute.xlu0 %8009
    %8011 = vrot.lane.b32.xlu0 %v7220, 126
    %v8012 = vpop.permute.xlu0 %8011
    %8013 = vrot.lane.b32.xlu0 %v7221, 126
    %v8014 = vpop.permute.xlu0 %8013
    %8015 = vrot.lane.b32.xlu0 %v7222, 126
    %v8016 = vpop.permute.xlu0 %8015
    %8017 = vrot.lane.b32.xlu0 %v7223, 126
    %v8018 = vpop.permute.xlu0 %8017
    %8019 = vrot.lane.b32.xlu0 %v7224, 126
    %v8020 = vpop.permute.xlu0 %8019
    %8021 = vrot.lane.b32.xlu0 %v7225, 126
    %v8022 = vpop.permute.xlu0 %8021
    %8023 = vrot.lane.b32.xlu0 %v7226, 126
    %v8024 = vpop.permute.xlu0 %8023
    %8025 = vrot.lane.b32.xlu0 %v7227, 126
    %v8026 = vpop.permute.xlu0 %8025
    %8027 = vrot.lane.b32.xlu0 %v7228, 126
    %v8028 = vpop.permute.xlu0 %8027
    %8029 = vrot.lane.b32.xlu0 %v7229, 126
    %v8030 = vpop.permute.xlu0 %8029
    %8031 = vrot.lane.b32.xlu0 %v7230, 126
    %v8032 = vpop.permute.xlu0 %8031
    %8033 = vrot.lane.b32.xlu0 %v7231, 126
    %v8034 = vpop.permute.xlu0 %8033
    %8035 = vrot.lane.b32.xlu0 %v7232, 126
    %v8036 = vpop.permute.xlu0 %8035
    %8037 = vrot.lane.b32.xlu0 %v7233, 126
    %v8038 = vpop.permute.xlu0 %8037
    %8039 = vrot.lane.b32.xlu0 %v7234, 126
    %v8040 = vpop.permute.xlu0 %8039
    %8041 = vrot.lane.b32.xlu0 %v7235, 126
    %v8042 = vpop.permute.xlu0 %8041
    %8043 = vrot.lane.b32.xlu0 %v7236, 126
    %v8044 = vpop.permute.xlu0 %8043
    %8045 = vrot.lane.b32.xlu0 %v7237, 126
    %v8046 = vpop.permute.xlu0 %8045
    %8047 = vrot.lane.b32.xlu0 %v7238, 126
    %v8048 = vpop.permute.xlu0 %8047
    %8049 = vrot.lane.b32.xlu0 %v7239, 126
    %v8050 = vpop.permute.xlu0 %8049
    %8051 = vrot.lane.b32.xlu0 %v7240, 126
    %v8052 = vpop.permute.xlu0 %8051
    %8053 = vrot.lane.b32.xlu0 %v7241, 126
    %v8054 = vpop.permute.xlu0 %8053
    %8055 = vrot.lane.b32.xlu0 %v7242, 126
    %v8056 = vpop.permute.xlu0 %8055
    %8057 = vrot.lane.b32.xlu0 %v7243, 126
    %v8058 = vpop.permute.xlu0 %8057
    %8059 = vrot.lane.b32.xlu0 %v7244, 126
    %v8060 = vpop.permute.xlu0 %8059
    %8061 = vrot.lane.b32.xlu0 %v7245, 126
    %v8062 = vpop.permute.xlu0 %8061
    %8063 = vrot.lane.b32.xlu0 %v7246, 126
    %v8064 = vpop.permute.xlu0 %8063
    %8065 = vrot.lane.b32.xlu0 %v7247, 126
    %v8066 = vpop.permute.xlu0 %8065
    %8067 = vrot.lane.b32.xlu0 %v7248, 126
    %v8068 = vpop.permute.xlu0 %8067
    %8069 = vrot.lane.b32.xlu0 %v7249, 126
    %v8070 = vpop.permute.xlu0 %8069
    %8071 = vrot.lane.b32.xlu0 %v7250, 126
    %v8072 = vpop.permute.xlu0 %8071
    %8073 = vrot.lane.b32.xlu0 %v7251, 126
    %v8074 = vpop.permute.xlu0 %8073
    %8075 = vrot.lane.b32.xlu0 %v7252, 126
    %v8076 = vpop.permute.xlu0 %8075
    %8077 = vrot.lane.b32.xlu0 %v7253, 126
    %v8078 = vpop.permute.xlu0 %8077
    %8079 = vrot.lane.b32.xlu0 %v7254, 126
    %v8080 = vpop.permute.xlu0 %8079
    %8081 = vrot.lane.b32.xlu0 %v7255, 126
    %v8082 = vpop.permute.xlu0 %8081
    %8083 = vrot.lane.b32.xlu0 %v7256, 126
    %v8084 = vpop.permute.xlu0 %8083
    %8085 = vrot.lane.b32.xlu0 %v7257, 126
    %v8086 = vpop.permute.xlu0 %8085
    %8087 = vrot.lane.b32.xlu0 %v7258, 126
    %v8088 = vpop.permute.xlu0 %8087
    %8089 = vrot.lane.b32.xlu0 %v7259, 126
    %v8090 = vpop.permute.xlu0 %8089
    %8091 = vrot.lane.b32.xlu0 %v7260, 126
    %v8092 = vpop.permute.xlu0 %8091
    %8093 = vrot.lane.b32.xlu0 %v7261, 126
    %v8094 = vpop.permute.xlu0 %8093
    %8095 = vrot.lane.b32.xlu0 %v7262, 126
    %v8096 = vpop.permute.xlu0 %8095
    %8097 = vrot.lane.b32.xlu0 %v7263, 126
    %v8098 = vpop.permute.xlu0 %8097
    %8099 = vrot.lane.b32.xlu0 %v7264, 126
    %v8100 = vpop.permute.xlu0 %8099
    %8101 = vrot.lane.b32.xlu0 %v7265, 126
    %v8102 = vpop.permute.xlu0 %8101
    %8103 = vrot.lane.b32.xlu0 %v7266, 126
    %v8104 = vpop.permute.xlu0 %8103
    %8105 = vrot.lane.b32.xlu0 %v7267, 126
    %v8106 = vpop.permute.xlu0 %8105
    %8107 = vrot.lane.b32.xlu0 %v7268, 126
    %v8108 = vpop.permute.xlu0 %8107
    %8109 = vrot.lane.b32.xlu0 %v7269, 126
    %v8110 = vpop.permute.xlu0 %8109
    %8111 = vrot.lane.b32.xlu0 %v7270, 126
    %v8112 = vpop.permute.xlu0 %8111
    %8113 = vrot.lane.b32.xlu0 %v7271, 126
    %v8114 = vpop.permute.xlu0 %8113
    %8115 = vrot.lane.b32.xlu0 %v7272, 126
    %v8116 = vpop.permute.xlu0 %8115
    %8117 = vrot.lane.b32.xlu0 %v7273, 126
    %v8118 = vpop.permute.xlu0 %8117
    %8119 = vrot.lane.b32.xlu0 %v7274, 126
    %v8120 = vpop.permute.xlu0 %8119
    %8121 = vrot.lane.b32.xlu0 %v7275, 126
    %v8122 = vpop.permute.xlu0 %8121
    %8123 = vrot.lane.b32.xlu0 %v7276, 126
    %v8124 = vpop.permute.xlu0 %8123
    %8125 = vrot.lane.b32.xlu0 %v7277, 126
    %v8126 = vpop.permute.xlu0 %8125
    %8127 = vrot.lane.b32.xlu0 %v7278, 126
    %v8128 = vpop.permute.xlu0 %8127
    %8129 = vrot.lane.b32.xlu0 %v7279, 126
    %v8130 = vpop.permute.xlu0 %8129
    %8131 = vrot.lane.b32.xlu0 %v7280, 126
    %v8132 = vpop.permute.xlu0 %8131
    %8133 = vrot.lane.b32.xlu0 %v7281, 126
    %v8134 = vpop.permute.xlu0 %8133
    %8135 = vrot.lane.b32.xlu0 %v7282, 126
    %v8136 = vpop.permute.xlu0 %8135
    %8137 = vrot.lane.b32.xlu0 %v7283, 126
    %v8138 = vpop.permute.xlu0 %8137
    %8139 = vrot.lane.b32.xlu0 %v7284, 126
    %v8140 = vpop.permute.xlu0 %8139
    %v8141 = vsel %vm3367, %v7926, %v7928
    %v8142 = vsel %vm3367, %v7928, %v7930
    %v8143 = vsel %vm3367, %v7930, %v7932
    %v8144 = vsel %vm3367, %v7932, %v7934
    %v8145 = vsel %vm3367, %v7934, %v7936
    %v8146 = vsel %vm3367, %v7936, %v7938
    %v8147 = vsel %vm3367, %v7938, %v7940
    %v8148 = vsel %vm3367, %v7940, %v7942
    %v8149 = vsel %vm3367, %v7942, %v7944
    %v8150 = vsel %vm3367, %v7944, %v7946
    %v8151 = vsel %vm3367, %v7946, %v7948
    %v8152 = vsel %vm3367, %v7948, %v7950
    %v8153 = vsel %vm3367, %v7950, %v7952
    %v8154 = vsel %vm3367, %v7952, %v7954
    %v8155 = vsel %vm3367, %v7954, %v7956
    %v8156 = vsel %vm3367, %v7956, %v7958
    %v8157 = vsel %vm3367, %v7958, %v7960
    %v8158 = vsel %vm3367, %v7960, %v7962
    %v8159 = vsel %vm3367, %v7962, %v7964
    %v8160 = vsel %vm3367, %v7964, %v7966
    %v8161 = vsel %vm3367, %v7966, %v7968
    %v8162 = vsel %vm3367, %v7968, %v7970
    %v8163 = vsel %vm3367, %v7970, %v7972
    %v8164 = vsel %vm3367, %v7972, %v7974
    %v8165 = vsel %vm3367, %v7976, %v7978
    %v8166 = vsel %vm3367, %v7978, %v7980
    %v8167 = vsel %vm3367, %v7980, %v7982
    %v8168 = vsel %vm3367, %v7982, %v7984
    %v8169 = vsel %vm3367, %v7984, %v7986
    %v8170 = vsel %vm3367, %v7986, %v7988
    %v8171 = vsel %vm3367, %v7988, %v7990
    %v8172 = vsel %vm3367, %v7990, %v7992
    %v8173 = vsel %vm3367, %v7992, %v7994
    %v8174 = vsel %vm3367, %v7994, %v7996
    %v8175 = vsel %vm3367, %v7996, %v7998
    %v8176 = vsel %vm3367, %v7998, %v8000
    %v8177 = vsel %vm3367, %v8000, %v8002
    %v8178 = vsel %vm3367, %v8002, %v8004
    %v8179 = vsel %vm3367, %v8004, %v8006
    %v8180 = vsel %vm3367, %v8006, %v8008
    %v8181 = vsel %vm3367, %v8008, %v8010
    %v8182 = vsel %vm3367, %v8010, %v8012
    %v8183 = vsel %vm3367, %v8012, %v8014
    %v8184 = vsel %vm3367, %v8014, %v8016
    %v8185 = vsel %vm3367, %v8016, %v8018
    %v8186 = vsel %vm3367, %v8018, %v8020
    %v8187 = vsel %vm3367, %v8020, %v8022
    %v8188 = vsel %vm3367, %v8022, %v8024
    %v8189 = vsel %vm3367, %v8024, %v8026
    %v8190 = vsel %vm3367, %v8026, %v8028
    %v8191 = vsel %vm3367, %v8030, %v8032
    %v8192 = vsel %vm3367, %v8034, %v8036
    %v8193 = vsel %vm3367, %v8036, %v8038
    %v8194 = vsel %vm3367, %v8038, %v8040
    %v8195 = vsel %vm3367, %v8040, %v8042
    %v8196 = vsel %vm3367, %v8042, %v8044
    %v8197 = vsel %vm3367, %v8044, %v8046
    %v8198 = vsel %vm3367, %v8046, %v8048
    %v8199 = vsel %vm3367, %v8048, %v8050
    %v8200 = vsel %vm3367, %v8050, %v8052
    %v8201 = vsel %vm3367, %v8052, %v8054
    %v8202 = vsel %vm3367, %v8054, %v8056
    %v8203 = vsel %vm3367, %v8056, %v8058
    %v8204 = vsel %vm3367, %v8058, %v8060
    %v8205 = vsel %vm3367, %v8060, %v8062
    %v8206 = vsel %vm3367, %v8062, %v8064
    %v8207 = vsel %vm3367, %v8064, %v8066
    %v8208 = vsel %vm3367, %v8066, %v8068
    %v8209 = vsel %vm3367, %v8068, %v8070
    %v8210 = vsel %vm3367, %v8070, %v8072
    %v8211 = vsel %vm3367, %v8072, %v8074
    %v8212 = vsel %vm3367, %v8074, %v8076
    %v8213 = vsel %vm3367, %v8076, %v8078
    %v8214 = vsel %vm3367, %v8078, %v8080
    %v8215 = vsel %vm3367, %v8080, %v8082
    %v8216 = vsel %vm3367, %v8084, %v8086
    %v8217 = vsel %vm3367, %v8086, %v8088
    %v8218 = vsel %vm3367, %v8088, %v8090
    %v8219 = vsel %vm3367, %v8090, %v8092
    %v8220 = vsel %vm3367, %v8092, %v8094
    %v8221 = vsel %vm3367, %v8094, %v8096
    %v8222 = vsel %vm3367, %v8096, %v8098
    %v8223 = vsel %vm3367, %v8098, %v8100
    %v8224 = vsel %vm3367, %v8100, %v8102
    %v8225 = vsel %vm3367, %v8102, %v8104
    %v8226 = vsel %vm3367, %v8104, %v8106
    %v8227 = vsel %vm3367, %v8106, %v8108
    %v8228 = vsel %vm3367, %v8108, %v8110
    %v8229 = vsel %vm3367, %v8110, %v8112
    %v8230 = vsel %vm3367, %v8112, %v8114
    %v8231 = vsel %vm3367, %v8114, %v8116
    %v8232 = vsel %vm3367, %v8116, %v8118
    %v8233 = vsel %vm3367, %v8118, %v8120
    %v8234 = vsel %vm3367, %v8120, %v8122
    %v8235 = vsel %vm3367, %v8122, %v8124
    %v8236 = vsel %vm3367, %v8124, %v8126
    %v8237 = vsel %vm3367, %v8126, %v8128
    %v8238 = vsel %vm3367, %v8128, %v8130
    %v8239 = vsel %vm3367, %v8130, %v8132
    %v8240 = vsel %vm3367, %v8132, %v8134
    %v8241 = vsel %vm3367, %v8134, %v8136
    %v8242 = vsel %vm3367, %v8138, %v8140
    %v8349 = vsel %vm3367, %v8032, %v7926
    %v8350 = vsel %vm3367, %v8140, %v8034
    %v8351 = vpack.c.bf16 %v8192, %v8141
    %v8352 = vpack.c.bf16 %v8193, %v8142
    %v8353 = vpack.c.bf16 %v8194, %v8143
    %v8354 = vpack.c.bf16 %v8195, %v8144
    %v8355 = vpack.c.bf16 %v8196, %v8145
    %v8356 = vpack.c.bf16 %v8197, %v8146
    %v8357 = vpack.c.bf16 %v8198, %v8147
    %v8358 = vpack.c.bf16 %v8199, %v8148
    %v8359 = vpack.c.bf16 %v8200, %v8149
    %v8360 = vpack.c.bf16 %v8201, %v8150
    %v8361 = vpack.c.bf16 %v8202, %v8151
    %v8362 = vpack.c.bf16 %v8203, %v8152
    %v8363 = vpack.c.bf16 %v8204, %v8153
    %v8364 = vpack.c.bf16 %v8205, %v8154
    %v8365 = vpack.c.bf16 %v8206, %v8155
    %v8366 = vpack.c.bf16 %v8207, %v8156
    %v8367 = vpack.c.bf16 %v8208, %v8157
    %v8368 = vpack.c.bf16 %v8209, %v8158
    %v8369 = vpack.c.bf16 %v8210, %v8159
    %v8370 = vpack.c.bf16 %v8211, %v8160
    %v8371 = vpack.c.bf16 %v8212, %v8161
    %v8372 = vpack.c.bf16 %v8213, %v8162
    %v8373 = vpack.c.bf16 %v8214, %v8163
    %v8374 = vpack.c.bf16 %v8215, %v8164
    %v8375 = vpack.c.bf16 %v8216, %v8165
    %v8376 = vpack.c.bf16 %v8217, %v8166
    %v8377 = vpack.c.bf16 %v8218, %v8167
    %v8378 = vpack.c.bf16 %v8219, %v8168
    %v8379 = vpack.c.bf16 %v8220, %v8169
    %v8380 = vpack.c.bf16 %v8221, %v8170
    %v8381 = vpack.c.bf16 %v8222, %v8171
    %v8382 = vpack.c.bf16 %v8223, %v8172
    %v8383 = vpack.c.bf16 %v8224, %v8173
    %v8384 = vpack.c.bf16 %v8225, %v8174
    %v8385 = vpack.c.bf16 %v8226, %v8175
    %v8386 = vpack.c.bf16 %v8227, %v8176
    %v8387 = vpack.c.bf16 %v8228, %v8177
    %v8388 = vpack.c.bf16 %v8229, %v8178
    %v8389 = vpack.c.bf16 %v8230, %v8179
    %v8390 = vpack.c.bf16 %v8231, %v8180
    %v8391 = vpack.c.bf16 %v8232, %v8181
    %v8392 = vpack.c.bf16 %v8233, %v8182
    %v8393 = vpack.c.bf16 %v8234, %v8183
    %v8394 = vpack.c.bf16 %v8235, %v8184
    %v8395 = vpack.c.bf16 %v8236, %v8185
    %v8396 = vpack.c.bf16 %v8237, %v8186
    %v8397 = vpack.c.bf16 %v8238, %v8187
    %v8398 = vpack.c.bf16 %v8239, %v8188
    %v8399 = vpack.c.bf16 %v8240, %v8189
    %v8400 = vpack.c.bf16 %v8241, %v8190
    %v8401 = vpack.c.bf16 %v8242, %v8191
    %v8402 = vpack.c.bf16 %v8350, %v8349
    %8404 = vset.pattern.permute.xlu0 0
    %8405 = vperm.xlu0 %8404, %v7286
    %v8406 = vpop.permute.xlu0 %8405
    %v8410 = vunpack.c.l.s4 1983009808
    %v8411 = vunpack.c.0.s8 %v8410
    %v8412 = vlaneseq
    %v8413 = vshrl.u32 %v8412, 7
    %v8414 = vsub.s32 %v8411, %v8413
    %v8415 = vrot.slane %v7285, %v8414
    %v8416 = vcombine.high %v8415, %v8415
    %vm8418 = vcmask 130048
    %v8420 = vsel %vm8418, %v8416, 0
    %8422 = vmatprep.subr.bf16.mxu0 %v7882
    %8423 = vmatpush1.bf16.msra.mxu0 %v7881
    %8424 = vmatprep.subr.bf16.mxu0 %v7296
    %8425 = vmatpush1.bf16.msra.mxu0 %v7295
    %8426 = vmatprep.subr.bf16.mxu0 %v8356
    %8427 = vmatpush1.bf16.msra.mxu0 %v8355
    %8428 = vmatprep.subr.bf16.mxu0 %v7878
    %8429 = vmatpush1.bf16.msra.mxu0 %v7877
    %8430 = vmatprep.subr.bf16.mxu0 %v7292
    %8431 = vmatpush1.bf16.msra.mxu0 %v7291
    %8432 = vmatprep.subr.bf16.mxu0 %v8352
    %8433 = vmatpush1.bf16.msra.mxu0 %v8351
    %8434 = vmatprep.subr.bf16.mxu0 %v7874
    %8435 = vmatpush1.bf16.msra.mxu0 %v7873
    %8436 = vmatprep.subr.bf16.mxu0 %v7288
    %8437 = vmatpush1.bf16.msra.mxu0 %v7287
    %8438 = vmatprep.subr.bf16.mxu0 0
    %8439 = vmatpush2.bf16.msra.mxu0 0
    %8440 = vmatprep.subr.bf16.mxu0 0
    %8441 = vmatpush2.bf16.msra.mxu0 0
    %8442 = vmatprep.subr.bf16.mxu0 0
    %8443 = vmatpush2.bf16.msra.mxu0 0
    %8444 = vmatprep.subr.bf16.mxu0 0
    %8445 = vmatpush2.bf16.msra.mxu0 0
    %8446 = vmatprep.subr.bf16.mxu0 0
    %8447 = vmatpush2.bf16.msra.mxu0 0
    %8448 = vmatprep.subr.bf16.mxu0 0
    %8449 = vmatpush2.bf16.msra.mxu0 0
    %8450 = vmatprep.subr.bf16.mxu0 0
    %8451 = vmatpush2.bf16.msra.mxu0 0
    %8452 = vmatprep.subr.bf16.mxu0 %v8360
    %8453 = vmatpush2.bf16.msra.mxu0 %v8359
    %8454 = vmatprep.mubr.bf16.mxu0 %v8420
    %8455 = vmatmul.mubr.bf16.gmra.mxu0 %v8415
    %v8456 = vpop.f32.mrf.mxu0
    %v8457 = vadd.f32 %v8406, %v8456
    %v8458 = vpop.f32.mrf.mxu0
    %v8459 = vadd.f32 %v8406, %v8458
    %v8460 = vpop.f32.mrf.mxu0
    %v8461 = vpop.f32.mrf.mxu0
    %8462 = vdwg.mxu0
    %8463 = vmatprep.subr.bf16.mxu0 %v7884
    %8464 = vmatpush1.bf16.msra.mxu0 %v7883
    %8465 = vmatprep.subr.bf16.mxu0 %v7298
    %8466 = vmatpush1.bf16.msra.mxu0 %v7297
    %8467 = vmatprep.subr.bf16.mxu0 %v8358
    %8468 = vmatpush1.bf16.msra.mxu0 %v8357
    %8469 = vmatprep.subr.bf16.mxu0 %v7880
    %8470 = vmatpush1.bf16.msra.mxu0 %v7879
    %8471 = vmatprep.subr.bf16.mxu0 %v7294
    %8472 = vmatpush1.bf16.msra.mxu0 %v7293
    %8473 = vmatprep.subr.bf16.mxu0 %v8354
    %8474 = vmatpush1.bf16.msra.mxu0 %v8353
    %8475 = vmatprep.subr.bf16.mxu0 %v7876
    %8476 = vmatpush1.bf16.msra.mxu0 %v7875
    %8477 = vmatprep.subr.bf16.mxu0 %v7290
    %8478 = vmatpush1.bf16.msra.mxu0 %v7289
    %8479 = vmatprep.subr.bf16.mxu0 0
    %8480 = vmatpush2.bf16.msra.mxu0 0
    %8481 = vmatprep.subr.bf16.mxu0 0
    %8482 = vmatpush2.bf16.msra.mxu0 0
    %8483 = vmatprep.subr.bf16.mxu0 0
    %8484 = vmatpush2.bf16.msra.mxu0 0
    %8485 = vmatprep.subr.bf16.mxu0 0
    %8486 = vmatpush2.bf16.msra.mxu0 0
    %8487 = vmatprep.subr.bf16.mxu0 0
    %8488 = vmatpush2.bf16.msra.mxu0 0
    %8489 = vmatprep.subr.bf16.mxu0 0
    %8490 = vmatpush2.bf16.msra.mxu0 0
    %8491 = vmatprep.subr.bf16.mxu0 0
    %8492 = vmatpush2.bf16.msra.mxu0 0
    %8493 = vmatprep.subr.bf16.mxu0 %v8362
    %8494 = vmatpush2.bf16.msra.mxu0 %v8361
    %8495 = vmatprep.mubr.bf16.mxu0 %v8420
    %8496 = vmatmul.mubr.bf16.gmra.mxu0 %v8415
    %v8497 = vpop.f32.mrf.mxu0
    %v8498 = vadd.f32 %v8406, %v8497
    %v8499 = vpop.f32.mrf.mxu0
    %v8500 = vadd.f32 %v8406, %v8499
    %v8501 = vpop.f32.mrf.mxu0
    %v8502 = vpop.f32.mrf.mxu0
    %8503 = vdwg.mxu0
    %8504 = vmatprep.subr.bf16.mxu0 %v7886
    %8505 = vmatpush1.bf16.msra.mxu0 %v7885
    %8506 = vmatprep.subr.bf16.mxu0 %v7300
    %8507 = vmatpush1.bf16.msra.mxu0 %v7299
    %8508 = vmatprep.subr.bf16.mxu0 %v8360
    %8509 = vmatpush1.bf16.msra.mxu0 %v8359
    %8510 = vmatprep.subr.bf16.mxu0 %v7882
    %8511 = vmatpush1.bf16.msra.mxu0 %v7881
    %8512 = vmatprep.subr.bf16.mxu0 %v7296
    %8513 = vmatpush1.bf16.msra.mxu0 %v7295
    %8514 = vmatprep.subr.bf16.mxu0 %v8356
    %8515 = vmatpush1.bf16.msra.mxu0 %v8355
    %8516 = vmatprep.subr.bf16.mxu0 %v7878
    %8517 = vmatpush1.bf16.msra.mxu0 %v7877
    %8518 = vmatprep.subr.bf16.mxu0 %v7292
    %8519 = vmatpush1.bf16.msra.mxu0 %v7291
    %8520 = vmatprep.subr.bf16.mxu0 0
    %8521 = vmatpush2.bf16.msra.mxu0 0
    %8522 = vmatprep.subr.bf16.mxu0 0
    %8523 = vmatpush2.bf16.msra.mxu0 0
    %8524 = vmatprep.subr.bf16.mxu0 0
    %8525 = vmatpush2.bf16.msra.mxu0 0
    %8526 = vmatprep.subr.bf16.mxu0 0
    %8527 = vmatpush2.bf16.msra.mxu0 0
    %8528 = vmatprep.subr.bf16.mxu0 0
    %8529 = vmatpush2.bf16.msra.mxu0 0
    %8530 = vmatprep.subr.bf16.mxu0 0
    %8531 = vmatpush2.bf16.msra.mxu0 0
    %8532 = vmatprep.subr.bf16.mxu0 0
    %8533 = vmatpush2.bf16.msra.mxu0 0
    %8534 = vmatprep.subr.bf16.mxu0 %v8364
    %8535 = vmatpush2.bf16.msra.mxu0 %v8363
    %8536 = vmatprep.mubr.bf16.mxu0 %v8420
    %8537 = vmatmul.mubr.bf16.gmra.mxu0 %v8415
    %v8538 = vpop.f32.mrf.mxu0
    %v8539 = vadd.f32 %v8406, %v8538
    %v8540 = vpop.f32.mrf.mxu0
    %v8541 = vadd.f32 %v8406, %v8540
    %v8542 = vpop.f32.mrf.mxu0
    %v8543 = vpop.f32.mrf.mxu0
    %8544 = vdwg.mxu0
    %8545 = vmatprep.subr.bf16.mxu0 %v7888
    %8546 = vmatpush1.bf16.msra.mxu0 %v7887
    %8547 = vmatprep.subr.bf16.mxu0 %v7302
    %8548 = vmatpush1.bf16.msra.mxu0 %v7301
    %8549 = vmatprep.subr.bf16.mxu0 %v8362
    %8550 = vmatpush1.bf16.msra.mxu0 %v8361
    %8551 = vmatprep.subr.bf16.mxu0 %v7884
    %8552 = vmatpush1.bf16.msra.mxu0 %v7883
    %8553 = vmatprep.subr.bf16.mxu0 %v7298
    %8554 = vmatpush1.bf16.msra.mxu0 %v7297
    %8555 = vmatprep.subr.bf16.mxu0 %v8358
    %8556 = vmatpush1.bf16.msra.mxu0 %v8357
    %8557 = vmatprep.subr.bf16.mxu0 %v7880
    %8558 = vmatpush1.bf16.msra.mxu0 %v7879
    %8559 = vmatprep.subr.bf16.mxu0 %v7294
    %8560 = vmatpush1.bf16.msra.mxu0 %v7293
    %8561 = vmatprep.subr.bf16.mxu0 0
    %8562 = vmatpush2.bf16.msra.mxu0 0
    %8563 = vmatprep.subr.bf16.mxu0 0
    %8564 = vmatpush2.bf16.msra.mxu0 0
    %8565 = vmatprep.subr.bf16.mxu0 0
    %8566 = vmatpush2.bf16.msra.mxu0 0
    %8567 = vmatprep.subr.bf16.mxu0 0
    %8568 = vmatpush2.bf16.msra.mxu0 0
    %8569 = vmatprep.subr.bf16.mxu0 0
    %8570 = vmatpush2.bf16.msra.mxu0 0
    %8571 = vmatprep.subr.bf16.mxu0 0
    %8572 = vmatpush2.bf16.msra.mxu0 0
    %8573 = vmatprep.subr.bf16.mxu0 0
    %8574 = vmatpush2.bf16.msra.mxu0 0
    %8575 = vmatprep.subr.bf16.mxu0 %v8366
    %8576 = vmatpush2.bf16.msra.mxu0 %v8365
    %8577 = vmatprep.mubr.bf16.mxu0 %v8420
    %8578 = vmatmul.mubr.bf16.gmra.mxu0 %v8415
    %v8579 = vpop.f32.mrf.mxu0
    %v8580 = vadd.f32 %v8406, %v8579
    %v8581 = vpop.f32.mrf.mxu0
    %v8582 = vadd.f32 %v8406, %v8581
    %v8583 = vpop.f32.mrf.mxu0
    %v8584 = vpop.f32.mrf.mxu0
    %8585 = vdwg.mxu0
    %8586 = vmatprep.subr.bf16.mxu0 %v7890
    %8587 = vmatpush1.bf16.msra.mxu0 %v7889
    %8588 = vmatprep.subr.bf16.mxu0 %v7304
    %8589 = vmatpush1.bf16.msra.mxu0 %v7303
    %8590 = vmatprep.subr.bf16.mxu0 %v8364
    %8591 = vmatpush1.bf16.msra.mxu0 %v8363
    %8592 = vmatprep.subr.bf16.mxu0 %v7886
    %8593 = vmatpush1.bf16.msra.mxu0 %v7885
    %8594 = vmatprep.subr.bf16.mxu0 %v7300
    %8595 = vmatpush1.bf16.msra.mxu0 %v7299
    %8596 = vmatprep.subr.bf16.mxu0 %v8360
    %8597 = vmatpush1.bf16.msra.mxu0 %v8359
    %8598 = vmatprep.subr.bf16.mxu0 %v7882
    %8599 = vmatpush1.bf16.msra.mxu0 %v7881
    %8600 = vmatprep.subr.bf16.mxu0 %v7296
    %8601 = vmatpush1.bf16.msra.mxu0 %v7295
    %8602 = vmatprep.subr.bf16.mxu0 0
    %8603 = vmatpush2.bf16.msra.mxu0 0
    %8604 = vmatprep.subr.bf16.mxu0 0
    %8605 = vmatpush2.bf16.msra.mxu0 0
    %8606 = vmatprep.subr.bf16.mxu0 0
    %8607 = vmatpush2.bf16.msra.mxu0 0
    %8608 = vmatprep.subr.bf16.mxu0 0
    %8609 = vmatpush2.bf16.msra.mxu0 0
    %8610 = vmatprep.subr.bf16.mxu0 0
    %8611 = vmatpush2.bf16.msra.mxu0 0
    %8612 = vmatprep.subr.bf16.mxu0 0
    %8613 = vmatpush2.bf16.msra.mxu0 0
    %8614 = vmatprep.subr.bf16.mxu0 0
    %8615 = vmatpush2.bf16.msra.mxu0 0
    %8616 = vmatprep.subr.bf16.mxu0 %v8368
    %8617 = vmatpush2.bf16.msra.mxu0 %v8367
    %8618 = vmatprep.mubr.bf16.mxu0 %v8420
    %8619 = vmatmul.mubr.bf16.gmra.mxu0 %v8415
    %v8620 = vpop.f32.mrf.mxu0
    %v8621 = vadd.f32 %v8406, %v8620
    %v8622 = vpop.f32.mrf.mxu0
    %v8623 = vadd.f32 %v8406, %v8622
    %v8624 = vpop.f32.mrf.mxu0
    %v8625 = vpop.f32.mrf.mxu0
    %8626 = vdwg.mxu0
    %8627 = vmatprep.subr.bf16.mxu0 %v7892
    %8628 = vmatpush1.bf16.msra.mxu0 %v7891
    %8629 = vmatprep.subr.bf16.mxu0 %v7306
    %8630 = vmatpush1.bf16.msra.mxu0 %v7305
    %8631 = vmatprep.subr.bf16.mxu0 %v8366
    %8632 = vmatpush1.bf16.msra.mxu0 %v8365
    %8633 = vmatprep.subr.bf16.mxu0 %v7888
    %8634 = vmatpush1.bf16.msra.mxu0 %v7887
    %8635 = vmatprep.subr.bf16.mxu0 %v7302
    %8636 = vmatpush1.bf16.msra.mxu0 %v7301
    %8637 = vmatprep.subr.bf16.mxu0 %v8362
    %8638 = vmatpush1.bf16.msra.mxu0 %v8361
    %8639 = vmatprep.subr.bf16.mxu0 %v7884
    %8640 = vmatpush1.bf16.msra.mxu0 %v7883
    %8641 = vmatprep.subr.bf16.mxu0 %v7298
    %8642 = vmatpush1.bf16.msra.mxu0 %v7297
    %8643 = vmatprep.subr.bf16.mxu0 0
    %8644 = vmatpush2.bf16.msra.mxu0 0
    %8645 = vmatprep.subr.bf16.mxu0 0
    %8646 = vmatpush2.bf16.msra.mxu0 0
    %8647 = vmatprep.subr.bf16.mxu0 0
    %8648 = vmatpush2.bf16.msra.mxu0 0
    %8649 = vmatprep.subr.bf16.mxu0 0
    %8650 = vmatpush2.bf16.msra.mxu0 0
    %8651 = vmatprep.subr.bf16.mxu0 0
    %8652 = vmatpush2.bf16.msra.mxu0 0
    %8653 = vmatprep.subr.bf16.mxu0 0
    %8654 = vmatpush2.bf16.msra.mxu0 0
    %8655 = vmatprep.subr.bf16.mxu0 0
    %8656 = vmatpush2.bf16.msra.mxu0 0
    %8657 = vmatprep.subr.bf16.mxu0 %v8370
    %8658 = vmatpush2.bf16.msra.mxu0 %v8369
    %8659 = vmatprep.mubr.bf16.mxu0 %v8420
    %8660 = vmatmul.mubr.bf16.gmra.mxu0 %v8415
    %v8661 = vpop.f32.mrf.mxu0
    %v8662 = vadd.f32 %v8406, %v8661
    %v8663 = vpop.f32.mrf.mxu0
    %v8664 = vadd.f32 %v8406, %v8663
    %v8665 = vpop.f32.mrf.mxu0
    %v8666 = vpop.f32.mrf.mxu0
    %8667 = vdwg.mxu0
    %8668 = vmatprep.subr.bf16.mxu0 %v7894
    %8669 = vmatpush1.bf16.msra.mxu0 %v7893
    %8670 = vmatprep.subr.bf16.mxu0 %v7308
    %8671 = vmatpush1.bf16.msra.mxu0 %v7307
    %8672 = vmatprep.subr.bf16.mxu0 %v8368
    %8673 = vmatpush1.bf16.msra.mxu0 %v8367
    %8674 = vmatprep.subr.bf16.mxu0 %v7890
    %8675 = vmatpush1.bf16.msra.mxu0 %v7889
    %8676 = vmatprep.subr.bf16.mxu0 %v7304
    %8677 = vmatpush1.bf16.msra.mxu0 %v7303
    %8678 = vmatprep.subr.bf16.mxu0 %v8364
    %8679 = vmatpush1.bf16.msra.mxu0 %v8363
    %8680 = vmatprep.subr.bf16.mxu0 %v7886
    %8681 = vmatpush1.bf16.msra.mxu0 %v7885
    %8682 = vmatprep.subr.bf16.mxu0 %v7300
    %8683 = vmatpush1.bf16.msra.mxu0 %v7299
    %8684 = vmatprep.subr.bf16.mxu0 0
    %8685 = vmatpush2.bf16.msra.mxu0 0
    %8686 = vmatprep.subr.bf16.mxu0 0
    %8687 = vmatpush2.bf16.msra.mxu0 0
    %8688 = vmatprep.subr.bf16.mxu0 0
    %8689 = vmatpush2.bf16.msra.mxu0 0
    %8690 = vmatprep.subr.bf16.mxu0 0
    %8691 = vmatpush2.bf16.msra.mxu0 0
    %8692 = vmatprep.subr.bf16.mxu0 0
    %8693 = vmatpush2.bf16.msra.mxu0 0
    %8694 = vmatprep.subr.bf16.mxu0 0
    %8695 = vmatpush2.bf16.msra.mxu0 0
    %8696 = vmatprep.subr.bf16.mxu0 0
    %8697 = vmatpush2.bf16.msra.mxu0 0
    %8698 = vmatprep.subr.bf16.mxu0 %v8372
    %8699 = vmatpush2.bf16.msra.mxu0 %v8371
    %8700 = vmatprep.mubr.bf16.mxu0 %v8420
    %8701 = vmatmul.mubr.bf16.gmra.mxu0 %v8415
    %v8702 = vpop.f32.mrf.mxu0
    %v8703 = vadd.f32 %v8406, %v8702
    %v8704 = vpop.f32.mrf.mxu0
    %v8705 = vadd.f32 %v8406, %v8704
    %v8706 = vpop.f32.mrf.mxu0
    %v8707 = vpop.f32.mrf.mxu0
    %8708 = vdwg.mxu0
    %8709 = vmatprep.subr.bf16.mxu0 %v7896
    %8710 = vmatpush1.bf16.msra.mxu0 %v7895
    %8711 = vmatprep.subr.bf16.mxu0 %v7310
    %8712 = vmatpush1.bf16.msra.mxu0 %v7309
    %8713 = vmatprep.subr.bf16.mxu0 %v8370
    %8714 = vmatpush1.bf16.msra.mxu0 %v8369
    %8715 = vmatprep.subr.bf16.mxu0 %v7892
    %8716 = vmatpush1.bf16.msra.mxu0 %v7891
    %8717 = vmatprep.subr.bf16.mxu0 %v7306
    %8718 = vmatpush1.bf16.msra.mxu0 %v7305
    %8719 = vmatprep.subr.bf16.mxu0 %v8366
    %8720 = vmatpush1.bf16.msra.mxu0 %v8365
    %8721 = vmatprep.subr.bf16.mxu0 %v7888
    %8722 = vmatpush1.bf16.msra.mxu0 %v7887
    %8723 = vmatprep.subr.bf16.mxu0 %v7302
    %8724 = vmatpush1.bf16.msra.mxu0 %v7301
    %8725 = vmatprep.subr.bf16.mxu0 0
    %8726 = vmatpush2.bf16.msra.mxu0 0
    %8727 = vmatprep.subr.bf16.mxu0 0
    %8728 = vmatpush2.bf16.msra.mxu0 0
    %8729 = vmatprep.subr.bf16.mxu0 0
    %8730 = vmatpush2.bf16.msra.mxu0 0
    %8731 = vmatprep.subr.bf16.mxu0 0
    %8732 = vmatpush2.bf16.msra.mxu0 0
    %8733 = vmatprep.subr.bf16.mxu0 0
    %8734 = vmatpush2.bf16.msra.mxu0 0
    %8735 = vmatprep.subr.bf16.mxu0 0
    %8736 = vmatpush2.bf16.msra.mxu0 0
    %8737 = vmatprep.subr.bf16.mxu0 0
    %8738 = vmatpush2.bf16.msra.mxu0 0
    %8739 = vmatprep.subr.bf16.mxu0 %v8374
    %8740 = vmatpush2.bf16.msra.mxu0 %v8373
    %8741 = vmatprep.mubr.bf16.mxu0 %v8420
    %8742 = vmatmul.mubr.bf16.gmra.mxu0 %v8415
    %v8743 = vpop.f32.mrf.mxu0
    %v8744 = vadd.f32 %v8406, %v8743
    %v8745 = vpop.f32.mrf.mxu0
    %v8746 = vpop.f32.mrf.mxu0
    %v8747 = vpop.f32.mrf.mxu0
    %8748 = vdwg.mxu0
    %8749 = vmatprep.subr.bf16.mxu0 %v7906
    %8750 = vmatpush1.bf16.msra.mxu0 %v7905
    %8751 = vmatprep.subr.bf16.mxu0 %v7320
    %8752 = vmatpush1.bf16.msra.mxu0 %v7319
    %8753 = vmatprep.subr.bf16.mxu0 %v8380
    %8754 = vmatpush1.bf16.msra.mxu0 %v8379
    %8755 = vmatprep.subr.bf16.mxu0 %v7902
    %8756 = vmatpush1.bf16.msra.mxu0 %v7901
    %8757 = vmatprep.subr.bf16.mxu0 %v7316
    %8758 = vmatpush1.bf16.msra.mxu0 %v7315
    %8759 = vmatprep.subr.bf16.mxu0 %v8376
    %8760 = vmatpush1.bf16.msra.mxu0 %v8375
    %8761 = vmatprep.subr.bf16.mxu0 %v7898
    %8762 = vmatpush1.bf16.msra.mxu0 %v7897
    %8763 = vmatprep.subr.bf16.mxu0 %v7312
    %8764 = vmatpush1.bf16.msra.mxu0 %v7311
    %8765 = vmatprep.subr.bf16.mxu0 0
    %8766 = vmatpush2.bf16.msra.mxu0 0
    %8767 = vmatprep.subr.bf16.mxu0 0
    %8768 = vmatpush2.bf16.msra.mxu0 0
    %8769 = vmatprep.subr.bf16.mxu0 0
    %8770 = vmatpush2.bf16.msra.mxu0 0
    %8771 = vmatprep.subr.bf16.mxu0 0
    %8772 = vmatpush2.bf16.msra.mxu0 0
    %8773 = vmatprep.subr.bf16.mxu0 0
    %8774 = vmatpush2.bf16.msra.mxu0 0
    %8775 = vmatprep.subr.bf16.mxu0 0
    %8776 = vmatpush2.bf16.msra.mxu0 0
    %8777 = vmatprep.subr.bf16.mxu0 0
    %8778 = vmatpush2.bf16.msra.mxu0 0
    %8779 = vmatprep.subr.bf16.mxu0 %v8384
    %8780 = vmatpush2.bf16.msra.mxu0 %v8383
    %8781 = vmatprep.mubr.bf16.mxu0 %v8420
    %8782 = vmatmul.mubr.bf16.gmra.mxu0 %v8415
    %v8783 = vpop.f32.mrf.mxu0
    %v8784 = vpop.f32.mrf.mxu0
    %v8785 = vadd.f32 %v8406, %v8784
    %v8786 = vpop.f32.mrf.mxu0
    %v8787 = vpop.f32.mrf.mxu0
    %8788 = vdwg.mxu0
    %8789 = vmatprep.subr.bf16.mxu0 %v7908
    %8790 = vmatpush1.bf16.msra.mxu0 %v7907
    %8791 = vmatprep.subr.bf16.mxu0 %v7322
    %8792 = vmatpush1.bf16.msra.mxu0 %v7321
    %8793 = vmatprep.subr.bf16.mxu0 %v8382
    %8794 = vmatpush1.bf16.msra.mxu0 %v8381
    %8795 = vmatprep.subr.bf16.mxu0 %v7904
    %8796 = vmatpush1.bf16.msra.mxu0 %v7903
    %8797 = vmatprep.subr.bf16.mxu0 %v7318
    %8798 = vmatpush1.bf16.msra.mxu0 %v7317
    %8799 = vmatprep.subr.bf16.mxu0 %v8378
    %8800 = vmatpush1.bf16.msra.mxu0 %v8377
    %8801 = vmatprep.subr.bf16.mxu0 %v7900
    %8802 = vmatpush1.bf16.msra.mxu0 %v7899
    %8803 = vmatprep.subr.bf16.mxu0 %v7314
    %8804 = vmatpush1.bf16.msra.mxu0 %v7313
    %8805 = vmatprep.subr.bf16.mxu0 0
    %8806 = vmatpush2.bf16.msra.mxu0 0
    %8807 = vmatprep.subr.bf16.mxu0 0
    %8808 = vmatpush2.bf16.msra.mxu0 0
    %8809 = vmatprep.subr.bf16.mxu0 0
    %8810 = vmatpush2.bf16.msra.mxu0 0
    %8811 = vmatprep.subr.bf16.mxu0 0
    %8812 = vmatpush2.bf16.msra.mxu0 0
    %8813 = vmatprep.subr.bf16.mxu0 0
    %8814 = vmatpush2.bf16.msra.mxu0 0
    %8815 = vmatprep.subr.bf16.mxu0 0
    %8816 = vmatpush2.bf16.msra.mxu0 0
    %8817 = vmatprep.subr.bf16.mxu0 0
    %8818 = vmatpush2.bf16.msra.mxu0 0
    %8819 = vmatprep.subr.bf16.mxu0 %v8386
    %8820 = vmatpush2.bf16.msra.mxu0 %v8385
    %8821 = vmatprep.mubr.bf16.mxu0 %v8420
    %8822 = vmatmul.mubr.bf16.gmra.mxu0 %v8415
    %v8823 = vpop.f32.mrf.mxu0
    %v8824 = vadd.f32 %v8406, %v8823
    %v8825 = vpop.f32.mrf.mxu0
    %v8826 = vadd.f32 %v8406, %v8825
    %v8827 = vpop.f32.mrf.mxu0
    %v8828 = vpop.f32.mrf.mxu0
    %8829 = vdwg.mxu0
    %8830 = vmatprep.subr.bf16.mxu0 %v7910
    %8831 = vmatpush1.bf16.msra.mxu0 %v7909
    %8832 = vmatprep.subr.bf16.mxu0 %v7324
    %8833 = vmatpush1.bf16.msra.mxu0 %v7323
    %8834 = vmatprep.subr.bf16.mxu0 %v8384
    %8835 = vmatpush1.bf16.msra.mxu0 %v8383
    %8836 = vmatprep.subr.bf16.mxu0 %v7906
    %8837 = vmatpush1.bf16.msra.mxu0 %v7905
    %8838 = vmatprep.subr.bf16.mxu0 %v7320
    %8839 = vmatpush1.bf16.msra.mxu0 %v7319
    %8840 = vmatprep.subr.bf16.mxu0 %v8380
    %8841 = vmatpush1.bf16.msra.mxu0 %v8379
    %8842 = vmatprep.subr.bf16.mxu0 %v7902
    %8843 = vmatpush1.bf16.msra.mxu0 %v7901
    %8844 = vmatprep.subr.bf16.mxu0 %v7316
    %8845 = vmatpush1.bf16.msra.mxu0 %v7315
    %8846 = vmatprep.subr.bf16.mxu0 0
    %8847 = vmatpush2.bf16.msra.mxu0 0
    %8848 = vmatprep.subr.bf16.mxu0 0
    %8849 = vmatpush2.bf16.msra.mxu0 0
    %8850 = vmatprep.subr.bf16.mxu0 0
    %8851 = vmatpush2.bf16.msra.mxu0 0
    %8852 = vmatprep.subr.bf16.mxu0 0
    %8853 = vmatpush2.bf16.msra.mxu0 0
    %8854 = vmatprep.subr.bf16.mxu0 0
    %8855 = vmatpush2.bf16.msra.mxu0 0
    %8856 = vmatprep.subr.bf16.mxu0 0
    %8857 = vmatpush2.bf16.msra.mxu0 0
    %8858 = vmatprep.subr.bf16.mxu0 0
    %8859 = vmatpush2.bf16.msra.mxu0 0
    %8860 = vmatprep.subr.bf16.mxu0 %v8388
    %8861 = vmatpush2.bf16.msra.mxu0 %v8387
    %8862 = vmatprep.mubr.bf16.mxu0 %v8420
    %8863 = vmatmul.mubr.bf16.gmra.mxu0 %v8415
    %v8864 = vpop.f32.mrf.mxu0
    %v8865 = vadd.f32 %v8406, %v8864
    %v8866 = vpop.f32.mrf.mxu0
    %v8867 = vadd.f32 %v8406, %v8866
    %v8868 = vpop.f32.mrf.mxu0
    %v8869 = vpop.f32.mrf.mxu0
    %8870 = vdwg.mxu0
    %8871 = vmatprep.subr.bf16.mxu0 %v7912
    %8872 = vmatpush1.bf16.msra.mxu0 %v7911
    %8873 = vmatprep.subr.bf16.mxu0 %v7326
    %8874 = vmatpush1.bf16.msra.mxu0 %v7325
    %8875 = vmatprep.subr.bf16.mxu0 %v8386
    %8876 = vmatpush1.bf16.msra.mxu0 %v8385
    %8877 = vmatprep.subr.bf16.mxu0 %v7908
    %8878 = vmatpush1.bf16.msra.mxu0 %v7907
    %8879 = vmatprep.subr.bf16.mxu0 %v7322
    %8880 = vmatpush1.bf16.msra.mxu0 %v7321
    %8881 = vmatprep.subr.bf16.mxu0 %v8382
    %8882 = vmatpush1.bf16.msra.mxu0 %v8381
    %8883 = vmatprep.subr.bf16.mxu0 %v7904
    %8884 = vmatpush1.bf16.msra.mxu0 %v7903
    %8885 = vmatprep.subr.bf16.mxu0 %v7318
    %8886 = vmatpush1.bf16.msra.mxu0 %v7317
    %8887 = vmatprep.subr.bf16.mxu0 0
    %8888 = vmatpush2.bf16.msra.mxu0 0
    %8889 = vmatprep.subr.bf16.mxu0 0
    %8890 = vmatpush2.bf16.msra.mxu0 0
    %8891 = vmatprep.subr.bf16.mxu0 0
    %8892 = vmatpush2.bf16.msra.mxu0 0
    %8893 = vmatprep.subr.bf16.mxu0 0
    %8894 = vmatpush2.bf16.msra.mxu0 0
    %8895 = vmatprep.subr.bf16.mxu0 0
    %8896 = vmatpush2.bf16.msra.mxu0 0
    %8897 = vmatprep.subr.bf16.mxu0 0
    %8898 = vmatpush2.bf16.msra.mxu0 0
    %8899 = vmatprep.subr.bf16.mxu0 0
    %8900 = vmatpush2.bf16.msra.mxu0 0
    %8901 = vmatprep.subr.bf16.mxu0 %v8390
    %8902 = vmatpush2.bf16.msra.mxu0 %v8389
    %8903 = vmatprep.mubr.bf16.mxu0 %v8420
    %8904 = vmatmul.mubr.bf16.gmra.mxu0 %v8415
    %v8905 = vpop.f32.mrf.mxu0
    %v8906 = vadd.f32 %v8406, %v8905
    %v8907 = vpop.f32.mrf.mxu0
    %v8908 = vadd.f32 %v8406, %v8907
    %v8909 = vpop.f32.mrf.mxu0
    %v8910 = vpop.f32.mrf.mxu0
    %8911 = vdwg.mxu0
    %8912 = vmatprep.subr.bf16.mxu0 %v7914
    %8913 = vmatpush1.bf16.msra.mxu0 %v7913
    %8914 = vmatprep.subr.bf16.mxu0 %v7328
    %8915 = vmatpush1.bf16.msra.mxu0 %v7327
    %8916 = vmatprep.subr.bf16.mxu0 %v8388
    %8917 = vmatpush1.bf16.msra.mxu0 %v8387
    %8918 = vmatprep.subr.bf16.mxu0 %v7910
    %8919 = vmatpush1.bf16.msra.mxu0 %v7909
    %8920 = vmatprep.subr.bf16.mxu0 %v7324
    %8921 = vmatpush1.bf16.msra.mxu0 %v7323
    %8922 = vmatprep.subr.bf16.mxu0 %v8384
    %8923 = vmatpush1.bf16.msra.mxu0 %v8383
    %8924 = vmatprep.subr.bf16.mxu0 %v7906
    %8925 = vmatpush1.bf16.msra.mxu0 %v7905
    %8926 = vmatprep.subr.bf16.mxu0 %v7320
    %8927 = vmatpush1.bf16.msra.mxu0 %v7319
    %8928 = vmatprep.subr.bf16.mxu0 0
    %8929 = vmatpush2.bf16.msra.mxu0 0
    %8930 = vmatprep.subr.bf16.mxu0 0
    %8931 = vmatpush2.bf16.msra.mxu0 0
    %8932 = vmatprep.subr.bf16.mxu0 0
    %8933 = vmatpush2.bf16.msra.mxu0 0
    %8934 = vmatprep.subr.bf16.mxu0 0
    %8935 = vmatpush2.bf16.msra.mxu0 0
    %8936 = vmatprep.subr.bf16.mxu0 0
    %8937 = vmatpush2.bf16.msra.mxu0 0
    %8938 = vmatprep.subr.bf16.mxu0 0
    %8939 = vmatpush2.bf16.msra.mxu0 0
    %8940 = vmatprep.subr.bf16.mxu0 0
    %8941 = vmatpush2.bf16.msra.mxu0 0
    %8942 = vmatprep.subr.bf16.mxu0 %v8392
    %8943 = vmatpush2.bf16.msra.mxu0 %v8391
    %8944 = vmatprep.mubr.bf16.mxu0 %v8420
    %8945 = vmatmul.mubr.bf16.gmra.mxu0 %v8415
    %v8946 = vpop.f32.mrf.mxu0
    %v8947 = vadd.f32 %v8406, %v8946
    %v8948 = vpop.f32.mrf.mxu0
    %v8949 = vadd.f32 %v8406, %v8948
    %v8950 = vpop.f32.mrf.mxu0
    %v8951 = vpop.f32.mrf.mxu0
    %8952 = vdwg.mxu0
    %8953 = vmatprep.subr.bf16.mxu0 %v7916
    %8954 = vmatpush1.bf16.msra.mxu0 %v7915
    %8955 = vmatprep.subr.bf16.mxu0 %v7330
    %8956 = vmatpush1.bf16.msra.mxu0 %v7329
    %8957 = vmatprep.subr.bf16.mxu0 %v8390
    %8958 = vmatpush1.bf16.msra.mxu0 %v8389
    %8959 = vmatprep.subr.bf16.mxu0 %v7912
    %8960 = vmatpush1.bf16.msra.mxu0 %v7911
    %8961 = vmatprep.subr.bf16.mxu0 %v7326
    %8962 = vmatpush1.bf16.msra.mxu0 %v7325
    %8963 = vmatprep.subr.bf16.mxu0 %v8386
    %8964 = vmatpush1.bf16.msra.mxu0 %v8385
    %8965 = vmatprep.subr.bf16.mxu0 %v7908
    %8966 = vmatpush1.bf16.msra.mxu0 %v7907
    %8967 = vmatprep.subr.bf16.mxu0 %v7322
    %8968 = vmatpush1.bf16.msra.mxu0 %v7321
    %8969 = vmatprep.subr.bf16.mxu0 0
    %8970 = vmatpush2.bf16.msra.mxu0 0
    %8971 = vmatprep.subr.bf16.mxu0 0
    %8972 = vmatpush2.bf16.msra.mxu0 0
    %8973 = vmatprep.subr.bf16.mxu0 0
    %8974 = vmatpush2.bf16.msra.mxu0 0
    %8975 = vmatprep.subr.bf16.mxu0 0
    %8976 = vmatpush2.bf16.msra.mxu0 0
    %8977 = vmatprep.subr.bf16.mxu0 0
    %8978 = vmatpush2.bf16.msra.mxu0 0
    %8979 = vmatprep.subr.bf16.mxu0 0
    %8980 = vmatpush2.bf16.msra.mxu0 0
    %8981 = vmatprep.subr.bf16.mxu0 0
    %8982 = vmatpush2.bf16.msra.mxu0 0
    %8983 = vmatprep.subr.bf16.mxu0 %v8394
    %8984 = vmatpush2.bf16.msra.mxu0 %v8393
    %8985 = vmatprep.mubr.bf16.mxu0 %v8420
    %8986 = vmatmul.mubr.bf16.gmra.mxu0 %v8415
    %v8987 = vpop.f32.mrf.mxu0
    %v8988 = vadd.f32 %v8406, %v8987
    %v8989 = vpop.f32.mrf.mxu0
    %v8990 = vadd.f32 %v8406, %v8989
    %v8991 = vpop.f32.mrf.mxu0
    %v8992 = vpop.f32.mrf.mxu0
    %8993 = vdwg.mxu0
    %8994 = vmatprep.subr.bf16.mxu0 %v7918
    %8995 = vmatpush1.bf16.msra.mxu0 %v7917
    %8996 = vmatprep.subr.bf16.mxu0 %v7332
    %8997 = vmatpush1.bf16.msra.mxu0 %v7331
    %8998 = vmatprep.subr.bf16.mxu0 %v8392
    %8999 = vmatpush1.bf16.msra.mxu0 %v8391
    %9000 = vmatprep.subr.bf16.mxu0 %v7914
    %9001 = vmatpush1.bf16.msra.mxu0 %v7913
    %9002 = vmatprep.subr.bf16.mxu0 %v7328
    %9003 = vmatpush1.bf16.msra.mxu0 %v7327
    %9004 = vmatprep.subr.bf16.mxu0 %v8388
    %9005 = vmatpush1.bf16.msra.mxu0 %v8387
    %9006 = vmatprep.subr.bf16.mxu0 %v7910
    %9007 = vmatpush1.bf16.msra.mxu0 %v7909
    %9008 = vmatprep.subr.bf16.mxu0 %v7324
    %9009 = vmatpush1.bf16.msra.mxu0 %v7323
    %9010 = vmatprep.subr.bf16.mxu0 0
    %9011 = vmatpush2.bf16.msra.mxu0 0
    %9012 = vmatprep.subr.bf16.mxu0 0
    %9013 = vmatpush2.bf16.msra.mxu0 0
    %9014 = vmatprep.subr.bf16.mxu0 0
    %9015 = vmatpush2.bf16.msra.mxu0 0
    %9016 = vmatprep.subr.bf16.mxu0 0
    %9017 = vmatpush2.bf16.msra.mxu0 0
    %9018 = vmatprep.subr.bf16.mxu0 0
    %9019 = vmatpush2.bf16.msra.mxu0 0
    %9020 = vmatprep.subr.bf16.mxu0 0
    %9021 = vmatpush2.bf16.msra.mxu0 0
    %9022 = vmatprep.subr.bf16.mxu0 0
    %9023 = vmatpush2.bf16.msra.mxu0 0
    %9024 = vmatprep.subr.bf16.mxu0 %v8396
    %9025 = vmatpush2.bf16.msra.mxu0 %v8395
    %9026 = vmatprep.mubr.bf16.mxu0 %v8420
    %9027 = vmatmul.mubr.bf16.gmra.mxu0 %v8415
    %v9028 = vpop.f32.mrf.mxu0
    %v9029 = vadd.f32 %v8406, %v9028
    %v9030 = vpop.f32.mrf.mxu0
    %v9031 = vadd.f32 %v8406, %v9030
    %v9032 = vpop.f32.mrf.mxu0
    %v9033 = vpop.f32.mrf.mxu0
    %9034 = vdwg.mxu0
    %9035 = vmatprep.subr.bf16.mxu0 %v7920
    %9036 = vmatpush1.bf16.msra.mxu0 %v7919
    %9037 = vmatprep.subr.bf16.mxu0 %v7334
    %9038 = vmatpush1.bf16.msra.mxu0 %v7333
    %9039 = vmatprep.subr.bf16.mxu0 %v8394
    %9040 = vmatpush1.bf16.msra.mxu0 %v8393
    %9041 = vmatprep.subr.bf16.mxu0 %v7916
    %9042 = vmatpush1.bf16.msra.mxu0 %v7915
    %9043 = vmatprep.subr.bf16.mxu0 %v7330
    %9044 = vmatpush1.bf16.msra.mxu0 %v7329
    %9045 = vmatprep.subr.bf16.mxu0 %v8390
    %9046 = vmatpush1.bf16.msra.mxu0 %v8389
    %9047 = vmatprep.subr.bf16.mxu0 %v7912
    %9048 = vmatpush1.bf16.msra.mxu0 %v7911
    %9049 = vmatprep.subr.bf16.mxu0 %v7326
    %9050 = vmatpush1.bf16.msra.mxu0 %v7325
    %9051 = vmatprep.subr.bf16.mxu0 0
    %9052 = vmatpush2.bf16.msra.mxu0 0
    %9053 = vmatprep.subr.bf16.mxu0 0
    %9054 = vmatpush2.bf16.msra.mxu0 0
    %9055 = vmatprep.subr.bf16.mxu0 0
    %9056 = vmatpush2.bf16.msra.mxu0 0
    %9057 = vmatprep.subr.bf16.mxu0 0
    %9058 = vmatpush2.bf16.msra.mxu0 0
    %9059 = vmatprep.subr.bf16.mxu0 0
    %9060 = vmatpush2.bf16.msra.mxu0 0
    %9061 = vmatprep.subr.bf16.mxu0 0
    %9062 = vmatpush2.bf16.msra.mxu0 0
    %9063 = vmatprep.subr.bf16.mxu0 0
    %9064 = vmatpush2.bf16.msra.mxu0 0
    %9065 = vmatprep.subr.bf16.mxu0 %v8398
    %9066 = vmatpush2.bf16.msra.mxu0 %v8397
    %9067 = vmatprep.mubr.bf16.mxu0 %v8420
    %9068 = vmatmul.mubr.bf16.gmra.mxu0 %v8415
    %v9069 = vpop.f32.mrf.mxu0
    %v9070 = vadd.f32 %v8406, %v9069
    %v9071 = vpop.f32.mrf.mxu0
    %v9072 = vadd.f32 %v8406, %v9071
    %v9073 = vpop.f32.mrf.mxu0
    %v9074 = vpop.f32.mrf.mxu0
    %9075 = vdwg.mxu0
    %9076 = vmatprep.subr.bf16.mxu0 %v7922
    %9077 = vmatpush1.bf16.msra.mxu0 %v7921
    %9078 = vmatprep.subr.bf16.mxu0 %v7336
    %9079 = vmatpush1.bf16.msra.mxu0 %v7335
    %9080 = vmatprep.subr.bf16.mxu0 %v8396
    %9081 = vmatpush1.bf16.msra.mxu0 %v8395
    %9082 = vmatprep.subr.bf16.mxu0 %v7918
    %9083 = vmatpush1.bf16.msra.mxu0 %v7917
    %9084 = vmatprep.subr.bf16.mxu0 %v7332
    %9085 = vmatpush1.bf16.msra.mxu0 %v7331
    %9086 = vmatprep.subr.bf16.mxu0 %v8392
    %9087 = vmatpush1.bf16.msra.mxu0 %v8391
    %9088 = vmatprep.subr.bf16.mxu0 %v7914
    %9089 = vmatpush1.bf16.msra.mxu0 %v7913
    %9090 = vmatprep.subr.bf16.mxu0 %v7328
    %9091 = vmatpush1.bf16.msra.mxu0 %v7327
    %9092 = vmatprep.subr.bf16.mxu0 0
    %9093 = vmatpush2.bf16.msra.mxu0 0
    %9094 = vmatprep.subr.bf16.mxu0 0
    %9095 = vmatpush2.bf16.msra.mxu0 0
    %9096 = vmatprep.subr.bf16.mxu0 0
    %9097 = vmatpush2.bf16.msra.mxu0 0
    %9098 = vmatprep.subr.bf16.mxu0 0
    %9099 = vmatpush2.bf16.msra.mxu0 0
    %9100 = vmatprep.subr.bf16.mxu0 0
    %9101 = vmatpush2.bf16.msra.mxu0 0
    %9102 = vmatprep.subr.bf16.mxu0 0
    %9103 = vmatpush2.bf16.msra.mxu0 0
    %9104 = vmatprep.subr.bf16.mxu0 0
    %9105 = vmatpush2.bf16.msra.mxu0 0
    %9106 = vmatprep.subr.bf16.mxu0 %v8400
    %9107 = vmatpush2.bf16.msra.mxu0 %v8399
    %9108 = vmatprep.mubr.bf16.mxu0 %v8420
    %9109 = vmatmul.mubr.bf16.gmra.mxu0 %v8415
    %v9110 = vpop.f32.mrf.mxu0
    %v9111 = vadd.f32 %v8406, %v9110
    %v9112 = vpop.f32.mrf.mxu0
    %v9113 = vpop.f32.mrf.mxu0
    %v9114 = vpop.f32.mrf.mxu0
    %9115 = vdwg.mxu0
    %9116 = vmatprep.subr.bf16.mxu0 %v2916
    %9117 = vmatpush1.bf16.msra.mxu0 %v2916
    %9118 = vmatprep.subr.bf16.mxu0 %v2916
    %9119 = vmatpush1.bf16.msra.mxu0 %v2916
    %9120 = vmatprep.subr.bf16.mxu0 %v2916
    %9121 = vmatpush1.bf16.msra.mxu0 %v2916
    %9122 = vmatprep.subr.bf16.mxu0 %v2916
    %9123 = vmatpush1.bf16.msra.mxu0 %v2916
    %9124 = vmatprep.subr.bf16.mxu0 %v2916
    %9125 = vmatpush1.bf16.msra.mxu0 %v2916
    %9126 = vmatprep.subr.bf16.mxu0 %v8402
    %9127 = vmatpush1.bf16.msra.mxu0 %v8401
    %9128 = vmatprep.subr.bf16.mxu0 %v7924
    %9129 = vmatpush1.bf16.msra.mxu0 %v7923
    %9130 = vmatprep.subr.bf16.mxu0 %v7338
    %9131 = vmatpush1.bf16.msra.mxu0 %v7337
    %9132 = vmatprep.subr.bf16.mxu0 0
    %9133 = vmatpush2.bf16.msra.mxu0 0
    %9134 = vmatprep.subr.bf16.mxu0 0
    %9135 = vmatpush2.bf16.msra.mxu0 0
    %9136 = vmatprep.subr.bf16.mxu0 0
    %9137 = vmatpush2.bf16.msra.mxu0 0
    %9138 = vmatprep.subr.bf16.mxu0 0
    %9139 = vmatpush2.bf16.msra.mxu0 0
    %9140 = vmatprep.subr.bf16.mxu0 0
    %9141 = vmatpush2.bf16.msra.mxu0 0
    %9142 = vmatprep.subr.bf16.mxu0 0
    %9143 = vmatpush2.bf16.msra.mxu0 0
    %9144 = vmatprep.subr.bf16.mxu0 0
    %9145 = vmatpush2.bf16.msra.mxu0 0
    %9146 = vmatprep.subr.bf16.mxu0 %v2916
    %9147 = vmatpush2.bf16.msra.mxu0 %v2916
    %9148 = vmatprep.mubr.bf16.mxu0 %v8420
    %9149 = vmatmul.mubr.bf16.gmra.mxu0 %v8415
    %v9150 = vpop.f32.mrf.mxu0
    %v9151 = vpop.f32.mrf.mxu0
    %v9152 = vadd.f32 %v8406, %v9151
    %v9153 = vpop.f32.mrf.mxu0
    %v9154 = vpop.f32.mrf.mxu0
    %9155 = vdwg.mxu0
    %v9156 = vmax.f32 %v8457, 0.0
    %v9157 = vmax.f32 %v8459, 0.0
    %v9158 = vmax.f32 %v8498, 0.0
    %v9159 = vmax.f32 %v8500, 0.0
    %v9160 = vmax.f32 %v8539, 0.0
    %v9161 = vmax.f32 %v8541, 0.0
    %v9162 = vmax.f32 %v8580, 0.0
    %v9163 = vmax.f32 %v8582, 0.0
    %v9164 = vmax.f32 %v8621, 0.0
    %v9165 = vmax.f32 %v8623, 0.0
    %v9166 = vmax.f32 %v8662, 0.0
    %v9167 = vmax.f32 %v8664, 0.0
    %v9168 = vmax.f32 %v8703, 0.0
    %v9169 = vmax.f32 %v8705, 0.0
    %v9170 = vmax.f32 %v8744, 0.0
    %v9171 = vmax.f32 %v8785, 0.0
    %v9172 = vmax.f32 %v8824, 0.0
    %v9173 = vmax.f32 %v8826, 0.0
    %v9174 = vmax.f32 %v8865, 0.0
    %v9175 = vmax.f32 %v8867, 0.0
    %v9176 = vmax.f32 %v8906, 0.0
    %v9177 = vmax.f32 %v8908, 0.0
    %v9178 = vmax.f32 %v8947, 0.0
    %v9179 = vmax.f32 %v8949, 0.0
    %v9180 = vmax.f32 %v8988, 0.0
    %v9181 = vmax.f32 %v8990, 0.0
    %v9182 = vmax.f32 %v9029, 0.0
    %v9183 = vmax.f32 %v9031, 0.0
    %v9184 = vmax.f32 %v9070, 0.0
    %v9185 = vmax.f32 %v9072, 0.0
    %v9186 = vmax.f32 %v9111, 0.0
    %v9187 = vmax.f32 %v9152, 0.0
    %v9188 = vmul.f32 %v9156, %v535
    %v9189 = vmul.f32 %v9157, %v536
    %v9190 = vmul.f32 %v9158, %v537
    %v9191 = vmul.f32 %v9159, %v538
    %v9192 = vmul.f32 %v9160, %v539
    %v9193 = vmul.f32 %v9161, %v540
    %v9194 = vmul.f32 %v9162, %v541
    %v9195 = vmul.f32 %v9163, %v542
    %v9196 = vmul.f32 %v9164, %v543
    %v9197 = vmul.f32 %v9165, %v544
    %v9198 = vmul.f32 %v9166, %v545
    %v9199 = vmul.f32 %v9167, %v546
    %v9200 = vmul.f32 %v9168, %v547
    %v9201 = vmul.f32 %v9169, %v548
    %v9202 = vmul.f32 %v9170, %v549
    %v9203 = vmul.f32 %v9171, %v550
    %v9204 = vmul.f32 %v9172, %v551
    %v9205 = vmul.f32 %v9173, %v552
    %v9206 = vmul.f32 %v9174, %v553
    %v9207 = vmul.f32 %v9175, %v554
    %v9208 = vmul.f32 %v9176, %v555
    %v9209 = vmul.f32 %v9177, %v556
    %v9210 = vmul.f32 %v9178, %v557
    %v9211 = vmul.f32 %v9179, %v558
    %v9212 = vmul.f32 %v9180, %v559
    %v9213 = vmul.f32 %v9181, %v560
    %v9214 = vmul.f32 %v9182, %v561
    %v9215 = vmul.f32 %v9183, %v562
    %v9216 = vmul.f32 %v9184, %v563
    %v9217 = vmul.f32 %v9185, %v564
    %v9218 = vmul.f32 %v9186, %v565
    %v9219 = vmul.f32 %v9187, %v566
    %9252 = vrot.lane.b32.xlu0 %v9188, 127
    %v9253 = vpop.permute.xlu0 %9252
    %9254 = vrot.lane.b32.xlu0 %v9189, 127
    %v9255 = vpop.permute.xlu0 %9254
    %9256 = vrot.lane.b32.xlu0 %v9190, 127
    %v9257 = vpop.permute.xlu0 %9256
    %9258 = vrot.lane.b32.xlu0 %v9191, 127
    %v9259 = vpop.permute.xlu0 %9258
    %9260 = vrot.lane.b32.xlu0 %v9192, 127
    %v9261 = vpop.permute.xlu0 %9260
    %9262 = vrot.lane.b32.xlu0 %v9193, 127
    %v9263 = vpop.permute.xlu0 %9262
    %9264 = vrot.lane.b32.xlu0 %v9194, 127
    %v9265 = vpop.permute.xlu0 %9264
    %9266 = vrot.lane.b32.xlu0 %v9195, 127
    %v9267 = vpop.permute.xlu0 %9266
    %9268 = vrot.lane.b32.xlu0 %v9196, 127
    %v9269 = vpop.permute.xlu0 %9268
    %9270 = vrot.lane.b32.xlu0 %v9197, 127
    %v9271 = vpop.permute.xlu0 %9270
    %9272 = vrot.lane.b32.xlu0 %v9198, 127
    %v9273 = vpop.permute.xlu0 %9272
    %9274 = vrot.lane.b32.xlu0 %v9199, 127
    %v9275 = vpop.permute.xlu0 %9274
    %9276 = vrot.lane.b32.xlu0 %v9200, 127
    %v9277 = vpop.permute.xlu0 %9276
    %9278 = vrot.lane.b32.xlu0 %v9201, 127
    %v9279 = vpop.permute.xlu0 %9278
    %9280 = vrot.lane.b32.xlu0 %v9202, 127
    %v9281 = vpop.permute.xlu0 %9280
    %9282 = vrot.lane.b32.xlu0 %v9203, 127
    %v9283 = vpop.permute.xlu0 %9282
    %9284 = vrot.lane.b32.xlu0 %v9204, 127
    %v9285 = vpop.permute.xlu0 %9284
    %9286 = vrot.lane.b32.xlu0 %v9205, 127
    %v9287 = vpop.permute.xlu0 %9286
    %9288 = vrot.lane.b32.xlu0 %v9206, 127
    %v9289 = vpop.permute.xlu0 %9288
    %9290 = vrot.lane.b32.xlu0 %v9207, 127
    %v9291 = vpop.permute.xlu0 %9290
    %9292 = vrot.lane.b32.xlu0 %v9208, 127
    %v9293 = vpop.permute.xlu0 %9292
    %9294 = vrot.lane.b32.xlu0 %v9209, 127
    %v9295 = vpop.permute.xlu0 %9294
    %9296 = vrot.lane.b32.xlu0 %v9210, 127
    %v9297 = vpop.permute.xlu0 %9296
    %9298 = vrot.lane.b32.xlu0 %v9211, 127
    %v9299 = vpop.permute.xlu0 %9298
    %9300 = vrot.lane.b32.xlu0 %v9212, 127
    %v9301 = vpop.permute.xlu0 %9300
    %9302 = vrot.lane.b32.xlu0 %v9213, 127
    %v9303 = vpop.permute.xlu0 %9302
    %9304 = vrot.lane.b32.xlu0 %v9214, 127
    %v9305 = vpop.permute.xlu0 %9304
    %9306 = vrot.lane.b32.xlu0 %v9215, 127
    %v9307 = vpop.permute.xlu0 %9306
    %9308 = vrot.lane.b32.xlu0 %v9216, 127
    %v9309 = vpop.permute.xlu0 %9308
    %9310 = vrot.lane.b32.xlu0 %v9217, 127
    %v9311 = vpop.permute.xlu0 %9310
    %9312 = vrot.lane.b32.xlu0 %v9218, 127
    %v9313 = vpop.permute.xlu0 %9312
    %9314 = vrot.lane.b32.xlu0 %v9219, 127
    %v9315 = vpop.permute.xlu0 %9314
    %v9316 = vsel %vm3085, %v9253, %v9255
    %v9317 = vsel %vm3085, %v9255, %v9257
    %v9318 = vsel %vm3085, %v9257, %v9259
    %v9319 = vsel %vm3085, %v9259, %v9261
    %v9320 = vsel %vm3085, %v9261, %v9263
    %v9321 = vsel %vm3085, %v9263, %v9265
    %v9322 = vsel %vm3085, %v9265, %v9267
    %v9323 = vsel %vm3085, %v9267, %v9269
    %v9324 = vsel %vm3085, %v9269, %v9271
    %v9325 = vsel %vm3085, %v9271, %v9273
    %v9326 = vsel %vm3085, %v9273, %v9275
    %v9327 = vsel %vm3085, %v9275, %v9277
    %v9328 = vsel %vm3085, %v9277, %v9279
    %v9329 = vsel %vm3085, %v9279, %v9281
    %v9330 = vsel %vm3085, %v9283, %v9285
    %v9331 = vsel %vm3085, %v9285, %v9287
    %v9332 = vsel %vm3085, %v9287, %v9289
    %v9333 = vsel %vm3085, %v9289, %v9291
    %v9334 = vsel %vm3085, %v9291, %v9293
    %v9335 = vsel %vm3085, %v9293, %v9295
    %v9336 = vsel %vm3085, %v9295, %v9297
    %v9337 = vsel %vm3085, %v9297, %v9299
    %v9338 = vsel %vm3085, %v9299, %v9301
    %v9339 = vsel %vm3085, %v9301, %v9303
    %v9340 = vsel %vm3085, %v9303, %v9305
    %v9341 = vsel %vm3085, %v9305, %v9307
    %v9342 = vsel %vm3085, %v9307, %v9309
    %v9343 = vsel %vm3085, %v9309, %v9311
    %v9344 = vsel %vm3085, %v9311, %v9313
    %v9376 = vsel %vm3085, %v9315, %v9253
    %v9377 = vmax.f32 %v9188, %v9316
    %v9378 = vmax.f32 %v9189, %v9317
    %v9379 = vmax.f32 %v9190, %v9318
    %v9380 = vmax.f32 %v9191, %v9319
    %v9381 = vmax.f32 %v9192, %v9320
    %v9382 = vmax.f32 %v9193, %v9321
    %v9383 = vmax.f32 %v9194, %v9322
    %v9384 = vmax.f32 %v9195, %v9323
    %v9385 = vmax.f32 %v9196, %v9324
    %v9386 = vmax.f32 %v9197, %v9325
    %v9387 = vmax.f32 %v9198, %v9326
    %v9388 = vmax.f32 %v9199, %v9327
    %v9389 = vmax.f32 %v9200, %v9328
    %v9390 = vmax.f32 %v9201, %v9329
    %v9391 = vmax.f32 %v9203, %v9330
    %v9392 = vmax.f32 %v9204, %v9331
    %v9393 = vmax.f32 %v9205, %v9332
    %v9394 = vmax.f32 %v9206, %v9333
    %v9395 = vmax.f32 %v9207, %v9334
    %v9396 = vmax.f32 %v9208, %v9335
    %v9397 = vmax.f32 %v9209, %v9336
    %v9398 = vmax.f32 %v9210, %v9337
    %v9399 = vmax.f32 %v9211, %v9338
    %v9400 = vmax.f32 %v9212, %v9339
    %v9401 = vmax.f32 %v9213, %v9340
    %v9402 = vmax.f32 %v9214, %v9341
    %v9403 = vmax.f32 %v9215, %v9342
    %v9404 = vmax.f32 %v9216, %v9343
    %v9405 = vmax.f32 %v9217, %v9344
    %v9406 = vmax.f32 %v9219, %v9376
    %9408 = vrot.lane.b32.xlu0 %v9406, 48
    %v9409 = vpop.permute.xlu0 %9408
    %9438 = vrot.lane.b32.xlu0 %v9377, 48
    %v9439 = vpop.permute.xlu0 %9438
    %9440 = vrot.lane.b32.xlu0 %v9378, 48
    %v9441 = vpop.permute.xlu0 %9440
    %9442 = vrot.lane.b32.xlu0 %v9379, 48
    %v9443 = vpop.permute.xlu0 %9442
    %9444 = vrot.lane.b32.xlu0 %v9380, 48
    %v9445 = vpop.permute.xlu0 %9444
    %9446 = vrot.lane.b32.xlu0 %v9381, 48
    %v9447 = vpop.permute.xlu0 %9446
    %9448 = vrot.lane.b32.xlu0 %v9382, 48
    %v9449 = vpop.permute.xlu0 %9448
    %9450 = vrot.lane.b32.xlu0 %v9383, 48
    %v9451 = vpop.permute.xlu0 %9450
    %9452 = vrot.lane.b32.xlu0 %v9384, 48
    %v9453 = vpop.permute.xlu0 %9452
    %9454 = vrot.lane.b32.xlu0 %v9385, 48
    %v9455 = vpop.permute.xlu0 %9454
    %9456 = vrot.lane.b32.xlu0 %v9386, 48
    %v9457 = vpop.permute.xlu0 %9456
    %9458 = vrot.lane.b32.xlu0 %v9387, 48
    %v9459 = vpop.permute.xlu0 %9458
    %9460 = vrot.lane.b32.xlu0 %v9388, 48
    %v9461 = vpop.permute.xlu0 %9460
    %9462 = vrot.lane.b32.xlu0 %v9389, 48
    %v9463 = vpop.permute.xlu0 %9462
    %9464 = vrot.lane.b32.xlu0 %v9391, 48
    %v9465 = vpop.permute.xlu0 %9464
    %9466 = vrot.lane.b32.xlu0 %v9392, 48
    %v9467 = vpop.permute.xlu0 %9466
    %9468 = vrot.lane.b32.xlu0 %v9393, 48
    %v9469 = vpop.permute.xlu0 %9468
    %9470 = vrot.lane.b32.xlu0 %v9394, 48
    %v9471 = vpop.permute.xlu0 %9470
    %9472 = vrot.lane.b32.xlu0 %v9395, 48
    %v9473 = vpop.permute.xlu0 %9472
    %9474 = vrot.lane.b32.xlu0 %v9396, 48
    %v9475 = vpop.permute.xlu0 %9474
    %9476 = vrot.lane.b32.xlu0 %v9397, 48
    %v9477 = vpop.permute.xlu0 %9476
    %9478 = vrot.lane.b32.xlu0 %v9398, 48
    %v9479 = vpop.permute.xlu0 %9478
    %9480 = vrot.lane.b32.xlu0 %v9399, 48
    %v9481 = vpop.permute.xlu0 %9480
    %9482 = vrot.lane.b32.xlu0 %v9400, 48
    %v9483 = vpop.permute.xlu0 %9482
    %9484 = vrot.lane.b32.xlu0 %v9401, 48
    %v9485 = vpop.permute.xlu0 %9484
    %9486 = vrot.lane.b32.xlu0 %v9402, 48
    %v9487 = vpop.permute.xlu0 %9486
    %9488 = vrot.lane.b32.xlu0 %v9403, 48
    %v9489 = vpop.permute.xlu0 %9488
    %9490 = vrot.lane.b32.xlu0 %v9404, 48
    %v9491 = vpop.permute.xlu0 %9490
    %v9492 = vsel %vm918, %v9439, %v9441
    %v9493 = vsel %vm918, %v9441, %v9443
    %v9494 = vsel %vm918, %v9443, %v9445
    %v9495 = vsel %vm918, %v9445, %v9447
    %v9496 = vsel %vm918, %v9447, %v9449
    %v9497 = vsel %vm918, %v9449, %v9451
    %v9498 = vsel %vm918, %v9451, %v9453
    %v9499 = vsel %vm918, %v9453, %v9455
    %v9500 = vsel %vm918, %v9455, %v9457
    %v9501 = vsel %vm918, %v9457, %v9459
    %v9502 = vsel %vm918, %v9459, %v9461
    %v9503 = vsel %vm918, %v9461, %v9463
    %v9504 = vsel %vm918, %v9465, %v9467
    %v9505 = vsel %vm918, %v9467, %v9469
    %v9506 = vsel %vm918, %v9469, %v9471
    %v9507 = vsel %vm918, %v9471, %v9473
    %v9508 = vsel %vm918, %v9473, %v9475
    %v9509 = vsel %vm918, %v9475, %v9477
    %v9510 = vsel %vm918, %v9477, %v9479
    %v9511 = vsel %vm918, %v9479, %v9481
    %v9512 = vsel %vm918, %v9481, %v9483
    %v9513 = vsel %vm918, %v9483, %v9485
    %v9514 = vsel %vm918, %v9485, %v9487
    %v9515 = vsel %vm918, %v9487, %v9489
    %v9516 = vsel %vm918, %v9489, %v9491
    %v9543 = vsel %vm918, %v9409, %v9439
    %9546 = vrot.lane.b32.xlu0 %v9377, 80
    %v9547 = vpop.permute.xlu0 %9546
    %9548 = vrot.lane.b32.xlu0 %v9378, 80
    %v9549 = vpop.permute.xlu0 %9548
    %9550 = vrot.lane.b32.xlu0 %v9379, 80
    %v9551 = vpop.permute.xlu0 %9550
    %9552 = vrot.lane.b32.xlu0 %v9380, 80
    %v9553 = vpop.permute.xlu0 %9552
    %9554 = vrot.lane.b32.xlu0 %v9381, 80
    %v9555 = vpop.permute.xlu0 %9554
    %9556 = vrot.lane.b32.xlu0 %v9382, 80
    %v9557 = vpop.permute.xlu0 %9556
    %9558 = vrot.lane.b32.xlu0 %v9383, 80
    %v9559 = vpop.permute.xlu0 %9558
    %9560 = vrot.lane.b32.xlu0 %v9384, 80
    %v9561 = vpop.permute.xlu0 %9560
    %9562 = vrot.lane.b32.xlu0 %v9385, 80
    %v9563 = vpop.permute.xlu0 %9562
    %9564 = vrot.lane.b32.xlu0 %v9386, 80
    %v9565 = vpop.permute.xlu0 %9564
    %9566 = vrot.lane.b32.xlu0 %v9387, 80
    %v9567 = vpop.permute.xlu0 %9566
    %9568 = vrot.lane.b32.xlu0 %v9388, 80
    %v9569 = vpop.permute.xlu0 %9568
    %9570 = vrot.lane.b32.xlu0 %v9389, 80
    %v9571 = vpop.permute.xlu0 %9570
    %9572 = vrot.lane.b32.xlu0 %v9390, 80
    %v9573 = vpop.permute.xlu0 %9572
    %9574 = vrot.lane.b32.xlu0 %v9392, 80
    %v9575 = vpop.permute.xlu0 %9574
    %9576 = vrot.lane.b32.xlu0 %v9393, 80
    %v9577 = vpop.permute.xlu0 %9576
    %9578 = vrot.lane.b32.xlu0 %v9394, 80
    %v9579 = vpop.permute.xlu0 %9578
    %9580 = vrot.lane.b32.xlu0 %v9395, 80
    %v9581 = vpop.permute.xlu0 %9580
    %9582 = vrot.lane.b32.xlu0 %v9396, 80
    %v9583 = vpop.permute.xlu0 %9582
    %9584 = vrot.lane.b32.xlu0 %v9397, 80
    %v9585 = vpop.permute.xlu0 %9584
    %9586 = vrot.lane.b32.xlu0 %v9398, 80
    %v9587 = vpop.permute.xlu0 %9586
    %9588 = vrot.lane.b32.xlu0 %v9399, 80
    %v9589 = vpop.permute.xlu0 %9588
    %9590 = vrot.lane.b32.xlu0 %v9400, 80
    %v9591 = vpop.permute.xlu0 %9590
    %9592 = vrot.lane.b32.xlu0 %v9401, 80
    %v9593 = vpop.permute.xlu0 %9592
    %9594 = vrot.lane.b32.xlu0 %v9402, 80
    %v9595 = vpop.permute.xlu0 %9594
    %9596 = vrot.lane.b32.xlu0 %v9403, 80
    %v9597 = vpop.permute.xlu0 %9596
    %9598 = vrot.lane.b32.xlu0 %v9404, 80
    %v9599 = vpop.permute.xlu0 %9598
    %9600 = vrot.lane.b32.xlu0 %v9405, 80
    %v9601 = vpop.permute.xlu0 %9600
    %v9602 = vsel %vm1612, %v9547, %v9549
    %v9603 = vsel %vm1612, %v9549, %v9551
    %v9604 = vsel %vm1612, %v9551, %v9553
    %v9605 = vsel %vm1612, %v9553, %v9555
    %v9606 = vsel %vm1612, %v9555, %v9557
    %v9607 = vsel %vm1612, %v9557, %v9559
    %v9608 = vsel %vm1612, %v9559, %v9561
    %v9609 = vsel %vm1612, %v9561, %v9563
    %v9610 = vsel %vm1612, %v9563, %v9565
    %v9611 = vsel %vm1612, %v9565, %v9567
    %v9612 = vsel %vm1612, %v9567, %v9569
    %v9613 = vsel %vm1612, %v9569, %v9571
    %v9614 = vsel %vm1612, %v9571, %v9573
    %v9615 = vsel %vm1612, %v9575, %v9577
    %v9616 = vsel %vm1612, %v9577, %v9579
    %v9617 = vsel %vm1612, %v9579, %v9581
    %v9618 = vsel %vm1612, %v9581, %v9583
    %v9619 = vsel %vm1612, %v9583, %v9585
    %v9620 = vsel %vm1612, %v9585, %v9587
    %v9621 = vsel %vm1612, %v9587, %v9589
    %v9622 = vsel %vm1612, %v9589, %v9591
    %v9623 = vsel %vm1612, %v9591, %v9593
    %v9624 = vsel %vm1612, %v9593, %v9595
    %v9625 = vsel %vm1612, %v9595, %v9597
    %v9626 = vsel %vm1612, %v9597, %v9599
    %v9627 = vsel %vm1612, %v9599, %v9601
    %9654 = vrot.lane.b32.xlu0 %v9377, 52
    %v9655 = vpop.permute.xlu0 %9654
    %9656 = vrot.lane.b32.xlu0 %v9378, 52
    %v9657 = vpop.permute.xlu0 %9656
    %9658 = vrot.lane.b32.xlu0 %v9379, 52
    %v9659 = vpop.permute.xlu0 %9658
    %9660 = vrot.lane.b32.xlu0 %v9380, 52
    %v9661 = vpop.permute.xlu0 %9660
    %9662 = vrot.lane.b32.xlu0 %v9381, 52
    %v9663 = vpop.permute.xlu0 %9662
    %9664 = vrot.lane.b32.xlu0 %v9382, 52
    %v9665 = vpop.permute.xlu0 %9664
    %9666 = vrot.lane.b32.xlu0 %v9383, 52
    %v9667 = vpop.permute.xlu0 %9666
    %9668 = vrot.lane.b32.xlu0 %v9384, 52
    %v9669 = vpop.permute.xlu0 %9668
    %9670 = vrot.lane.b32.xlu0 %v9385, 52
    %v9671 = vpop.permute.xlu0 %9670
    %9672 = vrot.lane.b32.xlu0 %v9386, 52
    %v9673 = vpop.permute.xlu0 %9672
    %9674 = vrot.lane.b32.xlu0 %v9387, 52
    %v9675 = vpop.permute.xlu0 %9674
    %9676 = vrot.lane.b32.xlu0 %v9388, 52
    %v9677 = vpop.permute.xlu0 %9676
    %9678 = vrot.lane.b32.xlu0 %v9389, 52
    %v9679 = vpop.permute.xlu0 %9678
    %9680 = vrot.lane.b32.xlu0 %v9390, 52
    %v9681 = vpop.permute.xlu0 %9680
    %9682 = vrot.lane.b32.xlu0 %v9392, 52
    %v9683 = vpop.permute.xlu0 %9682
    %9684 = vrot.lane.b32.xlu0 %v9393, 52
    %v9685 = vpop.permute.xlu0 %9684
    %9686 = vrot.lane.b32.xlu0 %v9394, 52
    %v9687 = vpop.permute.xlu0 %9686
    %9688 = vrot.lane.b32.xlu0 %v9395, 52
    %v9689 = vpop.permute.xlu0 %9688
    %9690 = vrot.lane.b32.xlu0 %v9396, 52
    %v9691 = vpop.permute.xlu0 %9690
    %9692 = vrot.lane.b32.xlu0 %v9397, 52
    %v9693 = vpop.permute.xlu0 %9692
    %9694 = vrot.lane.b32.xlu0 %v9398, 52
    %v9695 = vpop.permute.xlu0 %9694
    %9696 = vrot.lane.b32.xlu0 %v9399, 52
    %v9697 = vpop.permute.xlu0 %9696
    %9698 = vrot.lane.b32.xlu0 %v9400, 52
    %v9699 = vpop.permute.xlu0 %9698
    %9700 = vrot.lane.b32.xlu0 %v9401, 52
    %v9701 = vpop.permute.xlu0 %9700
    %9702 = vrot.lane.b32.xlu0 %v9402, 52
    %v9703 = vpop.permute.xlu0 %9702
    %9704 = vrot.lane.b32.xlu0 %v9403, 52
    %v9705 = vpop.permute.xlu0 %9704
    %9706 = vrot.lane.b32.xlu0 %v9404, 52
    %v9707 = vpop.permute.xlu0 %9706
    %9708 = vrot.lane.b32.xlu0 %v9405, 52
    %v9709 = vpop.permute.xlu0 %9708
    %v9710 = vsel %vm1894, %v9655, %v9657
    %v9711 = vsel %vm1894, %v9657, %v9659
    %v9712 = vsel %vm1894, %v9659, %v9661
    %v9713 = vsel %vm1894, %v9661, %v9663
    %v9714 = vsel %vm1894, %v9663, %v9665
    %v9715 = vsel %vm1894, %v9665, %v9667
    %v9716 = vsel %vm1894, %v9667, %v9669
    %v9717 = vsel %vm1894, %v9669, %v9671
    %v9718 = vsel %vm1894, %v9671, %v9673
    %v9719 = vsel %vm1894, %v9673, %v9675
    %v9720 = vsel %vm1894, %v9675, %v9677
    %v9721 = vsel %vm1894, %v9677, %v9679
    %v9722 = vsel %vm1894, %v9679, %v9681
    %v9723 = vsel %vm1894, %v9683, %v9685
    %v9724 = vsel %vm1894, %v9685, %v9687
    %v9725 = vsel %vm1894, %v9687, %v9689
    %v9726 = vsel %vm1894, %v9689, %v9691
    %v9727 = vsel %vm1894, %v9691, %v9693
    %v9728 = vsel %vm1894, %v9693, %v9695
    %v9729 = vsel %vm1894, %v9695, %v9697
    %v9730 = vsel %vm1894, %v9697, %v9699
    %v9731 = vsel %vm1894, %v9699, %v9701
    %v9732 = vsel %vm1894, %v9701, %v9703
    %v9733 = vsel %vm1894, %v9703, %v9705
    %v9734 = vsel %vm1894, %v9705, %v9707
    %v9735 = vsel %vm1894, %v9707, %v9709
    %v9736 = vrot.slane %v9377, 4
    %v9737 = vrot.slane %v9378, 4
    %v9738 = vrot.slane %v9379, 4
    %v9739 = vrot.slane %v9380, 4
    %v9740 = vrot.slane %v9381, 4
    %v9741 = vrot.slane %v9382, 4
    %v9742 = vrot.slane %v9383, 4
    %v9743 = vrot.slane %v9384, 4
    %v9744 = vrot.slane %v9385, 4
    %v9745 = vrot.slane %v9386, 4
    %v9746 = vrot.slane %v9387, 4
    %v9747 = vrot.slane %v9388, 4
    %v9748 = vrot.slane %v9389, 4
    %v9749 = vrot.slane %v9392, 4
    %v9750 = vrot.slane %v9393, 4
    %v9751 = vrot.slane %v9394, 4
    %v9752 = vrot.slane %v9395, 4
    %v9753 = vrot.slane %v9396, 4
    %v9754 = vrot.slane %v9397, 4
    %v9755 = vrot.slane %v9398, 4
    %v9756 = vrot.slane %v9399, 4
    %v9757 = vrot.slane %v9400, 4
    %v9758 = vrot.slane %v9401, 4
    %v9759 = vrot.slane %v9402, 4
    %v9760 = vrot.slane %v9403, 4
    %v9761 = vrot.slane %v9404, 4
    %v9788 = vrot.slane %v9710, 4
    %v9789 = vrot.slane %v9711, 4
    %v9790 = vrot.slane %v9712, 4
    %v9791 = vrot.slane %v9713, 4
    %v9792 = vrot.slane %v9714, 4
    %v9793 = vrot.slane %v9715, 4
    %v9794 = vrot.slane %v9716, 4
    %v9795 = vrot.slane %v9717, 4
    %v9796 = vrot.slane %v9718, 4
    %v9797 = vrot.slane %v9719, 4
    %v9798 = vrot.slane %v9720, 4
    %v9799 = vrot.slane %v9721, 4
    %v9800 = vrot.slane %v9722, 4
    %v9801 = vrot.slane %v9723, 4
    %v9802 = vrot.slane %v9724, 4
    %v9803 = vrot.slane %v9725, 4
    %v9804 = vrot.slane %v9726, 4
    %v9805 = vrot.slane %v9727, 4
    %v9806 = vrot.slane %v9728, 4
    %v9807 = vrot.slane %v9729, 4
    %v9808 = vrot.slane %v9730, 4
    %v9809 = vrot.slane %v9731, 4
    %v9810 = vrot.slane %v9732, 4
    %v9811 = vrot.slane %v9733, 4
    %v9812 = vrot.slane %v9734, 4
    %v9813 = vrot.slane %v9735, 4
    %v9840 = vsel %vm4185, %v9543, %v9736
    %v9841 = vsel %vm4185, %v9492, %v9737
    %v9842 = vsel %vm4185, %v9493, %v9738
    %v9843 = vsel %vm4185, %v9494, %v9739
    %v9844 = vsel %vm4185, %v9495, %v9740
    %v9845 = vsel %vm4185, %v9496, %v9741
    %v9846 = vsel %vm4185, %v9497, %v9742
    %v9847 = vsel %vm4185, %v9498, %v9743
    %v9848 = vsel %vm4185, %v9499, %v9744
    %v9849 = vsel %vm4185, %v9500, %v9745
    %v9850 = vsel %vm4185, %v9501, %v9746
    %v9851 = vsel %vm4185, %v9502, %v9747
    %v9852 = vsel %vm4185, %v9503, %v9748
    %v9853 = vsel %vm4185, %v9504, %v9749
    %v9854 = vsel %vm4185, %v9505, %v9750
    %v9855 = vsel %vm4185, %v9506, %v9751
    %v9856 = vsel %vm4185, %v9507, %v9752
    %v9857 = vsel %vm4185, %v9508, %v9753
    %v9858 = vsel %vm4185, %v9509, %v9754
    %v9859 = vsel %vm4185, %v9510, %v9755
    %v9860 = vsel %vm4185, %v9511, %v9756
    %v9861 = vsel %vm4185, %v9512, %v9757
    %v9862 = vsel %vm4185, %v9513, %v9758
    %v9863 = vsel %vm4185, %v9514, %v9759
    %v9864 = vsel %vm4185, %v9515, %v9760
    %v9865 = vsel %vm4185, %v9516, %v9761
    %v9866 = vsel %vm4185, %v9602, %v9788
    %v9867 = vsel %vm4185, %v9603, %v9789
    %v9868 = vsel %vm4185, %v9604, %v9790
    %v9869 = vsel %vm4185, %v9605, %v9791
    %v9870 = vsel %vm4185, %v9606, %v9792
    %v9871 = vsel %vm4185, %v9607, %v9793
    %v9872 = vsel %vm4185, %v9608, %v9794
    %v9873 = vsel %vm4185, %v9609, %v9795
    %v9874 = vsel %vm4185, %v9610, %v9796
    %v9875 = vsel %vm4185, %v9611, %v9797
    %v9876 = vsel %vm4185, %v9612, %v9798
    %v9877 = vsel %vm4185, %v9613, %v9799
    %v9878 = vsel %vm4185, %v9614, %v9800
    %v9879 = vsel %vm4185, %v9615, %v9801
    %v9880 = vsel %vm4185, %v9616, %v9802
    %v9881 = vsel %vm4185, %v9617, %v9803
    %v9882 = vsel %vm4185, %v9618, %v9804
    %v9883 = vsel %vm4185, %v9619, %v9805
    %v9884 = vsel %vm4185, %v9620, %v9806
    %v9885 = vsel %vm4185, %v9621, %v9807
    %v9886 = vsel %vm4185, %v9622, %v9808
    %v9887 = vsel %vm4185, %v9623, %v9809
    %v9888 = vsel %vm4185, %v9624, %v9810
    %v9889 = vsel %vm4185, %v9625, %v9811
    %v9890 = vsel %vm4185, %v9626, %v9812
    %v9891 = vsel %vm4185, %v9627, %v9813
    %v9892 = vld [vmem:[%s5] sm:$0xff]
    %v9893 = vld [vmem:[%s6] sm:$0xff]
    %v9894 = vpack.c.bf16 %v9866, %v9840
    %v9895 = vpack.c.bf16 %v9867, %v9841
    %v9896 = vpack.c.bf16 %v9868, %v9842
    %v9897 = vpack.c.bf16 %v9869, %v9843
    %v9898 = vpack.c.bf16 %v9870, %v9844
    %v9899 = vpack.c.bf16 %v9871, %v9845
    %v9900 = vpack.c.bf16 %v9872, %v9846
    %v9901 = vpack.c.bf16 %v9873, %v9847
    %v9902 = vpack.c.bf16 %v9874, %v9848
    %v9903 = vpack.c.bf16 %v9875, %v9849
    %v9904 = vpack.c.bf16 %v9876, %v9850
    %v9905 = vpack.c.bf16 %v9877, %v9851
    %v9906 = vpack.c.bf16 %v9879, %v9853
    %v9907 = vpack.c.bf16 %v9880, %v9854
    %v9908 = vpack.c.bf16 %v9881, %v9855
    %v9909 = vpack.c.bf16 %v9882, %v9856
    %v9910 = vpack.c.bf16 %v9883, %v9857
    %v9911 = vpack.c.bf16 %v9884, %v9858
    %v9912 = vpack.c.bf16 %v9885, %v9859
    %v9913 = vpack.c.bf16 %v9886, %v9860
    %v9914 = vpack.c.bf16 %v9887, %v9861
    %v9915 = vpack.c.bf16 %v9888, %v9862
    %v9916 = vpack.c.bf16 %v9889, %v9863
    %v9917 = vpack.c.bf16 %v9890, %v9864
    %9970 = vrot.lane.b32.xlu0 %v9840, 126
    %v9971 = vpop.permute.xlu0 %9970
    %9972 = vrot.lane.b32.xlu0 %v9841, 126
    %v9973 = vpop.permute.xlu0 %9972
    %9974 = vrot.lane.b32.xlu0 %v9842, 126
    %v9975 = vpop.permute.xlu0 %9974
    %9976 = vrot.lane.b32.xlu0 %v9843, 126
    %v9977 = vpop.permute.xlu0 %9976
    %9978 = vrot.lane.b32.xlu0 %v9844, 126
    %v9979 = vpop.permute.xlu0 %9978
    %9980 = vrot.lane.b32.xlu0 %v9845, 126
    %v9981 = vpop.permute.xlu0 %9980
    %9982 = vrot.lane.b32.xlu0 %v9846, 126
    %v9983 = vpop.permute.xlu0 %9982
    %9984 = vrot.lane.b32.xlu0 %v9847, 126
    %v9985 = vpop.permute.xlu0 %9984
    %9986 = vrot.lane.b32.xlu0 %v9848, 126
    %v9987 = vpop.permute.xlu0 %9986
    %9988 = vrot.lane.b32.xlu0 %v9849, 126
    %v9989 = vpop.permute.xlu0 %9988
    %9990 = vrot.lane.b32.xlu0 %v9850, 126
    %v9991 = vpop.permute.xlu0 %9990
    %9992 = vrot.lane.b32.xlu0 %v9851, 126
    %v9993 = vpop.permute.xlu0 %9992
    %9994 = vrot.lane.b32.xlu0 %v9852, 126
    %v9995 = vpop.permute.xlu0 %9994
    %9996 = vrot.lane.b32.xlu0 %v9853, 126
    %v9997 = vpop.permute.xlu0 %9996
    %9998 = vrot.lane.b32.xlu0 %v9854, 126
    %v9999 = vpop.permute.xlu0 %9998
    %10000 = vrot.lane.b32.xlu0 %v9855, 126
    %v10001 = vpop.permute.xlu0 %10000
    %10002 = vrot.lane.b32.xlu0 %v9856, 126
    %v10003 = vpop.permute.xlu0 %10002
    %10004 = vrot.lane.b32.xlu0 %v9857, 126
    %v10005 = vpop.permute.xlu0 %10004
    %10006 = vrot.lane.b32.xlu0 %v9858, 126
    %v10007 = vpop.permute.xlu0 %10006
    %10008 = vrot.lane.b32.xlu0 %v9859, 126
    %v10009 = vpop.permute.xlu0 %10008
    %10010 = vrot.lane.b32.xlu0 %v9860, 126
    %v10011 = vpop.permute.xlu0 %10010
    %10012 = vrot.lane.b32.xlu0 %v9861, 126
    %v10013 = vpop.permute.xlu0 %10012
    %10014 = vrot.lane.b32.xlu0 %v9862, 126
    %v10015 = vpop.permute.xlu0 %10014
    %10016 = vrot.lane.b32.xlu0 %v9863, 126
    %v10017 = vpop.permute.xlu0 %10016
    %10018 = vrot.lane.b32.xlu0 %v9864, 126
    %v10019 = vpop.permute.xlu0 %10018
    %10020 = vrot.lane.b32.xlu0 %v9865, 126
    %v10021 = vpop.permute.xlu0 %10020
    %10022 = vrot.lane.b32.xlu0 %v9866, 126
    %v10023 = vpop.permute.xlu0 %10022
    %10024 = vrot.lane.b32.xlu0 %v9867, 126
    %v10025 = vpop.permute.xlu0 %10024
    %10026 = vrot.lane.b32.xlu0 %v9868, 126
    %v10027 = vpop.permute.xlu0 %10026
    %10028 = vrot.lane.b32.xlu0 %v9869, 126
    %v10029 = vpop.permute.xlu0 %10028
    %10030 = vrot.lane.b32.xlu0 %v9870, 126
    %v10031 = vpop.permute.xlu0 %10030
    %10032 = vrot.lane.b32.xlu0 %v9871, 126
    %v10033 = vpop.permute.xlu0 %10032
    %10034 = vrot.lane.b32.xlu0 %v9872, 126
    %v10035 = vpop.permute.xlu0 %10034
    %10036 = vrot.lane.b32.xlu0 %v9873, 126
    %v10037 = vpop.permute.xlu0 %10036
    %10038 = vrot.lane.b32.xlu0 %v9874, 126
    %v10039 = vpop.permute.xlu0 %10038
    %10040 = vrot.lane.b32.xlu0 %v9875, 126
    %v10041 = vpop.permute.xlu0 %10040
    %10042 = vrot.lane.b32.xlu0 %v9876, 126
    %v10043 = vpop.permute.xlu0 %10042
    %10044 = vrot.lane.b32.xlu0 %v9877, 126
    %v10045 = vpop.permute.xlu0 %10044
    %10046 = vrot.lane.b32.xlu0 %v9878, 126
    %v10047 = vpop.permute.xlu0 %10046
    %10048 = vrot.lane.b32.xlu0 %v9879, 126
    %v10049 = vpop.permute.xlu0 %10048
    %10050 = vrot.lane.b32.xlu0 %v9880, 126
    %v10051 = vpop.permute.xlu0 %10050
    %10052 = vrot.lane.b32.xlu0 %v9881, 126
    %v10053 = vpop.permute.xlu0 %10052
    %10054 = vrot.lane.b32.xlu0 %v9882, 126
    %v10055 = vpop.permute.xlu0 %10054
    %10056 = vrot.lane.b32.xlu0 %v9883, 126
    %v10057 = vpop.permute.xlu0 %10056
    %10058 = vrot.lane.b32.xlu0 %v9884, 126
    %v10059 = vpop.permute.xlu0 %10058
    %10060 = vrot.lane.b32.xlu0 %v9885, 126
    %v10061 = vpop.permute.xlu0 %10060
    %10062 = vrot.lane.b32.xlu0 %v9886, 126
    %v10063 = vpop.permute.xlu0 %10062
    %10064 = vrot.lane.b32.xlu0 %v9887, 126
    %v10065 = vpop.permute.xlu0 %10064
    %10066 = vrot.lane.b32.xlu0 %v9888, 126
    %v10067 = vpop.permute.xlu0 %10066
    %10068 = vrot.lane.b32.xlu0 %v9889, 126
    %v10069 = vpop.permute.xlu0 %10068
    %10070 = vrot.lane.b32.xlu0 %v9890, 126
    %v10071 = vpop.permute.xlu0 %10070
    %10072 = vrot.lane.b32.xlu0 %v9891, 126
    %v10073 = vpop.permute.xlu0 %10072
    %v10074 = vsel %vm3367, %v9971, %v9973
    %v10075 = vsel %vm3367, %v9973, %v9975
    %v10076 = vsel %vm3367, %v9975, %v9977
    %v10077 = vsel %vm3367, %v9977, %v9979
    %v10078 = vsel %vm3367, %v9979, %v9981
    %v10079 = vsel %vm3367, %v9981, %v9983
    %v10080 = vsel %vm3367, %v9983, %v9985
    %v10081 = vsel %vm3367, %v9985, %v9987
    %v10082 = vsel %vm3367, %v9987, %v9989
    %v10083 = vsel %vm3367, %v9989, %v9991
    %v10084 = vsel %vm3367, %v9991, %v9993
    %v10085 = vsel %vm3367, %v9993, %v9995
    %v10086 = vsel %vm3367, %v9997, %v9999
    %v10087 = vsel %vm3367, %v9999, %v10001
    %v10088 = vsel %vm3367, %v10001, %v10003
    %v10089 = vsel %vm3367, %v10003, %v10005
    %v10090 = vsel %vm3367, %v10005, %v10007
    %v10091 = vsel %vm3367, %v10007, %v10009
    %v10092 = vsel %vm3367, %v10009, %v10011
    %v10093 = vsel %vm3367, %v10011, %v10013
    %v10094 = vsel %vm3367, %v10013, %v10015
    %v10095 = vsel %vm3367, %v10015, %v10017
    %v10096 = vsel %vm3367, %v10017, %v10019
    %v10097 = vsel %vm3367, %v10019, %v10021
    %v10098 = vsel %vm3367, %v10023, %v10025
    %v10099 = vsel %vm3367, %v10025, %v10027
    %v10100 = vsel %vm3367, %v10027, %v10029
    %v10101 = vsel %vm3367, %v10029, %v10031
    %v10102 = vsel %vm3367, %v10031, %v10033
    %v10103 = vsel %vm3367, %v10033, %v10035
    %v10104 = vsel %vm3367, %v10035, %v10037
    %v10105 = vsel %vm3367, %v10037, %v10039
    %v10106 = vsel %vm3367, %v10039, %v10041
    %v10107 = vsel %vm3367, %v10041, %v10043
    %v10108 = vsel %vm3367, %v10043, %v10045
    %v10109 = vsel %vm3367, %v10045, %v10047
    %v10110 = vsel %vm3367, %v10049, %v10051
    %v10111 = vsel %vm3367, %v10051, %v10053
    %v10112 = vsel %vm3367, %v10053, %v10055
    %v10113 = vsel %vm3367, %v10055, %v10057
    %v10114 = vsel %vm3367, %v10057, %v10059
    %v10115 = vsel %vm3367, %v10059, %v10061
    %v10116 = vsel %vm3367, %v10061, %v10063
    %v10117 = vsel %vm3367, %v10063, %v10065
    %v10118 = vsel %vm3367, %v10065, %v10067
    %v10119 = vsel %vm3367, %v10067, %v10069
    %v10120 = vsel %vm3367, %v10069, %v10071
    %v10121 = vsel %vm3367, %v10071, %v10073
    %v10170 = vpack.c.bf16 %v10098, %v10074
    %v10171 = vpack.c.bf16 %v10099, %v10075
    %v10172 = vpack.c.bf16 %v10100, %v10076
    %v10173 = vpack.c.bf16 %v10101, %v10077
    %v10174 = vpack.c.bf16 %v10102, %v10078
    %v10175 = vpack.c.bf16 %v10103, %v10079
    %v10176 = vpack.c.bf16 %v10104, %v10080
    %v10177 = vpack.c.bf16 %v10105, %v10081
    %v10178 = vpack.c.bf16 %v10106, %v10082
    %v10179 = vpack.c.bf16 %v10107, %v10083
    %v10180 = vpack.c.bf16 %v10108, %v10084
    %v10181 = vpack.c.bf16 %v10109, %v10085
    %v10182 = vpack.c.bf16 %v10110, %v10086
    %v10183 = vpack.c.bf16 %v10111, %v10087
    %v10184 = vpack.c.bf16 %v10112, %v10088
    %v10185 = vpack.c.bf16 %v10113, %v10089
    %v10186 = vpack.c.bf16 %v10114, %v10090
    %v10187 = vpack.c.bf16 %v10115, %v10091
    %v10188 = vpack.c.bf16 %v10116, %v10092
    %v10189 = vpack.c.bf16 %v10117, %v10093
    %v10190 = vpack.c.bf16 %v10118, %v10094
    %v10191 = vpack.c.bf16 %v10119, %v10095
    %v10192 = vpack.c.bf16 %v10120, %v10096
    %v10193 = vpack.c.bf16 %v10121, %v10097
    %10194 = vrot.lane.b32.xlu0 %v9840, 124
    %v10195 = vpop.permute.xlu0 %10194
    %10196 = vrot.lane.b32.xlu0 %v9841, 124
    %v10197 = vpop.permute.xlu0 %10196
    %10198 = vrot.lane.b32.xlu0 %v9842, 124
    %v10199 = vpop.permute.xlu0 %10198
    %10200 = vrot.lane.b32.xlu0 %v9843, 124
    %v10201 = vpop.permute.xlu0 %10200
    %10202 = vrot.lane.b32.xlu0 %v9844, 124
    %v10203 = vpop.permute.xlu0 %10202
    %10204 = vrot.lane.b32.xlu0 %v9845, 124
    %v10205 = vpop.permute.xlu0 %10204
    %10206 = vrot.lane.b32.xlu0 %v9846, 124
    %v10207 = vpop.permute.xlu0 %10206
    %10208 = vrot.lane.b32.xlu0 %v9847, 124
    %v10209 = vpop.permute.xlu0 %10208
    %10210 = vrot.lane.b32.xlu0 %v9848, 124
    %v10211 = vpop.permute.xlu0 %10210
    %10212 = vrot.lane.b32.xlu0 %v9849, 124
    %v10213 = vpop.permute.xlu0 %10212
    %10214 = vrot.lane.b32.xlu0 %v9850, 124
    %v10215 = vpop.permute.xlu0 %10214
    %10216 = vrot.lane.b32.xlu0 %v9851, 124
    %v10217 = vpop.permute.xlu0 %10216
    %10218 = vrot.lane.b32.xlu0 %v9852, 124
    %v10219 = vpop.permute.xlu0 %10218
    %10220 = vrot.lane.b32.xlu0 %v9853, 124
    %v10221 = vpop.permute.xlu0 %10220
    %10222 = vrot.lane.b32.xlu0 %v9854, 124
    %v10223 = vpop.permute.xlu0 %10222
    %10224 = vrot.lane.b32.xlu0 %v9855, 124
    %v10225 = vpop.permute.xlu0 %10224
    %10226 = vrot.lane.b32.xlu0 %v9856, 124
    %v10227 = vpop.permute.xlu0 %10226
    %10228 = vrot.lane.b32.xlu0 %v9857, 124
    %v10229 = vpop.permute.xlu0 %10228
    %10230 = vrot.lane.b32.xlu0 %v9858, 124
    %v10231 = vpop.permute.xlu0 %10230
    %10232 = vrot.lane.b32.xlu0 %v9859, 124
    %v10233 = vpop.permute.xlu0 %10232
    %10234 = vrot.lane.b32.xlu0 %v9860, 124
    %v10235 = vpop.permute.xlu0 %10234
    %10236 = vrot.lane.b32.xlu0 %v9861, 124
    %v10237 = vpop.permute.xlu0 %10236
    %10238 = vrot.lane.b32.xlu0 %v9862, 124
    %v10239 = vpop.permute.xlu0 %10238
    %10240 = vrot.lane.b32.xlu0 %v9863, 124
    %v10241 = vpop.permute.xlu0 %10240
    %10242 = vrot.lane.b32.xlu0 %v9864, 124
    %v10243 = vpop.permute.xlu0 %10242
    %10244 = vrot.lane.b32.xlu0 %v9865, 124
    %v10245 = vpop.permute.xlu0 %10244
    %10246 = vrot.lane.b32.xlu0 %v9866, 124
    %v10247 = vpop.permute.xlu0 %10246
    %10248 = vrot.lane.b32.xlu0 %v9867, 124
    %v10249 = vpop.permute.xlu0 %10248
    %10250 = vrot.lane.b32.xlu0 %v9868, 124
    %v10251 = vpop.permute.xlu0 %10250
    %10252 = vrot.lane.b32.xlu0 %v9869, 124
    %v10253 = vpop.permute.xlu0 %10252
    %10254 = vrot.lane.b32.xlu0 %v9870, 124
    %v10255 = vpop.permute.xlu0 %10254
    %10256 = vrot.lane.b32.xlu0 %v9871, 124
    %v10257 = vpop.permute.xlu0 %10256
    %10258 = vrot.lane.b32.xlu0 %v9872, 124
    %v10259 = vpop.permute.xlu0 %10258
    %10260 = vrot.lane.b32.xlu0 %v9873, 124
    %v10261 = vpop.permute.xlu0 %10260
    %10262 = vrot.lane.b32.xlu0 %v9874, 124
    %v10263 = vpop.permute.xlu0 %10262
    %10264 = vrot.lane.b32.xlu0 %v9875, 124
    %v10265 = vpop.permute.xlu0 %10264
    %10266 = vrot.lane.b32.xlu0 %v9876, 124
    %v10267 = vpop.permute.xlu0 %10266
    %10268 = vrot.lane.b32.xlu0 %v9877, 124
    %v10269 = vpop.permute.xlu0 %10268
    %10270 = vrot.lane.b32.xlu0 %v9878, 124
    %v10271 = vpop.permute.xlu0 %10270
    %10272 = vrot.lane.b32.xlu0 %v9879, 124
    %v10273 = vpop.permute.xlu0 %10272
    %10274 = vrot.lane.b32.xlu0 %v9880, 124
    %v10275 = vpop.permute.xlu0 %10274
    %10276 = vrot.lane.b32.xlu0 %v9881, 124
    %v10277 = vpop.permute.xlu0 %10276
    %10278 = vrot.lane.b32.xlu0 %v9882, 124
    %v10279 = vpop.permute.xlu0 %10278
    %10280 = vrot.lane.b32.xlu0 %v9883, 124
    %v10281 = vpop.permute.xlu0 %10280
    %10282 = vrot.lane.b32.xlu0 %v9884, 124
    %v10283 = vpop.permute.xlu0 %10282
    %10284 = vrot.lane.b32.xlu0 %v9885, 124
    %v10285 = vpop.permute.xlu0 %10284
    %10286 = vrot.lane.b32.xlu0 %v9886, 124
    %v10287 = vpop.permute.xlu0 %10286
    %10288 = vrot.lane.b32.xlu0 %v9887, 124
    %v10289 = vpop.permute.xlu0 %10288
    %10290 = vrot.lane.b32.xlu0 %v9888, 124
    %v10291 = vpop.permute.xlu0 %10290
    %10292 = vrot.lane.b32.xlu0 %v9889, 124
    %v10293 = vpop.permute.xlu0 %10292
    %10294 = vrot.lane.b32.xlu0 %v9890, 124
    %v10295 = vpop.permute.xlu0 %10294
    %10296 = vrot.lane.b32.xlu0 %v9891, 124
    %v10297 = vpop.permute.xlu0 %10296
    %vm10298 = vcmask 1014784
    %v10299 = vsel %vm10298, %v10195, %v10197
    %v10300 = vsel %vm10298, %v10197, %v10199
    %v10301 = vsel %vm10298, %v10199, %v10201
    %v10302 = vsel %vm10298, %v10201, %v10203
    %v10303 = vsel %vm10298, %v10203, %v10205
    %v10304 = vsel %vm10298, %v10205, %v10207
    %v10305 = vsel %vm10298, %v10207, %v10209
    %v10306 = vsel %vm10298, %v10209, %v10211
    %v10307 = vsel %vm10298, %v10211, %v10213
    %v10308 = vsel %vm10298, %v10213, %v10215
    %v10309 = vsel %vm10298, %v10215, %v10217
    %v10310 = vsel %vm10298, %v10217, %v10219
    %v10311 = vsel %vm10298, %v10221, %v10223
    %v10312 = vsel %vm10298, %v10223, %v10225
    %v10313 = vsel %vm10298, %v10225, %v10227
    %v10314 = vsel %vm10298, %v10227, %v10229
    %v10315 = vsel %vm10298, %v10229, %v10231
    %v10316 = vsel %vm10298, %v10231, %v10233
    %v10317 = vsel %vm10298, %v10233, %v10235
    %v10318 = vsel %vm10298, %v10235, %v10237
    %v10319 = vsel %vm10298, %v10237, %v10239
    %v10320 = vsel %vm10298, %v10239, %v10241
    %v10321 = vsel %vm10298, %v10241, %v10243
    %v10322 = vsel %vm10298, %v10243, %v10245
    %v10323 = vsel %vm10298, %v10247, %v10249
    %v10324 = vsel %vm10298, %v10249, %v10251
    %v10325 = vsel %vm10298, %v10251, %v10253
    %v10326 = vsel %vm10298, %v10253, %v10255
    %v10327 = vsel %vm10298, %v10255, %v10257
    %v10328 = vsel %vm10298, %v10257, %v10259
    %v10329 = vsel %vm10298, %v10259, %v10261
    %v10330 = vsel %vm10298, %v10261, %v10263
    %v10331 = vsel %vm10298, %v10263, %v10265
    %v10332 = vsel %vm10298, %v10265, %v10267
    %v10333 = vsel %vm10298, %v10267, %v10269
    %v10334 = vsel %vm10298, %v10269, %v10271
    %v10335 = vsel %vm10298, %v10273, %v10275
    %v10336 = vsel %vm10298, %v10275, %v10277
    %v10337 = vsel %vm10298, %v10277, %v10279
    %v10338 = vsel %vm10298, %v10279, %v10281
    %v10339 = vsel %vm10298, %v10281, %v10283
    %v10340 = vsel %vm10298, %v10283, %v10285
    %v10341 = vsel %vm10298, %v10285, %v10287
    %v10342 = vsel %vm10298, %v10287, %v10289
    %v10343 = vsel %vm10298, %v10289, %v10291
    %v10344 = vsel %vm10298, %v10291, %v10293
    %v10345 = vsel %vm10298, %v10293, %v10295
    %v10346 = vsel %vm10298, %v10295, %v10297
    %v10395 = vpack.c.bf16 %v10323, %v10299
    %v10396 = vpack.c.bf16 %v10324, %v10300
    %v10397 = vpack.c.bf16 %v10325, %v10301
    %v10398 = vpack.c.bf16 %v10326, %v10302
    %v10399 = vpack.c.bf16 %v10327, %v10303
    %v10400 = vpack.c.bf16 %v10328, %v10304
    %v10401 = vpack.c.bf16 %v10329, %v10305
    %v10402 = vpack.c.bf16 %v10330, %v10306
    %v10403 = vpack.c.bf16 %v10331, %v10307
    %v10404 = vpack.c.bf16 %v10332, %v10308
    %v10405 = vpack.c.bf16 %v10333, %v10309
    %v10406 = vpack.c.bf16 %v10334, %v10310
    %v10407 = vpack.c.bf16 %v10335, %v10311
    %v10408 = vpack.c.bf16 %v10336, %v10312
    %v10409 = vpack.c.bf16 %v10337, %v10313
    %v10410 = vpack.c.bf16 %v10338, %v10314
    %v10411 = vpack.c.bf16 %v10339, %v10315
    %v10412 = vpack.c.bf16 %v10340, %v10316
    %v10413 = vpack.c.bf16 %v10341, %v10317
    %v10414 = vpack.c.bf16 %v10342, %v10318
    %v10415 = vpack.c.bf16 %v10343, %v10319
    %v10416 = vpack.c.bf16 %v10344, %v10320
    %v10417 = vpack.c.bf16 %v10345, %v10321
    %v10418 = vpack.c.bf16 %v10346, %v10322
    %10420 = vset.pattern.permute.xlu0 0
    %10421 = vperm.xlu0 %10420, %v9893
    %v10422 = vpop.permute.xlu0 %10421
    %v10425 = vunpack.c.l.b16 %v9892
    %v10426 = vunpack.c.h.b16 %v9892
    %v10427 = vpack.c.b16 %v10425, %v10425
    %v10428 = vpack.c.b16 %v10426, %v10426
    %v10431 = vsel %vm8418, %v10428, 0
    %10433 = vmatprep.subr.bf16.mxu0 %v10179
    %10434 = vmatpush1.bf16.msra.mxu0 %v10178
    %10435 = vmatprep.subr.bf16.mxu0 %v9903
    %10436 = vmatpush1.bf16.msra.mxu0 %v9902
    %10437 = vmatprep.subr.bf16.mxu0 %v10400
    %10438 = vmatpush1.bf16.msra.mxu0 %v10399
    %10439 = vmatprep.subr.bf16.mxu0 %v10175
    %10440 = vmatpush1.bf16.msra.mxu0 %v10174
    %10441 = vmatprep.subr.bf16.mxu0 %v9899
    %10442 = vmatpush1.bf16.msra.mxu0 %v9898
    %10443 = vmatprep.subr.bf16.mxu0 %v10396
    %10444 = vmatpush1.bf16.msra.mxu0 %v10395
    %10445 = vmatprep.subr.bf16.mxu0 %v10171
    %10446 = vmatpush1.bf16.msra.mxu0 %v10170
    %10447 = vmatprep.subr.bf16.mxu0 %v9895
    %10448 = vmatpush1.bf16.msra.mxu0 %v9894
    %10449 = vmatprep.subr.bf16.mxu0 0
    %10450 = vmatpush2.bf16.msra.mxu0 0
    %10451 = vmatprep.subr.bf16.mxu0 0
    %10452 = vmatpush2.bf16.msra.mxu0 0
    %10453 = vmatprep.subr.bf16.mxu0 0
    %10454 = vmatpush2.bf16.msra.mxu0 0
    %10455 = vmatprep.subr.bf16.mxu0 0
    %10456 = vmatpush2.bf16.msra.mxu0 0
    %10457 = vmatprep.subr.bf16.mxu0 0
    %10458 = vmatpush2.bf16.msra.mxu0 0
    %10459 = vmatprep.subr.bf16.mxu0 0
    %10460 = vmatpush2.bf16.msra.mxu0 0
    %10461 = vmatprep.subr.bf16.mxu0 0
    %10462 = vmatpush2.bf16.msra.mxu0 0
    %10463 = vmatprep.subr.bf16.mxu0 %v10404
    %10464 = vmatpush2.bf16.msra.mxu0 %v10403
    %10465 = vmatprep.mubr.bf16.mxu0 %v10431
    %10466 = vmatmul.mubr.bf16.gmra.mxu0 %v10427
    %v10467 = vpop.f32.mrf.mxu0
    %v10468 = vadd.f32 %v10422, %v10467
    %v10469 = vpop.f32.mrf.mxu0
    %v10470 = vadd.f32 %v10422, %v10469
    %v10471 = vpop.f32.mrf.mxu0
    %v10472 = vpop.f32.mrf.mxu0
    %10473 = vdwg.mxu0
    %10474 = vmatprep.subr.bf16.mxu0 %v10181
    %10475 = vmatpush1.bf16.msra.mxu0 %v10180
    %10476 = vmatprep.subr.bf16.mxu0 %v9905
    %10477 = vmatpush1.bf16.msra.mxu0 %v9904
    %10478 = vmatprep.subr.bf16.mxu0 %v10402
    %10479 = vmatpush1.bf16.msra.mxu0 %v10401
    %10480 = vmatprep.subr.bf16.mxu0 %v10177
    %10481 = vmatpush1.bf16.msra.mxu0 %v10176
    %10482 = vmatprep.subr.bf16.mxu0 %v9901
    %10483 = vmatpush1.bf16.msra.mxu0 %v9900
    %10484 = vmatprep.subr.bf16.mxu0 %v10398
    %10485 = vmatpush1.bf16.msra.mxu0 %v10397
    %10486 = vmatprep.subr.bf16.mxu0 %v10173
    %10487 = vmatpush1.bf16.msra.mxu0 %v10172
    %10488 = vmatprep.subr.bf16.mxu0 %v9897
    %10489 = vmatpush1.bf16.msra.mxu0 %v9896
    %10490 = vmatprep.subr.bf16.mxu0 0
    %10491 = vmatpush2.bf16.msra.mxu0 0
    %10492 = vmatprep.subr.bf16.mxu0 0
    %10493 = vmatpush2.bf16.msra.mxu0 0
    %10494 = vmatprep.subr.bf16.mxu0 0
    %10495 = vmatpush2.bf16.msra.mxu0 0
    %10496 = vmatprep.subr.bf16.mxu0 0
    %10497 = vmatpush2.bf16.msra.mxu0 0
    %10498 = vmatprep.subr.bf16.mxu0 0
    %10499 = vmatpush2.bf16.msra.mxu0 0
    %10500 = vmatprep.subr.bf16.mxu0 0
    %10501 = vmatpush2.bf16.msra.mxu0 0
    %10502 = vmatprep.subr.bf16.mxu0 0
    %10503 = vmatpush2.bf16.msra.mxu0 0
    %10504 = vmatprep.subr.bf16.mxu0 %v10406
    %10505 = vmatpush2.bf16.msra.mxu0 %v10405
    %10506 = vmatprep.mubr.bf16.mxu0 %v10431
    %10507 = vmatmul.mubr.bf16.gmra.mxu0 %v10427
    %v10508 = vpop.f32.mrf.mxu0
    %v10509 = vadd.f32 %v10422, %v10508
    %v10510 = vpop.f32.mrf.mxu0
    %v10511 = vpop.f32.mrf.mxu0
    %v10512 = vpop.f32.mrf.mxu0
    %10513 = vdwg.mxu0
    %10514 = vmatprep.subr.bf16.mxu0 %v10191
    %10515 = vmatpush1.bf16.msra.mxu0 %v10190
    %10516 = vmatprep.subr.bf16.mxu0 %v9915
    %10517 = vmatpush1.bf16.msra.mxu0 %v9914
    %10518 = vmatprep.subr.bf16.mxu0 %v10412
    %10519 = vmatpush1.bf16.msra.mxu0 %v10411
    %10520 = vmatprep.subr.bf16.mxu0 %v10187
    %10521 = vmatpush1.bf16.msra.mxu0 %v10186
    %10522 = vmatprep.subr.bf16.mxu0 %v9911
    %10523 = vmatpush1.bf16.msra.mxu0 %v9910
    %10524 = vmatprep.subr.bf16.mxu0 %v10408
    %10525 = vmatpush1.bf16.msra.mxu0 %v10407
    %10526 = vmatprep.subr.bf16.mxu0 %v10183
    %10527 = vmatpush1.bf16.msra.mxu0 %v10182
    %10528 = vmatprep.subr.bf16.mxu0 %v9907
    %10529 = vmatpush1.bf16.msra.mxu0 %v9906
    %10530 = vmatprep.subr.bf16.mxu0 0
    %10531 = vmatpush2.bf16.msra.mxu0 0
    %10532 = vmatprep.subr.bf16.mxu0 0
    %10533 = vmatpush2.bf16.msra.mxu0 0
    %10534 = vmatprep.subr.bf16.mxu0 0
    %10535 = vmatpush2.bf16.msra.mxu0 0
    %10536 = vmatprep.subr.bf16.mxu0 0
    %10537 = vmatpush2.bf16.msra.mxu0 0
    %10538 = vmatprep.subr.bf16.mxu0 0
    %10539 = vmatpush2.bf16.msra.mxu0 0
    %10540 = vmatprep.subr.bf16.mxu0 0
    %10541 = vmatpush2.bf16.msra.mxu0 0
    %10542 = vmatprep.subr.bf16.mxu0 0
    %10543 = vmatpush2.bf16.msra.mxu0 0
    %10544 = vmatprep.subr.bf16.mxu0 %v10416
    %10545 = vmatpush2.bf16.msra.mxu0 %v10415
    %10546 = vmatprep.mubr.bf16.mxu0 %v10431
    %10547 = vmatmul.mubr.bf16.gmra.mxu0 %v10427
    %v10548 = vpop.f32.mrf.mxu0
    %v10549 = vadd.f32 %v10422, %v10548
    %v10550 = vpop.f32.mrf.mxu0
    %v10551 = vadd.f32 %v10422, %v10550
    %v10552 = vpop.f32.mrf.mxu0
    %v10553 = vpop.f32.mrf.mxu0
    %10554 = vdwg.mxu0
    %10555 = vmatprep.subr.bf16.mxu0 %v10193
    %10556 = vmatpush1.bf16.msra.mxu0 %v10192
    %10557 = vmatprep.subr.bf16.mxu0 %v9917
    %10558 = vmatpush1.bf16.msra.mxu0 %v9916
    %10559 = vmatprep.subr.bf16.mxu0 %v10414
    %10560 = vmatpush1.bf16.msra.mxu0 %v10413
    %10561 = vmatprep.subr.bf16.mxu0 %v10189
    %10562 = vmatpush1.bf16.msra.mxu0 %v10188
    %10563 = vmatprep.subr.bf16.mxu0 %v9913
    %10564 = vmatpush1.bf16.msra.mxu0 %v9912
    %10565 = vmatprep.subr.bf16.mxu0 %v10410
    %10566 = vmatpush1.bf16.msra.mxu0 %v10409
    %10567 = vmatprep.subr.bf16.mxu0 %v10185
    %10568 = vmatpush1.bf16.msra.mxu0 %v10184
    %10569 = vmatprep.subr.bf16.mxu0 %v9909
    %10570 = vmatpush1.bf16.msra.mxu0 %v9908
    %10571 = vmatprep.subr.bf16.mxu0 0
    %10572 = vmatpush2.bf16.msra.mxu0 0
    %10573 = vmatprep.subr.bf16.mxu0 0
    %10574 = vmatpush2.bf16.msra.mxu0 0
    %10575 = vmatprep.subr.bf16.mxu0 0
    %10576 = vmatpush2.bf16.msra.mxu0 0
    %10577 = vmatprep.subr.bf16.mxu0 0
    %10578 = vmatpush2.bf16.msra.mxu0 0
    %10579 = vmatprep.subr.bf16.mxu0 0
    %10580 = vmatpush2.bf16.msra.mxu0 0
    %10581 = vmatprep.subr.bf16.mxu0 0
    %10582 = vmatpush2.bf16.msra.mxu0 0
    %10583 = vmatprep.subr.bf16.mxu0 0
    %10584 = vmatpush2.bf16.msra.mxu0 0
    %10585 = vmatprep.subr.bf16.mxu0 %v10418
    %10586 = vmatpush2.bf16.msra.mxu0 %v10417
    %10587 = vmatprep.mubr.bf16.mxu0 %v10431
    %10588 = vmatmul.mubr.bf16.gmra.mxu0 %v10427
    %v10589 = vpop.f32.mrf.mxu0
    %v10590 = vadd.f32 %v10422, %v10589
    %v10591 = vpop.f32.mrf.mxu0
    %v10592 = vpop.f32.mrf.mxu0
    %v10593 = vpop.f32.mrf.mxu0
    %10594 = vdwg.mxu0
    %v10595 = vmax.f32 %v10468, 0.0
    %v10596 = vmax.f32 %v10470, 0.0
    %v10597 = vmax.f32 %v10509, 0.0
    %v10598 = vmax.f32 %v10549, 0.0
    %v10599 = vmax.f32 %v10551, 0.0
    %v10600 = vmax.f32 %v10590, 0.0
    %10607 = vrot.lane.b32.xlu0 %v10595, 126
    %v10608 = vpop.permute.xlu0 %10607
    %10609 = vrot.lane.b32.xlu0 %v10596, 126
    %v10610 = vpop.permute.xlu0 %10609
    %10611 = vrot.lane.b32.xlu0 %v10597, 126
    %v10612 = vpop.permute.xlu0 %10611
    %10613 = vrot.lane.b32.xlu0 %v10598, 126
    %v10614 = vpop.permute.xlu0 %10613
    %10615 = vrot.lane.b32.xlu0 %v10599, 126
    %v10616 = vpop.permute.xlu0 %10615
    %10617 = vrot.lane.b32.xlu0 %v10600, 126
    %v10618 = vpop.permute.xlu0 %10617
    %v10619 = vsel %vm3367, %v10608, %v10610
    %v10620 = vsel %vm3367, %v10610, %v10612
    %v10621 = vsel %vm3367, %v10614, %v10616
    %v10622 = vsel %vm3367, %v10616, %v10618
    %v10627 = vmax.f32 %v10595, %v10619
    %v10628 = vmax.f32 %v10596, %v10620
    %v10629 = vmax.f32 %v10598, %v10621
    %v10630 = vmax.f32 %v10599, %v10622
    %v10631 = vlaneseq
    %v10632 = vshrl.u32 %v10631, 7
    %v10633 = vadd.s32 %v10632, 8
    %v10634 = vadd.s32 %v10632, 16
    %v10635 = vadd.s32 %v10632, 24
    %v10636 = vadd.s32 %v10632, 32
    %v10637 = vadd.s32 %v10632, 40
    %v10638 = vadd.s32 %v10632, 48
    %v10639 = vadd.s32 %v10632, 56
    %v10640 = vadd.s32 %v10632, 64
    %v10641 = vadd.s32 %v10632, 72
    %v10642 = vadd.s32 %v10632, 80
    %v10643 = vadd.s32 %v10632, 88
    %v10644 = vadd.s32 %v10632, 96
    %v10645 = vadd.s32 %v10632, 104
    %v10646 = vadd.s32 %v10632, 112
    %v10647 = vadd.s32 %v10632, 120
    %v10648 = vadd.s32 %v10632, 128
    %v10649 = vadd.s32 %v10632, 136
    %v10650 = vadd.s32 %v10632, 144
    %v10651 = vadd.s32 %v10632, 152
    %v10652 = vadd.s32 %v10632, 160
    %v10653 = vadd.s32 %v10632, 168
    %v10654 = vadd.s32 %v10632, 176
    %v10655 = vadd.s32 %v10632, 184
    %v10656 = vadd.s32 %v10632, 192
    %v10657 = vadd.s32 %v10632, 200
    %v10658 = vadd.s32 %v10632, 208
    %v10659 = vadd.s32 %v10632, 216
    %v10660 = vadd.s32 %v10632, 224
    %v10661 = vadd.s32 %v10632, 232
    %v10662 = vadd.s32 %v10632, 240
    %v10663 = vadd.s32 %v10632, 248
    %v10664 = vmul.u32 %v55, 4
    %vm10665 = vcmp.eq.s32.totalorder %v10632, %v10664
    %vm10666 = vcmp.eq.s32.totalorder %v10633, %v10664
    %vm10667 = vcmp.eq.s32.totalorder %v10634, %v10664
    %vm10668 = vcmp.eq.s32.totalorder %v10635, %v10664
    %vm10669 = vcmp.eq.s32.totalorder %v10636, %v10664
    %vm10670 = vcmp.eq.s32.totalorder %v10637, %v10664
    %vm10671 = vcmp.eq.s32.totalorder %v10638, %v10664
    %vm10672 = vcmp.eq.s32.totalorder %v10639, %v10664
    %vm10673 = vcmp.eq.s32.totalorder %v10640, %v10664
    %vm10674 = vcmp.eq.s32.totalorder %v10641, %v10664
    %vm10675 = vcmp.eq.s32.totalorder %v10642, %v10664
    %vm10676 = vcmp.eq.s32.totalorder %v10643, %v10664
    %vm10677 = vcmp.eq.s32.totalorder %v10644, %v10664
    %vm10678 = vcmp.eq.s32.totalorder %v10645, %v10664
    %vm10679 = vcmp.eq.s32.totalorder %v10646, %v10664
    %vm10680 = vcmp.eq.s32.totalorder %v10647, %v10664
    %vm10681 = vcmp.eq.s32.totalorder %v10648, %v10664
    %vm10682 = vcmp.eq.s32.totalorder %v10649, %v10664
    %vm10683 = vcmp.eq.s32.totalorder %v10650, %v10664
    %vm10684 = vcmp.eq.s32.totalorder %v10651, %v10664
    %vm10685 = vcmp.eq.s32.totalorder %v10652, %v10664
    %vm10686 = vcmp.eq.s32.totalorder %v10653, %v10664
    %vm10687 = vcmp.eq.s32.totalorder %v10654, %v10664
    %vm10688 = vcmp.eq.s32.totalorder %v10655, %v10664
    %vm10689 = vcmp.eq.s32.totalorder %v10656, %v10664
    %vm10690 = vcmp.eq.s32.totalorder %v10657, %v10664
    %vm10691 = vcmp.eq.s32.totalorder %v10658, %v10664
    %vm10692 = vcmp.eq.s32.totalorder %v10659, %v10664
    %vm10693 = vcmp.eq.s32.totalorder %v10660, %v10664
    %vm10694 = vcmp.eq.s32.totalorder %v10661, %v10664
    %vm10695 = vcmp.eq.s32.totalorder %v10662, %v10664
    %vm10696 = vcmp.eq.s32.totalorder %v10663, %v10664
    %vm10697 = vcmp.lt.s32.totalorder %v55, 55
    %vm10698 = vmand %vm10665, %vm10697
    %vm10699 = vmand %vm10666, %vm10697
    %vm10700 = vmand %vm10667, %vm10697
    %vm10701 = vmand %vm10668, %vm10697
    %vm10702 = vmand %vm10669, %vm10697
    %vm10703 = vmand %vm10670, %vm10697
    %vm10704 = vmand %vm10671, %vm10697
    %vm10705 = vmand %vm10672, %vm10697
    %vm10706 = vmand %vm10673, %vm10697
    %vm10707 = vmand %vm10674, %vm10697
    %vm10708 = vmand %vm10675, %vm10697
    %vm10709 = vmand %vm10676, %vm10697
    %vm10710 = vmand %vm10677, %vm10697
    %vm10711 = vmand %vm10678, %vm10697
    %vm10712 = vmand %vm10679, %vm10697
    %vm10713 = vmand %vm10680, %vm10697
    %vm10714 = vmand %vm10681, %vm10697
    %vm10715 = vmand %vm10682, %vm10697
    %vm10716 = vmand %vm10683, %vm10697
    %vm10717 = vmand %vm10684, %vm10697
    %vm10718 = vmand %vm10685, %vm10697
    %vm10719 = vmand %vm10686, %vm10697
    %vm10720 = vmand %vm10687, %vm10697
    %vm10721 = vmand %vm10688, %vm10697
    %vm10722 = vmand %vm10689, %vm10697
    %vm10723 = vmand %vm10690, %vm10697
    %vm10724 = vmand %vm10691, %vm10697
    %vm10725 = vmand %vm10692, %vm10697
    %vm10726 = vmand %vm10693, %vm10697
    %vm10727 = vmand %vm10694, %vm10697
    %vm10728 = vmand %vm10695, %vm10697
    %vm10729 = vmand %vm10696, %vm10697
    %v10730 = vsel %vm10698, 1.0, 0.0
    %v10731 = vsel %vm10699, 1.0, 0.0
    %v10732 = vsel %vm10700, 1.0, 0.0
    %v10733 = vsel %vm10701, 1.0, 0.0
    %v10734 = vsel %vm10702, 1.0, 0.0
    %v10735 = vsel %vm10703, 1.0, 0.0
    %v10736 = vsel %vm10704, 1.0, 0.0
    %v10737 = vsel %vm10705, 1.0, 0.0
    %v10738 = vsel %vm10706, 1.0, 0.0
    %v10739 = vsel %vm10707, 1.0, 0.0
    %v10740 = vsel %vm10708, 1.0, 0.0
    %v10741 = vsel %vm10709, 1.0, 0.0
    %v10742 = vsel %vm10710, 1.0, 0.0
    %v10743 = vsel %vm10711, 1.0, 0.0
    %v10744 = vsel %vm10712, 1.0, 0.0
    %v10745 = vsel %vm10713, 1.0, 0.0
    %v10746 = vsel %vm10714, 1.0, 0.0
    %v10747 = vsel %vm10715, 1.0, 0.0
    %v10748 = vsel %vm10716, 1.0, 0.0
    %v10749 = vsel %vm10717, 1.0, 0.0
    %v10750 = vsel %vm10718, 1.0, 0.0
    %v10751 = vsel %vm10719, 1.0, 0.0
    %v10752 = vsel %vm10720, 1.0, 0.0
    %v10753 = vsel %vm10721, 1.0, 0.0
    %v10754 = vsel %vm10722, 1.0, 0.0
    %v10755 = vsel %vm10723, 1.0, 0.0
    %v10756 = vsel %vm10724, 1.0, 0.0
    %v10757 = vsel %vm10725, 1.0, 0.0
    %v10758 = vsel %vm10726, 1.0, 0.0
    %v10759 = vsel %vm10727, 1.0, 0.0
    %v10760 = vsel %vm10728, 1.0, 0.0
    %v10761 = vsel %vm10729, 1.0, 0.0
    %v10762 = vpack.c.bf16 %v10731, %v10730
    %v10763 = vpack.c.bf16 %v10733, %v10732
    %v10764 = vpack.c.bf16 %v10735, %v10734
    %v10765 = vpack.c.bf16 %v10737, %v10736
    %v10766 = vpack.c.bf16 %v10739, %v10738
    %v10767 = vpack.c.bf16 %v10741, %v10740
    %v10768 = vpack.c.bf16 %v10743, %v10742
    %v10769 = vpack.c.bf16 %v10745, %v10744
    %v10770 = vpack.c.bf16 %v10747, %v10746
    %v10771 = vpack.c.bf16 %v10749, %v10748
    %v10772 = vpack.c.bf16 %v10751, %v10750
    %v10773 = vpack.c.bf16 %v10753, %v10752
    %v10774 = vpack.c.bf16 %v10755, %v10754
    %v10775 = vpack.c.bf16 %v10757, %v10756
    %v10776 = vpack.c.bf16 %v10759, %v10758
    %v10777 = vpack.c.bf16 %v10761, %v10760
    %v10780 = vrot.slane %v10629, 7
    %v10781 = vrot.slane %v10630, 7
    %v10784 = vsel %vm2687, %v10627, %v10780
    %v10785 = vsel %vm2687, %v10628, %v10781
    %v10786 = vpack.c.bf16 %v10784, %v10784
    %v10787 = vpack.c.bf16 %v10785, %v10785
    %10788 = vmatprep.subr.bf16.mxu0 0
    %10789 = vmatpush1.bf16.msra.mxu0 %v10769
    %10790 = vmatprep.subr.bf16.mxu0 0
    %10791 = vmatpush1.bf16.msra.mxu0 %v10768
    %10792 = vmatprep.subr.bf16.mxu0 0
    %10793 = vmatpush1.bf16.msra.mxu0 %v10767
    %10794 = vmatprep.subr.bf16.mxu0 0
    %10795 = vmatpush1.bf16.msra.mxu0 %v10766
    %10796 = vmatprep.subr.bf16.mxu0 0
    %10797 = vmatpush1.bf16.msra.mxu0 %v10765
    %10798 = vmatprep.subr.bf16.mxu0 0
    %10799 = vmatpush1.bf16.msra.mxu0 %v10764
    %10800 = vmatprep.subr.bf16.mxu0 0
    %10801 = vmatpush1.bf16.msra.mxu0 %v10763
    %10802 = vmatprep.subr.bf16.mxu0 0
    %10803 = vmatpush1.bf16.msra.mxu0 %v10762
    %10804 = vmatprep.subr.bf16.mxu0 0
    %10805 = vmatpush2.bf16.msra.mxu0 %v10777
    %10806 = vmatprep.subr.bf16.mxu0 0
    %10807 = vmatpush2.bf16.msra.mxu0 %v10776
    %10808 = vmatprep.subr.bf16.mxu0 0
    %10809 = vmatpush2.bf16.msra.mxu0 %v10775
    %10810 = vmatprep.subr.bf16.mxu0 0
    %10811 = vmatpush2.bf16.msra.mxu0 %v10774
    %10812 = vmatprep.subr.bf16.mxu0 0
    %10813 = vmatpush2.bf16.msra.mxu0 %v10773
    %10814 = vmatprep.subr.bf16.mxu0 0
    %10815 = vmatpush2.bf16.msra.mxu0 %v10772
    %10816 = vmatprep.subr.bf16.mxu0 0
    %10817 = vmatpush2.bf16.msra.mxu0 %v10771
    %10818 = vmatprep.subr.bf16.mxu0 0
    %10819 = vmatpush2.bf16.msra.mxu0 %v10770
    %10820 = vmatprep.mubr.bf16.mxu0 %v10787
    %10821 = vmatmul.mubr.bf16.gmra.mxu0 %v10786
    %v10822 = vpop.f32.mrf.mxu0
    %v10823 = vadd.f32 0.0, %v10822
    %v10824 = vpop.f32.mrf.mxu0
    %v10825 = vpop.f32.mrf.mxu0
    %v10826 = vpop.f32.mrf.mxu0
    %10827 = vdwg.mxu0
    %v10830 = vrot.slane %v10627, 1
    %v10831 = vrot.slane %v10628, 1
    %v10834 = vsel %vm2687, %v10830, %v10629
    %v10835 = vsel %vm2687, %v10831, %v10630
    %v10836 = vpack.c.bf16 %v10834, %v10834
    %v10837 = vpack.c.bf16 %v10835, %v10835
    %10838 = vmatprep.subr.bf16.mxu0 0
    %10839 = vmatpush1.bf16.msra.mxu0 %v10769
    %10840 = vmatprep.subr.bf16.mxu0 0
    %10841 = vmatpush1.bf16.msra.mxu0 %v10768
    %10842 = vmatprep.subr.bf16.mxu0 0
    %10843 = vmatpush1.bf16.msra.mxu0 %v10767
    %10844 = vmatprep.subr.bf16.mxu0 0
    %10845 = vmatpush1.bf16.msra.mxu0 %v10766
    %10846 = vmatprep.subr.bf16.mxu0 0
    %10847 = vmatpush1.bf16.msra.mxu0 %v10765
    %10848 = vmatprep.subr.bf16.mxu0 0
    %10849 = vmatpush1.bf16.msra.mxu0 %v10764
    %10850 = vmatprep.subr.bf16.mxu0 0
    %10851 = vmatpush1.bf16.msra.mxu0 %v10763
    %10852 = vmatprep.subr.bf16.mxu0 0
    %10853 = vmatpush1.bf16.msra.mxu0 %v10762
    %10854 = vmatprep.subr.bf16.mxu0 0
    %10855 = vmatpush2.bf16.msra.mxu0 %v10777
    %10856 = vmatprep.subr.bf16.mxu0 0
    %10857 = vmatpush2.bf16.msra.mxu0 %v10776
    %10858 = vmatprep.subr.bf16.mxu0 0
    %10859 = vmatpush2.bf16.msra.mxu0 %v10775
    %10860 = vmatprep.subr.bf16.mxu0 0
    %10861 = vmatpush2.bf16.msra.mxu0 %v10774
    %10862 = vmatprep.subr.bf16.mxu0 0
    %10863 = vmatpush2.bf16.msra.mxu0 %v10773
    %10864 = vmatprep.subr.bf16.mxu0 0
    %10865 = vmatpush2.bf16.msra.mxu0 %v10772
    %10866 = vmatprep.subr.bf16.mxu0 0
    %10867 = vmatpush2.bf16.msra.mxu0 %v10771
    %10868 = vmatprep.subr.bf16.mxu0 0
    %10869 = vmatpush2.bf16.msra.mxu0 %v10770
    %10870 = vmatprep.mubr.bf16.mxu0 %v10837
    %10871 = vmatmul.mubr.bf16.gmra.mxu0 %v10836
    %v10872 = vpop.f32.mrf.mxu0
    %v10873 = vadd.f32 0.0, %v10872
    %v10874 = vpop.f32.mrf.mxu0
    %v10875 = vpop.f32.mrf.mxu0
    %v10876 = vpop.f32.mrf.mxu0
    %10877 = vdwg.mxu0
    %v10878 = vrot.slane %v10627, 2
    %v10879 = vrot.slane %v10628, 2
    %v10882 = vrot.slane %v10629, 1
    %v10883 = vrot.slane %v10630, 1
    %v10886 = vsel %vm2687, %v10878, %v10882
    %v10887 = vsel %vm2687, %v10879, %v10883
    %v10888 = vpack.c.bf16 %v10886, %v10886
    %v10889 = vpack.c.bf16 %v10887, %v10887
    %10890 = vmatprep.subr.bf16.mxu0 0
    %10891 = vmatpush1.bf16.msra.mxu0 %v10769
    %10892 = vmatprep.subr.bf16.mxu0 0
    %10893 = vmatpush1.bf16.msra.mxu0 %v10768
    %10894 = vmatprep.subr.bf16.mxu0 0
    %10895 = vmatpush1.bf16.msra.mxu0 %v10767
    %10896 = vmatprep.subr.bf16.mxu0 0
    %10897 = vmatpush1.bf16.msra.mxu0 %v10766
    %10898 = vmatprep.subr.bf16.mxu0 0
    %10899 = vmatpush1.bf16.msra.mxu0 %v10765
    %10900 = vmatprep.subr.bf16.mxu0 0
    %10901 = vmatpush1.bf16.msra.mxu0 %v10764
    %10902 = vmatprep.subr.bf16.mxu0 0
    %10903 = vmatpush1.bf16.msra.mxu0 %v10763
    %10904 = vmatprep.subr.bf16.mxu0 0
    %10905 = vmatpush1.bf16.msra.mxu0 %v10762
    %10906 = vmatprep.subr.bf16.mxu0 0
    %10907 = vmatpush2.bf16.msra.mxu0 %v10777
    %10908 = vmatprep.subr.bf16.mxu0 0
    %10909 = vmatpush2.bf16.msra.mxu0 %v10776
    %10910 = vmatprep.subr.bf16.mxu0 0
    %10911 = vmatpush2.bf16.msra.mxu0 %v10775
    %10912 = vmatprep.subr.bf16.mxu0 0
    %10913 = vmatpush2.bf16.msra.mxu0 %v10774
    %10914 = vmatprep.subr.bf16.mxu0 0
    %10915 = vmatpush2.bf16.msra.mxu0 %v10773
    %10916 = vmatprep.subr.bf16.mxu0 0
    %10917 = vmatpush2.bf16.msra.mxu0 %v10772
    %10918 = vmatprep.subr.bf16.mxu0 0
    %10919 = vmatpush2.bf16.msra.mxu0 %v10771
    %10920 = vmatprep.subr.bf16.mxu0 0
    %10921 = vmatpush2.bf16.msra.mxu0 %v10770
    %10922 = vmatprep.mubr.bf16.mxu0 %v10889
    %10923 = vmatmul.mubr.bf16.gmra.mxu0 %v10888
    %v10924 = vpop.f32.mrf.mxu0
    %v10925 = vadd.f32 0.0, %v10924
    %v10926 = vpop.f32.mrf.mxu0
    %v10927 = vpop.f32.mrf.mxu0
    %v10928 = vpop.f32.mrf.mxu0
    %10929 = vdwg.mxu0
    %v10930 = vrot.slane %v10627, 3
    %v10931 = vrot.slane %v10628, 3
    %v10934 = vrot.slane %v10629, 2
    %v10935 = vrot.slane %v10630, 2
    %v10938 = vsel %vm2687, %v10930, %v10934
    %v10939 = vsel %vm2687, %v10931, %v10935
    %v10940 = vpack.c.bf16 %v10938, %v10938
    %v10941 = vpack.c.bf16 %v10939, %v10939
    %10942 = vmatprep.subr.bf16.mxu0 0
    %10943 = vmatpush1.bf16.msra.mxu0 %v10769
    %10944 = vmatprep.subr.bf16.mxu0 0
    %10945 = vmatpush1.bf16.msra.mxu0 %v10768
    %10946 = vmatprep.subr.bf16.mxu0 0
    %10947 = vmatpush1.bf16.msra.mxu0 %v10767
    %10948 = vmatprep.subr.bf16.mxu0 0
    %10949 = vmatpush1.bf16.msra.mxu0 %v10766
    %10950 = vmatprep.subr.bf16.mxu0 0
    %10951 = vmatpush1.bf16.msra.mxu0 %v10765
    %10952 = vmatprep.subr.bf16.mxu0 0
    %10953 = vmatpush1.bf16.msra.mxu0 %v10764
    %10954 = vmatprep.subr.bf16.mxu0 0
    %10955 = vmatpush1.bf16.msra.mxu0 %v10763
    %10956 = vmatprep.subr.bf16.mxu0 0
    %10957 = vmatpush1.bf16.msra.mxu0 %v10762
    %10958 = vmatprep.subr.bf16.mxu0 0
    %10959 = vmatpush2.bf16.msra.mxu0 %v10777
    %10960 = vmatprep.subr.bf16.mxu0 0
    %10961 = vmatpush2.bf16.msra.mxu0 %v10776
    %10962 = vmatprep.subr.bf16.mxu0 0
    %10963 = vmatpush2.bf16.msra.mxu0 %v10775
    %10964 = vmatprep.subr.bf16.mxu0 0
    %10965 = vmatpush2.bf16.msra.mxu0 %v10774
    %10966 = vmatprep.subr.bf16.mxu0 0
    %10967 = vmatpush2.bf16.msra.mxu0 %v10773
    %10968 = vmatprep.subr.bf16.mxu0 0
    %10969 = vmatpush2.bf16.msra.mxu0 %v10772
    %10970 = vmatprep.subr.bf16.mxu0 0
    %10971 = vmatpush2.bf16.msra.mxu0 %v10771
    %10972 = vmatprep.subr.bf16.mxu0 0
    %10973 = vmatpush2.bf16.msra.mxu0 %v10770
    %10974 = vmatprep.mubr.bf16.mxu0 %v10941
    %10975 = vmatmul.mubr.bf16.gmra.mxu0 %v10940
    %v10976 = vpop.f32.mrf.mxu0
    %v10977 = vadd.f32 0.0, %v10976
    %v10978 = vpop.f32.mrf.mxu0
    %v10979 = vpop.f32.mrf.mxu0
    %v10980 = vpop.f32.mrf.mxu0
    %10981 = vdwg.mxu0
    %v10982 = vrot.slane %v10627, 4
    %v10983 = vrot.slane %v10628, 4
    %v10986 = vrot.slane %v10629, 3
    %v10987 = vrot.slane %v10630, 3
    %v10990 = vsel %vm2687, %v10982, %v10986
    %v10991 = vsel %vm2687, %v10983, %v10987
    %v10992 = vpack.c.bf16 %v10990, %v10990
    %v10993 = vpack.c.bf16 %v10991, %v10991
    %10994 = vmatprep.subr.bf16.mxu0 0
    %10995 = vmatpush1.bf16.msra.mxu0 %v10769
    %10996 = vmatprep.subr.bf16.mxu0 0
    %10997 = vmatpush1.bf16.msra.mxu0 %v10768
    %10998 = vmatprep.subr.bf16.mxu0 0
    %10999 = vmatpush1.bf16.msra.mxu0 %v10767
    %11000 = vmatprep.subr.bf16.mxu0 0
    %11001 = vmatpush1.bf16.msra.mxu0 %v10766
    %11002 = vmatprep.subr.bf16.mxu0 0
    %11003 = vmatpush1.bf16.msra.mxu0 %v10765
    %11004 = vmatprep.subr.bf16.mxu0 0
    %11005 = vmatpush1.bf16.msra.mxu0 %v10764
    %11006 = vmatprep.subr.bf16.mxu0 0
    %11007 = vmatpush1.bf16.msra.mxu0 %v10763
    %11008 = vmatprep.subr.bf16.mxu0 0
    %11009 = vmatpush1.bf16.msra.mxu0 %v10762
    %11010 = vmatprep.subr.bf16.mxu0 0
    %11011 = vmatpush2.bf16.msra.mxu0 %v10777
    %11012 = vmatprep.subr.bf16.mxu0 0
    %11013 = vmatpush2.bf16.msra.mxu0 %v10776
    %11014 = vmatprep.subr.bf16.mxu0 0
    %11015 = vmatpush2.bf16.msra.mxu0 %v10775
    %11016 = vmatprep.subr.bf16.mxu0 0
    %11017 = vmatpush2.bf16.msra.mxu0 %v10774
    %11018 = vmatprep.subr.bf16.mxu0 0
    %11019 = vmatpush2.bf16.msra.mxu0 %v10773
    %11020 = vmatprep.subr.bf16.mxu0 0
    %11021 = vmatpush2.bf16.msra.mxu0 %v10772
    %11022 = vmatprep.subr.bf16.mxu0 0
    %11023 = vmatpush2.bf16.msra.mxu0 %v10771
    %11024 = vmatprep.subr.bf16.mxu0 0
    %11025 = vmatpush2.bf16.msra.mxu0 %v10770
    %11026 = vmatprep.mubr.bf16.mxu0 %v10993
    %11027 = vmatmul.mubr.bf16.gmra.mxu0 %v10992
    %v11028 = vpop.f32.mrf.mxu0
    %v11029 = vadd.f32 0.0, %v11028
    %v11030 = vpop.f32.mrf.mxu0
    %v11031 = vpop.f32.mrf.mxu0
    %v11032 = vpop.f32.mrf.mxu0
    %11033 = vdwg.mxu0
    %v11034 = vrot.slane %v10627, 5
    %v11035 = vrot.slane %v10628, 5
    %v11038 = vrot.slane %v10629, 4
    %v11039 = vrot.slane %v10630, 4
    %v11042 = vsel %vm2687, %v11034, %v11038
    %v11043 = vsel %vm2687, %v11035, %v11039
    %v11044 = vpack.c.bf16 %v11042, %v11042
    %v11045 = vpack.c.bf16 %v11043, %v11043
    %11046 = vmatprep.subr.bf16.mxu0 0
    %11047 = vmatpush1.bf16.msra.mxu0 %v10769
    %11048 = vmatprep.subr.bf16.mxu0 0
    %11049 = vmatpush1.bf16.msra.mxu0 %v10768
    %11050 = vmatprep.subr.bf16.mxu0 0
    %11051 = vmatpush1.bf16.msra.mxu0 %v10767
    %11052 = vmatprep.subr.bf16.mxu0 0
    %11053 = vmatpush1.bf16.msra.mxu0 %v10766
    %11054 = vmatprep.subr.bf16.mxu0 0
    %11055 = vmatpush1.bf16.msra.mxu0 %v10765
    %11056 = vmatprep.subr.bf16.mxu0 0
    %11057 = vmatpush1.bf16.msra.mxu0 %v10764
    %11058 = vmatprep.subr.bf16.mxu0 0
    %11059 = vmatpush1.bf16.msra.mxu0 %v10763
    %11060 = vmatprep.subr.bf16.mxu0 0
    %11061 = vmatpush1.bf16.msra.mxu0 %v10762
    %11062 = vmatprep.subr.bf16.mxu0 0
    %11063 = vmatpush2.bf16.msra.mxu0 %v10777
    %11064 = vmatprep.subr.bf16.mxu0 0
    %11065 = vmatpush2.bf16.msra.mxu0 %v10776
    %11066 = vmatprep.subr.bf16.mxu0 0
    %11067 = vmatpush2.bf16.msra.mxu0 %v10775
    %11068 = vmatprep.subr.bf16.mxu0 0
    %11069 = vmatpush2.bf16.msra.mxu0 %v10774
    %11070 = vmatprep.subr.bf16.mxu0 0
    %11071 = vmatpush2.bf16.msra.mxu0 %v10773
    %11072 = vmatprep.subr.bf16.mxu0 0
    %11073 = vmatpush2.bf16.msra.mxu0 %v10772
    %11074 = vmatprep.subr.bf16.mxu0 0
    %11075 = vmatpush2.bf16.msra.mxu0 %v10771
    %11076 = vmatprep.subr.bf16.mxu0 0
    %11077 = vmatpush2.bf16.msra.mxu0 %v10770
    %11078 = vmatprep.mubr.bf16.mxu0 %v11045
    %11079 = vmatmul.mubr.bf16.gmra.mxu0 %v11044
    %v11080 = vpop.f32.mrf.mxu0
    %v11081 = vadd.f32 0.0, %v11080
    %v11082 = vpop.f32.mrf.mxu0
    %v11083 = vpop.f32.mrf.mxu0
    %v11084 = vpop.f32.mrf.mxu0
    %11085 = vdwg.mxu0
    %v11086 = vrot.slane %v10627, 6
    %v11087 = vrot.slane %v10628, 6
    %v11090 = vrot.slane %v10629, 5
    %v11091 = vrot.slane %v10630, 5
    %v11094 = vsel %vm2687, %v11086, %v11090
    %v11095 = vsel %vm2687, %v11087, %v11091
    %v11096 = vpack.c.bf16 %v11094, %v11094
    %v11097 = vpack.c.bf16 %v11095, %v11095
    %11098 = vmatprep.subr.bf16.mxu0 0
    %11099 = vmatpush1.bf16.msra.mxu0 %v10769
    %11100 = vmatprep.subr.bf16.mxu0 0
    %11101 = vmatpush1.bf16.msra.mxu0 %v10768
    %11102 = vmatprep.subr.bf16.mxu0 0
    %11103 = vmatpush1.bf16.msra.mxu0 %v10767
    %11104 = vmatprep.subr.bf16.mxu0 0
    %11105 = vmatpush1.bf16.msra.mxu0 %v10766
    %11106 = vmatprep.subr.bf16.mxu0 0
    %11107 = vmatpush1.bf16.msra.mxu0 %v10765
    %11108 = vmatprep.subr.bf16.mxu0 0
    %11109 = vmatpush1.bf16.msra.mxu0 %v10764
    %11110 = vmatprep.subr.bf16.mxu0 0
    %11111 = vmatpush1.bf16.msra.mxu0 %v10763
    %11112 = vmatprep.subr.bf16.mxu0 0
    %11113 = vmatpush1.bf16.msra.mxu0 %v10762
    %11114 = vmatprep.subr.bf16.mxu0 0
    %11115 = vmatpush2.bf16.msra.mxu0 %v10777
    %11116 = vmatprep.subr.bf16.mxu0 0
    %11117 = vmatpush2.bf16.msra.mxu0 %v10776
    %11118 = vmatprep.subr.bf16.mxu0 0
    %11119 = vmatpush2.bf16.msra.mxu0 %v10775
    %11120 = vmatprep.subr.bf16.mxu0 0
    %11121 = vmatpush2.bf16.msra.mxu0 %v10774
    %11122 = vmatprep.subr.bf16.mxu0 0
    %11123 = vmatpush2.bf16.msra.mxu0 %v10773
    %11124 = vmatprep.subr.bf16.mxu0 0
    %11125 = vmatpush2.bf16.msra.mxu0 %v10772
    %11126 = vmatprep.subr.bf16.mxu0 0
    %11127 = vmatpush2.bf16.msra.mxu0 %v10771
    %11128 = vmatprep.subr.bf16.mxu0 0
    %11129 = vmatpush2.bf16.msra.mxu0 %v10770
    %11130 = vmatprep.mubr.bf16.mxu0 %v11097
    %11131 = vmatmul.mubr.bf16.gmra.mxu0 %v11096
    %v11132 = vpop.f32.mrf.mxu0
    %v11133 = vadd.f32 0.0, %v11132
    %v11134 = vpop.f32.mrf.mxu0
    %v11135 = vpop.f32.mrf.mxu0
    %v11136 = vpop.f32.mrf.mxu0
    %11137 = vdwg.mxu0
    %v11138 = vrot.slane %v10627, 7
    %v11139 = vrot.slane %v10628, 7
    %v11142 = vrot.slane %v10629, 6
    %v11143 = vrot.slane %v10630, 6
    %v11146 = vsel %vm2687, %v11138, %v11142
    %v11147 = vsel %vm2687, %v11139, %v11143
    %v11148 = vpack.c.bf16 %v11146, %v11146
    %v11149 = vpack.c.bf16 %v11147, %v11147
    %11150 = vmatprep.subr.bf16.mxu0 0
    %11151 = vmatpush1.bf16.msra.mxu0 %v10769
    %11152 = vmatprep.subr.bf16.mxu0 0
    %11153 = vmatpush1.bf16.msra.mxu0 %v10768
    %11154 = vmatprep.subr.bf16.mxu0 0
    %11155 = vmatpush1.bf16.msra.mxu0 %v10767
    %11156 = vmatprep.subr.bf16.mxu0 0
    %11157 = vmatpush1.bf16.msra.mxu0 %v10766
    %11158 = vmatprep.subr.bf16.mxu0 0
    %11159 = vmatpush1.bf16.msra.mxu0 %v10765
    %11160 = vmatprep.subr.bf16.mxu0 0
    %11161 = vmatpush1.bf16.msra.mxu0 %v10764
    %11162 = vmatprep.subr.bf16.mxu0 0
    %11163 = vmatpush1.bf16.msra.mxu0 %v10763
    %11164 = vmatprep.subr.bf16.mxu0 0
    %11165 = vmatpush1.bf16.msra.mxu0 %v10762
    %11166 = vmatprep.subr.bf16.mxu0 0
    %11167 = vmatpush2.bf16.msra.mxu0 %v10777
    %11168 = vmatprep.subr.bf16.mxu0 0
    %11169 = vmatpush2.bf16.msra.mxu0 %v10776
    %11170 = vmatprep.subr.bf16.mxu0 0
    %11171 = vmatpush2.bf16.msra.mxu0 %v10775
    %11172 = vmatprep.subr.bf16.mxu0 0
    %11173 = vmatpush2.bf16.msra.mxu0 %v10774
    %11174 = vmatprep.subr.bf16.mxu0 0
    %11175 = vmatpush2.bf16.msra.mxu0 %v10773
    %11176 = vmatprep.subr.bf16.mxu0 0
    %11177 = vmatpush2.bf16.msra.mxu0 %v10772
    %11178 = vmatprep.subr.bf16.mxu0 0
    %11179 = vmatpush2.bf16.msra.mxu0 %v10771
    %11180 = vmatprep.subr.bf16.mxu0 0
    %11181 = vmatpush2.bf16.msra.mxu0 %v10770
    %11182 = vmatprep.mubr.bf16.mxu0 %v11149
    %11183 = vmatmul.mubr.bf16.gmra.mxu0 %v11148
    %v11184 = vpop.f32.mrf.mxu0
    %v11185 = vadd.f32 0.0, %v11184
    %v11186 = vpop.f32.mrf.mxu0
    %v11187 = vpop.f32.mrf.mxu0
    %v11188 = vpop.f32.mrf.mxu0
    %11189 = vdwg.mxu0
    %11191 = vrot.lane.b32.xlu0 %v10873, 64
    %v11192 = vpop.permute.xlu0 %11191
    %11195 = vrot.lane.b32.xlu0 %v10977, 64
    %v11196 = vpop.permute.xlu0 %11195
    %11199 = vrot.lane.b32.xlu0 %v11081, 64
    %v11200 = vpop.permute.xlu0 %11199
    %11203 = vrot.lane.b32.xlu0 %v11185, 64
    %v11204 = vpop.permute.xlu0 %11203
    %vm11206 = vcmask 523264
    %v11207 = vsel %vm11206, %v10823, %v11192
    %v11208 = vsel %vm11206, %v10925, %v11196
    %v11209 = vsel %vm11206, %v11029, %v11200
    %v11210 = vsel %vm11206, %v11133, %v11204
    %v11211 = vpack.c.bf16 %v11207, %v11207
    %v11212 = vpack.c.bf16 %v11208, %v11208
    %v11213 = vpack.c.bf16 %v11209, %v11209
    %v11214 = vpack.c.bf16 %v11210, %v11210
    %v11215 = vld [vmem:[#allocation2] sm:$0xff]
    %v11216 = vld [vmem:[#allocation2 + $0x8] sm:$0xff]
    %v11217 = vld [vmem:[#allocation2 + $0x10] sm:$0xff]
    %v11218 = vld [vmem:[#allocation2 + $0x18] sm:$0xff]
    %v11219 = vld [vmem:[#allocation2 + $0x20] sm:$0xff]
    %v11220 = vld [vmem:[#allocation2 + $0x28] sm:$0xff]
    %v11221 = vld [vmem:[#allocation2 + $0x30] sm:$0xff]
    %v11222 = vld [vmem:[#allocation2 + $0x38] sm:$0xff]
    %v11223 = vld [vmem:[#allocation2 + $0x40] sm:$0xff]
    %v11224 = vld [vmem:[#allocation2 + $0x48] sm:$0xff]
    %v11225 = vld [vmem:[#allocation2 + $0x50] sm:$0xff]
    %v11226 = vld [vmem:[#allocation2 + $0x58] sm:$0xff]
    %v11227 = vld [vmem:[#allocation2 + $0x60] sm:$0xff]
    %v11228 = vld [vmem:[#allocation2 + $0x68] sm:$0xff]
    %v11229 = vld [vmem:[#allocation2 + $0x70] sm:$0xff]
    %v11230 = vld [vmem:[#allocation2 + $0x78] sm:$0xff]
    %v11231 = vld [vmem:[#allocation2 + $0x80] sm:$0xff]
    %v11232 = vld [vmem:[#allocation2 + $0x88] sm:$0xff]
    %v11233 = vld [vmem:[#allocation2 + $0x90] sm:$0xff]
    %v11234 = vld [vmem:[#allocation2 + $0x98] sm:$0xff]
    %v11235 = vld [vmem:[#allocation2 + $0xa0] sm:$0xff]
    %v11236 = vld [vmem:[#allocation2 + $0xa8] sm:$0xff]
    %v11237 = vld [vmem:[#allocation2 + $0xb0] sm:$0xff]
    %v11238 = vld [vmem:[#allocation2 + $0xb8] sm:$0xff]
    %v11239 = vld [vmem:[#allocation2 + $0xc0] sm:$0xff]
    %v11240 = vld [vmem:[#allocation2 + $0xc8] sm:$0xff]
    %v11241 = vld [vmem:[#allocation2 + $0xd0] sm:$0xff]
    %v11242 = vld [vmem:[#allocation2 + $0xd8] sm:$0xff]
    %v11243 = vld [vmem:[#allocation2 + $0xe0] sm:$0xff]
    %v11244 = vld [vmem:[#allocation2 + $0xe8] sm:$0xff]
    %v11245 = vld [vmem:[#allocation2 + $0xf0] sm:$0xff]
    %v11246 = vld [vmem:[#allocation2 + $0xf8] sm:$0xff]
    %v11247 = vld [vmem:[#allocation2 + $0x100] sm:$0xff]
    %v11248 = vld [vmem:[#allocation2 + $0x108] sm:$0xff]
    %v11249 = vld [vmem:[#allocation2 + $0x110] sm:$0xff]
    %v11250 = vld [vmem:[#allocation2 + $0x118] sm:$0xff]
    %v11251 = vld [vmem:[#allocation2 + $0x120] sm:$0xff]
    %v11252 = vld [vmem:[#allocation2 + $0x128] sm:$0xff]
    %v11253 = vld [vmem:[#allocation2 + $0x130] sm:$0xff]
    %v11254 = vld [vmem:[#allocation2 + $0x138] sm:$0xff]
    %v11255 = vld [vmem:[#allocation2 + $0x140] sm:$0xff]
    %v11256 = vld [vmem:[#allocation2 + $0x148] sm:$0xff]
    %v11257 = vld [vmem:[#allocation2 + $0x150] sm:$0xff]
    %v11258 = vld [vmem:[#allocation2 + $0x158] sm:$0xff]
    %v11259 = vld [vmem:[#allocation2 + $0x160] sm:$0xff]
    %v11260 = vld [vmem:[#allocation2 + $0x168] sm:$0xff]
    %v11261 = vld [vmem:[#allocation2 + $0x170] sm:$0xff]
    %v11262 = vld [vmem:[#allocation2 + $0x178] sm:$0xff]
    %v11263 = vld [vmem:[#allocation2 + $0x180] sm:$0xff]
    %v11264 = vld [vmem:[#allocation2 + $0x188] sm:$0xff]
    %v11265 = vld [vmem:[#allocation2 + $0x190] sm:$0xff]
    %v11266 = vld [vmem:[#allocation2 + $0x198] sm:$0xff]
    %v11267 = vld [vmem:[#allocation2 + $0x1a0] sm:$0xff]
    %v11268 = vld [vmem:[#allocation2 + $0x1a8] sm:$0xff]
    %v11269 = vld [vmem:[#allocation2 + $0x1b0] sm:$0xff]
    %v11270 = vld [vmem:[#allocation2 + $0x1b8] sm:$0xff]
    %v11271 = vld [vmem:[#allocation2 + $0x1c0] sm:$0xff]
    %v11272 = vld [vmem:[#allocation2 + $0x1c8] sm:$0xff]
    %v11273 = vld [vmem:[#allocation2 + $0x1d0] sm:$0xff]
    %v11274 = vld [vmem:[#allocation2 + $0x1d8] sm:$0xff]
    %v11275 = vld [vmem:[#allocation2 + $0x1e0] sm:$0xff]
    %v11276 = vld [vmem:[#allocation2 + $0x1e8] sm:$0xff]
    %v11277 = vld [vmem:[#allocation2 + $0x1f0] sm:$0xff]
    %v11278 = vld [vmem:[#allocation2 + $0x1f8] sm:$0xff]
    %v11279 = vld [vmem:[#allocation2 + $0x200] sm:$0xff]
    %v11280 = vld [vmem:[#allocation2 + $0x208] sm:$0xff]
    %v11281 = vld [vmem:[#allocation2 + $0x210] sm:$0xff]
    %v11282 = vld [vmem:[#allocation2 + $0x218] sm:$0xff]
    %v11283 = vld [vmem:[#allocation2 + $0x220] sm:$0xff]
    %v11284 = vld [vmem:[#allocation2 + $0x228] sm:$0xff]
    %v11285 = vld [vmem:[#allocation2 + $0x230] sm:$0xff]
    %v11286 = vld [vmem:[#allocation2 + $0x238] sm:$0xff]
    %v11287 = vld [vmem:[#allocation2 + $0x240] sm:$0xff]
    %v11288 = vld [vmem:[#allocation2 + $0x248] sm:$0xff]
    %v11289 = vld [vmem:[#allocation2 + $0x250] sm:$0xff]
    %v11290 = vld [vmem:[#allocation2 + $0x258] sm:$0xff]
    %v11291 = vld [vmem:[#allocation2 + $0x260] sm:$0xff]
    %v11292 = vld [vmem:[#allocation2 + $0x268] sm:$0xff]
    %v11293 = vld [vmem:[#allocation2 + $0x270] sm:$0xff]
    %v11294 = vld [vmem:[#allocation2 + $0x278] sm:$0xff]
    %v11295 = vld [vmem:[#allocation2 + $0x280] sm:$0xff]
    %v11296 = vld [vmem:[#allocation2 + $0x288] sm:$0xff]
    %v11297 = vld [vmem:[#allocation2 + $0x290] sm:$0xff]
    %v11298 = vld [vmem:[#allocation2 + $0x298] sm:$0xff]
    %v11299 = vld [vmem:[#allocation2 + $0x2a0] sm:$0xff]
    %v11300 = vld [vmem:[#allocation2 + $0x2a8] sm:$0xff]
    %v11301 = vld [vmem:[#allocation2 + $0x2b0] sm:$0xff]
    %v11302 = vld [vmem:[#allocation2 + $0x2b8] sm:$0xff]
    %v11303 = vld [vmem:[#allocation2 + $0x2c0] sm:$0xff]
    %v11304 = vld [vmem:[#allocation2 + $0x2c8] sm:$0xff]
    %v11305 = vld [vmem:[#allocation2 + $0x2d0] sm:$0xff]
    %v11306 = vld [vmem:[#allocation2 + $0x2d8] sm:$0xff]
    %v11307 = vld [vmem:[#allocation2 + $0x2e0] sm:$0xff]
    %v11308 = vld [vmem:[#allocation2 + $0x2e8] sm:$0xff]
    %v11309 = vld [vmem:[#allocation2 + $0x2f0] sm:$0xff]
    %v11310 = vld [vmem:[#allocation2 + $0x2f8] sm:$0xff]
    %v11311 = vld [vmem:[#allocation2 + $0x300] sm:$0xff]
    %v11312 = vld [vmem:[#allocation2 + $0x308] sm:$0xff]
    %v11313 = vld [vmem:[#allocation2 + $0x310] sm:$0xff]
    %v11314 = vld [vmem:[#allocation2 + $0x318] sm:$0xff]
    %v11315 = vld [vmem:[#allocation2 + $0x320] sm:$0xff]
    %v11316 = vld [vmem:[#allocation2 + $0x328] sm:$0xff]
    %v11317 = vld [vmem:[#allocation2 + $0x330] sm:$0xff]
    %v11318 = vld [vmem:[#allocation2 + $0x338] sm:$0xff]
    %v11319 = vld [vmem:[#allocation2 + $0x340] sm:$0xff]
    %v11320 = vld [vmem:[#allocation2 + $0x348] sm:$0xff]
    %v11321 = vld [vmem:[#allocation2 + $0x350] sm:$0xff]
    %v11322 = vld [vmem:[#allocation2 + $0x358] sm:$0xff]
    %v11323 = vld [vmem:[#allocation2 + $0x360] sm:$0xff]
    %v11324 = vld [vmem:[#allocation2 + $0x368] sm:$0xff]
    %v11325 = vld [vmem:[#allocation2 + $0x370] sm:$0xff]
    %v11326 = vld [vmem:[#allocation2 + $0x378] sm:$0xff]
    %v11327 = vld [vmem:[#allocation2 + $0x380] sm:$0xff]
    %v11328 = vld [vmem:[#allocation2 + $0x388] sm:$0xff]
    %v11329 = vld [vmem:[#allocation2 + $0x390] sm:$0xff]
    %v11330 = vld [vmem:[#allocation2 + $0x398] sm:$0xff]
    %v11331 = vld [vmem:[#allocation2 + $0x3a0] sm:$0xff]
    %v11332 = vld [vmem:[#allocation2 + $0x3a8] sm:$0xff]
    %v11333 = vld [vmem:[#allocation2 + $0x3b0] sm:$0xff]
    %v11334 = vld [vmem:[#allocation2 + $0x3b8] sm:$0xff]
    %v11335 = vld [vmem:[#allocation2 + $0x3c0] sm:$0xff]
    %v11336 = vld [vmem:[#allocation2 + $0x3c8] sm:$0xff]
    %v11337 = vld [vmem:[#allocation2 + $0x3d0] sm:$0xff]
    %v11338 = vld [vmem:[#allocation2 + $0x3d8] sm:$0xff]
    %v11339 = vld [vmem:[#allocation2 + $0x3e0] sm:$0xff]
    %v11340 = vld [vmem:[#allocation2 + $0x3e8] sm:$0xff]
    %v11341 = vld [vmem:[#allocation2 + $0x3f0] sm:$0xff]
    %v11342 = vld [vmem:[#allocation2 + $0x3f8] sm:$0xff]
    %v11343 = vld [vmem:[%s8] sm:$0xf]
    %v11345 = vlaneseq
    %v11346 = vshrl.u32 %v11345, 7
    %v11347 = vsub.s32 0, %v11346
    %v11348 = vrot.slane %v11343, %v11347
    %v11349 = vlaneseq
    %v11350 = vshrl.u32 %v11349, 7
    %v11351 = vsub.s32 1, %v11350
    %v11352 = vrot.slane %v11343, %v11351
    %v11353 = vlaneseq
    %v11354 = vshrl.u32 %v11353, 7
    %v11355 = vsub.s32 2, %v11354
    %v11356 = vrot.slane %v11343, %v11355
    %v11357 = vlaneseq
    %v11358 = vshrl.u32 %v11357, 7
    %v11359 = vsub.s32 3, %v11358
    %v11360 = vrot.slane %v11343, %v11359
    %v11493 = vunpack.c.l.b16 %v11215
    %v11494 = vunpack.c.h.b16 %v11215
    %v11495 = vunpack.c.l.b16 %v11216
    %v11496 = vunpack.c.h.b16 %v11216
    %v11497 = vunpack.c.l.b16 %v11217
    %v11498 = vunpack.c.h.b16 %v11217
    %v11499 = vunpack.c.l.b16 %v11218
    %v11500 = vunpack.c.h.b16 %v11218
    %v11501 = vunpack.c.l.b16 %v11219
    %v11502 = vunpack.c.h.b16 %v11219
    %v11503 = vunpack.c.l.b16 %v11220
    %v11504 = vunpack.c.h.b16 %v11220
    %v11505 = vunpack.c.l.b16 %v11221
    %v11506 = vunpack.c.h.b16 %v11221
    %v11507 = vunpack.c.l.b16 %v11222
    %v11508 = vunpack.c.h.b16 %v11222
    %v11509 = vunpack.c.l.b16 %v11223
    %v11510 = vunpack.c.h.b16 %v11223
    %v11511 = vunpack.c.l.b16 %v11224
    %v11512 = vunpack.c.h.b16 %v11224
    %v11513 = vunpack.c.l.b16 %v11225
    %v11514 = vunpack.c.h.b16 %v11225
    %v11515 = vunpack.c.l.b16 %v11226
    %v11516 = vunpack.c.h.b16 %v11226
    %v11517 = vunpack.c.l.b16 %v11227
    %v11518 = vunpack.c.h.b16 %v11227
    %v11519 = vunpack.c.l.b16 %v11228
    %v11520 = vunpack.c.h.b16 %v11228
    %v11521 = vunpack.c.l.b16 %v11229
    %v11522 = vunpack.c.h.b16 %v11229
    %v11523 = vunpack.c.l.b16 %v11230
    %v11524 = vunpack.c.h.b16 %v11230
    %v11525 = vunpack.c.l.b16 %v11231
    %v11526 = vunpack.c.h.b16 %v11231
    %v11527 = vunpack.c.l.b16 %v11232
    %v11528 = vunpack.c.h.b16 %v11232
    %v11529 = vunpack.c.l.b16 %v11233
    %v11530 = vunpack.c.h.b16 %v11233
    %v11531 = vunpack.c.l.b16 %v11234
    %v11532 = vunpack.c.h.b16 %v11234
    %v11533 = vunpack.c.l.b16 %v11235
    %v11534 = vunpack.c.h.b16 %v11235
    %v11535 = vunpack.c.l.b16 %v11236
    %v11536 = vunpack.c.h.b16 %v11236
    %v11537 = vunpack.c.l.b16 %v11237
    %v11538 = vunpack.c.h.b16 %v11237
    %v11539 = vunpack.c.l.b16 %v11238
    %v11540 = vunpack.c.h.b16 %v11238
    %v11541 = vunpack.c.l.b16 %v11239
    %v11542 = vunpack.c.h.b16 %v11239
    %v11543 = vunpack.c.l.b16 %v11240
    %v11544 = vunpack.c.h.b16 %v11240
    %v11545 = vunpack.c.l.b16 %v11241
    %v11546 = vunpack.c.h.b16 %v11241
    %v11547 = vunpack.c.l.b16 %v11242
    %v11548 = vunpack.c.h.b16 %v11242
    %v11549 = vunpack.c.l.b16 %v11243
    %v11550 = vunpack.c.h.b16 %v11243
    %v11551 = vunpack.c.l.b16 %v11244
    %v11552 = vunpack.c.h.b16 %v11244
    %v11553 = vunpack.c.l.b16 %v11245
    %v11554 = vunpack.c.h.b16 %v11245
    %v11555 = vunpack.c.l.b16 %v11246
    %v11556 = vunpack.c.h.b16 %v11246
    %v11557 = vunpack.c.l.b16 %v11247
    %v11558 = vunpack.c.h.b16 %v11247
    %v11559 = vunpack.c.l.b16 %v11248
    %v11560 = vunpack.c.h.b16 %v11248
    %v11561 = vunpack.c.l.b16 %v11249
    %v11562 = vunpack.c.h.b16 %v11249
    %v11563 = vunpack.c.l.b16 %v11250
    %v11564 = vunpack.c.h.b16 %v11250
    %v11565 = vunpack.c.l.b16 %v11251
    %v11566 = vunpack.c.h.b16 %v11251
    %v11567 = vunpack.c.l.b16 %v11252
    %v11568 = vunpack.c.h.b16 %v11252
    %v11569 = vunpack.c.l.b16 %v11253
    %v11570 = vunpack.c.h.b16 %v11253
    %v11571 = vunpack.c.l.b16 %v11254
    %v11572 = vunpack.c.h.b16 %v11254
    %v11573 = vunpack.c.l.b16 %v11255
    %v11574 = vunpack.c.h.b16 %v11255
    %v11575 = vunpack.c.l.b16 %v11256
    %v11576 = vunpack.c.h.b16 %v11256
    %v11577 = vunpack.c.l.b16 %v11257
    %v11578 = vunpack.c.h.b16 %v11257
    %v11579 = vunpack.c.l.b16 %v11258
    %v11580 = vunpack.c.h.b16 %v11258
    %v11581 = vunpack.c.l.b16 %v11259
    %v11582 = vunpack.c.h.b16 %v11259
    %v11583 = vunpack.c.l.b16 %v11260
    %v11584 = vunpack.c.h.b16 %v11260
    %v11585 = vunpack.c.l.b16 %v11261
    %v11586 = vunpack.c.h.b16 %v11261
    %v11587 = vunpack.c.l.b16 %v11262
    %v11588 = vunpack.c.h.b16 %v11262
    %v11589 = vunpack.c.l.b16 %v11263
    %v11590 = vunpack.c.h.b16 %v11263
    %v11591 = vunpack.c.l.b16 %v11264
    %v11592 = vunpack.c.h.b16 %v11264
    %v11593 = vunpack.c.l.b16 %v11265
    %v11594 = vunpack.c.h.b16 %v11265
    %v11595 = vunpack.c.l.b16 %v11266
    %v11596 = vunpack.c.h.b16 %v11266
    %v11597 = vunpack.c.l.b16 %v11267
    %v11598 = vunpack.c.h.b16 %v11267
    %v11599 = vunpack.c.l.b16 %v11268
    %v11600 = vunpack.c.h.b16 %v11268
    %v11601 = vunpack.c.l.b16 %v11269
    %v11602 = vunpack.c.h.b16 %v11269
    %v11603 = vunpack.c.l.b16 %v11270
    %v11604 = vunpack.c.h.b16 %v11270
    %v11605 = vunpack.c.l.b16 %v11271
    %v11606 = vunpack.c.h.b16 %v11271
    %v11607 = vunpack.c.l.b16 %v11272
    %v11608 = vunpack.c.h.b16 %v11272
    %v11609 = vunpack.c.l.b16 %v11273
    %v11610 = vunpack.c.h.b16 %v11273
    %v11611 = vunpack.c.l.b16 %v11274
    %v11612 = vunpack.c.h.b16 %v11274
    %v11613 = vunpack.c.l.b16 %v11275
    %v11614 = vunpack.c.h.b16 %v11275
    %v11615 = vunpack.c.l.b16 %v11276
    %v11616 = vunpack.c.h.b16 %v11276
    %v11617 = vunpack.c.l.b16 %v11277
    %v11618 = vunpack.c.h.b16 %v11277
    %v11619 = vunpack.c.l.b16 %v11278
    %v11620 = vunpack.c.h.b16 %v11278
    %v11621 = vunpack.c.l.b16 %v11279
    %v11622 = vunpack.c.h.b16 %v11279
    %v11623 = vunpack.c.l.b16 %v11280
    %v11624 = vunpack.c.h.b16 %v11280
    %v11625 = vunpack.c.l.b16 %v11281
    %v11626 = vunpack.c.h.b16 %v11281
    %v11627 = vunpack.c.l.b16 %v11282
    %v11628 = vunpack.c.h.b16 %v11282
    %v11629 = vunpack.c.l.b16 %v11283
    %v11630 = vunpack.c.h.b16 %v11283
    %v11631 = vunpack.c.l.b16 %v11284
    %v11632 = vunpack.c.h.b16 %v11284
    %v11633 = vunpack.c.l.b16 %v11285
    %v11634 = vunpack.c.h.b16 %v11285
    %v11635 = vunpack.c.l.b16 %v11286
    %v11636 = vunpack.c.h.b16 %v11286
    %v11637 = vunpack.c.l.b16 %v11287
    %v11638 = vunpack.c.h.b16 %v11287
    %v11639 = vunpack.c.l.b16 %v11288
    %v11640 = vunpack.c.h.b16 %v11288
    %v11641 = vunpack.c.l.b16 %v11289
    %v11642 = vunpack.c.h.b16 %v11289
    %v11643 = vunpack.c.l.b16 %v11290
    %v11644 = vunpack.c.h.b16 %v11290
    %v11645 = vunpack.c.l.b16 %v11291
    %v11646 = vunpack.c.h.b16 %v11291
    %v11647 = vunpack.c.l.b16 %v11292
    %v11648 = vunpack.c.h.b16 %v11292
    %v11649 = vunpack.c.l.b16 %v11293
    %v11650 = vunpack.c.h.b16 %v11293
    %v11651 = vunpack.c.l.b16 %v11294
    %v11652 = vunpack.c.h.b16 %v11294
    %v11653 = vunpack.c.l.b16 %v11295
    %v11654 = vunpack.c.h.b16 %v11295
    %v11655 = vunpack.c.l.b16 %v11296
    %v11656 = vunpack.c.h.b16 %v11296
    %v11657 = vunpack.c.l.b16 %v11297
    %v11658 = vunpack.c.h.b16 %v11297
    %v11659 = vunpack.c.l.b16 %v11298
    %v11660 = vunpack.c.h.b16 %v11298
    %v11661 = vunpack.c.l.b16 %v11299
    %v11662 = vunpack.c.h.b16 %v11299
    %v11663 = vunpack.c.l.b16 %v11300
    %v11664 = vunpack.c.h.b16 %v11300
    %v11665 = vunpack.c.l.b16 %v11301
    %v11666 = vunpack.c.h.b16 %v11301
    %v11667 = vunpack.c.l.b16 %v11302
    %v11668 = vunpack.c.h.b16 %v11302
    %v11669 = vunpack.c.l.b16 %v11303
    %v11670 = vunpack.c.h.b16 %v11303
    %v11671 = vunpack.c.l.b16 %v11304
    %v11672 = vunpack.c.h.b16 %v11304
    %v11673 = vunpack.c.l.b16 %v11305
    %v11674 = vunpack.c.h.b16 %v11305
    %v11675 = vunpack.c.l.b16 %v11306
    %v11676 = vunpack.c.h.b16 %v11306
    %v11677 = vunpack.c.l.b16 %v11307
    %v11678 = vunpack.c.h.b16 %v11307
    %v11679 = vunpack.c.l.b16 %v11308
    %v11680 = vunpack.c.h.b16 %v11308
    %v11681 = vunpack.c.l.b16 %v11309
    %v11682 = vunpack.c.h.b16 %v11309
    %v11683 = vunpack.c.l.b16 %v11310
    %v11684 = vunpack.c.h.b16 %v11310
    %v11685 = vunpack.c.l.b16 %v11311
    %v11686 = vunpack.c.h.b16 %v11311
    %v11687 = vunpack.c.l.b16 %v11312
    %v11688 = vunpack.c.h.b16 %v11312
    %v11689 = vunpack.c.l.b16 %v11313
    %v11690 = vunpack.c.h.b16 %v11313
    %v11691 = vunpack.c.l.b16 %v11314
    %v11692 = vunpack.c.h.b16 %v11314
    %v11693 = vunpack.c.l.b16 %v11315
    %v11694 = vunpack.c.h.b16 %v11315
    %v11695 = vunpack.c.l.b16 %v11316
    %v11696 = vunpack.c.h.b16 %v11316
    %v11697 = vunpack.c.l.b16 %v11317
    %v11698 = vunpack.c.h.b16 %v11317
    %v11699 = vunpack.c.l.b16 %v11318
    %v11700 = vunpack.c.h.b16 %v11318
    %v11701 = vunpack.c.l.b16 %v11319
    %v11702 = vunpack.c.h.b16 %v11319
    %v11703 = vunpack.c.l.b16 %v11320
    %v11704 = vunpack.c.h.b16 %v11320
    %v11705 = vunpack.c.l.b16 %v11321
    %v11706 = vunpack.c.h.b16 %v11321
    %v11707 = vunpack.c.l.b16 %v11322
    %v11708 = vunpack.c.h.b16 %v11322
    %v11709 = vunpack.c.l.b16 %v11323
    %v11710 = vunpack.c.h.b16 %v11323
    %v11711 = vunpack.c.l.b16 %v11324
    %v11712 = vunpack.c.h.b16 %v11324
    %v11713 = vunpack.c.l.b16 %v11325
    %v11714 = vunpack.c.h.b16 %v11325
    %v11715 = vunpack.c.l.b16 %v11326
    %v11716 = vunpack.c.h.b16 %v11326
    %v11717 = vunpack.c.l.b16 %v11327
    %v11718 = vunpack.c.h.b16 %v11327
    %v11719 = vunpack.c.l.b16 %v11328
    %v11720 = vunpack.c.h.b16 %v11328
    %v11721 = vunpack.c.l.b16 %v11329
    %v11722 = vunpack.c.h.b16 %v11329
    %v11723 = vunpack.c.l.b16 %v11330
    %v11724 = vunpack.c.h.b16 %v11330
    %v11725 = vunpack.c.l.b16 %v11331
    %v11726 = vunpack.c.h.b16 %v11331
    %v11727 = vunpack.c.l.b16 %v11332
    %v11728 = vunpack.c.h.b16 %v11332
    %v11729 = vunpack.c.l.b16 %v11333
    %v11730 = vunpack.c.h.b16 %v11333
    %v11731 = vunpack.c.l.b16 %v11334
    %v11732 = vunpack.c.h.b16 %v11334
    %v11733 = vunpack.c.l.b16 %v11335
    %v11734 = vunpack.c.h.b16 %v11335
    %v11735 = vunpack.c.l.b16 %v11336
    %v11736 = vunpack.c.h.b16 %v11336
    %v11737 = vunpack.c.l.b16 %v11337
    %v11738 = vunpack.c.h.b16 %v11337
    %v11739 = vunpack.c.l.b16 %v11338
    %v11740 = vunpack.c.h.b16 %v11338
    %v11741 = vunpack.c.l.b16 %v11339
    %v11742 = vunpack.c.h.b16 %v11339
    %v11743 = vunpack.c.l.b16 %v11340
    %v11744 = vunpack.c.h.b16 %v11340
    %v11745 = vunpack.c.l.b16 %v11341
    %v11746 = vunpack.c.h.b16 %v11341
    %v11747 = vunpack.c.l.b16 %v11342
    %v11748 = vunpack.c.h.b16 %v11342
    %v11749 = vpack.c.b16 %v11497, %v11493
    %v11750 = vpack.c.b16 %v11498, %v11494
    %v11751 = vpack.c.b16 %v11499, %v11495
    %v11752 = vpack.c.b16 %v11500, %v11496
    %v11753 = vpack.c.b16 %v11505, %v11501
    %v11754 = vpack.c.b16 %v11506, %v11502
    %v11755 = vpack.c.b16 %v11507, %v11503
    %v11756 = vpack.c.b16 %v11508, %v11504
    %v11757 = vpack.c.b16 %v11513, %v11509
    %v11758 = vpack.c.b16 %v11514, %v11510
    %v11759 = vpack.c.b16 %v11515, %v11511
    %v11760 = vpack.c.b16 %v11516, %v11512
    %v11761 = vpack.c.b16 %v11521, %v11517
    %v11762 = vpack.c.b16 %v11522, %v11518
    %v11763 = vpack.c.b16 %v11523, %v11519
    %v11764 = vpack.c.b16 %v11524, %v11520
    %v11765 = vpack.c.b16 %v11529, %v11525
    %v11766 = vpack.c.b16 %v11530, %v11526
    %v11767 = vpack.c.b16 %v11531, %v11527
    %v11768 = vpack.c.b16 %v11532, %v11528
    %v11769 = vpack.c.b16 %v11537, %v11533
    %v11770 = vpack.c.b16 %v11538, %v11534
    %v11771 = vpack.c.b16 %v11539, %v11535
    %v11772 = vpack.c.b16 %v11540, %v11536
    %v11773 = vpack.c.b16 %v11545, %v11541
    %v11774 = vpack.c.b16 %v11546, %v11542
    %v11775 = vpack.c.b16 %v11547, %v11543
    %v11776 = vpack.c.b16 %v11548, %v11544
    %v11777 = vpack.c.b16 %v11553, %v11549
    %v11778 = vpack.c.b16 %v11554, %v11550
    %v11779 = vpack.c.b16 %v11555, %v11551
    %v11780 = vpack.c.b16 %v11556, %v11552
    %v11781 = vpack.c.b16 %v11561, %v11557
    %v11782 = vpack.c.b16 %v11562, %v11558
    %v11783 = vpack.c.b16 %v11563, %v11559
    %v11784 = vpack.c.b16 %v11564, %v11560
    %v11785 = vpack.c.b16 %v11569, %v11565
    %v11786 = vpack.c.b16 %v11570, %v11566
    %v11787 = vpack.c.b16 %v11571, %v11567
    %v11788 = vpack.c.b16 %v11572, %v11568
    %v11789 = vpack.c.b16 %v11577, %v11573
    %v11790 = vpack.c.b16 %v11578, %v11574
    %v11791 = vpack.c.b16 %v11579, %v11575
    %v11792 = vpack.c.b16 %v11580, %v11576
    %v11793 = vpack.c.b16 %v11585, %v11581
    %v11794 = vpack.c.b16 %v11586, %v11582
    %v11795 = vpack.c.b16 %v11587, %v11583
    %v11796 = vpack.c.b16 %v11588, %v11584
    %v11797 = vpack.c.b16 %v11593, %v11589
    %v11798 = vpack.c.b16 %v11594, %v11590
    %v11799 = vpack.c.b16 %v11595, %v11591
    %v11800 = vpack.c.b16 %v11596, %v11592
    %v11801 = vpack.c.b16 %v11601, %v11597
    %v11802 = vpack.c.b16 %v11602, %v11598
    %v11803 = vpack.c.b16 %v11603, %v11599
    %v11804 = vpack.c.b16 %v11604, %v11600
    %v11805 = vpack.c.b16 %v11609, %v11605
    %v11806 = vpack.c.b16 %v11610, %v11606
    %v11807 = vpack.c.b16 %v11611, %v11607
    %v11808 = vpack.c.b16 %v11612, %v11608
    %v11809 = vpack.c.b16 %v11617, %v11613
    %v11810 = vpack.c.b16 %v11618, %v11614
    %v11811 = vpack.c.b16 %v11619, %v11615
    %v11812 = vpack.c.b16 %v11620, %v11616
    %v11813 = vpack.c.b16 %v11625, %v11621
    %v11814 = vpack.c.b16 %v11626, %v11622
    %v11815 = vpack.c.b16 %v11627, %v11623
    %v11816 = vpack.c.b16 %v11628, %v11624
    %v11817 = vpack.c.b16 %v11633, %v11629
    %v11818 = vpack.c.b16 %v11634, %v11630
    %v11819 = vpack.c.b16 %v11635, %v11631
    %v11820 = vpack.c.b16 %v11636, %v11632
    %v11821 = vpack.c.b16 %v11641, %v11637
    %v11822 = vpack.c.b16 %v11642, %v11638
    %v11823 = vpack.c.b16 %v11643, %v11639
    %v11824 = vpack.c.b16 %v11644, %v11640
    %v11825 = vpack.c.b16 %v11649, %v11645
    %v11826 = vpack.c.b16 %v11650, %v11646
    %v11827 = vpack.c.b16 %v11651, %v11647
    %v11828 = vpack.c.b16 %v11652, %v11648
    %v11829 = vpack.c.b16 %v11657, %v11653
    %v11830 = vpack.c.b16 %v11658, %v11654
    %v11831 = vpack.c.b16 %v11659, %v11655
    %v11832 = vpack.c.b16 %v11660, %v11656
    %v11833 = vpack.c.b16 %v11665, %v11661
    %v11834 = vpack.c.b16 %v11666, %v11662
    %v11835 = vpack.c.b16 %v11667, %v11663
    %v11836 = vpack.c.b16 %v11668, %v11664
    %v11837 = vpack.c.b16 %v11673, %v11669
    %v11838 = vpack.c.b16 %v11674, %v11670
    %v11839 = vpack.c.b16 %v11675, %v11671
    %v11840 = vpack.c.b16 %v11676, %v11672
    %v11841 = vpack.c.b16 %v11681, %v11677
    %v11842 = vpack.c.b16 %v11682, %v11678
    %v11843 = vpack.c.b16 %v11683, %v11679
    %v11844 = vpack.c.b16 %v11684, %v11680
    %v11845 = vpack.c.b16 %v11689, %v11685
    %v11846 = vpack.c.b16 %v11690, %v11686
    %v11847 = vpack.c.b16 %v11691, %v11687
    %v11848 = vpack.c.b16 %v11692, %v11688
    %v11849 = vpack.c.b16 %v11697, %v11693
    %v11850 = vpack.c.b16 %v11698, %v11694
    %v11851 = vpack.c.b16 %v11699, %v11695
    %v11852 = vpack.c.b16 %v11700, %v11696
    %v11853 = vpack.c.b16 %v11705, %v11701
    %v11854 = vpack.c.b16 %v11706, %v11702
    %v11855 = vpack.c.b16 %v11707, %v11703
    %v11856 = vpack.c.b16 %v11708, %v11704
    %v11857 = vpack.c.b16 %v11713, %v11709
    %v11858 = vpack.c.b16 %v11714, %v11710
    %v11859 = vpack.c.b16 %v11715, %v11711
    %v11860 = vpack.c.b16 %v11716, %v11712
    %v11861 = vpack.c.b16 %v11721, %v11717
    %v11862 = vpack.c.b16 %v11722, %v11718
    %v11863 = vpack.c.b16 %v11723, %v11719
    %v11864 = vpack.c.b16 %v11724, %v11720
    %v11865 = vpack.c.b16 %v11729, %v11725
    %v11866 = vpack.c.b16 %v11730, %v11726
    %v11867 = vpack.c.b16 %v11731, %v11727
    %v11868 = vpack.c.b16 %v11732, %v11728
    %v11869 = vpack.c.b16 %v11737, %v11733
    %v11870 = vpack.c.b16 %v11738, %v11734
    %v11871 = vpack.c.b16 %v11739, %v11735
    %v11872 = vpack.c.b16 %v11740, %v11736
    %v11873 = vpack.c.b16 %v11745, %v11741
    %v11874 = vpack.c.b16 %v11746, %v11742
    %v11875 = vpack.c.b16 %v11747, %v11743
    %v11876 = vpack.c.b16 %v11748, %v11744
    %12005 = vmatprep.subr.bf16.mxu0 %v11778
    %12006 = vmatpush1.bf16.msra.mxu0 %v11777
    %12007 = vmatprep.subr.bf16.mxu0 %v11774
    %12008 = vmatpush1.bf16.msra.mxu0 %v11773
    %12009 = vmatprep.subr.bf16.mxu0 %v11770
    %12010 = vmatpush1.bf16.msra.mxu0 %v11769
    %12011 = vmatprep.subr.bf16.mxu0 %v11766
    %12012 = vmatpush1.bf16.msra.mxu0 %v11765
    %12013 = vmatprep.subr.bf16.mxu0 %v11762
    %12014 = vmatpush1.bf16.msra.mxu0 %v11761
    %12015 = vmatprep.subr.bf16.mxu0 %v11758
    %12016 = vmatpush1.bf16.msra.mxu0 %v11757
    %12017 = vmatprep.subr.bf16.mxu0 %v11754
    %12018 = vmatpush1.bf16.msra.mxu0 %v11753
    %12019 = vmatprep.subr.bf16.mxu0 %v11750
    %12020 = vmatpush1.bf16.msra.mxu0 %v11749
    %12021 = vmatprep.subr.bf16.mxu0 %v11810
    %12022 = vmatpush2.bf16.msra.mxu0 %v11809
    %12023 = vmatprep.subr.bf16.mxu0 %v11806
    %12024 = vmatpush2.bf16.msra.mxu0 %v11805
    %12025 = vmatprep.subr.bf16.mxu0 %v11802
    %12026 = vmatpush2.bf16.msra.mxu0 %v11801
    %12027 = vmatprep.subr.bf16.mxu0 %v11798
    %12028 = vmatpush2.bf16.msra.mxu0 %v11797
    %12029 = vmatprep.subr.bf16.mxu0 %v11794
    %12030 = vmatpush2.bf16.msra.mxu0 %v11793
    %12031 = vmatprep.subr.bf16.mxu0 %v11790
    %12032 = vmatpush2.bf16.msra.mxu0 %v11789
    %12033 = vmatprep.subr.bf16.mxu0 %v11786
    %12034 = vmatpush2.bf16.msra.mxu0 %v11785
    %12035 = vmatprep.subr.bf16.mxu0 %v11782
    %12036 = vmatpush2.bf16.msra.mxu0 %v11781
    %12037 = vmatprep.mubr.bf16.mxu0 %v11212
    %12038 = vmatmul.mubr.bf16.gmra.mxu0 %v11211
    %v12039 = vpop.f32.mrf.mxu0
    %v12040 = vadd.f32 %v11348, %v12039
    %v12041 = vpop.f32.mrf.mxu0
    %v12042 = vadd.f32 %v11352, %v12041
    %v12043 = vpop.f32.mrf.mxu0
    %v12044 = vpop.f32.mrf.mxu0
    %12045 = vdwg.mxu0
    %12046 = vmatprep.subr.bf16.mxu0 %v11842
    %12047 = vmatpush1.bf16.msra.mxu0 %v11841
    %12048 = vmatprep.subr.bf16.mxu0 %v11838
    %12049 = vmatpush1.bf16.msra.mxu0 %v11837
    %12050 = vmatprep.subr.bf16.mxu0 %v11834
    %12051 = vmatpush1.bf16.msra.mxu0 %v11833
    %12052 = vmatprep.subr.bf16.mxu0 %v11830
    %12053 = vmatpush1.bf16.msra.mxu0 %v11829
    %12054 = vmatprep.subr.bf16.mxu0 %v11826
    %12055 = vmatpush1.bf16.msra.mxu0 %v11825
    %12056 = vmatprep.subr.bf16.mxu0 %v11822
    %12057 = vmatpush1.bf16.msra.mxu0 %v11821
    %12058 = vmatprep.subr.bf16.mxu0 %v11818
    %12059 = vmatpush1.bf16.msra.mxu0 %v11817
    %12060 = vmatprep.subr.bf16.mxu0 %v11814
    %12061 = vmatpush1.bf16.msra.mxu0 %v11813
    %12062 = vmatprep.subr.bf16.mxu0 %v11874
    %12063 = vmatpush2.bf16.msra.mxu0 %v11873
    %12064 = vmatprep.subr.bf16.mxu0 %v11870
    %12065 = vmatpush2.bf16.msra.mxu0 %v11869
    %12066 = vmatprep.subr.bf16.mxu0 %v11866
    %12067 = vmatpush2.bf16.msra.mxu0 %v11865
    %12068 = vmatprep.subr.bf16.mxu0 %v11862
    %12069 = vmatpush2.bf16.msra.mxu0 %v11861
    %12070 = vmatprep.subr.bf16.mxu0 %v11858
    %12071 = vmatpush2.bf16.msra.mxu0 %v11857
    %12072 = vmatprep.subr.bf16.mxu0 %v11854
    %12073 = vmatpush2.bf16.msra.mxu0 %v11853
    %12074 = vmatprep.subr.bf16.mxu0 %v11850
    %12075 = vmatpush2.bf16.msra.mxu0 %v11849
    %12076 = vmatprep.subr.bf16.mxu0 %v11846
    %12077 = vmatpush2.bf16.msra.mxu0 %v11845
    %12078 = vmatprep.mubr.bf16.mxu0 %v11214
    %12079 = vmatmul.mubr.bf16.gmra.mxu0 %v11213
    %v12080 = vpop.f32.mrf.mxu0
    %v12081 = vadd.f32 %v12040, %v12080
    %v12082 = vpop.f32.mrf.mxu0
    %v12083 = vadd.f32 %v12042, %v12082
    %v12084 = vpop.f32.mrf.mxu0
    %v12085 = vpop.f32.mrf.mxu0
    %12086 = vdwg.mxu0
    %12087 = vmatprep.subr.bf16.mxu0 %v11780
    %12088 = vmatpush1.bf16.msra.mxu0 %v11779
    %12089 = vmatprep.subr.bf16.mxu0 %v11776
    %12090 = vmatpush1.bf16.msra.mxu0 %v11775
    %12091 = vmatprep.subr.bf16.mxu0 %v11772
    %12092 = vmatpush1.bf16.msra.mxu0 %v11771
    %12093 = vmatprep.subr.bf16.mxu0 %v11768
    %12094 = vmatpush1.bf16.msra.mxu0 %v11767
    %12095 = vmatprep.subr.bf16.mxu0 %v11764
    %12096 = vmatpush1.bf16.msra.mxu0 %v11763
    %12097 = vmatprep.subr.bf16.mxu0 %v11760
    %12098 = vmatpush1.bf16.msra.mxu0 %v11759
    %12099 = vmatprep.subr.bf16.mxu0 %v11756
    %12100 = vmatpush1.bf16.msra.mxu0 %v11755
    %12101 = vmatprep.subr.bf16.mxu0 %v11752
    %12102 = vmatpush1.bf16.msra.mxu0 %v11751
    %12103 = vmatprep.subr.bf16.mxu0 %v11812
    %12104 = vmatpush2.bf16.msra.mxu0 %v11811
    %12105 = vmatprep.subr.bf16.mxu0 %v11808
    %12106 = vmatpush2.bf16.msra.mxu0 %v11807
    %12107 = vmatprep.subr.bf16.mxu0 %v11804
    %12108 = vmatpush2.bf16.msra.mxu0 %v11803
    %12109 = vmatprep.subr.bf16.mxu0 %v11800
    %12110 = vmatpush2.bf16.msra.mxu0 %v11799
    %12111 = vmatprep.subr.bf16.mxu0 %v11796
    %12112 = vmatpush2.bf16.msra.mxu0 %v11795
    %12113 = vmatprep.subr.bf16.mxu0 %v11792
    %12114 = vmatpush2.bf16.msra.mxu0 %v11791
    %12115 = vmatprep.subr.bf16.mxu0 %v11788
    %12116 = vmatpush2.bf16.msra.mxu0 %v11787
    %12117 = vmatprep.subr.bf16.mxu0 %v11784
    %12118 = vmatpush2.bf16.msra.mxu0 %v11783
    %12119 = vmatprep.mubr.bf16.mxu0 %v11212
    %12120 = vmatmul.mubr.bf16.gmra.mxu0 %v11211
    %v12121 = vpop.f32.mrf.mxu0
    %v12122 = vadd.f32 %v11356, %v12121
    %v12123 = vpop.f32.mrf.mxu0
    %v12124 = vadd.f32 %v11360, %v12123
    %v12125 = vpop.f32.mrf.mxu0
    %v12126 = vpop.f32.mrf.mxu0
    %12127 = vdwg.mxu0
    %12128 = vmatprep.subr.bf16.mxu0 %v11844
    %12129 = vmatpush1.bf16.msra.mxu0 %v11843
    %12130 = vmatprep.subr.bf16.mxu0 %v11840
    %12131 = vmatpush1.bf16.msra.mxu0 %v11839
    %12132 = vmatprep.subr.bf16.mxu0 %v11836
    %12133 = vmatpush1.bf16.msra.mxu0 %v11835
    %12134 = vmatprep.subr.bf16.mxu0 %v11832
    %12135 = vmatpush1.bf16.msra.mxu0 %v11831
    %12136 = vmatprep.subr.bf16.mxu0 %v11828
    %12137 = vmatpush1.bf16.msra.mxu0 %v11827
    %12138 = vmatprep.subr.bf16.mxu0 %v11824
    %12139 = vmatpush1.bf16.msra.mxu0 %v11823
    %12140 = vmatprep.subr.bf16.mxu0 %v11820
    %12141 = vmatpush1.bf16.msra.mxu0 %v11819
    %12142 = vmatprep.subr.bf16.mxu0 %v11816
    %12143 = vmatpush1.bf16.msra.mxu0 %v11815
    %12144 = vmatprep.subr.bf16.mxu0 %v11876
    %12145 = vmatpush2.bf16.msra.mxu0 %v11875
    %12146 = vmatprep.subr.bf16.mxu0 %v11872
    %12147 = vmatpush2.bf16.msra.mxu0 %v11871
    %12148 = vmatprep.subr.bf16.mxu0 %v11868
    %12149 = vmatpush2.bf16.msra.mxu0 %v11867
    %12150 = vmatprep.subr.bf16.mxu0 %v11864
    %12151 = vmatpush2.bf16.msra.mxu0 %v11863
    %12152 = vmatprep.subr.bf16.mxu0 %v11860
    %12153 = vmatpush2.bf16.msra.mxu0 %v11859
    %12154 = vmatprep.subr.bf16.mxu0 %v11856
    %12155 = vmatpush2.bf16.msra.mxu0 %v11855
    %12156 = vmatprep.subr.bf16.mxu0 %v11852
    %12157 = vmatpush2.bf16.msra.mxu0 %v11851
    %12158 = vmatprep.subr.bf16.mxu0 %v11848
    %12159 = vmatpush2.bf16.msra.mxu0 %v11847
    %12160 = vmatprep.mubr.bf16.mxu0 %v11214
    %12161 = vmatmul.mubr.bf16.gmra.mxu0 %v11213
    %v12162 = vpop.f32.mrf.mxu0
    %v12163 = vadd.f32 %v12122, %v12162
    %v12164 = vpop.f32.mrf.mxu0
    %v12165 = vadd.f32 %v12124, %v12164
    %v12166 = vpop.f32.mrf.mxu0
    %v12167 = vpop.f32.mrf.mxu0
    %12168 = vdwg.mxu0
    %v12169 = vmax.f32 %v12081, 0.0
    %v12170 = vmax.f32 %v12083, 0.0
    %v12171 = vmax.f32 %v12163, 0.0
    %v12172 = vmax.f32 %v12165, 0.0
    %v12173 = vpack.c.bf16 %v12169, %v12169
    %v12174 = vpack.c.bf16 %v12170, %v12170
    %v12175 = vpack.c.bf16 %v12171, %v12171
    %v12176 = vpack.c.bf16 %v12172, %v12172
    %v12177 = vld [vmem:[%s9] sm:$0xf]
    %v12178 = vld [vmem:[%s9 + $0x4] sm:$0xf]
    %v12179 = vld [vmem:[%s9 + $0x8] sm:$0xf]
    %v12180 = vld [vmem:[%s9 + $0xc] sm:$0xf]
    %v12181 = vld [vmem:[%s9 + $0x10] sm:$0xf]
    %v12182 = vld [vmem:[%s9 + $0x14] sm:$0xf]
    %v12183 = vld [vmem:[%s9 + $0x18] sm:$0xf]
    %v12184 = vld [vmem:[%s9 + $0x1c] sm:$0xf]
    %v12185 = vld [vmem:[%s9 + $0x20] sm:$0xf]
    %v12186 = vld [vmem:[%s9 + $0x24] sm:$0xf]
    %v12187 = vld [vmem:[%s9 + $0x28] sm:$0xf]
    %v12188 = vld [vmem:[%s9 + $0x2c] sm:$0xf]
    %v12189 = vld [vmem:[%s9 + $0x30] sm:$0xf]
    %v12190 = vld [vmem:[%s9 + $0x34] sm:$0xf]
    %v12191 = vld [vmem:[%s9 + $0x38] sm:$0xf]
    %v12192 = vld [vmem:[%s9 + $0x3c] sm:$0xf]
    %v12193 = vld [vmem:[%s9 + $0x40] sm:$0xf]
    %v12194 = vld [vmem:[%s9 + $0x44] sm:$0xf]
    %v12195 = vld [vmem:[%s9 + $0x48] sm:$0xf]
    %v12196 = vld [vmem:[%s9 + $0x4c] sm:$0xf]
    %v12197 = vld [vmem:[%s9 + $0x50] sm:$0xf]
    %v12198 = vld [vmem:[%s9 + $0x54] sm:$0xf]
    %v12199 = vld [vmem:[%s9 + $0x58] sm:$0xf]
    %v12200 = vld [vmem:[%s9 + $0x5c] sm:$0xf]
    %v12201 = vld [vmem:[%s9 + $0x60] sm:$0xf]
    %v12202 = vld [vmem:[%s9 + $0x64] sm:$0xf]
    %v12203 = vld [vmem:[%s9 + $0x68] sm:$0xf]
    %v12204 = vld [vmem:[%s9 + $0x6c] sm:$0xf]
    %v12205 = vld [vmem:[%s9 + $0x70] sm:$0xf]
    %v12206 = vld [vmem:[%s9 + $0x74] sm:$0xf]
    %v12207 = vld [vmem:[%s9 + $0x78] sm:$0xf]
    %v12208 = vld [vmem:[%s9 + $0x7c] sm:$0xf]
    %v12209 = vld [vmem:[%s9 + $0x80] sm:$0xf]
    %v12210 = vld [vmem:[%s9 + $0x84] sm:$0xf]
    %v12211 = vld [vmem:[%s9 + $0x88] sm:$0xf]
    %v12212 = vld [vmem:[%s9 + $0x8c] sm:$0xf]
    %v12213 = vld [vmem:[%s9 + $0x90] sm:$0xf]
    %v12214 = vld [vmem:[%s9 + $0x94] sm:$0xf]
    %v12215 = vld [vmem:[%s9 + $0x98] sm:$0xf]
    %v12216 = vld [vmem:[%s9 + $0x9c] sm:$0xf]
    %v12217 = vld [vmem:[%s9 + $0xa0] sm:$0xf]
    %v12218 = vld [vmem:[%s9 + $0xa4] sm:$0xf]
    %v12219 = vld [vmem:[%s9 + $0xa8] sm:$0xf]
    %v12220 = vld [vmem:[%s9 + $0xac] sm:$0xf]
    %v12221 = vld [vmem:[%s9 + $0xb0] sm:$0xf]
    %v12222 = vld [vmem:[%s9 + $0xb4] sm:$0xf]
    %v12223 = vld [vmem:[%s9 + $0xb8] sm:$0xf]
    %v12224 = vld [vmem:[%s9 + $0xbc] sm:$0xf]
    %v12225 = vld [vmem:[%s9 + $0xc0] sm:$0xf]
    %v12226 = vld [vmem:[%s9 + $0xc4] sm:$0xf]
    %v12227 = vld [vmem:[%s9 + $0xc8] sm:$0xf]
    %v12228 = vld [vmem:[%s9 + $0xcc] sm:$0xf]
    %v12229 = vld [vmem:[%s9 + $0xd0] sm:$0xf]
    %v12230 = vld [vmem:[%s9 + $0xd4] sm:$0xf]
    %v12231 = vld [vmem:[%s9 + $0xd8] sm:$0xf]
    %v12232 = vld [vmem:[%s9 + $0xdc] sm:$0xf]
    %v12233 = vld [vmem:[%s9 + $0xe0] sm:$0xf]
    %v12234 = vld [vmem:[%s9 + $0xe4] sm:$0xf]
    %v12235 = vld [vmem:[%s9 + $0xe8] sm:$0xf]
    %v12236 = vld [vmem:[%s9 + $0xec] sm:$0xf]
    %v12237 = vld [vmem:[%s9 + $0xf0] sm:$0xf]
    %v12238 = vld [vmem:[%s9 + $0xf4] sm:$0xf]
    %v12239 = vld [vmem:[%s9 + $0xf8] sm:$0xf]
    %v12240 = vld [vmem:[%s9 + $0xfc] sm:$0xf]
    %v12241 = vld [vmem:[%s10] sm:$0x1]
    %v12243 = vlaneseq
    %v12244 = vshrl.u32 %v12243, 7
    %v12245 = vsub.s32 0, %v12244
    %v12246 = vrot.slane %v12241, %v12245
    %v12312 = vunpack.c.l.b16 %v12177
    %v12313 = vunpack.c.l.b16 %v12178
    %v12314 = vunpack.c.l.b16 %v12179
    %v12315 = vunpack.c.l.b16 %v12180
    %v12316 = vunpack.c.l.b16 %v12181
    %v12317 = vunpack.c.l.b16 %v12182
    %v12318 = vunpack.c.l.b16 %v12183
    %v12319 = vunpack.c.l.b16 %v12184
    %v12320 = vunpack.c.l.b16 %v12185
    %v12321 = vunpack.c.l.b16 %v12186
    %v12322 = vunpack.c.l.b16 %v12187
    %v12323 = vunpack.c.l.b16 %v12188
    %v12324 = vunpack.c.l.b16 %v12189
    %v12325 = vunpack.c.l.b16 %v12190
    %v12326 = vunpack.c.l.b16 %v12191
    %v12327 = vunpack.c.l.b16 %v12192
    %v12328 = vunpack.c.l.b16 %v12193
    %v12329 = vunpack.c.l.b16 %v12194
    %v12330 = vunpack.c.l.b16 %v12195
    %v12331 = vunpack.c.l.b16 %v12196
    %v12332 = vunpack.c.l.b16 %v12197
    %v12333 = vunpack.c.l.b16 %v12198
    %v12334 = vunpack.c.l.b16 %v12199
    %v12335 = vunpack.c.l.b16 %v12200
    %v12336 = vunpack.c.l.b16 %v12201
    %v12337 = vunpack.c.l.b16 %v12202
    %v12338 = vunpack.c.l.b16 %v12203
    %v12339 = vunpack.c.l.b16 %v12204
    %v12340 = vunpack.c.l.b16 %v12205
    %v12341 = vunpack.c.l.b16 %v12206
    %v12342 = vunpack.c.l.b16 %v12207
    %v12343 = vunpack.c.l.b16 %v12208
    %v12344 = vunpack.c.l.b16 %v12209
    %v12345 = vunpack.c.l.b16 %v12210
    %v12346 = vunpack.c.l.b16 %v12211
    %v12347 = vunpack.c.l.b16 %v12212
    %v12348 = vunpack.c.l.b16 %v12213
    %v12349 = vunpack.c.l.b16 %v12214
    %v12350 = vunpack.c.l.b16 %v12215
    %v12351 = vunpack.c.l.b16 %v12216
    %v12352 = vunpack.c.l.b16 %v12217
    %v12353 = vunpack.c.l.b16 %v12218
    %v12354 = vunpack.c.l.b16 %v12219
    %v12355 = vunpack.c.l.b16 %v12220
    %v12356 = vunpack.c.l.b16 %v12221
    %v12357 = vunpack.c.l.b16 %v12222
    %v12358 = vunpack.c.l.b16 %v12223
    %v12359 = vunpack.c.l.b16 %v12224
    %v12360 = vunpack.c.l.b16 %v12225
    %v12361 = vunpack.c.l.b16 %v12226
    %v12362 = vunpack.c.l.b16 %v12227
    %v12363 = vunpack.c.l.b16 %v12228
    %v12364 = vunpack.c.l.b16 %v12229
    %v12365 = vunpack.c.l.b16 %v12230
    %v12366 = vunpack.c.l.b16 %v12231
    %v12367 = vunpack.c.l.b16 %v12232
    %v12368 = vunpack.c.l.b16 %v12233
    %v12369 = vunpack.c.l.b16 %v12234
    %v12370 = vunpack.c.l.b16 %v12235
    %v12371 = vunpack.c.l.b16 %v12236
    %v12372 = vunpack.c.l.b16 %v12237
    %v12373 = vunpack.c.l.b16 %v12238
    %v12374 = vunpack.c.l.b16 %v12239
    %v12375 = vunpack.c.l.b16 %v12240
    %v12376 = vpack.c.b16 %v12313, %v12312
    %v12377 = vpack.c.b16 %v12315, %v12314
    %v12378 = vpack.c.b16 %v12317, %v12316
    %v12379 = vpack.c.b16 %v12319, %v12318
    %v12380 = vpack.c.b16 %v12321, %v12320
    %v12381 = vpack.c.b16 %v12323, %v12322
    %v12382 = vpack.c.b16 %v12325, %v12324
    %v12383 = vpack.c.b16 %v12327, %v12326
    %v12384 = vpack.c.b16 %v12329, %v12328
    %v12385 = vpack.c.b16 %v12331, %v12330
    %v12386 = vpack.c.b16 %v12333, %v12332
    %v12387 = vpack.c.b16 %v12335, %v12334
    %v12388 = vpack.c.b16 %v12337, %v12336
    %v12389 = vpack.c.b16 %v12339, %v12338
    %v12390 = vpack.c.b16 %v12341, %v12340
    %v12391 = vpack.c.b16 %v12343, %v12342
    %v12392 = vpack.c.b16 %v12345, %v12344
    %v12393 = vpack.c.b16 %v12347, %v12346
    %v12394 = vpack.c.b16 %v12349, %v12348
    %v12395 = vpack.c.b16 %v12351, %v12350
    %v12396 = vpack.c.b16 %v12353, %v12352
    %v12397 = vpack.c.b16 %v12355, %v12354
    %v12398 = vpack.c.b16 %v12357, %v12356
    %v12399 = vpack.c.b16 %v12359, %v12358
    %v12400 = vpack.c.b16 %v12361, %v12360
    %v12401 = vpack.c.b16 %v12363, %v12362
    %v12402 = vpack.c.b16 %v12365, %v12364
    %v12403 = vpack.c.b16 %v12367, %v12366
    %v12404 = vpack.c.b16 %v12369, %v12368
    %v12405 = vpack.c.b16 %v12371, %v12370
    %v12406 = vpack.c.b16 %v12373, %v12372
    %v12407 = vpack.c.b16 %v12375, %v12374
    %12440 = vmatprep.subr.bf16.mxu0 0
    %12441 = vmatpush1.bf16.msra.mxu0 %v12383
    %12442 = vmatprep.subr.bf16.mxu0 0
    %12443 = vmatpush1.bf16.msra.mxu0 %v12382
    %12444 = vmatprep.subr.bf16.mxu0 0
    %12445 = vmatpush1.bf16.msra.mxu0 %v12381
    %12446 = vmatprep.subr.bf16.mxu0 0
    %12447 = vmatpush1.bf16.msra.mxu0 %v12380
    %12448 = vmatprep.subr.bf16.mxu0 0
    %12449 = vmatpush1.bf16.msra.mxu0 %v12379
    %12450 = vmatprep.subr.bf16.mxu0 0
    %12451 = vmatpush1.bf16.msra.mxu0 %v12378
    %12452 = vmatprep.subr.bf16.mxu0 0
    %12453 = vmatpush1.bf16.msra.mxu0 %v12377
    %12454 = vmatprep.subr.bf16.mxu0 0
    %12455 = vmatpush1.bf16.msra.mxu0 %v12376
    %12456 = vmatprep.subr.bf16.mxu0 0
    %12457 = vmatpush2.bf16.msra.mxu0 %v12391
    %12458 = vmatprep.subr.bf16.mxu0 0
    %12459 = vmatpush2.bf16.msra.mxu0 %v12390
    %12460 = vmatprep.subr.bf16.mxu0 0
    %12461 = vmatpush2.bf16.msra.mxu0 %v12389
    %12462 = vmatprep.subr.bf16.mxu0 0
    %12463 = vmatpush2.bf16.msra.mxu0 %v12388
    %12464 = vmatprep.subr.bf16.mxu0 0
    %12465 = vmatpush2.bf16.msra.mxu0 %v12387
    %12466 = vmatprep.subr.bf16.mxu0 0
    %12467 = vmatpush2.bf16.msra.mxu0 %v12386
    %12468 = vmatprep.subr.bf16.mxu0 0
    %12469 = vmatpush2.bf16.msra.mxu0 %v12385
    %12470 = vmatprep.subr.bf16.mxu0 0
    %12471 = vmatpush2.bf16.msra.mxu0 %v12384
    %12472 = vmatprep.mubr.bf16.mxu0 %v12174
    %12473 = vmatmul.mubr.bf16.gmra.mxu0 %v12173
    %v12474 = vpop.f32.mrf.mxu0
    %v12475 = vadd.f32 %v12246, %v12474
    %v12476 = vpop.f32.mrf.mxu0
    %v12477 = vpop.f32.mrf.mxu0
    %v12478 = vpop.f32.mrf.mxu0
    %12479 = vdwg.mxu0
    %12480 = vmatprep.subr.bf16.mxu0 0
    %12481 = vmatpush1.bf16.msra.mxu0 %v12399
    %12482 = vmatprep.subr.bf16.mxu0 0
    %12483 = vmatpush1.bf16.msra.mxu0 %v12398
    %12484 = vmatprep.subr.bf16.mxu0 0
    %12485 = vmatpush1.bf16.msra.mxu0 %v12397
    %12486 = vmatprep.subr.bf16.mxu0 0
    %12487 = vmatpush1.bf16.msra.mxu0 %v12396
    %12488 = vmatprep.subr.bf16.mxu0 0
    %12489 = vmatpush1.bf16.msra.mxu0 %v12395
    %12490 = vmatprep.subr.bf16.mxu0 0
    %12491 = vmatpush1.bf16.msra.mxu0 %v12394
    %12492 = vmatprep.subr.bf16.mxu0 0
    %12493 = vmatpush1.bf16.msra.mxu0 %v12393
    %12494 = vmatprep.subr.bf16.mxu0 0
    %12495 = vmatpush1.bf16.msra.mxu0 %v12392
    %12496 = vmatprep.subr.bf16.mxu0 0
    %12497 = vmatpush2.bf16.msra.mxu0 %v12407
    %12498 = vmatprep.subr.bf16.mxu0 0
    %12499 = vmatpush2.bf16.msra.mxu0 %v12406
    %12500 = vmatprep.subr.bf16.mxu0 0
    %12501 = vmatpush2.bf16.msra.mxu0 %v12405
    %12502 = vmatprep.subr.bf16.mxu0 0
    %12503 = vmatpush2.bf16.msra.mxu0 %v12404
    %12504 = vmatprep.subr.bf16.mxu0 0
    %12505 = vmatpush2.bf16.msra.mxu0 %v12403
    %12506 = vmatprep.subr.bf16.mxu0 0
    %12507 = vmatpush2.bf16.msra.mxu0 %v12402
    %12508 = vmatprep.subr.bf16.mxu0 0
    %12509 = vmatpush2.bf16.msra.mxu0 %v12401
    %12510 = vmatprep.subr.bf16.mxu0 0
    %12511 = vmatpush2.bf16.msra.mxu0 %v12400
    %12512 = vmatprep.mubr.bf16.mxu0 %v12176
    %12513 = vmatmul.mubr.bf16.gmra.mxu0 %v12175
    %v12514 = vpop.f32.mrf.mxu0
    %v12515 = vadd.f32 %v12475, %v12514
    %v12516 = vpop.f32.mrf.mxu0
    %v12517 = vpop.f32.mrf.mxu0
    %v12518 = vpop.f32.mrf.mxu0
    %12519 = vdwg.mxu0
    %vm12520 = vcmask 713728
    %12521 = vst.msk [vmem:[#allocation5] sm:$0x3] %vm12520, %v12515
    // Predicated region
    $region50: #{vggnet2016_forward.1} parent=1 // pred_check
      _
    $region51: #{vggnet2016_forward.1} parent=1 // pred_check_branch
      %12523 = sbr.rel (0) target = $region53
    $region52: #{vggnet2016_forward.1} parent=1 // pred_region
      %s12525 = ssub.s32 32, 32
      %12526 = vsyncadd [#allocation4], %s12525
      %s12528 = sshll.u32 [#allocation5], 4
      %s12529 = int_to_ptr.vmem [resolvable:$true] %s12528
      %12531 = dma.vmem_to_hbm [thread:$0]  %s12529, 32, %s11, [#allocation4]
    $region53: #{vggnet2016_forward.1} parent=1 // pred_fallthru
      _
    // Predicated region
    $region54: #{vggnet2016_forward.1} parent=1 // pred_check
      _
    $region55: #{vggnet2016_forward.1} parent=1 // pred_check_branch
      %12533 = sbr.rel (0) target = $region57
    $region56: #{vggnet2016_forward.1} parent=1 // pred_region
      %12534 = dma.done [#allocation4], 32
    $region57: #{vggnet2016_forward.1} parent=1 // pred_fallthru
      _
    %12535 = vsyncpa [#allocation3], 1
    %12536 = vsyncpa [#allocation4], 1

</llo_original>
